<compile_context>
chip_gen: v7x
topology: tpu7x:2x2x1
jax: 0.10.0
libtpu: 0.0.40
codegen_flags: <defaults>
</compile_context>

<pallas_src>
import jax
import jax.numpy as jnp
from jax.experimental import pallas as pl
from jax.experimental.pallas import tpu as pltpu

LN_EPS = 1e-5
SQRT2 = 1.4142135623730951
LANE = 128
SUBLANE = 8
PACK = 16          # bf16 sublane packing


def _round_up(x, m):
    return (x + m - 1) // m * m


def _gelu(x):
    # exact (erf) GELU, matching torch.nn.GELU() default
    return 0.5 * x * (1.0 + jax.lax.erf(x * (1.0 / SQRT2)))


def _default_vmem_limit():
    # ~75% of physical VMEM: ~96 MiB on v5e/v6e (128 MiB), ~48 MiB on v7x (64 MiB).
    cap = 64 * 1024 * 1024
    try:
        cap = int(getattr(pltpu.get_tpu_info(), "vmem_capacity_bytes", cap))
    except Exception:
        pass
    return max(32 * 1024 * 1024, (3 * cap) // 4)


def _make_fused_kernel(k, H, W, pad, Wpa, S, R2, c_real, has_proj, strip_in_kernel):
    """Fused per-image kernel.

    Row layout: the spatially zero-padded image is flattened into a (rows, C) slab with
    channels on the 128-lane axis. With Wpa = round_up(W + 2*pad, 8), conv tap (dy, dx)
    for every output position is the contiguous row slice [dy*Wpa+dx : dy*Wpa+dx + H*Wpa)
    of that slab, so each conv is k*k MXU matmuls — no im2col, no gathers. Rows whose
    column lands in the Wpa-W padding region are garbage; they are masked to zero before
    feeding conv2 and stripped before writeback.
    """
    M = H * Wpa                      # working rows per image (incl. garbage cols)
    base = pad * Wpa + pad           # input-slab offset of interior pixel (0, 0)
    rd0 = S - base                   # conv2 tap (0,0) read offset into the scratch
    inv_c = 1.0 / float(c_real)      # LayerNorm divides by the REAL channel count

    def layernorm(y, g, bt):
        # one-pass mean / E[y^2]; padded channels are exactly zero by construction.
        mu = jnp.sum(y, axis=-1, keepdims=True) * inv_c
        ms = jnp.sum(y * y, axis=-1, keepdims=True) * inv_c
        var = ms - mu * mu
        return (y - mu) * jax.lax.rsqrt(var + LN_EPS) * g + bt

    def conv_taps(read_lhs, w_ref, row0):
        acc = None
        for dy in range(k):
            for dx in range(k):
                lhs = read_lhs(row0 + dy * Wpa + dx)              # (M, C) bf16
                part = jnp.dot(lhs, w_ref[dy * k + dx],
                               preferred_element_type=jnp.float32)
                acc = part if acc is None else acc + part
        return acc                                                # (M, Cout_p) f32

    def kernel(xflat_ref, mask_ref, w1_ref, b1_ref, g1_ref, bt1_ref,
               w2_ref, b2_ref, g2_ref, bt2_ref, *rest):
        if has_proj:
            wres_ref, bres_ref, o_ref, y1pad_ref = rest
        else:
            o_ref, y1pad_ref = rest
        cp = y1pad_ref.shape[1]

        # ---------------- conv1 + bias + LayerNorm2d + GELU ------------------
        acc1 = conv_taps(lambda off: xflat_ref[0, off:off + M, :], w1_ref, 0)
        y1 = _gelu(layernorm(acc1 + b1_ref[...], g1_ref[...], bt1_ref[...]))

        # zero the garbage (flattened-padding) columns so the inter-row border of the
        # scratch is written as exact zeros.
        y1 = y1 * jnp.tile(mask_ref[...], (H, 1))                 # (M, 1) broadcast

        # zero only the thin top/bottom borders of the scratch (the interior is fully
        # rewritten every grid step), then store y1 once as bf16.
        if S > 0:
            y1pad_ref[0:S, :] = jnp.zeros((S, cp), y1pad_ref.dtype)
        zlo = (S + M) // PACK * PACK          # pack-aligned start; overlap rewritten below
        if R2 > zlo:
            y1pad_ref[zlo:R2, :] = jnp.zeros((R2 - zlo, cp), y1pad_ref.dtype)
        y1pad_ref[S:S + M, :] = y1.astype(y1pad_ref.dtype)

        # ---------------- conv2 + bias + LayerNorm2d --------------------------
        acc2 = conv_taps(lambda off: y1pad_ref[off:off + M, :], w2_ref, rd0)
        y2 = layernorm(acc2 + b2_ref[...], g2_ref[...], bt2_ref[...])

        # ---------------- residual + final GELU -------------------------------
        xres = xflat_ref[0, base:base + M, :]                     # (M, Cin_p) bf16
        if has_proj:
            r = jnp.dot(xres, wres_ref[...],
                        preferred_element_type=jnp.float32) + bres_ref[...]
        else:
            r = xres.astype(jnp.float32)                          # identity residual
        z = y2 + r                                                # (M, Cout_p) f32

        if strip_in_kernel:
            # drop the Wpa-W garbage columns before writeback (W % 8 == 0 keeps the
            # reshape/slice tile-aligned).
            z = z.reshape(H, Wpa, cp)[:, :W, :].reshape(H * W, cp)
        o_ref[0] = _gelu(z)

    return kernel


def res_conv_block(x_nchw, params, k, stride, pad, *, vmem_limit_bytes=None):
    """NCHW in / NCHW out, matching the PyTorch ResConvBlock.forward."""
    N, Cin, H, W = x_nchw.shape
    Cout = params["w1"].shape[0]

    Ho = (H + 2 * pad - k) // stride + 1
    Wo = (W + 2 * pad - k) // stride + 1
    if stride != 1 or (Ho, Wo) != (H, W):
        # The module's `x += r` only works when the convs preserve spatial shape.
        raise ValueError("ResConvBlock requires spatially-preserving convs "
                         f"(stride=1, 2*pad == k-1); got k={k}, stride={stride}, pad={pad}")

    Cin_p = _round_up(Cin, LANE)
    Cout_p = _round_up(Cout, LANE)
    has_proj = Cin != Cout

    Hp = H + 2 * pad
    Wpa = _round_up(W + 2 * pad, SUBLANE)   # sublane-aligned padded row width
    M = H * Wpa                             # working rows per image
    R = (Hp + 1) * Wpa                      # input-slab rows (+1 zero row for last taps)
    base = pad * Wpa + pad
    S = _round_up(base, PACK)               # pack-aligned interior offset in the scratch
    R2 = _round_up(S + M + base, PACK)      # scratch rows (covers the last conv2 taps)
    strip_in_kernel = (W % SUBLANE == 0)
    Mout = H * W if strip_in_kernel else M

    # ---- input slab: NHWC bf16, zero-padded (spatial -> Wpa + channel), flattened ----
    x_nhwc = jnp.transpose(x_nchw.astype(jnp.bfloat16), (0, 2, 3, 1))
    xflat = jnp.pad(x_nhwc, ((0, 0), (pad, pad + 1), (pad, Wpa - W - pad), (0, Cin_p - Cin)))
    xflat = xflat.reshape(N, R, Cin_p)

    # ---- weights: (Cout, Cin, k, k) -> (k*k, Cin_p, Cout_p), zero-padded, bf16 -------
    def pack_conv_w(w, cin_pad):
        cout, cin = w.shape[0], w.shape[1]
        w = jnp.transpose(w, (2, 3, 1, 0)).reshape(k * k, cin, cout)
        w = jnp.pad(w, ((0, 0), (0, cin_pad - cin), (0, Cout_p - cout)))
        return w.astype(jnp.bfloat16)

    def pack_vec(v):
        return jnp.pad(v, (0, Cout_p - v.shape[0])).reshape(1, Cout_p).astype(jnp.float32)

    w1 = pack_conv_w(params["w1"], Cin_p)
    w2 = pack_conv_w(params["w2"], Cout_p)
    b1, g1, bt1 = pack_vec(params["b1"]), pack_vec(params["g1"]), pack_vec(params["bt1"])
    b2, g2, bt2 = pack_vec(params["b2"]), pack_vec(params["g2"]), pack_vec(params["bt2"])

    # one period of the garbage-column mask (tiled to (M, 1) inside the kernel)
    mask = (jnp.arange(Wpa) < W).astype(jnp.float32).reshape(Wpa, 1)

    kernel = _make_fused_kernel(k, H, W, pad, Wpa, S, R2, Cout, has_proj, strip_in_kernel)

    vec_spec = pl.BlockSpec((1, Cout_p), lambda n: (0, 0))
    in_specs = [
        pl.BlockSpec((1, R, Cin_p), lambda n: (n, 0, 0)),            # input slab
        pl.BlockSpec((Wpa, 1), lambda n: (0, 0)),                    # column-mask period
        pl.BlockSpec((k * k, Cin_p, Cout_p), lambda n: (0, 0, 0)),   # conv1 weights
        vec_spec, vec_spec, vec_spec,                                # b1, g1, bt1
        pl.BlockSpec((k * k, Cout_p, Cout_p), lambda n: (0, 0, 0)),  # conv2 weights
        vec_spec, vec_spec, vec_spec,                                # b2, g2, bt2
    ]
    args = [xflat, mask, w1, b1, g1, bt1, w2, b2, g2, bt2]
    if has_proj:
        wres = jnp.transpose(params["wres"].reshape(Cout, Cin), (1, 0))
        wres = jnp.pad(wres, ((0, Cin_p - Cin), (0, Cout_p - Cout))).astype(jnp.bfloat16)
        in_specs += [pl.BlockSpec((Cin_p, Cout_p), lambda n: (0, 0)), vec_spec]
        args += [wres, pack_vec(params["bres"])]

    if vmem_limit_bytes is None:
        vmem_limit_bytes = _default_vmem_limit()

    out = pl.pallas_call(
        kernel,
        out_shape=jax.ShapeDtypeStruct((N, Mout, Cout_p), jnp.float32),
        grid_spec=pltpu.PrefetchScalarGridSpec(
            num_scalar_prefetch=0,
            grid=(N,),                                     # one image per grid step
            in_specs=in_specs,
            out_specs=pl.BlockSpec((1, Mout, Cout_p), lambda n: (n, 0, 0)),
            scratch_shapes=[pltpu.VMEM((R2, Cout_p), jnp.bfloat16)],   # zero-bordered y1
        ),
        compiler_params=pltpu.CompilerParams(
            dimension_semantics=("parallel",),
            vmem_limit_bytes=vmem_limit_bytes,
        ),
    )(*args)

    # drop remaining padding, back to NCHW for the public API
    # TODO(synk): expose NHWC (and optionally bf16) output to drop this final transpose.
    if strip_in_kernel:
        out = out.reshape(N, H, W, Cout_p)[:, :, :, :Cout]
    else:
        out = out.reshape(N, H, Wpa, Cout_p)[:, :, :W, :Cout]
    return jnp.transpose(out, (0, 3, 1, 2))


# ------------------------------ pure-JAX reference ------------------------------

def _ref_forward(x, params, k, stride, pad):
    def conv(x, w, b, s, p):
        y = jax.lax.conv_general_dilated(
            x, w, (s, s), [(p, p), (p, p)],
            dimension_numbers=("NCHW", "OIHW", "NCHW"))
        return y + b[None, :, None, None]

    def ln(x, g, bt):
        mu = x.mean(axis=1, keepdims=True)
        var = ((x - mu) ** 2).mean(axis=1, keepdims=True)
        return (x - mu) / jnp.sqrt(var + LN_EPS) * g[None, :, None, None] + bt[None, :, None, None]

    def gelu(x):
        return 0.5 * x * (1.0 + jax.lax.erf(x / SQRT2))

    Cin = x.shape[1]
    Cout = params["w1"].shape[0]
    r = x if Cin == Cout else conv(x, params["wres"], params["bres"], 1, 0)
    h = gelu(ln(conv(x, params["w1"], params["b1"], stride, pad), params["g1"], params["bt1"]))
    h = ln(conv(h, params["w2"], params["b2"], stride, pad), params["g2"], params["bt2"])
    return gelu(h + r)


# ----------------------------------- main ----------------------------------------

if __name__ == "__main__":
    k, stride, pad = 3, 1, 1    # spatial-preserving, as the residual add requires
    N, H, W = 2, 16, 16

    def make_params(key, cin, cout):
        ks = jax.random.split(key, 10)
        p = {
            "w1":  0.1 * jax.random.normal(ks[0], (cout, cin, k, k), jnp.float32),
            "b1":  0.1 * jax.random.normal(ks[1], (cout,), jnp.float32),
            "g1":  1.0 + 0.1 * jax.random.normal(ks[2], (cout,), jnp.float32),
            "bt1": 0.1 * jax.random.normal(ks[3], (cout,), jnp.float32),
            "w2":  0.1 * jax.random.normal(ks[4], (cout, cout, k, k), jnp.float32),
            "b2":  0.1 * jax.random.normal(ks[5], (cout,), jnp.float32),
            "g2":  1.0 + 0.1 * jax.random.normal(ks[6], (cout,), jnp.float32),
            "bt2": 0.1 * jax.random.normal(ks[7], (cout,), jnp.float32),
        }
        if cin != cout:
            p["wres"] = 0.1 * jax.random.normal(ks[8], (cout, cin, 1, 1), jnp.float32)
            p["bres"] = 0.1 * jax.random.normal(ks[9], (cout,), jnp.float32)
        return p

    root = jax.random.PRNGKey(0)
    k1, k2, k3, k4 = jax.random.split(root, 4)

    # projection residual (Cin != Cout) and identity residual (Cin == Cout)
    for cin, cout, pkey, xkey in [(4, 8, k1, k2), (8, 8, k3, k4)]:
        params = make_params(pkey, cin, cout)
        x = jax.random.normal(xkey, (N, cin, H, W), jnp.float32)

        fwd = jax.jit(lambda xx, pp: res_conv_block(xx, pp, k, stride, pad))
        out = jax.block_until_ready(fwd(x, params))
        ref = jax.block_until_ready(_ref_forward(x, params, k, stride, pad))

        assert out.shape == (N, cout, H, W)
        # bf16 input slab + bf16 MXU operands (f32 accumulation / LN / GELU)
        # => loosened tolerance vs. the pure-f32 reference.
        err = float(jnp.max(jnp.abs(out - ref)))
        assert jnp.allclose(out, ref, rtol=5e-2, atol=5e-2), \
            f"cin={cin} cout={cout} max_abs_err={err}"

    print("KERNEL_OK")
</pallas_src>

<mosaic_0001>
module attributes {stable_mosaic.version = 11 : i64} {
  func.func @kernel(%arg0: i32, %arg1: memref<1x456x128xbf16, #tpu.memory_space<vmem>>, %arg2: memref<24x1xf32, #tpu.memory_space<vmem>>, %arg3: memref<9x128x128xbf16, #tpu.memory_space<vmem>>, %arg4: memref<1x128xf32, #tpu.memory_space<vmem>>, %arg5: memref<1x128xf32, #tpu.memory_space<vmem>>, %arg6: memref<1x128xf32, #tpu.memory_space<vmem>>, %arg7: memref<9x128x128xbf16, #tpu.memory_space<vmem>>, %arg8: memref<1x128xf32, #tpu.memory_space<vmem>>, %arg9: memref<1x128xf32, #tpu.memory_space<vmem>>, %arg10: memref<1x128xf32, #tpu.memory_space<vmem>>, %arg11: memref<128x128xbf16, #tpu.memory_space<vmem>>, %arg12: memref<1x128xf32, #tpu.memory_space<vmem>>, %arg13: memref<1x256x128xf32, #tpu.memory_space<vmem>>, %arg14: memref<448x128xbf16, #tpu.memory_space<vmem>>) attributes {dimension_semantics = [#tpu.dimension_semantics<parallel>], iteration_bounds = array<i64: 2>, scalar_prefetch = 0 : i64, scratch_operands = 1 : i64, tpu.core_type = #tpu.core_type<tc>, window_params = [{transform_indices = @transform_0, window_bounds = array<i64: 1, 456, 128>}, {pipeline_mode = #tpu.pipeline_mode<synchronous>, transform_indices = @transform_1, window_bounds = array<i64: 24, 1>}, {pipeline_mode = #tpu.pipeline_mode<synchronous>, transform_indices = @transform_2, window_bounds = array<i64: 9, 128, 128>}, {pipeline_mode = #tpu.pipeline_mode<synchronous>, transform_indices = @transform_3, window_bounds = array<i64: 1, 128>}, {pipeline_mode = #tpu.pipeline_mode<synchronous>, transform_indices = @transform_4, window_bounds = array<i64: 1, 128>}, {pipeline_mode = #tpu.pipeline_mode<synchronous>, transform_indices = @transform_5, window_bounds = array<i64: 1, 128>}, {pipeline_mode = #tpu.pipeline_mode<synchronous>, transform_indices = @transform_6, window_bounds = array<i64: 9, 128, 128>}, {pipeline_mode = #tpu.pipeline_mode<synchronous>, transform_indices = @transform_7, window_bounds = array<i64: 1, 128>}, {pipeline_mode = #tpu.pipeline_mode<synchronous>, transform_indices = @transform_8, window_bounds = array<i64: 1, 128>}, {pipeline_mode = #tpu.pipeline_mode<synchronous>, transform_indices = @transform_9, window_bounds = array<i64: 1, 128>}, {pipeline_mode = #tpu.pipeline_mode<synchronous>, transform_indices = @transform_10, window_bounds = array<i64: 128, 128>}, {pipeline_mode = #tpu.pipeline_mode<synchronous>, transform_indices = @transform_11, window_bounds = array<i64: 1, 128>}, {transform_indices = @transform_12, window_bounds = array<i64: 1, 256, 128>}]} {
    %c0 = arith.constant 0 : index
    %c0_0 = arith.constant 0 : index
    %c0_1 = arith.constant 0 : index
    %0 = vector.load %arg1[%c0, %c0_0, %c0_1] : memref<1x456x128xbf16, #tpu.memory_space<vmem>>, vector<1x384x128xbf16>
    %1 = vector.shape_cast %0 : vector<1x384x128xbf16> to vector<384x128xbf16>
    %c0_2 = arith.constant 0 : index
    %c0_3 = arith.constant 0 : index
    %c0_4 = arith.constant 0 : index
    %2 = vector.load %arg3[%c0_2, %c0_3, %c0_4] : memref<9x128x128xbf16, #tpu.memory_space<vmem>>, vector<1x128x128xbf16>
    %3 = vector.shape_cast %2 : vector<1x128x128xbf16> to vector<128x128xbf16>
    %cst = arith.constant dense<0.000000e+00> : vector<384x128xf32>
    %4 = tpu.matmul %1, %3, %cst {dimension_numbers = #tpu.dot_dimension_numbers<[1], [0], [0], [1], [0, 0, 1, 1], [], []>} : vector<384x128xbf16>, vector<128x128xbf16>, vector<384x128xf32> -> vector<384x128xf32>
    %c0_5 = arith.constant 0 : index
    %c1 = arith.constant 1 : index
    %c0_6 = arith.constant 0 : index
    %5 = vector.load %arg1[%c0_5, %c1, %c0_6] : memref<1x456x128xbf16, #tpu.memory_space<vmem>>, vector<1x384x128xbf16>
    %6 = vector.shape_cast %5 : vector<1x384x128xbf16> to vector<384x128xbf16>
    %c1_7 = arith.constant 1 : index
    %c0_8 = arith.constant 0 : index
    %c0_9 = arith.constant 0 : index
    %7 = vector.load %arg3[%c1_7, %c0_8, %c0_9] : memref<9x128x128xbf16, #tpu.memory_space<vmem>>, vector<1x128x128xbf16>
    %8 = vector.shape_cast %7 : vector<1x128x128xbf16> to vector<128x128xbf16>
    %cst_10 = arith.constant dense<0.000000e+00> : vector<384x128xf32>
    %9 = tpu.matmul %6, %8, %cst_10 {dimension_numbers = #tpu.dot_dimension_numbers<[1], [0], [0], [1], [0, 0, 1, 1], [], []>} : vector<384x128xbf16>, vector<128x128xbf16>, vector<384x128xf32> -> vector<384x128xf32>
    %10 = arith.addf %4, %9 : vector<384x128xf32>
    %c0_11 = arith.constant 0 : index
    %c2 = arith.constant 2 : index
    %c0_12 = arith.constant 0 : index
    %11 = vector.load %arg1[%c0_11, %c2, %c0_12] : memref<1x456x128xbf16, #tpu.memory_space<vmem>>, vector<1x384x128xbf16>
    %12 = vector.shape_cast %11 : vector<1x384x128xbf16> to vector<384x128xbf16>
    %c2_13 = arith.constant 2 : index
    %c0_14 = arith.constant 0 : index
    %c0_15 = arith.constant 0 : index
    %13 = vector.load %arg3[%c2_13, %c0_14, %c0_15] : memref<9x128x128xbf16, #tpu.memory_space<vmem>>, vector<1x128x128xbf16>
    %14 = vector.shape_cast %13 : vector<1x128x128xbf16> to vector<128x128xbf16>
    %cst_16 = arith.constant dense<0.000000e+00> : vector<384x128xf32>
    %15 = tpu.matmul %12, %14, %cst_16 {dimension_numbers = #tpu.dot_dimension_numbers<[1], [0], [0], [1], [0, 0, 1, 1], [], []>} : vector<384x128xbf16>, vector<128x128xbf16>, vector<384x128xf32> -> vector<384x128xf32>
    %16 = arith.addf %10, %15 : vector<384x128xf32>
    %c0_17 = arith.constant 0 : index
    %c24 = arith.constant 24 : index
    %c0_18 = arith.constant 0 : index
    %17 = vector.load %arg1[%c0_17, %c24, %c0_18] : memref<1x456x128xbf16, #tpu.memory_space<vmem>>, vector<1x384x128xbf16>
    %18 = vector.shape_cast %17 : vector<1x384x128xbf16> to vector<384x128xbf16>
    %c3 = arith.constant 3 : index
    %c0_19 = arith.constant 0 : index
    %c0_20 = arith.constant 0 : index
    %19 = vector.load %arg3[%c3, %c0_19, %c0_20] : memref<9x128x128xbf16, #tpu.memory_space<vmem>>, vector<1x128x128xbf16>
    %20 = vector.shape_cast %19 : vector<1x128x128xbf16> to vector<128x128xbf16>
    %cst_21 = arith.constant dense<0.000000e+00> : vector<384x128xf32>
    %21 = tpu.matmul %18, %20, %cst_21 {dimension_numbers = #tpu.dot_dimension_numbers<[1], [0], [0], [1], [0, 0, 1, 1], [], []>} : vector<384x128xbf16>, vector<128x128xbf16>, vector<384x128xf32> -> vector<384x128xf32>
    %22 = arith.addf %16, %21 : vector<384x128xf32>
    %c0_22 = arith.constant 0 : index
    %c25 = arith.constant 25 : index
    %c0_23 = arith.constant 0 : index
    %23 = vector.load %arg1[%c0_22, %c25, %c0_23] : memref<1x456x128xbf16, #tpu.memory_space<vmem>>, vector<1x384x128xbf16>
    %24 = vector.shape_cast %23 : vector<1x384x128xbf16> to vector<384x128xbf16>
    %c4 = arith.constant 4 : index
    %c0_24 = arith.constant 0 : index
    %c0_25 = arith.constant 0 : index
    %25 = vector.load %arg3[%c4, %c0_24, %c0_25] : memref<9x128x128xbf16, #tpu.memory_space<vmem>>, vector<1x128x128xbf16>
    %26 = vector.shape_cast %25 : vector<1x128x128xbf16> to vector<128x128xbf16>
    %cst_26 = arith.constant dense<0.000000e+00> : vector<384x128xf32>
    %27 = tpu.matmul %24, %26, %cst_26 {dimension_numbers = #tpu.dot_dimension_numbers<[1], [0], [0], [1], [0, 0, 1, 1], [], []>} : vector<384x128xbf16>, vector<128x128xbf16>, vector<384x128xf32> -> vector<384x128xf32>
    %28 = arith.addf %22, %27 : vector<384x128xf32>
    %c0_27 = arith.constant 0 : index
    %c26 = arith.constant 26 : index
    %c0_28 = arith.constant 0 : index
    %29 = vector.load %arg1[%c0_27, %c26, %c0_28] : memref<1x456x128xbf16, #tpu.memory_space<vmem>>, vector<1x384x128xbf16>
    %30 = vector.shape_cast %29 : vector<1x384x128xbf16> to vector<384x128xbf16>
    %c5 = arith.constant 5 : index
    %c0_29 = arith.constant 0 : index
    %c0_30 = arith.constant 0 : index
    %31 = vector.load %arg3[%c5, %c0_29, %c0_30] : memref<9x128x128xbf16, #tpu.memory_space<vmem>>, vector<1x128x128xbf16>
    %32 = vector.shape_cast %31 : vector<1x128x128xbf16> to vector<128x128xbf16>
    %cst_31 = arith.constant dense<0.000000e+00> : vector<384x128xf32>
    %33 = tpu.matmul %30, %32, %cst_31 {dimension_numbers = #tpu.dot_dimension_numbers<[1], [0], [0], [1], [0, 0, 1, 1], [], []>} : vector<384x128xbf16>, vector<128x128xbf16>, vector<384x128xf32> -> vector<384x128xf32>
    %34 = arith.addf %28, %33 : vector<384x128xf32>
    %c0_32 = arith.constant 0 : index
    %c48 = arith.constant 48 : index
    %c0_33 = arith.constant 0 : index
    %35 = vector.load %arg1[%c0_32, %c48, %c0_33] : memref<1x456x128xbf16, #tpu.memory_space<vmem>>, vector<1x384x128xbf16>
    %36 = vector.shape_cast %35 : vector<1x384x128xbf16> to vector<384x128xbf16>
    %c6 = arith.constant 6 : index
    %c0_34 = arith.constant 0 : index
    %c0_35 = arith.constant 0 : index
    %37 = vector.load %arg3[%c6, %c0_34, %c0_35] : memref<9x128x128xbf16, #tpu.memory_space<vmem>>, vector<1x128x128xbf16>
    %38 = vector.shape_cast %37 : vector<1x128x128xbf16> to vector<128x128xbf16>
    %cst_36 = arith.constant dense<0.000000e+00> : vector<384x128xf32>
    %39 = tpu.matmul %36, %38, %cst_36 {dimension_numbers = #tpu.dot_dimension_numbers<[1], [0], [0], [1], [0, 0, 1, 1], [], []>} : vector<384x128xbf16>, vector<128x128xbf16>, vector<384x128xf32> -> vector<384x128xf32>
    %40 = arith.addf %34, %39 : vector<384x128xf32>
    %c0_37 = arith.constant 0 : index
    %c49 = arith.constant 49 : index
    %c0_38 = arith.constant 0 : index
    %41 = vector.load %arg1[%c0_37, %c49, %c0_38] : memref<1x456x128xbf16, #tpu.memory_space<vmem>>, vector<1x384x128xbf16>
    %42 = vector.shape_cast %41 : vector<1x384x128xbf16> to vector<384x128xbf16>
    %c7 = arith.constant 7 : index
    %c0_39 = arith.constant 0 : index
    %c0_40 = arith.constant 0 : index
    %43 = vector.load %arg3[%c7, %c0_39, %c0_40] : memref<9x128x128xbf16, #tpu.memory_space<vmem>>, vector<1x128x128xbf16>
    %44 = vector.shape_cast %43 : vector<1x128x128xbf16> to vector<128x128xbf16>
    %cst_41 = arith.constant dense<0.000000e+00> : vector<384x128xf32>
    %45 = tpu.matmul %42, %44, %cst_41 {dimension_numbers = #tpu.dot_dimension_numbers<[1], [0], [0], [1], [0, 0, 1, 1], [], []>} : vector<384x128xbf16>, vector<128x128xbf16>, vector<384x128xf32> -> vector<384x128xf32>
    %46 = arith.addf %40, %45 : vector<384x128xf32>
    %c0_42 = arith.constant 0 : index
    %c50 = arith.constant 50 : index
    %c0_43 = arith.constant 0 : index
    %47 = vector.load %arg1[%c0_42, %c50, %c0_43] : memref<1x456x128xbf16, #tpu.memory_space<vmem>>, vector<1x384x128xbf16>
    %48 = vector.shape_cast %47 : vector<1x384x128xbf16> to vector<384x128xbf16>
    %c8 = arith.constant 8 : index
    %c0_44 = arith.constant 0 : index
    %c0_45 = arith.constant 0 : index
    %49 = vector.load %arg3[%c8, %c0_44, %c0_45] : memref<9x128x128xbf16, #tpu.memory_space<vmem>>, vector<1x128x128xbf16>
    %50 = vector.shape_cast %49 : vector<1x128x128xbf16> to vector<128x128xbf16>
    %cst_46 = arith.constant dense<0.000000e+00> : vector<384x128xf32>
    %51 = tpu.matmul %48, %50, %cst_46 {dimension_numbers = #tpu.dot_dimension_numbers<[1], [0], [0], [1], [0, 0, 1, 1], [], []>} : vector<384x128xbf16>, vector<128x128xbf16>, vector<384x128xf32> -> vector<384x128xf32>
    %52 = arith.addf %46, %51 : vector<384x128xf32>
    %c0_47 = arith.constant 0 : index
    %c0_48 = arith.constant 0 : index
    %53 = vector.load %arg4[%c0_47, %c0_48] : memref<1x128xf32, #tpu.memory_space<vmem>>, vector<1x128xf32>
    %54 = vector.broadcast %53 : vector<1x128xf32> to vector<384x128xf32>
    %55 = arith.addf %52, %54 : vector<384x128xf32>
    %c0_49 = arith.constant 0 : index
    %c0_50 = arith.constant 0 : index
    %56 = vector.load %arg5[%c0_49, %c0_50] : memref<1x128xf32, #tpu.memory_space<vmem>>, vector<1x128xf32>
    %c0_51 = arith.constant 0 : index
    %c0_52 = arith.constant 0 : index
    %57 = vector.load %arg6[%c0_51, %c0_52] : memref<1x128xf32, #tpu.memory_space<vmem>>, vector<1x128xf32>
    %cst_53 = arith.constant dense<0.000000e+00> : vector<384xf32>
    %58 = vector.multi_reduction <add>, %55, %cst_53 [1] : vector<384x128xf32> to vector<384xf32>
    %59 = vector.shape_cast %58 : vector<384xf32> to vector<384x1xf32>
    %cst_54 = arith.constant 1.250000e-01 : f32
    %60 = vector.broadcast %cst_54 : f32 to vector<384x1xf32>
    %61 = arith.mulf %59, %60 : vector<384x1xf32>
    %62 = arith.mulf %55, %55 : vector<384x128xf32>
    %cst_55 = arith.constant dense<0.000000e+00> : vector<384xf32>
    %63 = vector.multi_reduction <add>, %62, %cst_55 [1] : vector<384x128xf32> to vector<384xf32>
    %64 = vector.shape_cast %63 : vector<384xf32> to vector<384x1xf32>
    %cst_56 = arith.constant 1.250000e-01 : f32
    %65 = vector.broadcast %cst_56 : f32 to vector<384x1xf32>
    %66 = arith.mulf %64, %65 : vector<384x1xf32>
    %67 = arith.mulf %61, %61 : vector<384x1xf32>
    %68 = arith.subf %66, %67 : vector<384x1xf32>
    %69 = vector.broadcast %61 : vector<384x1xf32> to vector<384x128xf32>
    %70 = arith.subf %55, %69 : vector<384x128xf32>
    %cst_57 = arith.constant 9.99999974E-6 : f32
    %71 = vector.broadcast %cst_57 : f32 to vector<384x1xf32>
    %72 = arith.addf %68, %71 : vector<384x1xf32>
    %73 = math.rsqrt %72 : vector<384x1xf32>
    %74 = vector.broadcast %73 : vector<384x1xf32> to vector<384x128xf32>
    %75 = arith.mulf %70, %74 : vector<384x128xf32>
    %76 = vector.broadcast %56 : vector<1x128xf32> to vector<384x128xf32>
    %77 = arith.mulf %75, %76 : vector<384x128xf32>
    %78 = vector.broadcast %57 : vector<1x128xf32> to vector<384x128xf32>
    %79 = arith.addf %77, %78 : vector<384x128xf32>
    %cst_58 = arith.constant 5.000000e-01 : f32
    %80 = vector.broadcast %cst_58 : f32 to vector<384x128xf32>
    %81 = arith.mulf %80, %79 : vector<384x128xf32>
    %cst_59 = arith.constant 0.707106769 : f32
    %82 = vector.broadcast %cst_59 : f32 to vector<384x128xf32>
    %83 = arith.mulf %79, %82 : vector<384x128xf32>
    %84 = math.erf %83 : vector<384x128xf32>
    %cst_60 = arith.constant 1.000000e+00 : f32
    %85 = vector.broadcast %cst_60 : f32 to vector<384x128xf32>
    %86 = arith.addf %85, %84 : vector<384x128xf32>
    %87 = arith.mulf %81, %86 : vector<384x128xf32>
    %c0_61 = arith.constant 0 : index
    %c0_62 = arith.constant 0 : index
    %88 = vector.load %arg2[%c0_61, %c0_62] : memref<24x1xf32, #tpu.memory_space<vmem>>, vector<24x1xf32>
    %89 = tpu.concatenate %88, %88, %88, %88, %88, %88, %88, %88, %88, %88, %88, %88, %88, %88, %88, %88 in 0 : vector<24x1xf32>, vector<24x1xf32>, vector<24x1xf32>, vector<24x1xf32>, vector<24x1xf32>, vector<24x1xf32>, vector<24x1xf32>, vector<24x1xf32>, vector<24x1xf32>, vector<24x1xf32>, vector<24x1xf32>, vector<24x1xf32>, vector<24x1xf32>, vector<24x1xf32>, vector<24x1xf32>, vector<24x1xf32> -> vector<384x1xf32>
    %90 = vector.broadcast %89 : vector<384x1xf32> to vector<384x128xf32>
    %91 = arith.mulf %87, %90 : vector<384x128xf32>
    %cst_63 = arith.constant 0.000000e+00 : bf16
    %92 = vector.broadcast %cst_63 : bf16 to vector<32x128xbf16>
    %c0_64 = arith.constant 0 : index
    %c0_65 = arith.constant 0 : index
    %93 = vector.load %arg14[%c0_64, %c0_65] : memref<448x128xbf16, #tpu.memory_space<vmem>>, vector<32x128xbf16>
    tpu.vector_store %arg14[%c0_64, %c0_65], %92 {strides = array<i32>} : memref<448x128xbf16, #tpu.memory_space<vmem>>, vector<32x128xbf16>,
    %cst_66 = arith.constant 0.000000e+00 : bf16
    %94 = vector.broadcast %cst_66 : bf16 to vector<32x128xbf16>
    %c416 = arith.constant 416 : index
    %c0_67 = arith.constant 0 : index
    %95 = vector.load %arg14[%c416, %c0_67] : memref<448x128xbf16, #tpu.memory_space<vmem>>, vector<32x128xbf16>
    tpu.vector_store %arg14[%c416, %c0_67], %94 {strides = array<i32>} : memref<448x128xbf16, #tpu.memory_space<vmem>>, vector<32x128xbf16>,
    %96 = arith.truncf %91 : vector<384x128xf32> to vector<384x128xbf16>
    %c32 = arith.constant 32 : index
    %c0_68 = arith.constant 0 : index
    %97 = vector.load %arg14[%c32, %c0_68] : memref<448x128xbf16, #tpu.memory_space<vmem>>, vector<384x128xbf16>
    tpu.vector_store %arg14[%c32, %c0_68], %96 {strides = array<i32>} : memref<448x128xbf16, #tpu.memory_space<vmem>>, vector<384x128xbf16>,
    %c7_69 = arith.constant 7 : index
    %c0_70 = arith.constant 0 : index
    %98 = vector.load %arg14[%c7_69, %c0_70] : memref<448x128xbf16, #tpu.memory_space<vmem>>, vector<384x128xbf16>
    %c0_71 = arith.constant 0 : index
    %c0_72 = arith.constant 0 : index
    %c0_73 = arith.constant 0 : index
    %99 = vector.load %arg7[%c0_71, %c0_72, %c0_73] : memref<9x128x128xbf16, #tpu.memory_space<vmem>>, vector<1x128x128xbf16>
    %100 = vector.shape_cast %99 : vector<1x128x128xbf16> to vector<128x128xbf16>
    %cst_74 = arith.constant dense<0.000000e+00> : vector<384x128xf32>
    %101 = tpu.matmul %98, %100, %cst_74 {dimension_numbers = #tpu.dot_dimension_numbers<[1], [0], [0], [1], [0, 0, 1, 1], [], []>} : vector<384x128xbf16>, vector<128x128xbf16>, vector<384x128xf32> -> vector<384x128xf32>
    %c8_75 = arith.constant 8 : index
    %c0_76 = arith.constant 0 : index
    %102 = vector.load %arg14[%c8_75, %c0_76] : memref<448x128xbf16, #tpu.memory_space<vmem>>, vector<384x128xbf16>
    %c1_77 = arith.constant 1 : index
    %c0_78 = arith.constant 0 : index
    %c0_79 = arith.constant 0 : index
    %103 = vector.load %arg7[%c1_77, %c0_78, %c0_79] : memref<9x128x128xbf16, #tpu.memory_space<vmem>>, vector<1x128x128xbf16>
    %104 = vector.shape_cast %103 : vector<1x128x128xbf16> to vector<128x128xbf16>
    %cst_80 = arith.constant dense<0.000000e+00> : vector<384x128xf32>
    %105 = tpu.matmul %102, %104, %cst_80 {dimension_numbers = #tpu.dot_dimension_numbers<[1], [0], [0], [1], [0, 0, 1, 1], [], []>} : vector<384x128xbf16>, vector<128x128xbf16>, vector<384x128xf32> -> vector<384x128xf32>
    %106 = arith.addf %101, %105 : vector<384x128xf32>
    %c9 = arith.constant 9 : index
    %c0_81 = arith.constant 0 : index
    %107 = vector.load %arg14[%c9, %c0_81] : memref<448x128xbf16, #tpu.memory_space<vmem>>, vector<384x128xbf16>
    %c2_82 = arith.constant 2 : index
    %c0_83 = arith.constant 0 : index
    %c0_84 = arith.constant 0 : index
    %108 = vector.load %arg7[%c2_82, %c0_83, %c0_84] : memref<9x128x128xbf16, #tpu.memory_space<vmem>>, vector<1x128x128xbf16>
    %109 = vector.shape_cast %108 : vector<1x128x128xbf16> to vector<128x128xbf16>
    %cst_85 = arith.constant dense<0.000000e+00> : vector<384x128xf32>
    %110 = tpu.matmul %107, %109, %cst_85 {dimension_numbers = #tpu.dot_dimension_numbers<[1], [0], [0], [1], [0, 0, 1, 1], [], []>} : vector<384x128xbf16>, vector<128x128xbf16>, vector<384x128xf32> -> vector<384x128xf32>
    %111 = arith.addf %106, %110 : vector<384x128xf32>
    %c31 = arith.constant 31 : index
    %c0_86 = arith.constant 0 : index
    %112 = vector.load %arg14[%c31, %c0_86] : memref<448x128xbf16, #tpu.memory_space<vmem>>, vector<384x128xbf16>
    %c3_87 = arith.constant 3 : index
    %c0_88 = arith.constant 0 : index
    %c0_89 = arith.constant 0 : index
    %113 = vector.load %arg7[%c3_87, %c0_88, %c0_89] : memref<9x128x128xbf16, #tpu.memory_space<vmem>>, vector<1x128x128xbf16>
    %114 = vector.shape_cast %113 : vector<1x128x128xbf16> to vector<128x128xbf16>
    %cst_90 = arith.constant dense<0.000000e+00> : vector<384x128xf32>
    %115 = tpu.matmul %112, %114, %cst_90 {dimension_numbers = #tpu.dot_dimension_numbers<[1], [0], [0], [1], [0, 0, 1, 1], [], []>} : vector<384x128xbf16>, vector<128x128xbf16>, vector<384x128xf32> -> vector<384x128xf32>
    %116 = arith.addf %111, %115 : vector<384x128xf32>
    %c32_91 = arith.constant 32 : index
    %c0_92 = arith.constant 0 : index
    %117 = vector.load %arg14[%c32_91, %c0_92] : memref<448x128xbf16, #tpu.memory_space<vmem>>, vector<384x128xbf16>
    %c4_93 = arith.constant 4 : index
    %c0_94 = arith.constant 0 : index
    %c0_95 = arith.constant 0 : index
    %118 = vector.load %arg7[%c4_93, %c0_94, %c0_95] : memref<9x128x128xbf16, #tpu.memory_space<vmem>>, vector<1x128x128xbf16>
    %119 = vector.shape_cast %118 : vector<1x128x128xbf16> to vector<128x128xbf16>
    %cst_96 = arith.constant dense<0.000000e+00> : vector<384x128xf32>
    %120 = tpu.matmul %117, %119, %cst_96 {dimension_numbers = #tpu.dot_dimension_numbers<[1], [0], [0], [1], [0, 0, 1, 1], [], []>} : vector<384x128xbf16>, vector<128x128xbf16>, vector<384x128xf32> -> vector<384x128xf32>
    %121 = arith.addf %116, %120 : vector<384x128xf32>
    %c33 = arith.constant 33 : index
    %c0_97 = arith.constant 0 : index
    %122 = vector.load %arg14[%c33, %c0_97] : memref<448x128xbf16, #tpu.memory_space<vmem>>, vector<384x128xbf16>
    %c5_98 = arith.constant 5 : index
    %c0_99 = arith.constant 0 : index
    %c0_100 = arith.constant 0 : index
    %123 = vector.load %arg7[%c5_98, %c0_99, %c0_100] : memref<9x128x128xbf16, #tpu.memory_space<vmem>>, vector<1x128x128xbf16>
    %124 = vector.shape_cast %123 : vector<1x128x128xbf16> to vector<128x128xbf16>
    %cst_101 = arith.constant dense<0.000000e+00> : vector<384x128xf32>
    %125 = tpu.matmul %122, %124, %cst_101 {dimension_numbers = #tpu.dot_dimension_numbers<[1], [0], [0], [1], [0, 0, 1, 1], [], []>} : vector<384x128xbf16>, vector<128x128xbf16>, vector<384x128xf32> -> vector<384x128xf32>
    %126 = arith.addf %121, %125 : vector<384x128xf32>
    %c55 = arith.constant 55 : index
    %c0_102 = arith.constant 0 : index
    %127 = vector.load %arg14[%c55, %c0_102] : memref<448x128xbf16, #tpu.memory_space<vmem>>, vector<384x128xbf16>
    %c6_103 = arith.constant 6 : index
    %c0_104 = arith.constant 0 : index
    %c0_105 = arith.constant 0 : index
    %128 = vector.load %arg7[%c6_103, %c0_104, %c0_105] : memref<9x128x128xbf16, #tpu.memory_space<vmem>>, vector<1x128x128xbf16>
    %129 = vector.shape_cast %128 : vector<1x128x128xbf16> to vector<128x128xbf16>
    %cst_106 = arith.constant dense<0.000000e+00> : vector<384x128xf32>
    %130 = tpu.matmul %127, %129, %cst_106 {dimension_numbers = #tpu.dot_dimension_numbers<[1], [0], [0], [1], [0, 0, 1, 1], [], []>} : vector<384x128xbf16>, vector<128x128xbf16>, vector<384x128xf32> -> vector<384x128xf32>
    %131 = arith.addf %126, %130 : vector<384x128xf32>
    %c56 = arith.constant 56 : index
    %c0_107 = arith.constant 0 : index
    %132 = vector.load %arg14[%c56, %c0_107] : memref<448x128xbf16, #tpu.memory_space<vmem>>, vector<384x128xbf16>
    %c7_108 = arith.constant 7 : index
    %c0_109 = arith.constant 0 : index
    %c0_110 = arith.constant 0 : index
    %133 = vector.load %arg7[%c7_108, %c0_109, %c0_110] : memref<9x128x128xbf16, #tpu.memory_space<vmem>>, vector<1x128x128xbf16>
    %134 = vector.shape_cast %133 : vector<1x128x128xbf16> to vector<128x128xbf16>
    %cst_111 = arith.constant dense<0.000000e+00> : vector<384x128xf32>
    %135 = tpu.matmul %132, %134, %cst_111 {dimension_numbers = #tpu.dot_dimension_numbers<[1], [0], [0], [1], [0, 0, 1, 1], [], []>} : vector<384x128xbf16>, vector<128x128xbf16>, vector<384x128xf32> -> vector<384x128xf32>
    %136 = arith.addf %131, %135 : vector<384x128xf32>
    %c57 = arith.constant 57 : index
    %c0_112 = arith.constant 0 : index
    %137 = vector.load %arg14[%c57, %c0_112] : memref<448x128xbf16, #tpu.memory_space<vmem>>, vector<384x128xbf16>
    %c8_113 = arith.constant 8 : index
    %c0_114 = arith.constant 0 : index
    %c0_115 = arith.constant 0 : index
    %138 = vector.load %arg7[%c8_113, %c0_114, %c0_115] : memref<9x128x128xbf16, #tpu.memory_space<vmem>>, vector<1x128x128xbf16>
    %139 = vector.shape_cast %138 : vector<1x128x128xbf16> to vector<128x128xbf16>
    %cst_116 = arith.constant dense<0.000000e+00> : vector<384x128xf32>
    %140 = tpu.matmul %137, %139, %cst_116 {dimension_numbers = #tpu.dot_dimension_numbers<[1], [0], [0], [1], [0, 0, 1, 1], [], []>} : vector<384x128xbf16>, vector<128x128xbf16>, vector<384x128xf32> -> vector<384x128xf32>
    %141 = arith.addf %136, %140 : vector<384x128xf32>
    %c0_117 = arith.constant 0 : index
    %c0_118 = arith.constant 0 : index
    %142 = vector.load %arg8[%c0_117, %c0_118] : memref<1x128xf32, #tpu.memory_space<vmem>>, vector<1x128xf32>
    %143 = vector.broadcast %142 : vector<1x128xf32> to vector<384x128xf32>
    %144 = arith.addf %141, %143 : vector<384x128xf32>
    %c0_119 = arith.constant 0 : index
    %c0_120 = arith.constant 0 : index
    %145 = vector.load %arg9[%c0_119, %c0_120] : memref<1x128xf32, #tpu.memory_space<vmem>>, vector<1x128xf32>
    %c0_121 = arith.constant 0 : index
    %c0_122 = arith.constant 0 : index
    %146 = vector.load %arg10[%c0_121, %c0_122] : memref<1x128xf32, #tpu.memory_space<vmem>>, vector<1x128xf32>
    %cst_123 = arith.constant dense<0.000000e+00> : vector<384xf32>
    %147 = vector.multi_reduction <add>, %144, %cst_123 [1] : vector<384x128xf32> to vector<384xf32>
    %148 = vector.shape_cast %147 : vector<384xf32> to vector<384x1xf32>
    %cst_124 = arith.constant 1.250000e-01 : f32
    %149 = vector.broadcast %cst_124 : f32 to vector<384x1xf32>
    %150 = arith.mulf %148, %149 : vector<384x1xf32>
    %151 = arith.mulf %144, %144 : vector<384x128xf32>
    %cst_125 = arith.constant dense<0.000000e+00> : vector<384xf32>
    %152 = vector.multi_reduction <add>, %151, %cst_125 [1] : vector<384x128xf32> to vector<384xf32>
    %153 = vector.shape_cast %152 : vector<384xf32> to vector<384x1xf32>
    %cst_126 = arith.constant 1.250000e-01 : f32
    %154 = vector.broadcast %cst_126 : f32 to vector<384x1xf32>
    %155 = arith.mulf %153, %154 : vector<384x1xf32>
    %156 = arith.mulf %150, %150 : vector<384x1xf32>
    %157 = arith.subf %155, %156 : vector<384x1xf32>
    %158 = vector.broadcast %150 : vector<384x1xf32> to vector<384x128xf32>
    %159 = arith.subf %144, %158 : vector<384x128xf32>
    %cst_127 = arith.constant 9.99999974E-6 : f32
    %160 = vector.broadcast %cst_127 : f32 to vector<384x1xf32>
    %161 = arith.addf %157, %160 : vector<384x1xf32>
    %162 = math.rsqrt %161 : vector<384x1xf32>
    %163 = vector.broadcast %162 : vector<384x1xf32> to vector<384x128xf32>
    %164 = arith.mulf %159, %163 : vector<384x128xf32>
    %165 = vector.broadcast %145 : vector<1x128xf32> to vector<384x128xf32>
    %166 = arith.mulf %164, %165 : vector<384x128xf32>
    %167 = vector.broadcast %146 : vector<1x128xf32> to vector<384x128xf32>
    %168 = arith.addf %166, %167 : vector<384x128xf32>
    %c0_128 = arith.constant 0 : index
    %c25_129 = arith.constant 25 : index
    %c0_130 = arith.constant 0 : index
    %169 = vector.load %arg1[%c0_128, %c25_129, %c0_130] : memref<1x456x128xbf16, #tpu.memory_space<vmem>>, vector<1x384x128xbf16>
    %170 = vector.shape_cast %169 : vector<1x384x128xbf16> to vector<384x128xbf16>
    %c0_131 = arith.constant 0 : index
    %c0_132 = arith.constant 0 : index
    %171 = vector.load %arg11[%c0_131, %c0_132] : memref<128x128xbf16, #tpu.memory_space<vmem>>, vector<128x128xbf16>
    %cst_133 = arith.constant dense<0.000000e+00> : vector<384x128xf32>
    %172 = tpu.matmul %170, %171, %cst_133 {dimension_numbers = #tpu.dot_dimension_numbers<[1], [0], [0], [1], [0, 0, 1, 1], [], []>} : vector<384x128xbf16>, vector<128x128xbf16>, vector<384x128xf32> -> vector<384x128xf32>
    %c0_134 = arith.constant 0 : index
    %c0_135 = arith.constant 0 : index
    %173 = vector.load %arg12[%c0_134, %c0_135] : memref<1x128xf32, #tpu.memory_space<vmem>>, vector<1x128xf32>
    %174 = vector.broadcast %173 : vector<1x128xf32> to vector<384x128xf32>
    %175 = arith.addf %172, %174 : vector<384x128xf32>
    %176 = arith.addf %168, %175 : vector<384x128xf32>
    %177 = vector.shape_cast %176 : vector<384x128xf32> to vector<16x24x128xf32>
    %178 = vector.extract_strided_slice %177 {offsets = [0, 0, 0], sizes = [16, 16, 128], strides = [1, 1, 1]} : vector<16x24x128xf32> to vector<16x16x128xf32>
    %179 = vector.shape_cast %178 : vector<16x16x128xf32> to vector<256x128xf32>
    %cst_136 = arith.constant 5.000000e-01 : f32
    %180 = vector.broadcast %cst_136 : f32 to vector<256x128xf32>
    %181 = arith.mulf %180, %179 : vector<256x128xf32>
    %cst_137 = arith.constant 0.707106769 : f32
    %182 = vector.broadcast %cst_137 : f32 to vector<256x128xf32>
    %183 = arith.mulf %179, %182 : vector<256x128xf32>
    %184 = math.erf %183 : vector<256x128xf32>
    %cst_138 = arith.constant 1.000000e+00 : f32
    %185 = vector.broadcast %cst_138 : f32 to vector<256x128xf32>
    %186 = arith.addf %185, %184 : vector<256x128xf32>
    %187 = arith.mulf %181, %186 : vector<256x128xf32>
    %c0_139 = arith.constant 0 : index
    %c0_140 = arith.constant 0 : index
    %c0_141 = arith.constant 0 : index
    %188 = vector.load %arg13[%c0_139, %c0_140, %c0_141] : memref<1x256x128xf32, #tpu.memory_space<vmem>>, vector<1x256x128xf32>
    %189 = vector.shape_cast %188 : vector<1x256x128xf32> to vector<256x128xf32>
    %190 = vector.shape_cast %187 : vector<256x128xf32> to vector<1x256x128xf32>
    tpu.vector_store %arg13[%c0_139, %c0_140, %c0_141], %190 {strides = array<i32>} : memref<1x256x128xf32, #tpu.memory_space<vmem>>, vector<1x256x128xf32>,
    return
  }
  func.func @transform_0(%arg0: i32) -> (i32, i32, i32) {
    %c0_i32 = arith.constant 0 : i32
    %c0_i32_0 = arith.constant 0 : i32
    %c0_i32_1 = arith.constant 0 : i32
    return %arg0, %c0_i32, %c0_i32_0 : i32, i32, i32
  }
  func.func @transform_1(%arg0: i32) -> (i32, i32) {
    %c0_i32 = arith.constant 0 : i32
    %c0_i32_0 = arith.constant 0 : i32
    %c0_i32_1 = arith.constant 0 : i32
    return %c0_i32, %c0_i32_0 : i32, i32
  }
  func.func @transform_2(%arg0: i32) -> (i32, i32, i32) {
    %c0_i32 = arith.constant 0 : i32
    %c0_i32_0 = arith.constant 0 : i32
    %c0_i32_1 = arith.constant 0 : i32
    %c0_i32_2 = arith.constant 0 : i32
    return %c0_i32, %c0_i32_0, %c0_i32_1 : i32, i32, i32
  }
  func.func @transform_3(%arg0: i32) -> (i32, i32) {
    %c0_i32 = arith.constant 0 : i32
    %c0_i32_0 = arith.constant 0 : i32
    %c0_i32_1 = arith.constant 0 : i32
    return %c0_i32, %c0_i32_0 : i32, i32
  }
  func.func @transform_4(%arg0: i32) -> (i32, i32) {
    %c0_i32 = arith.constant 0 : i32
    %c0_i32_0 = arith.constant 0 : i32
    %c0_i32_1 = arith.constant 0 : i32
    return %c0_i32, %c0_i32_0 : i32, i32
  }
  func.func @transform_5(%arg0: i32) -> (i32, i32) {
    %c0_i32 = arith.constant 0 : i32
    %c0_i32_0 = arith.constant 0 : i32
    %c0_i32_1 = arith.constant 0 : i32
    return %c0_i32, %c0_i32_0 : i32, i32
  }
  func.func @transform_6(%arg0: i32) -> (i32, i32, i32) {
    %c0_i32 = arith.constant 0 : i32
    %c0_i32_0 = arith.constant 0 : i32
    %c0_i32_1 = arith.constant 0 : i32
    %c0_i32_2 = arith.constant 0 : i32
    return %c0_i32, %c0_i32_0, %c0_i32_1 : i32, i32, i32
  }
  func.func @transform_7(%arg0: i32) -> (i32, i32) {
    %c0_i32 = arith.constant 0 : i32
    %c0_i32_0 = arith.constant 0 : i32
    %c0_i32_1 = arith.constant 0 : i32
    return %c0_i32, %c0_i32_0 : i32, i32
  }
  func.func @transform_8(%arg0: i32) -> (i32, i32) {
    %c0_i32 = arith.constant 0 : i32
    %c0_i32_0 = arith.constant 0 : i32
    %c0_i32_1 = arith.constant 0 : i32
    return %c0_i32, %c0_i32_0 : i32, i32
  }
  func.func @transform_9(%arg0: i32) -> (i32, i32) {
    %c0_i32 = arith.constant 0 : i32
    %c0_i32_0 = arith.constant 0 : i32
    %c0_i32_1 = arith.constant 0 : i32
    return %c0_i32, %c0_i32_0 : i32, i32
  }
  func.func @transform_10(%arg0: i32) -> (i32, i32) {
    %c0_i32 = arith.constant 0 : i32
    %c0_i32_0 = arith.constant 0 : i32
    %c0_i32_1 = arith.constant 0 : i32
    return %c0_i32, %c0_i32_0 : i32, i32
  }
  func.func @transform_11(%arg0: i32) -> (i32, i32) {
    %c0_i32 = arith.constant 0 : i32
    %c0_i32_0 = arith.constant 0 : i32
    %c0_i32_1 = arith.constant 0 : i32
    return %c0_i32, %c0_i32_0 : i32, i32
  }
  func.func @transform_12(%arg0: i32) -> (i32, i32, i32) {
    %c0_i32 = arith.constant 0 : i32
    %c0_i32_0 = arith.constant 0 : i32
    %c0_i32_1 = arith.constant 0 : i32
    return %arg0, %c0_i32, %c0_i32_0 : i32, i32, i32
  }
}

</mosaic_0001>

<llo_original>
// kernel: _lambda_.1
$region0: #{_lambda_.1}
  #allocation0 [shape = 'u32[]', space=smem, size = 0x4, offset = 0x4, fixed_abs, tag = 'smem constant byte address 0x4 - core index']
  #allocation1 [shape = 'u32[144,128]{1,0:T(1,128)}', space=vmem, size = 0x12000, scoped, tag = 'internal scratch']
  #allocation2 [shape = 'bf16[448,128]{1,0:T(16,128)(2,1)}', space=vmem, size = 0x1c000, scoped, tag = 'scratch operand']
  %s0 = inlined_call_operand.vmem [shape: bf16[2,456,128], index: 0, kind: input, shape index: {}]
  %s1 = inlined_call_operand.vmem [shape: f32[24,1], index: 1, kind: input, shape index: {}]
  %s2 = inlined_call_operand.vmem [shape: bf16[9,128,128], index: 2, kind: input, shape index: {}]
  %s3 = inlined_call_operand.vmem [shape: f32[1,128], index: 3, kind: input, shape index: {}]
  %s4 = inlined_call_operand.vmem [shape: f32[1,128], index: 4, kind: input, shape index: {}]
  %s5 = inlined_call_operand.vmem [shape: f32[1,128], index: 5, kind: input, shape index: {}]
  %s6 = inlined_call_operand.vmem [shape: bf16[9,128,128], index: 6, kind: input, shape index: {}]
  %s7 = inlined_call_operand.vmem [shape: f32[1,128], index: 7, kind: input, shape index: {}]
  %s8 = inlined_call_operand.vmem [shape: f32[1,128], index: 8, kind: input, shape index: {}]
  %s9 = inlined_call_operand.vmem [shape: f32[1,128], index: 9, kind: input, shape index: {}]
  %s10 = inlined_call_operand.vmem [shape: bf16[128,128], index: 10, kind: input, shape index: {}]
  %s11 = inlined_call_operand.vmem [shape: f32[1,128], index: 11, kind: input, shape index: {}]
  %s12 = inlined_call_operand.vmem [shape: f32[2,256,128], index: 12, kind: output, shape index: {}]
  %s13 = sld [smem:[#allocation0]]
  $region81: #{_lambda_.1} parent=0
    _
  %s15 = ssub.s32 1, %s13
  %s16 = scalar_select 0, %s15, %s13
  loop: start=0, step=1, limit=4
  $region2: #{_lambda_.1} parent=0 // loop_pre_header
    _
  $region3: #{_lambda_.1} parent=0 // loop_header
    %s18 = sphi 0, %s22
    %p19 = scmp.ge.s32.totalorder %s18, 4
    %s28 = sphi 0, %s30
    %s31 = sphi 0, %s28
    %s32 = sphi 0, %s31
    %s48 = sphi 0, %s32
    %s52 = sphi 0, %s52
    %s54 = sphi 0, %s52
    %s55 = sphi 0, %s54
    %s69 = sphi 0, %s55
    %s73 = sphi 0, %s73
    %s75 = sphi 0, %s73
    %s76 = sphi 0, %s75
    %s90 = sphi 0, %s76
    %s94 = sphi 0, %s94
    %s96 = sphi 0, %s94
    %s97 = sphi 0, %s96
    %s111 = sphi 0, %s97
    %s115 = sphi 0, %s115
    %s117 = sphi 0, %s115
    %s118 = sphi 0, %s117
    %s132 = sphi 0, %s118
    %s136 = sphi 0, %s136
    %s138 = sphi 0, %s136
    %s139 = sphi 0, %s138
    %s153 = sphi 0, %s139
    %s157 = sphi 0, %s157
    %s159 = sphi 0, %s157
    %s160 = sphi 0, %s159
    %s174 = sphi 0, %s160
    %s178 = sphi 0, %s178
    %s180 = sphi 0, %s178
    %s181 = sphi 0, %s180
    %s195 = sphi 0, %s181
    %s199 = sphi 0, %s199
    %s201 = sphi 0, %s199
    %s202 = sphi 0, %s201
    %s216 = sphi 0, %s202
    %s220 = sphi 0, %s220
    %s222 = sphi 0, %s220
    %s223 = sphi 0, %s222
    %s237 = sphi 0, %s223
    %s241 = sphi 0, %s241
    %s243 = sphi 0, %s241
    %s244 = sphi 0, %s243
    %s258 = sphi 0, %s244
    %s262 = sphi 0, %s262
    %s264 = sphi 0, %s262
    %s265 = sphi 0, %s264
    %s279 = sphi 0, %s265
    %s285 = sphi 0, %s287
    %s288 = sphi 0, %s285
    %s289 = sphi 0, %s288
    %s305 = sphi 0, %s289
  $region4: #{_lambda_.1} parent=0 // loop_header_branch
    %21 = sbr.rel (%p19) target = $region8
  $region5: #{_lambda_.1} parent=0 // loop_body
    %s23 = ssub.s32 %s18, 1
    %s24 = ssub.s32 %s18, 2
    %s25 = sadd.s32 %s18, 1
    %s26 = ssub.s32 %s18, %s25
    %p27 = scmp.eq.s32.totalorder %s26, 0
    %s29 = sadd.s32 %s28, 1
    %s30 = scalar_select %p27, %s28, %s29
    %p33 = pneg %p27
    %p34 = scmp.eq.s32.totalorder %s18, 1
    %p35 = por %p33, %p34
    %p36 = scmp.ne.s32.totalorder %s28, %s31
    %p37 = scmp.eq.s32.totalorder %s18, 0
    %p38 = por %p36, %p37
    %p39 = scmp.ne.s32.totalorder %s28, %s31
    %p40 = scmp.eq.s32.totalorder %s23, 1
    %p41 = por %p39, %p40
    %p42 = scmp.ne.s32.totalorder %s31, %s32
    %p43 = scmp.eq.s32.totalorder %s23, 0
    %p44 = por %p42, %p43
    %p45 = scmp.ne.s32.totalorder %s31, %s32
    %p46 = scmp.eq.s32.totalorder %s24, 1
    %p47 = por %p45, %p46
    %p49 = scmp.ne.s32.totalorder %s32, %s48
    %p50 = scmp.eq.s32.totalorder %s24, 0
    %p51 = por %p49, %p50
    %s53 = sadd.s32 %s52, 1
    %p56 = scmp.eq.s32.totalorder %s18, 1
    %p57 = scmp.ne.s32.totalorder %s52, %s54
    %p58 = scmp.eq.s32.totalorder %s18, 0
    %p59 = por %p57, %p58
    %p60 = scmp.ne.s32.totalorder %s52, %s54
    %p61 = scmp.eq.s32.totalorder %s23, 1
    %p62 = por %p60, %p61
    %p63 = scmp.ne.s32.totalorder %s54, %s55
    %p64 = scmp.eq.s32.totalorder %s23, 0
    %p65 = por %p63, %p64
    %p66 = scmp.ne.s32.totalorder %s54, %s55
    %p67 = scmp.eq.s32.totalorder %s24, 1
    %p68 = por %p66, %p67
    %p70 = scmp.ne.s32.totalorder %s55, %s69
    %p71 = scmp.eq.s32.totalorder %s24, 0
    %p72 = por %p70, %p71
    %s74 = sadd.s32 %s73, 1
    %p77 = scmp.eq.s32.totalorder %s18, 1
    %p78 = scmp.ne.s32.totalorder %s73, %s75
    %p79 = scmp.eq.s32.totalorder %s18, 0
    %p80 = por %p78, %p79
    %p81 = scmp.ne.s32.totalorder %s73, %s75
    %p82 = scmp.eq.s32.totalorder %s23, 1
    %p83 = por %p81, %p82
    %p84 = scmp.ne.s32.totalorder %s75, %s76
    %p85 = scmp.eq.s32.totalorder %s23, 0
    %p86 = por %p84, %p85
    %p87 = scmp.ne.s32.totalorder %s75, %s76
    %p88 = scmp.eq.s32.totalorder %s24, 1
    %p89 = por %p87, %p88
    %p91 = scmp.ne.s32.totalorder %s76, %s90
    %p92 = scmp.eq.s32.totalorder %s24, 0
    %p93 = por %p91, %p92
    %s95 = sadd.s32 %s94, 1
    %p98 = scmp.eq.s32.totalorder %s18, 1
    %p99 = scmp.ne.s32.totalorder %s94, %s96
    %p100 = scmp.eq.s32.totalorder %s18, 0
    %p101 = por %p99, %p100
    %p102 = scmp.ne.s32.totalorder %s94, %s96
    %p103 = scmp.eq.s32.totalorder %s23, 1
    %p104 = por %p102, %p103
    %p105 = scmp.ne.s32.totalorder %s96, %s97
    %p106 = scmp.eq.s32.totalorder %s23, 0
    %p107 = por %p105, %p106
    %p108 = scmp.ne.s32.totalorder %s96, %s97
    %p109 = scmp.eq.s32.totalorder %s24, 1
    %p110 = por %p108, %p109
    %p112 = scmp.ne.s32.totalorder %s97, %s111
    %p113 = scmp.eq.s32.totalorder %s24, 0
    %p114 = por %p112, %p113
    %s116 = sadd.s32 %s115, 1
    %p119 = scmp.eq.s32.totalorder %s18, 1
    %p120 = scmp.ne.s32.totalorder %s115, %s117
    %p121 = scmp.eq.s32.totalorder %s18, 0
    %p122 = por %p120, %p121
    %p123 = scmp.ne.s32.totalorder %s115, %s117
    %p124 = scmp.eq.s32.totalorder %s23, 1
    %p125 = por %p123, %p124
    %p126 = scmp.ne.s32.totalorder %s117, %s118
    %p127 = scmp.eq.s32.totalorder %s23, 0
    %p128 = por %p126, %p127
    %p129 = scmp.ne.s32.totalorder %s117, %s118
    %p130 = scmp.eq.s32.totalorder %s24, 1
    %p131 = por %p129, %p130
    %p133 = scmp.ne.s32.totalorder %s118, %s132
    %p134 = scmp.eq.s32.totalorder %s24, 0
    %p135 = por %p133, %p134
    %s137 = sadd.s32 %s136, 1
    %p140 = scmp.eq.s32.totalorder %s18, 1
    %p141 = scmp.ne.s32.totalorder %s136, %s138
    %p142 = scmp.eq.s32.totalorder %s18, 0
    %p143 = por %p141, %p142
    %p144 = scmp.ne.s32.totalorder %s136, %s138
    %p145 = scmp.eq.s32.totalorder %s23, 1
    %p146 = por %p144, %p145
    %p147 = scmp.ne.s32.totalorder %s138, %s139
    %p148 = scmp.eq.s32.totalorder %s23, 0
    %p149 = por %p147, %p148
    %p150 = scmp.ne.s32.totalorder %s138, %s139
    %p151 = scmp.eq.s32.totalorder %s24, 1
    %p152 = por %p150, %p151
    %p154 = scmp.ne.s32.totalorder %s139, %s153
    %p155 = scmp.eq.s32.totalorder %s24, 0
    %p156 = por %p154, %p155
    %s158 = sadd.s32 %s157, 1
    %p161 = scmp.eq.s32.totalorder %s18, 1
    %p162 = scmp.ne.s32.totalorder %s157, %s159
    %p163 = scmp.eq.s32.totalorder %s18, 0
    %p164 = por %p162, %p163
    %p165 = scmp.ne.s32.totalorder %s157, %s159
    %p166 = scmp.eq.s32.totalorder %s23, 1
    %p167 = por %p165, %p166
    %p168 = scmp.ne.s32.totalorder %s159, %s160
    %p169 = scmp.eq.s32.totalorder %s23, 0
    %p170 = por %p168, %p169
    %p171 = scmp.ne.s32.totalorder %s159, %s160
    %p172 = scmp.eq.s32.totalorder %s24, 1
    %p173 = por %p171, %p172
    %p175 = scmp.ne.s32.totalorder %s160, %s174
    %p176 = scmp.eq.s32.totalorder %s24, 0
    %p177 = por %p175, %p176
    %s179 = sadd.s32 %s178, 1
    %p182 = scmp.eq.s32.totalorder %s18, 1
    %p183 = scmp.ne.s32.totalorder %s178, %s180
    %p184 = scmp.eq.s32.totalorder %s18, 0
    %p185 = por %p183, %p184
    %p186 = scmp.ne.s32.totalorder %s178, %s180
    %p187 = scmp.eq.s32.totalorder %s23, 1
    %p188 = por %p186, %p187
    %p189 = scmp.ne.s32.totalorder %s180, %s181
    %p190 = scmp.eq.s32.totalorder %s23, 0
    %p191 = por %p189, %p190
    %p192 = scmp.ne.s32.totalorder %s180, %s181
    %p193 = scmp.eq.s32.totalorder %s24, 1
    %p194 = por %p192, %p193
    %p196 = scmp.ne.s32.totalorder %s181, %s195
    %p197 = scmp.eq.s32.totalorder %s24, 0
    %p198 = por %p196, %p197
    %s200 = sadd.s32 %s199, 1
    %p203 = scmp.eq.s32.totalorder %s18, 1
    %p204 = scmp.ne.s32.totalorder %s199, %s201
    %p205 = scmp.eq.s32.totalorder %s18, 0
    %p206 = por %p204, %p205
    %p207 = scmp.ne.s32.totalorder %s199, %s201
    %p208 = scmp.eq.s32.totalorder %s23, 1
    %p209 = por %p207, %p208
    %p210 = scmp.ne.s32.totalorder %s201, %s202
    %p211 = scmp.eq.s32.totalorder %s23, 0
    %p212 = por %p210, %p211
    %p213 = scmp.ne.s32.totalorder %s201, %s202
    %p214 = scmp.eq.s32.totalorder %s24, 1
    %p215 = por %p213, %p214
    %p217 = scmp.ne.s32.totalorder %s202, %s216
    %p218 = scmp.eq.s32.totalorder %s24, 0
    %p219 = por %p217, %p218
    %s221 = sadd.s32 %s220, 1
    %p224 = scmp.eq.s32.totalorder %s18, 1
    %p225 = scmp.ne.s32.totalorder %s220, %s222
    %p226 = scmp.eq.s32.totalorder %s18, 0
    %p227 = por %p225, %p226
    %p228 = scmp.ne.s32.totalorder %s220, %s222
    %p229 = scmp.eq.s32.totalorder %s23, 1
    %p230 = por %p228, %p229
    %p231 = scmp.ne.s32.totalorder %s222, %s223
    %p232 = scmp.eq.s32.totalorder %s23, 0
    %p233 = por %p231, %p232
    %p234 = scmp.ne.s32.totalorder %s222, %s223
    %p235 = scmp.eq.s32.totalorder %s24, 1
    %p236 = por %p234, %p235
    %p238 = scmp.ne.s32.totalorder %s223, %s237
    %p239 = scmp.eq.s32.totalorder %s24, 0
    %p240 = por %p238, %p239
    %s242 = sadd.s32 %s241, 1
    %p245 = scmp.eq.s32.totalorder %s18, 1
    %p246 = scmp.ne.s32.totalorder %s241, %s243
    %p247 = scmp.eq.s32.totalorder %s18, 0
    %p248 = por %p246, %p247
    %p249 = scmp.ne.s32.totalorder %s241, %s243
    %p250 = scmp.eq.s32.totalorder %s23, 1
    %p251 = por %p249, %p250
    %p252 = scmp.ne.s32.totalorder %s243, %s244
    %p253 = scmp.eq.s32.totalorder %s23, 0
    %p254 = por %p252, %p253
    %p255 = scmp.ne.s32.totalorder %s243, %s244
    %p256 = scmp.eq.s32.totalorder %s24, 1
    %p257 = por %p255, %p256
    %p259 = scmp.ne.s32.totalorder %s244, %s258
    %p260 = scmp.eq.s32.totalorder %s24, 0
    %p261 = por %p259, %p260
    %s263 = sadd.s32 %s262, 1
    %p266 = scmp.eq.s32.totalorder %s18, 1
    %p267 = scmp.ne.s32.totalorder %s262, %s264
    %p268 = scmp.eq.s32.totalorder %s18, 0
    %p269 = por %p267, %p268
    %p270 = scmp.ne.s32.totalorder %s262, %s264
    %p271 = scmp.eq.s32.totalorder %s23, 1
    %p272 = por %p270, %p271
    %p273 = scmp.ne.s32.totalorder %s264, %s265
    %p274 = scmp.eq.s32.totalorder %s23, 0
    %p275 = por %p273, %p274
    %p276 = scmp.ne.s32.totalorder %s264, %s265
    %p277 = scmp.eq.s32.totalorder %s24, 1
    %p278 = por %p276, %p277
    %p280 = scmp.ne.s32.totalorder %s265, %s279
    %p281 = scmp.eq.s32.totalorder %s24, 0
    %p282 = por %p280, %p281
    %s283 = ssub.s32 %s18, %s25
    %p284 = scmp.eq.s32.totalorder %s283, 0
    %s286 = sadd.s32 %s285, 1
    %s287 = scalar_select %p284, %s285, %s286
    %p290 = pneg %p284
    %p291 = scmp.eq.s32.totalorder %s18, 1
    %p292 = por %p290, %p291
    %p293 = scmp.ne.s32.totalorder %s285, %s288
    %p294 = scmp.eq.s32.totalorder %s18, 0
    %p295 = por %p293, %p294
    %p296 = scmp.ne.s32.totalorder %s285, %s288
    %p297 = scmp.eq.s32.totalorder %s23, 1
    %p298 = por %p296, %p297
    %p299 = scmp.ne.s32.totalorder %s288, %s289
    %p300 = scmp.eq.s32.totalorder %s23, 0
    %p301 = por %p299, %p300
    %p302 = scmp.ne.s32.totalorder %s288, %s289
    %p303 = scmp.eq.s32.totalorder %s24, 1
    %p304 = por %p302, %p303
    %p306 = scmp.ne.s32.totalorder %s289, %s305
    %p307 = scmp.eq.s32.totalorder %s24, 0
    %p308 = por %p306, %p307
    %p309 = scmp.le.s32.totalorder 1, %s18
    %p310 = scmp.lt.s32.totalorder %s18, 3
    %p311 = pnand %p309, %p310
    %p312 = pneg %p311
    // Predicated region
    $region9: #{_lambda_.1} parent=5 // pred_check
      _
    $region10: #{_lambda_.1} parent=5 // pred_check_branch
      %314 = sbr.rel (%p311) target = $region12
    $region11: #{_lambda_.1} parent=5 // pred_region
      %s315 = ssub.s32 %s18, 1
      // Predicated region
      $region13: #{_lambda_.1} parent=11 // pred_check
        %p316 = pneg %p65
      $region14: #{_lambda_.1} parent=11 // pred_check_branch
        %318 = sbr.rel (%p316) target = $region16
      $region15: #{_lambda_.1} parent=11 // pred_region
        _
      $region16: #{_lambda_.1} parent=11 // pred_fallthru
        _
      // Predicated region
      $region17: #{_lambda_.1} parent=11 // pred_check
        %p319 = pneg %p86
      $region18: #{_lambda_.1} parent=11 // pred_check_branch
        %321 = sbr.rel (%p319) target = $region20
      $region19: #{_lambda_.1} parent=11 // pred_region
        _
      $region20: #{_lambda_.1} parent=11 // pred_fallthru
        _
      // Predicated region
      $region21: #{_lambda_.1} parent=11 // pred_check
        %p322 = pneg %p107
      $region22: #{_lambda_.1} parent=11 // pred_check_branch
        %324 = sbr.rel (%p322) target = $region24
      $region23: #{_lambda_.1} parent=11 // pred_region
        _
      $region24: #{_lambda_.1} parent=11 // pred_fallthru
        _
      // Predicated region
      $region25: #{_lambda_.1} parent=11 // pred_check
        %p325 = pneg %p128
      $region26: #{_lambda_.1} parent=11 // pred_check_branch
        %327 = sbr.rel (%p325) target = $region28
      $region27: #{_lambda_.1} parent=11 // pred_region
        _
      $region28: #{_lambda_.1} parent=11 // pred_fallthru
        _
      // Predicated region
      $region29: #{_lambda_.1} parent=11 // pred_check
        %p328 = pneg %p149
      $region30: #{_lambda_.1} parent=11 // pred_check_branch
        %330 = sbr.rel (%p328) target = $region32
      $region31: #{_lambda_.1} parent=11 // pred_region
        _
      $region32: #{_lambda_.1} parent=11 // pred_fallthru
        _
      // Predicated region
      $region33: #{_lambda_.1} parent=11 // pred_check
        %p331 = pneg %p170
      $region34: #{_lambda_.1} parent=11 // pred_check_branch
        %333 = sbr.rel (%p331) target = $region36
      $region35: #{_lambda_.1} parent=11 // pred_region
        _
      $region36: #{_lambda_.1} parent=11 // pred_fallthru
        _
      // Predicated region
      $region37: #{_lambda_.1} parent=11 // pred_check
        %p334 = pneg %p191
      $region38: #{_lambda_.1} parent=11 // pred_check_branch
        %336 = sbr.rel (%p334) target = $region40
      $region39: #{_lambda_.1} parent=11 // pred_region
        _
      $region40: #{_lambda_.1} parent=11 // pred_fallthru
        _
      // Predicated region
      $region41: #{_lambda_.1} parent=11 // pred_check
        %p337 = pneg %p212
      $region42: #{_lambda_.1} parent=11 // pred_check_branch
        %339 = sbr.rel (%p337) target = $region44
      $region43: #{_lambda_.1} parent=11 // pred_region
        _
      $region44: #{_lambda_.1} parent=11 // pred_fallthru
        _
      // Predicated region
      $region45: #{_lambda_.1} parent=11 // pred_check
        %p340 = pneg %p233
      $region46: #{_lambda_.1} parent=11 // pred_check_branch
        %342 = sbr.rel (%p340) target = $region48
      $region47: #{_lambda_.1} parent=11 // pred_region
        _
      $region48: #{_lambda_.1} parent=11 // pred_fallthru
        _
      // Predicated region
      $region49: #{_lambda_.1} parent=11 // pred_check
        %p343 = pneg %p254
      $region50: #{_lambda_.1} parent=11 // pred_check_branch
        %345 = sbr.rel (%p343) target = $region52
      $region51: #{_lambda_.1} parent=11 // pred_region
        _
      $region52: #{_lambda_.1} parent=11 // pred_fallthru
        _
      // Predicated region
      $region53: #{_lambda_.1} parent=11 // pred_check
        %p346 = pneg %p275
      $region54: #{_lambda_.1} parent=11 // pred_check_branch
        %348 = sbr.rel (%p346) target = $region56
      $region55: #{_lambda_.1} parent=11 // pred_region
        _
      $region56: #{_lambda_.1} parent=11 // pred_fallthru
        _
    $region12: #{_lambda_.1} parent=5 // pred_fallthru
      _
    %p349 = scmp.lt.s32.totalorder %s18, 2
    // Predicated region
    $region57: #{_lambda_.1} parent=5 // pred_check
      %p350 = pneg %p349
    $region58: #{_lambda_.1} parent=5 // pred_check_branch
      %352 = sbr.rel (%p350) target = $region60
    $region59: #{_lambda_.1} parent=5 // pred_region
      // Predicated region
      $region61: #{_lambda_.1} parent=59 // pred_check
        %p353 = pneg %p38
      $region62: #{_lambda_.1} parent=59 // pred_check_branch
        %355 = sbr.rel (%p353) target = $region64
      $region63: #{_lambda_.1} parent=59 // pred_region
        %p356 = scmp.lt.s32.totalorder %s18, 1
        %s357 = scalar_select %p356, %s18, 1
        %s358 = smul.addr %s357, 57
        %s359 = smul.addr %s358, 4
        %s360 = scalar_lea.vmem %s0, %s359
      $region64: #{_lambda_.1} parent=59 // pred_fallthru
        _
    $region60: #{_lambda_.1} parent=5 // pred_fallthru
      _
    %p361 = scmp.le.s32.totalorder 1, %s18
    %p362 = scmp.lt.s32.totalorder %s18, 3
    %p363 = pnand %p361, %p362
    %p364 = pneg %p363
    // Predicated region
    $region65: #{_lambda_.1} parent=5 // pred_check
      _
    $region66: #{_lambda_.1} parent=5 // pred_check_branch
      %366 = sbr.rel (%p363) target = $region68
    $region67: #{_lambda_.1} parent=5 // pred_region
      %s367 = ssub.s32 %s18, 1
      %p368 = scmp.lt.s32.totalorder %s23, 1
      %s369 = scalar_select %p368, %s23, 1
      %s370 = smul.addr %s369, 57
      %s371 = smul.addr %s370, 4
      %s372 = scalar_lea.vmem %s0, %s371
      %p373 = pneg %p44
      %p374 = pneg %p41
      %p375 = pneg %p65
      %p376 = pneg %p62
      %p377 = pneg %p86
      %p378 = pneg %p83
      %p379 = pneg %p107
      %p380 = pneg %p104
      %p381 = pneg %p128
      %p382 = pneg %p125
      %p383 = pneg %p149
      %p384 = pneg %p146
      %p385 = pneg %p170
      %p386 = pneg %p167
      %p387 = pneg %p191
      %p388 = pneg %p188
      %p389 = pneg %p212
      %p390 = pneg %p209
      %p391 = pneg %p233
      %p392 = pneg %p230
      %p393 = pneg %p254
      %p394 = pneg %p251
      %p395 = pneg %p275
      %p396 = pneg %p272
      %p397 = pneg %p301
      %p398 = pneg %p298
      %p399 = scmp.lt.s32.totalorder %s23, 1
      %s400 = scalar_select %p399, %s23, 1
      %s401 = smul.addr %s400, 32
      %s402 = smul.addr %s401, 8
      %s403 = scalar_lea.vmem %s12, %s402
      %p404 = scmp.lt.s32.totalorder %s23, 1
      %s405 = scalar_select %p404, %s23, 1
      %s406 = smul.addr %s405, 57
      %s407 = smul.addr %s406, 4
      %s408 = scalar_lea.vmem %s0, %s407
      %p409 = scmp.lt.s32.totalorder %s23, 1
      %s410 = scalar_select %p409, %s23, 1
      %s411 = smul.addr %s410, 32
      %s412 = smul.addr %s411, 8
      %s413 = scalar_lea.vmem %s12, %s412
      %v415 = vld [vmem:[%s408] sm:$0xf]
      %v416 = vld [vmem:[%s408 + $0x4] sm:$0xf]
      %v417 = vld [vmem:[%s408 + $0x8] sm:$0xf]
      %v418 = vld [vmem:[%s408 + $0xc] sm:$0xf]
      %v419 = vld [vmem:[%s408 + $0x10] sm:$0xf]
      %v420 = vld [vmem:[%s408 + $0x14] sm:$0xf]
      %v421 = vld [vmem:[%s408 + $0x18] sm:$0xf]
      %v422 = vld [vmem:[%s408 + $0x1c] sm:$0xf]
      %v423 = vld [vmem:[%s408 + $0x20] sm:$0xf]
      %v424 = vld [vmem:[%s408 + $0x24] sm:$0xf]
      %v425 = vld [vmem:[%s408 + $0x28] sm:$0xf]
      %v426 = vld [vmem:[%s408 + $0x2c] sm:$0xf]
      %v427 = vld [vmem:[%s408 + $0x30] sm:$0xf]
      %v428 = vld [vmem:[%s408 + $0x34] sm:$0xf]
      %v429 = vld [vmem:[%s408 + $0x38] sm:$0xf]
      %v430 = vld [vmem:[%s408 + $0x3c] sm:$0xf]
      %v431 = vld [vmem:[%s408 + $0x40] sm:$0xf]
      %v432 = vld [vmem:[%s408 + $0x44] sm:$0xf]
      %v433 = vld [vmem:[%s408 + $0x48] sm:$0xf]
      %v434 = vld [vmem:[%s408 + $0x4c] sm:$0xf]
      %v435 = vld [vmem:[%s408 + $0x50] sm:$0xf]
      %v436 = vld [vmem:[%s408 + $0x54] sm:$0xf]
      %v437 = vld [vmem:[%s408 + $0x58] sm:$0xf]
      %v438 = vld [vmem:[%s408 + $0x5c] sm:$0xf]
      %v439 = vld [vmem:[%s408 + $0x60] sm:$0xf]
      %v440 = vld [vmem:[%s408 + $0x64] sm:$0xf]
      %v441 = vld [vmem:[%s408 + $0x68] sm:$0xf]
      %v442 = vld [vmem:[%s408 + $0x6c] sm:$0xf]
      %v443 = vld [vmem:[%s408 + $0x70] sm:$0xf]
      %v444 = vld [vmem:[%s408 + $0x74] sm:$0xf]
      %v445 = vld [vmem:[%s408 + $0x78] sm:$0xf]
      %v446 = vld [vmem:[%s408 + $0x7c] sm:$0xf]
      %v447 = vld [vmem:[%s408 + $0x80] sm:$0xf]
      %v448 = vld [vmem:[%s408 + $0x84] sm:$0xf]
      %v449 = vld [vmem:[%s408 + $0x88] sm:$0xf]
      %v450 = vld [vmem:[%s408 + $0x8c] sm:$0xf]
      %v451 = vld [vmem:[%s408 + $0x90] sm:$0xf]
      %v452 = vld [vmem:[%s408 + $0x94] sm:$0xf]
      %v453 = vld [vmem:[%s408 + $0x98] sm:$0xf]
      %v454 = vld [vmem:[%s408 + $0x9c] sm:$0xf]
      %v455 = vld [vmem:[%s408 + $0xa0] sm:$0xf]
      %v456 = vld [vmem:[%s408 + $0xa4] sm:$0xf]
      %v457 = vld [vmem:[%s408 + $0xa8] sm:$0xf]
      %v458 = vld [vmem:[%s408 + $0xac] sm:$0xf]
      %v459 = vld [vmem:[%s408 + $0xb0] sm:$0xf]
      %v460 = vld [vmem:[%s408 + $0xb4] sm:$0xf]
      %v461 = vld [vmem:[%s408 + $0xb8] sm:$0xf]
      %v462 = vld [vmem:[%s408 + $0xbc] sm:$0xf]
      %v463 = vld [vmem:[%s2] sm:$0xf]
      %v464 = vld [vmem:[%s2 + $0x4] sm:$0xf]
      %v465 = vld [vmem:[%s2 + $0x8] sm:$0xf]
      %v466 = vld [vmem:[%s2 + $0xc] sm:$0xf]
      %v467 = vld [vmem:[%s2 + $0x10] sm:$0xf]
      %v468 = vld [vmem:[%s2 + $0x14] sm:$0xf]
      %v469 = vld [vmem:[%s2 + $0x18] sm:$0xf]
      %v470 = vld [vmem:[%s2 + $0x1c] sm:$0xf]
      %v471 = vld [vmem:[%s2 + $0x20] sm:$0xf]
      %v472 = vld [vmem:[%s2 + $0x24] sm:$0xf]
      %v473 = vld [vmem:[%s2 + $0x28] sm:$0xf]
      %v474 = vld [vmem:[%s2 + $0x2c] sm:$0xf]
      %v475 = vld [vmem:[%s2 + $0x30] sm:$0xf]
      %v476 = vld [vmem:[%s2 + $0x34] sm:$0xf]
      %v477 = vld [vmem:[%s2 + $0x38] sm:$0xf]
      %v478 = vld [vmem:[%s2 + $0x3c] sm:$0xf]
      %v479 = vld [vmem:[%s408 + $0xc0] sm:$0x1]
      %s480 = scalar_lea.vmem %s2, 64
      %v481 = vld [vmem:[%s480] sm:$0xf]
      %v482 = vld [vmem:[%s480 + $0x4] sm:$0xf]
      %v483 = vld [vmem:[%s480 + $0x8] sm:$0xf]
      %v484 = vld [vmem:[%s480 + $0xc] sm:$0xf]
      %v485 = vld [vmem:[%s480 + $0x10] sm:$0xf]
      %v486 = vld [vmem:[%s480 + $0x14] sm:$0xf]
      %v487 = vld [vmem:[%s480 + $0x18] sm:$0xf]
      %v488 = vld [vmem:[%s480 + $0x1c] sm:$0xf]
      %v489 = vld [vmem:[%s480 + $0x20] sm:$0xf]
      %v490 = vld [vmem:[%s480 + $0x24] sm:$0xf]
      %v491 = vld [vmem:[%s480 + $0x28] sm:$0xf]
      %v492 = vld [vmem:[%s480 + $0x2c] sm:$0xf]
      %v493 = vld [vmem:[%s480 + $0x30] sm:$0xf]
      %v494 = vld [vmem:[%s480 + $0x34] sm:$0xf]
      %v495 = vld [vmem:[%s480 + $0x38] sm:$0xf]
      %v496 = vld [vmem:[%s480 + $0x3c] sm:$0xf]
      %v546 = vunpack.c.l.b16 %v415
      %v547 = vunpack.c.l.b16 %v416
      %v548 = vunpack.c.l.b16 %v417
      %v549 = vunpack.c.l.b16 %v418
      %v550 = vunpack.c.l.b16 %v419
      %v551 = vunpack.c.l.b16 %v420
      %v552 = vunpack.c.l.b16 %v421
      %v553 = vunpack.c.l.b16 %v422
      %v554 = vunpack.c.l.b16 %v423
      %v555 = vunpack.c.l.b16 %v424
      %v556 = vunpack.c.l.b16 %v425
      %v557 = vunpack.c.l.b16 %v426
      %v558 = vunpack.c.l.b16 %v427
      %v559 = vunpack.c.l.b16 %v428
      %v560 = vunpack.c.l.b16 %v429
      %v561 = vunpack.c.l.b16 %v430
      %v562 = vunpack.c.l.b16 %v431
      %v563 = vunpack.c.l.b16 %v432
      %v564 = vunpack.c.l.b16 %v433
      %v565 = vunpack.c.l.b16 %v434
      %v566 = vunpack.c.l.b16 %v435
      %v567 = vunpack.c.l.b16 %v436
      %v568 = vunpack.c.l.b16 %v437
      %v569 = vunpack.c.l.b16 %v438
      %v570 = vunpack.c.l.b16 %v439
      %v571 = vunpack.c.l.b16 %v440
      %v572 = vunpack.c.l.b16 %v441
      %v573 = vunpack.c.l.b16 %v442
      %v574 = vunpack.c.l.b16 %v443
      %v575 = vunpack.c.l.b16 %v444
      %v576 = vunpack.c.l.b16 %v445
      %v577 = vunpack.c.l.b16 %v446
      %v578 = vunpack.c.l.b16 %v447
      %v579 = vunpack.c.l.b16 %v448
      %v580 = vunpack.c.l.b16 %v449
      %v581 = vunpack.c.l.b16 %v450
      %v582 = vunpack.c.l.b16 %v451
      %v583 = vunpack.c.l.b16 %v452
      %v584 = vunpack.c.l.b16 %v453
      %v585 = vunpack.c.l.b16 %v454
      %v586 = vunpack.c.l.b16 %v455
      %v587 = vunpack.c.l.b16 %v456
      %v588 = vunpack.c.l.b16 %v457
      %v589 = vunpack.c.l.b16 %v458
      %v590 = vunpack.c.l.b16 %v459
      %v591 = vunpack.c.l.b16 %v460
      %v592 = vunpack.c.l.b16 %v461
      %v593 = vunpack.c.l.b16 %v462
      %v594 = vunpack.c.l.b16 %v479
      %v595 = vpack.c.b16 %v547, %v546
      %v596 = vpack.c.b16 %v549, %v548
      %v597 = vpack.c.b16 %v551, %v550
      %v598 = vpack.c.b16 %v553, %v552
      %v599 = vpack.c.b16 %v555, %v554
      %v600 = vpack.c.b16 %v557, %v556
      %v601 = vpack.c.b16 %v559, %v558
      %v602 = vpack.c.b16 %v561, %v560
      %v603 = vpack.c.b16 %v563, %v562
      %v604 = vpack.c.b16 %v565, %v564
      %v605 = vpack.c.b16 %v567, %v566
      %v606 = vpack.c.b16 %v569, %v568
      %v607 = vpack.c.b16 %v571, %v570
      %v608 = vpack.c.b16 %v573, %v572
      %v609 = vpack.c.b16 %v575, %v574
      %v610 = vpack.c.b16 %v577, %v576
      %v611 = vpack.c.b16 %v579, %v578
      %v612 = vpack.c.b16 %v581, %v580
      %v613 = vpack.c.b16 %v583, %v582
      %v614 = vpack.c.b16 %v585, %v584
      %v615 = vpack.c.b16 %v587, %v586
      %v616 = vpack.c.b16 %v589, %v588
      %v617 = vpack.c.b16 %v591, %v590
      %v618 = vpack.c.b16 %v593, %v592
      %v619 = vpack.c.b16 %v594, %v594
      %vm620 = vsmask.f32 7424
      %v622 = vshrl.u32 %v595, 16
      %v624 = vshll.u32 %v595, 16
      %v626 = vrot.slane %v624, 1
      %v627 = vor.u32 %v622, %v626
      %v629 = vshll.u32 %v596, 16
      %v631 = vrot.slane %v629, 1
      %v632 = vsel %vm620, %v627, %v631
      %v633 = vshrl.u32 %v596, 16
      %v635 = vor.u32 %v633, %v631
      %v637 = vshll.u32 %v597, 16
      %v639 = vrot.slane %v637, 1
      %v640 = vsel %vm620, %v635, %v639
      %v641 = vshrl.u32 %v597, 16
      %v643 = vor.u32 %v641, %v639
      %v645 = vshll.u32 %v598, 16
      %v647 = vrot.slane %v645, 1
      %v648 = vsel %vm620, %v643, %v647
      %v649 = vshrl.u32 %v598, 16
      %v651 = vor.u32 %v649, %v647
      %v653 = vshll.u32 %v599, 16
      %v655 = vrot.slane %v653, 1
      %v656 = vsel %vm620, %v651, %v655
      %v657 = vshrl.u32 %v599, 16
      %v659 = vor.u32 %v657, %v655
      %v661 = vshll.u32 %v600, 16
      %v663 = vrot.slane %v661, 1
      %v664 = vsel %vm620, %v659, %v663
      %v665 = vshrl.u32 %v600, 16
      %v667 = vor.u32 %v665, %v663
      %v669 = vshll.u32 %v601, 16
      %v671 = vrot.slane %v669, 1
      %v672 = vsel %vm620, %v667, %v671
      %v673 = vshrl.u32 %v601, 16
      %v675 = vor.u32 %v673, %v671
      %v677 = vshll.u32 %v602, 16
      %v679 = vrot.slane %v677, 1
      %v680 = vsel %vm620, %v675, %v679
      %v681 = vshrl.u32 %v602, 16
      %v683 = vor.u32 %v681, %v679
      %v685 = vshll.u32 %v603, 16
      %v687 = vrot.slane %v685, 1
      %v688 = vsel %vm620, %v683, %v687
      %v689 = vshrl.u32 %v603, 16
      %v691 = vor.u32 %v689, %v687
      %v693 = vshll.u32 %v604, 16
      %v695 = vrot.slane %v693, 1
      %v696 = vsel %vm620, %v691, %v695
      %v697 = vshrl.u32 %v604, 16
      %v699 = vor.u32 %v697, %v695
      %v701 = vshll.u32 %v605, 16
      %v703 = vrot.slane %v701, 1
      %v704 = vsel %vm620, %v699, %v703
      %v705 = vshrl.u32 %v605, 16
      %v707 = vor.u32 %v705, %v703
      %v709 = vshll.u32 %v606, 16
      %v711 = vrot.slane %v709, 1
      %v712 = vsel %vm620, %v707, %v711
      %v713 = vshrl.u32 %v606, 16
      %v715 = vor.u32 %v713, %v711
      %v717 = vshll.u32 %v607, 16
      %v719 = vrot.slane %v717, 1
      %v720 = vsel %vm620, %v715, %v719
      %v721 = vshrl.u32 %v607, 16
      %v723 = vor.u32 %v721, %v719
      %v725 = vshll.u32 %v608, 16
      %v727 = vrot.slane %v725, 1
      %v728 = vsel %vm620, %v723, %v727
      %v729 = vshrl.u32 %v608, 16
      %v731 = vor.u32 %v729, %v727
      %v733 = vshll.u32 %v609, 16
      %v735 = vrot.slane %v733, 1
      %v736 = vsel %vm620, %v731, %v735
      %v737 = vshrl.u32 %v609, 16
      %v739 = vor.u32 %v737, %v735
      %v741 = vshll.u32 %v610, 16
      %v743 = vrot.slane %v741, 1
      %v744 = vsel %vm620, %v739, %v743
      %v745 = vshrl.u32 %v610, 16
      %v747 = vor.u32 %v745, %v743
      %v749 = vshll.u32 %v611, 16
      %v751 = vrot.slane %v749, 1
      %v752 = vsel %vm620, %v747, %v751
      %v753 = vshrl.u32 %v611, 16
      %v755 = vor.u32 %v753, %v751
      %v757 = vshll.u32 %v612, 16
      %v759 = vrot.slane %v757, 1
      %v760 = vsel %vm620, %v755, %v759
      %v761 = vshrl.u32 %v612, 16
      %v763 = vor.u32 %v761, %v759
      %v765 = vshll.u32 %v613, 16
      %v767 = vrot.slane %v765, 1
      %v768 = vsel %vm620, %v763, %v767
      %v769 = vshrl.u32 %v613, 16
      %v771 = vor.u32 %v769, %v767
      %v773 = vshll.u32 %v614, 16
      %v775 = vrot.slane %v773, 1
      %v776 = vsel %vm620, %v771, %v775
      %v777 = vshrl.u32 %v614, 16
      %v779 = vor.u32 %v777, %v775
      %v781 = vshll.u32 %v615, 16
      %v783 = vrot.slane %v781, 1
      %v784 = vsel %vm620, %v779, %v783
      %v785 = vshrl.u32 %v615, 16
      %v787 = vor.u32 %v785, %v783
      %v789 = vshll.u32 %v616, 16
      %v791 = vrot.slane %v789, 1
      %v792 = vsel %vm620, %v787, %v791
      %v793 = vshrl.u32 %v616, 16
      %v795 = vor.u32 %v793, %v791
      %v797 = vshll.u32 %v617, 16
      %v799 = vrot.slane %v797, 1
      %v800 = vsel %vm620, %v795, %v799
      %v801 = vshrl.u32 %v617, 16
      %v803 = vor.u32 %v801, %v799
      %v805 = vshll.u32 %v618, 16
      %v807 = vrot.slane %v805, 1
      %v808 = vsel %vm620, %v803, %v807
      %v809 = vshrl.u32 %v618, 16
      %v811 = vor.u32 %v809, %v807
      %v813 = vshll.u32 %v619, 16
      %v815 = vrot.slane %v813, 1
      %v816 = vsel %vm620, %v811, %v815
      %v857 = vunpack.c.l.b16 %v481
      %v858 = vunpack.c.l.b16 %v482
      %v859 = vunpack.c.l.b16 %v483
      %v860 = vunpack.c.l.b16 %v484
      %v861 = vunpack.c.l.b16 %v485
      %v862 = vunpack.c.l.b16 %v486
      %v863 = vunpack.c.l.b16 %v487
      %v864 = vunpack.c.l.b16 %v488
      %v865 = vunpack.c.l.b16 %v489
      %v866 = vunpack.c.l.b16 %v490
      %v867 = vunpack.c.l.b16 %v491
      %v868 = vunpack.c.l.b16 %v492
      %v869 = vunpack.c.l.b16 %v493
      %v870 = vunpack.c.l.b16 %v494
      %v871 = vunpack.c.l.b16 %v495
      %v872 = vunpack.c.l.b16 %v496
      %v873 = vpack.c.b16 %v858, %v857
      %v874 = vpack.c.b16 %v860, %v859
      %v875 = vpack.c.b16 %v862, %v861
      %v876 = vpack.c.b16 %v864, %v863
      %v877 = vpack.c.b16 %v866, %v865
      %v878 = vpack.c.b16 %v868, %v867
      %v879 = vpack.c.b16 %v870, %v869
      %v880 = vpack.c.b16 %v872, %v871
      %889 = vmatprep.subr.bf16.mxu0 0
      %890 = vmatpush1.bf16.msra.mxu0 %v873
      %891 = vmatprep.subr.bf16.mxu0 0
      %892 = vmatpush1.bf16.msra.mxu0 %v874
      %893 = vmatprep.subr.bf16.mxu0 0
      %894 = vmatpush1.bf16.msra.mxu0 %v875
      %895 = vmatprep.subr.bf16.mxu0 0
      %896 = vmatpush1.bf16.msra.mxu0 %v876
      %897 = vmatprep.subr.bf16.mxu0 0
      %898 = vmatpush1.bf16.msra.mxu0 %v877
      %899 = vmatprep.subr.bf16.mxu0 0
      %900 = vmatpush1.bf16.msra.mxu0 %v878
      %901 = vmatprep.subr.bf16.mxu0 0
      %902 = vmatpush1.bf16.msra.mxu0 %v879
      %903 = vmatprep.subr.bf16.mxu0 0
      %904 = vmatpush1.bf16.msra.mxu0 %v880
      %905 = vmatprep.subr.bf16.mxu0 0
      %906 = vmatpush1.bf16.msra.mxu0 0
      %907 = vmatprep.subr.bf16.mxu0 0
      %908 = vmatpush1.bf16.msra.mxu0 0
      %909 = vmatprep.subr.bf16.mxu0 0
      %910 = vmatpush1.bf16.msra.mxu0 0
      %911 = vmatprep.subr.bf16.mxu0 0
      %912 = vmatpush1.bf16.msra.mxu0 0
      %913 = vmatprep.subr.bf16.mxu0 0
      %914 = vmatpush1.bf16.msra.mxu0 0
      %915 = vmatprep.subr.bf16.mxu0 0
      %916 = vmatpush1.bf16.msra.mxu0 0
      %917 = vmatprep.subr.bf16.mxu0 0
      %918 = vmatpush1.bf16.msra.mxu0 0
      %919 = vmatprep.subr.bf16.mxu0 0
      %920 = vmatpush1.bf16.msra.mxu0 0
      %921 = vmatprep.mubr.bf16.mxu0 0
      %922 = vmatmul.mubr.bf16.gmra.mrb[0].mxu0 %v632
      %v923 = vpop.f32.mrb[0].mxu0
      %v924 = vadd.f32 0.0, %v923
      %v925 = vpop.f32.mrb[0].mxu0
      %v926 = vpop.f32.mrb[0].mxu0
      %v927 = vadd.f32 0.0, %v926
      %v928 = vpop.f32.mrb[0].mxu0
      %929 = vmatprep.mubr.bf16.mxu0 0
      %930 = vmatmul.mubr.bf16.gmra.mrb[0].mxu0 %v640
      %v931 = vpop.f32.mrb[0].mxu0
      %v932 = vadd.f32 0.0, %v931
      %v933 = vpop.f32.mrb[0].mxu0
      %v934 = vpop.f32.mrb[0].mxu0
      %v935 = vadd.f32 0.0, %v934
      %v936 = vpop.f32.mrb[0].mxu0
      %937 = vmatprep.mubr.bf16.mxu0 0
      %938 = vmatmul.mubr.bf16.gmra.mrb[0].mxu0 %v648
      %v939 = vpop.f32.mrb[0].mxu0
      %v940 = vadd.f32 0.0, %v939
      %v941 = vpop.f32.mrb[0].mxu0
      %v942 = vpop.f32.mrb[0].mxu0
      %v943 = vadd.f32 0.0, %v942
      %v944 = vpop.f32.mrb[0].mxu0
      %945 = vmatprep.mubr.bf16.mxu0 0
      %946 = vmatmul.mubr.bf16.gmra.mrb[0].mxu0 %v656
      %v947 = vpop.f32.mrb[0].mxu0
      %v948 = vadd.f32 0.0, %v947
      %v949 = vpop.f32.mrb[0].mxu0
      %v950 = vpop.f32.mrb[0].mxu0
      %v951 = vadd.f32 0.0, %v950
      %v952 = vpop.f32.mrb[0].mxu0
      %953 = vmatprep.mubr.bf16.mxu0 0
      %954 = vmatmul.mubr.bf16.gmra.mrb[0].mxu0 %v664
      %v955 = vpop.f32.mrb[0].mxu0
      %v956 = vadd.f32 0.0, %v955
      %v957 = vpop.f32.mrb[0].mxu0
      %v958 = vpop.f32.mrb[0].mxu0
      %v959 = vadd.f32 0.0, %v958
      %v960 = vpop.f32.mrb[0].mxu0
      %961 = vmatprep.mubr.bf16.mxu0 0
      %962 = vmatmul.mubr.bf16.gmra.mrb[0].mxu0 %v672
      %v963 = vpop.f32.mrb[0].mxu0
      %v964 = vadd.f32 0.0, %v963
      %v965 = vpop.f32.mrb[0].mxu0
      %v966 = vpop.f32.mrb[0].mxu0
      %v967 = vadd.f32 0.0, %v966
      %v968 = vpop.f32.mrb[0].mxu0
      %969 = vmatprep.mubr.bf16.mxu0 0
      %970 = vmatmul.mubr.bf16.gmra.mrb[0].mxu0 %v680
      %v971 = vpop.f32.mrb[0].mxu0
      %v972 = vadd.f32 0.0, %v971
      %v973 = vpop.f32.mrb[0].mxu0
      %v974 = vpop.f32.mrb[0].mxu0
      %v975 = vadd.f32 0.0, %v974
      %v976 = vpop.f32.mrb[0].mxu0
      %977 = vmatprep.mubr.bf16.mxu0 0
      %978 = vmatmul.mubr.bf16.gmra.mrb[0].mxu0 %v688
      %v979 = vpop.f32.mrb[0].mxu0
      %v980 = vadd.f32 0.0, %v979
      %v981 = vpop.f32.mrb[0].mxu0
      %v982 = vpop.f32.mrb[0].mxu0
      %v983 = vadd.f32 0.0, %v982
      %v984 = vpop.f32.mrb[0].mxu0
      %985 = vmatprep.mubr.bf16.mxu0 0
      %986 = vmatmul.mubr.bf16.gmra.mrb[0].mxu0 %v696
      %v987 = vpop.f32.mrb[0].mxu0
      %v988 = vadd.f32 0.0, %v987
      %v989 = vpop.f32.mrb[0].mxu0
      %v990 = vpop.f32.mrb[0].mxu0
      %v991 = vadd.f32 0.0, %v990
      %v992 = vpop.f32.mrb[0].mxu0
      %993 = vmatprep.mubr.bf16.mxu0 0
      %994 = vmatmul.mubr.bf16.gmra.mrb[0].mxu0 %v704
      %v995 = vpop.f32.mrb[0].mxu0
      %v996 = vadd.f32 0.0, %v995
      %v997 = vpop.f32.mrb[0].mxu0
      %v998 = vpop.f32.mrb[0].mxu0
      %v999 = vadd.f32 0.0, %v998
      %v1000 = vpop.f32.mrb[0].mxu0
      %1001 = vmatprep.mubr.bf16.mxu0 0
      %1002 = vmatmul.mubr.bf16.gmra.mrb[0].mxu0 %v712
      %v1003 = vpop.f32.mrb[0].mxu0
      %v1004 = vadd.f32 0.0, %v1003
      %v1005 = vpop.f32.mrb[0].mxu0
      %v1006 = vpop.f32.mrb[0].mxu0
      %v1007 = vadd.f32 0.0, %v1006
      %v1008 = vpop.f32.mrb[0].mxu0
      %1009 = vmatprep.mubr.bf16.mxu0 0
      %1010 = vmatmul.mubr.bf16.gmra.mrb[0].mxu0 %v720
      %v1011 = vpop.f32.mrb[0].mxu0
      %v1012 = vadd.f32 0.0, %v1011
      %v1013 = vpop.f32.mrb[0].mxu0
      %v1014 = vpop.f32.mrb[0].mxu0
      %v1015 = vadd.f32 0.0, %v1014
      %v1016 = vpop.f32.mrb[0].mxu0
      %1017 = vmatprep.mubr.bf16.mxu0 0
      %1018 = vmatmul.mubr.bf16.gmra.mrb[0].mxu0 %v728
      %v1019 = vpop.f32.mrb[0].mxu0
      %v1020 = vadd.f32 0.0, %v1019
      %v1021 = vpop.f32.mrb[0].mxu0
      %v1022 = vpop.f32.mrb[0].mxu0
      %v1023 = vadd.f32 0.0, %v1022
      %v1024 = vpop.f32.mrb[0].mxu0
      %1025 = vmatprep.mubr.bf16.mxu0 0
      %1026 = vmatmul.mubr.bf16.gmra.mrb[0].mxu0 %v736
      %v1027 = vpop.f32.mrb[0].mxu0
      %v1028 = vadd.f32 0.0, %v1027
      %v1029 = vpop.f32.mrb[0].mxu0
      %v1030 = vpop.f32.mrb[0].mxu0
      %v1031 = vadd.f32 0.0, %v1030
      %v1032 = vpop.f32.mrb[0].mxu0
      %1033 = vmatprep.mubr.bf16.mxu0 0
      %1034 = vmatmul.mubr.bf16.gmra.mrb[0].mxu0 %v744
      %v1035 = vpop.f32.mrb[0].mxu0
      %v1036 = vadd.f32 0.0, %v1035
      %v1037 = vpop.f32.mrb[0].mxu0
      %v1038 = vpop.f32.mrb[0].mxu0
      %v1039 = vadd.f32 0.0, %v1038
      %v1040 = vpop.f32.mrb[0].mxu0
      %1041 = vmatprep.mubr.bf16.mxu0 0
      %1042 = vmatmul.mubr.bf16.gmra.mrb[0].mxu0 %v752
      %v1043 = vpop.f32.mrb[0].mxu0
      %v1044 = vadd.f32 0.0, %v1043
      %v1045 = vpop.f32.mrb[0].mxu0
      %v1046 = vpop.f32.mrb[0].mxu0
      %v1047 = vadd.f32 0.0, %v1046
      %v1048 = vpop.f32.mrb[0].mxu0
      %1049 = vmatprep.mubr.bf16.mxu0 0
      %1050 = vmatmul.mubr.bf16.gmra.mrb[0].mxu0 %v760
      %v1051 = vpop.f32.mrb[0].mxu0
      %v1052 = vadd.f32 0.0, %v1051
      %v1053 = vpop.f32.mrb[0].mxu0
      %v1054 = vpop.f32.mrb[0].mxu0
      %v1055 = vadd.f32 0.0, %v1054
      %v1056 = vpop.f32.mrb[0].mxu0
      %1057 = vmatprep.mubr.bf16.mxu0 0
      %1058 = vmatmul.mubr.bf16.gmra.mrb[0].mxu0 %v768
      %v1059 = vpop.f32.mrb[0].mxu0
      %v1060 = vadd.f32 0.0, %v1059
      %v1061 = vpop.f32.mrb[0].mxu0
      %v1062 = vpop.f32.mrb[0].mxu0
      %v1063 = vadd.f32 0.0, %v1062
      %v1064 = vpop.f32.mrb[0].mxu0
      %1065 = vmatprep.mubr.bf16.mxu0 0
      %1066 = vmatmul.mubr.bf16.gmra.mrb[0].mxu0 %v776
      %v1067 = vpop.f32.mrb[0].mxu0
      %v1068 = vadd.f32 0.0, %v1067
      %v1069 = vpop.f32.mrb[0].mxu0
      %v1070 = vpop.f32.mrb[0].mxu0
      %v1071 = vadd.f32 0.0, %v1070
      %v1072 = vpop.f32.mrb[0].mxu0
      %1073 = vmatprep.mubr.bf16.mxu0 0
      %1074 = vmatmul.mubr.bf16.gmra.mrb[0].mxu0 %v784
      %v1075 = vpop.f32.mrb[0].mxu0
      %v1076 = vadd.f32 0.0, %v1075
      %v1077 = vpop.f32.mrb[0].mxu0
      %v1078 = vpop.f32.mrb[0].mxu0
      %v1079 = vadd.f32 0.0, %v1078
      %v1080 = vpop.f32.mrb[0].mxu0
      %1081 = vmatprep.mubr.bf16.mxu0 0
      %1082 = vmatmul.mubr.bf16.gmra.mrb[0].mxu0 %v792
      %v1083 = vpop.f32.mrb[0].mxu0
      %v1084 = vadd.f32 0.0, %v1083
      %v1085 = vpop.f32.mrb[0].mxu0
      %v1086 = vpop.f32.mrb[0].mxu0
      %v1087 = vadd.f32 0.0, %v1086
      %v1088 = vpop.f32.mrb[0].mxu0
      %1089 = vmatprep.mubr.bf16.mxu0 0
      %1090 = vmatmul.mubr.bf16.gmra.mrb[0].mxu0 %v800
      %v1091 = vpop.f32.mrb[0].mxu0
      %v1092 = vadd.f32 0.0, %v1091
      %v1093 = vpop.f32.mrb[0].mxu0
      %v1094 = vpop.f32.mrb[0].mxu0
      %v1095 = vadd.f32 0.0, %v1094
      %v1096 = vpop.f32.mrb[0].mxu0
      %1097 = vmatprep.mubr.bf16.mxu0 0
      %1098 = vmatmul.mubr.bf16.gmra.mrb[0].mxu0 %v808
      %v1099 = vpop.f32.mrb[0].mxu0
      %v1100 = vadd.f32 0.0, %v1099
      %v1101 = vpop.f32.mrb[0].mxu0
      %v1102 = vpop.f32.mrb[0].mxu0
      %v1103 = vadd.f32 0.0, %v1102
      %v1104 = vpop.f32.mrb[0].mxu0
      %1105 = vmatprep.mubr.bf16.mxu0 0
      %1106 = vmatmul.mubr.bf16.gmra.mrb[0].mxu0 %v816
      %v1107 = vpop.f32.mrb[0].mxu0
      %v1108 = vadd.f32 0.0, %v1107
      %v1109 = vpop.f32.mrb[0].mxu0
      %v1110 = vpop.f32.mrb[0].mxu0
      %v1111 = vadd.f32 0.0, %v1110
      %v1112 = vpop.f32.mrb[0].mxu0
      %1113 = vdwg.mxu0
      %v1154 = vunpack.c.l.b16 %v463
      %v1155 = vunpack.c.l.b16 %v464
      %v1156 = vunpack.c.l.b16 %v465
      %v1157 = vunpack.c.l.b16 %v466
      %v1158 = vunpack.c.l.b16 %v467
      %v1159 = vunpack.c.l.b16 %v468
      %v1160 = vunpack.c.l.b16 %v469
      %v1161 = vunpack.c.l.b16 %v470
      %v1162 = vunpack.c.l.b16 %v471
      %v1163 = vunpack.c.l.b16 %v472
      %v1164 = vunpack.c.l.b16 %v473
      %v1165 = vunpack.c.l.b16 %v474
      %v1166 = vunpack.c.l.b16 %v475
      %v1167 = vunpack.c.l.b16 %v476
      %v1168 = vunpack.c.l.b16 %v477
      %v1169 = vunpack.c.l.b16 %v478
      %v1170 = vpack.c.b16 %v1155, %v1154
      %v1171 = vpack.c.b16 %v1157, %v1156
      %v1172 = vpack.c.b16 %v1159, %v1158
      %v1173 = vpack.c.b16 %v1161, %v1160
      %v1174 = vpack.c.b16 %v1163, %v1162
      %v1175 = vpack.c.b16 %v1165, %v1164
      %v1176 = vpack.c.b16 %v1167, %v1166
      %v1177 = vpack.c.b16 %v1169, %v1168
      %1186 = vmatprep.subr.bf16.mxu0 0
      %1187 = vmatpush1.bf16.msra.mxu0 %v1170
      %1188 = vmatprep.subr.bf16.mxu0 0
      %1189 = vmatpush1.bf16.msra.mxu0 %v1171
      %1190 = vmatprep.subr.bf16.mxu0 0
      %1191 = vmatpush1.bf16.msra.mxu0 %v1172
      %1192 = vmatprep.subr.bf16.mxu0 0
      %1193 = vmatpush1.bf16.msra.mxu0 %v1173
      %1194 = vmatprep.subr.bf16.mxu0 0
      %1195 = vmatpush1.bf16.msra.mxu0 %v1174
      %1196 = vmatprep.subr.bf16.mxu0 0
      %1197 = vmatpush1.bf16.msra.mxu0 %v1175
      %1198 = vmatprep.subr.bf16.mxu0 0
      %1199 = vmatpush1.bf16.msra.mxu0 %v1176
      %1200 = vmatprep.subr.bf16.mxu0 0
      %1201 = vmatpush1.bf16.msra.mxu0 %v1177
      %1202 = vmatprep.subr.bf16.mxu0 0
      %1203 = vmatpush1.bf16.msra.mxu0 0
      %1204 = vmatprep.subr.bf16.mxu0 0
      %1205 = vmatpush1.bf16.msra.mxu0 0
      %1206 = vmatprep.subr.bf16.mxu0 0
      %1207 = vmatpush1.bf16.msra.mxu0 0
      %1208 = vmatprep.subr.bf16.mxu0 0
      %1209 = vmatpush1.bf16.msra.mxu0 0
      %1210 = vmatprep.subr.bf16.mxu0 0
      %1211 = vmatpush1.bf16.msra.mxu0 0
      %1212 = vmatprep.subr.bf16.mxu0 0
      %1213 = vmatpush1.bf16.msra.mxu0 0
      %1214 = vmatprep.subr.bf16.mxu0 0
      %1215 = vmatpush1.bf16.msra.mxu0 0
      %1216 = vmatprep.subr.bf16.mxu0 0
      %1217 = vmatpush1.bf16.msra.mxu0 0
      %1218 = vmatprep.mubr.bf16.mxu0 0
      %1219 = vmatmul.mubr.bf16.gmra.mrb[0].mxu0 %v595
      %v1220 = vpop.f32.mrb[0].mxu0
      %v1221 = vadd.f32 %v924, %v1220
      %v1222 = vpop.f32.mrb[0].mxu0
      %v1223 = vpop.f32.mrb[0].mxu0
      %v1224 = vadd.f32 %v927, %v1223
      %v1225 = vpop.f32.mrb[0].mxu0
      %1226 = vmatprep.mubr.bf16.mxu0 0
      %1227 = vmatmul.mubr.bf16.gmra.mrb[0].mxu0 %v596
      %v1228 = vpop.f32.mrb[0].mxu0
      %v1229 = vadd.f32 %v932, %v1228
      %v1230 = vpop.f32.mrb[0].mxu0
      %v1231 = vpop.f32.mrb[0].mxu0
      %v1232 = vadd.f32 %v935, %v1231
      %v1233 = vpop.f32.mrb[0].mxu0
      %1234 = vmatprep.mubr.bf16.mxu0 0
      %1235 = vmatmul.mubr.bf16.gmra.mrb[0].mxu0 %v597
      %v1236 = vpop.f32.mrb[0].mxu0
      %v1237 = vadd.f32 %v940, %v1236
      %v1238 = vpop.f32.mrb[0].mxu0
      %v1239 = vpop.f32.mrb[0].mxu0
      %v1240 = vadd.f32 %v943, %v1239
      %v1241 = vpop.f32.mrb[0].mxu0
      %1242 = vmatprep.mubr.bf16.mxu0 0
      %1243 = vmatmul.mubr.bf16.gmra.mrb[0].mxu0 %v598
      %v1244 = vpop.f32.mrb[0].mxu0
      %v1245 = vadd.f32 %v948, %v1244
      %v1246 = vpop.f32.mrb[0].mxu0
      %v1247 = vpop.f32.mrb[0].mxu0
      %v1248 = vadd.f32 %v951, %v1247
      %v1249 = vpop.f32.mrb[0].mxu0
      %1250 = vmatprep.mubr.bf16.mxu0 0
      %1251 = vmatmul.mubr.bf16.gmra.mrb[0].mxu0 %v599
      %v1252 = vpop.f32.mrb[0].mxu0
      %v1253 = vadd.f32 %v956, %v1252
      %v1254 = vpop.f32.mrb[0].mxu0
      %v1255 = vpop.f32.mrb[0].mxu0
      %v1256 = vadd.f32 %v959, %v1255
      %v1257 = vpop.f32.mrb[0].mxu0
      %1258 = vmatprep.mubr.bf16.mxu0 0
      %1259 = vmatmul.mubr.bf16.gmra.mrb[0].mxu0 %v600
      %v1260 = vpop.f32.mrb[0].mxu0
      %v1261 = vadd.f32 %v964, %v1260
      %v1262 = vpop.f32.mrb[0].mxu0
      %v1263 = vpop.f32.mrb[0].mxu0
      %v1264 = vadd.f32 %v967, %v1263
      %v1265 = vpop.f32.mrb[0].mxu0
      %1266 = vmatprep.mubr.bf16.mxu0 0
      %1267 = vmatmul.mubr.bf16.gmra.mrb[0].mxu0 %v601
      %v1268 = vpop.f32.mrb[0].mxu0
      %v1269 = vadd.f32 %v972, %v1268
      %v1270 = vpop.f32.mrb[0].mxu0
      %v1271 = vpop.f32.mrb[0].mxu0
      %v1272 = vadd.f32 %v975, %v1271
      %v1273 = vpop.f32.mrb[0].mxu0
      %1274 = vmatprep.mubr.bf16.mxu0 0
      %1275 = vmatmul.mubr.bf16.gmra.mrb[0].mxu0 %v602
      %v1276 = vpop.f32.mrb[0].mxu0
      %v1277 = vadd.f32 %v980, %v1276
      %v1278 = vpop.f32.mrb[0].mxu0
      %v1279 = vpop.f32.mrb[0].mxu0
      %v1280 = vadd.f32 %v983, %v1279
      %v1281 = vpop.f32.mrb[0].mxu0
      %1282 = vmatprep.mubr.bf16.mxu0 0
      %1283 = vmatmul.mubr.bf16.gmra.mrb[0].mxu0 %v603
      %v1284 = vpop.f32.mrb[0].mxu0
      %v1285 = vadd.f32 %v988, %v1284
      %v1286 = vpop.f32.mrb[0].mxu0
      %v1287 = vpop.f32.mrb[0].mxu0
      %v1288 = vadd.f32 %v991, %v1287
      %v1289 = vpop.f32.mrb[0].mxu0
      %1290 = vmatprep.mubr.bf16.mxu0 0
      %1291 = vmatmul.mubr.bf16.gmra.mrb[0].mxu0 %v604
      %v1292 = vpop.f32.mrb[0].mxu0
      %v1293 = vadd.f32 %v996, %v1292
      %v1294 = vpop.f32.mrb[0].mxu0
      %v1295 = vpop.f32.mrb[0].mxu0
      %v1296 = vadd.f32 %v999, %v1295
      %v1297 = vpop.f32.mrb[0].mxu0
      %1298 = vmatprep.mubr.bf16.mxu0 0
      %1299 = vmatmul.mubr.bf16.gmra.mrb[0].mxu0 %v605
      %v1300 = vpop.f32.mrb[0].mxu0
      %v1301 = vadd.f32 %v1004, %v1300
      %v1302 = vpop.f32.mrb[0].mxu0
      %v1303 = vpop.f32.mrb[0].mxu0
      %v1304 = vadd.f32 %v1007, %v1303
      %v1305 = vpop.f32.mrb[0].mxu0
      %1306 = vmatprep.mubr.bf16.mxu0 0
      %1307 = vmatmul.mubr.bf16.gmra.mrb[0].mxu0 %v606
      %v1308 = vpop.f32.mrb[0].mxu0
      %v1309 = vadd.f32 %v1012, %v1308
      %v1310 = vpop.f32.mrb[0].mxu0
      %v1311 = vpop.f32.mrb[0].mxu0
      %v1312 = vadd.f32 %v1015, %v1311
      %v1313 = vpop.f32.mrb[0].mxu0
      %1314 = vmatprep.mubr.bf16.mxu0 0
      %1315 = vmatmul.mubr.bf16.gmra.mrb[0].mxu0 %v607
      %v1316 = vpop.f32.mrb[0].mxu0
      %v1317 = vadd.f32 %v1020, %v1316
      %v1318 = vpop.f32.mrb[0].mxu0
      %v1319 = vpop.f32.mrb[0].mxu0
      %v1320 = vadd.f32 %v1023, %v1319
      %v1321 = vpop.f32.mrb[0].mxu0
      %1322 = vmatprep.mubr.bf16.mxu0 0
      %1323 = vmatmul.mubr.bf16.gmra.mrb[0].mxu0 %v608
      %v1324 = vpop.f32.mrb[0].mxu0
      %v1325 = vadd.f32 %v1028, %v1324
      %v1326 = vpop.f32.mrb[0].mxu0
      %v1327 = vpop.f32.mrb[0].mxu0
      %v1328 = vadd.f32 %v1031, %v1327
      %v1329 = vpop.f32.mrb[0].mxu0
      %1330 = vmatprep.mubr.bf16.mxu0 0
      %1331 = vmatmul.mubr.bf16.gmra.mrb[0].mxu0 %v609
      %v1332 = vpop.f32.mrb[0].mxu0
      %v1333 = vadd.f32 %v1036, %v1332
      %v1334 = vpop.f32.mrb[0].mxu0
      %v1335 = vpop.f32.mrb[0].mxu0
      %v1336 = vadd.f32 %v1039, %v1335
      %v1337 = vpop.f32.mrb[0].mxu0
      %1338 = vmatprep.mubr.bf16.mxu0 0
      %1339 = vmatmul.mubr.bf16.gmra.mrb[0].mxu0 %v610
      %v1340 = vpop.f32.mrb[0].mxu0
      %v1341 = vadd.f32 %v1044, %v1340
      %v1342 = vpop.f32.mrb[0].mxu0
      %v1343 = vpop.f32.mrb[0].mxu0
      %v1344 = vadd.f32 %v1047, %v1343
      %v1345 = vpop.f32.mrb[0].mxu0
      %1346 = vmatprep.mubr.bf16.mxu0 0
      %1347 = vmatmul.mubr.bf16.gmra.mrb[0].mxu0 %v611
      %v1348 = vpop.f32.mrb[0].mxu0
      %v1349 = vadd.f32 %v1052, %v1348
      %v1350 = vpop.f32.mrb[0].mxu0
      %v1351 = vpop.f32.mrb[0].mxu0
      %v1352 = vadd.f32 %v1055, %v1351
      %v1353 = vpop.f32.mrb[0].mxu0
      %1354 = vmatprep.mubr.bf16.mxu0 0
      %1355 = vmatmul.mubr.bf16.gmra.mrb[0].mxu0 %v612
      %v1356 = vpop.f32.mrb[0].mxu0
      %v1357 = vadd.f32 %v1060, %v1356
      %v1358 = vpop.f32.mrb[0].mxu0
      %v1359 = vpop.f32.mrb[0].mxu0
      %v1360 = vadd.f32 %v1063, %v1359
      %v1361 = vpop.f32.mrb[0].mxu0
      %1362 = vmatprep.mubr.bf16.mxu0 0
      %1363 = vmatmul.mubr.bf16.gmra.mrb[0].mxu0 %v613
      %v1364 = vpop.f32.mrb[0].mxu0
      %v1365 = vadd.f32 %v1068, %v1364
      %v1366 = vpop.f32.mrb[0].mxu0
      %v1367 = vpop.f32.mrb[0].mxu0
      %v1368 = vadd.f32 %v1071, %v1367
      %v1369 = vpop.f32.mrb[0].mxu0
      %1370 = vmatprep.mubr.bf16.mxu0 0
      %1371 = vmatmul.mubr.bf16.gmra.mrb[0].mxu0 %v614
      %v1372 = vpop.f32.mrb[0].mxu0
      %v1373 = vadd.f32 %v1076, %v1372
      %v1374 = vpop.f32.mrb[0].mxu0
      %v1375 = vpop.f32.mrb[0].mxu0
      %v1376 = vadd.f32 %v1079, %v1375
      %v1377 = vpop.f32.mrb[0].mxu0
      %1378 = vmatprep.mubr.bf16.mxu0 0
      %1379 = vmatmul.mubr.bf16.gmra.mrb[0].mxu0 %v615
      %v1380 = vpop.f32.mrb[0].mxu0
      %v1381 = vadd.f32 %v1084, %v1380
      %v1382 = vpop.f32.mrb[0].mxu0
      %v1383 = vpop.f32.mrb[0].mxu0
      %v1384 = vadd.f32 %v1087, %v1383
      %v1385 = vpop.f32.mrb[0].mxu0
      %1386 = vmatprep.mubr.bf16.mxu0 0
      %1387 = vmatmul.mubr.bf16.gmra.mrb[0].mxu0 %v616
      %v1388 = vpop.f32.mrb[0].mxu0
      %v1389 = vadd.f32 %v1092, %v1388
      %v1390 = vpop.f32.mrb[0].mxu0
      %v1391 = vpop.f32.mrb[0].mxu0
      %v1392 = vadd.f32 %v1095, %v1391
      %v1393 = vpop.f32.mrb[0].mxu0
      %1394 = vmatprep.mubr.bf16.mxu0 0
      %1395 = vmatmul.mubr.bf16.gmra.mrb[0].mxu0 %v617
      %v1396 = vpop.f32.mrb[0].mxu0
      %v1397 = vadd.f32 %v1100, %v1396
      %v1398 = vpop.f32.mrb[0].mxu0
      %v1399 = vpop.f32.mrb[0].mxu0
      %v1400 = vadd.f32 %v1103, %v1399
      %v1401 = vpop.f32.mrb[0].mxu0
      %1402 = vmatprep.mubr.bf16.mxu0 0
      %1403 = vmatmul.mubr.bf16.gmra.mrb[0].mxu0 %v618
      %v1404 = vpop.f32.mrb[0].mxu0
      %v1405 = vadd.f32 %v1108, %v1404
      %v1406 = vpop.f32.mrb[0].mxu0
      %v1407 = vpop.f32.mrb[0].mxu0
      %v1408 = vadd.f32 %v1111, %v1407
      %v1409 = vpop.f32.mrb[0].mxu0
      %1410 = vdwg.mxu0
      %v1411 = vld [vmem:[%s408] sm:$0xe]
      %s1412 = scalar_lea.vmem %s2, 128
      %v1413 = vld [vmem:[%s1412] sm:$0xf]
      %v1414 = vld [vmem:[%s1412 + $0x4] sm:$0xf]
      %v1415 = vld [vmem:[%s1412 + $0x8] sm:$0xf]
      %v1416 = vld [vmem:[%s1412 + $0xc] sm:$0xf]
      %v1417 = vld [vmem:[%s1412 + $0x10] sm:$0xf]
      %v1418 = vld [vmem:[%s1412 + $0x14] sm:$0xf]
      %v1419 = vld [vmem:[%s1412 + $0x18] sm:$0xf]
      %v1420 = vld [vmem:[%s1412 + $0x1c] sm:$0xf]
      %v1421 = vld [vmem:[%s1412 + $0x20] sm:$0xf]
      %v1422 = vld [vmem:[%s1412 + $0x24] sm:$0xf]
      %v1423 = vld [vmem:[%s1412 + $0x28] sm:$0xf]
      %v1424 = vld [vmem:[%s1412 + $0x2c] sm:$0xf]
      %v1425 = vld [vmem:[%s1412 + $0x30] sm:$0xf]
      %v1426 = vld [vmem:[%s1412 + $0x34] sm:$0xf]
      %v1427 = vld [vmem:[%s1412 + $0x38] sm:$0xf]
      %v1428 = vld [vmem:[%s1412 + $0x3c] sm:$0xf]
      %v1430 = vunpack.c.l.b16 %v1411
      %v1431 = vpack.c.b16 %v547, %v1430
      %vm1432 = vcmask 1046528
      %v1433 = vrot.slane %v1431, 1
      %v1434 = vrot.slane %v596, 1
      %v1435 = vsel %vm1432, %v1433, %v1434
      %v1436 = vrot.slane %v597, 1
      %v1437 = vsel %vm1432, %v1434, %v1436
      %v1438 = vrot.slane %v598, 1
      %v1439 = vsel %vm1432, %v1436, %v1438
      %v1440 = vrot.slane %v599, 1
      %v1441 = vsel %vm1432, %v1438, %v1440
      %v1442 = vrot.slane %v600, 1
      %v1443 = vsel %vm1432, %v1440, %v1442
      %v1444 = vrot.slane %v601, 1
      %v1445 = vsel %vm1432, %v1442, %v1444
      %v1446 = vrot.slane %v602, 1
      %v1447 = vsel %vm1432, %v1444, %v1446
      %v1448 = vrot.slane %v603, 1
      %v1449 = vsel %vm1432, %v1446, %v1448
      %v1450 = vrot.slane %v604, 1
      %v1451 = vsel %vm1432, %v1448, %v1450
      %v1452 = vrot.slane %v605, 1
      %v1453 = vsel %vm1432, %v1450, %v1452
      %v1454 = vrot.slane %v606, 1
      %v1455 = vsel %vm1432, %v1452, %v1454
      %v1456 = vrot.slane %v607, 1
      %v1457 = vsel %vm1432, %v1454, %v1456
      %v1458 = vrot.slane %v608, 1
      %v1459 = vsel %vm1432, %v1456, %v1458
      %v1460 = vrot.slane %v609, 1
      %v1461 = vsel %vm1432, %v1458, %v1460
      %v1462 = vrot.slane %v610, 1
      %v1463 = vsel %vm1432, %v1460, %v1462
      %v1464 = vrot.slane %v611, 1
      %v1465 = vsel %vm1432, %v1462, %v1464
      %v1466 = vrot.slane %v612, 1
      %v1467 = vsel %vm1432, %v1464, %v1466
      %v1468 = vrot.slane %v613, 1
      %v1469 = vsel %vm1432, %v1466, %v1468
      %v1470 = vrot.slane %v614, 1
      %v1471 = vsel %vm1432, %v1468, %v1470
      %v1472 = vrot.slane %v615, 1
      %v1473 = vsel %vm1432, %v1470, %v1472
      %v1474 = vrot.slane %v616, 1
      %v1475 = vsel %vm1432, %v1472, %v1474
      %v1476 = vrot.slane %v617, 1
      %v1477 = vsel %vm1432, %v1474, %v1476
      %v1478 = vrot.slane %v618, 1
      %v1479 = vsel %vm1432, %v1476, %v1478
      %v1480 = vrot.slane %v619, 1
      %v1481 = vsel %vm1432, %v1478, %v1480
      %v1522 = vunpack.c.l.b16 %v1413
      %v1523 = vunpack.c.l.b16 %v1414
      %v1524 = vunpack.c.l.b16 %v1415
      %v1525 = vunpack.c.l.b16 %v1416
      %v1526 = vunpack.c.l.b16 %v1417
      %v1527 = vunpack.c.l.b16 %v1418
      %v1528 = vunpack.c.l.b16 %v1419
      %v1529 = vunpack.c.l.b16 %v1420
      %v1530 = vunpack.c.l.b16 %v1421
      %v1531 = vunpack.c.l.b16 %v1422
      %v1532 = vunpack.c.l.b16 %v1423
      %v1533 = vunpack.c.l.b16 %v1424
      %v1534 = vunpack.c.l.b16 %v1425
      %v1535 = vunpack.c.l.b16 %v1426
      %v1536 = vunpack.c.l.b16 %v1427
      %v1537 = vunpack.c.l.b16 %v1428
      %v1538 = vpack.c.b16 %v1523, %v1522
      %v1539 = vpack.c.b16 %v1525, %v1524
      %v1540 = vpack.c.b16 %v1527, %v1526
      %v1541 = vpack.c.b16 %v1529, %v1528
      %v1542 = vpack.c.b16 %v1531, %v1530
      %v1543 = vpack.c.b16 %v1533, %v1532
      %v1544 = vpack.c.b16 %v1535, %v1534
      %v1545 = vpack.c.b16 %v1537, %v1536
      %1554 = vmatprep.subr.bf16.mxu0 0
      %1555 = vmatpush1.bf16.msra.mxu0 %v1538
      %1556 = vmatprep.subr.bf16.mxu0 0
      %1557 = vmatpush1.bf16.msra.mxu0 %v1539
      %1558 = vmatprep.subr.bf16.mxu0 0
      %1559 = vmatpush1.bf16.msra.mxu0 %v1540
      %1560 = vmatprep.subr.bf16.mxu0 0
      %1561 = vmatpush1.bf16.msra.mxu0 %v1541
      %1562 = vmatprep.subr.bf16.mxu0 0
      %1563 = vmatpush1.bf16.msra.mxu0 %v1542
      %1564 = vmatprep.subr.bf16.mxu0 0
      %1565 = vmatpush1.bf16.msra.mxu0 %v1543
      %1566 = vmatprep.subr.bf16.mxu0 0
      %1567 = vmatpush1.bf16.msra.mxu0 %v1544
      %1568 = vmatprep.subr.bf16.mxu0 0
      %1569 = vmatpush1.bf16.msra.mxu0 %v1545
      %1570 = vmatprep.subr.bf16.mxu0 0
      %1571 = vmatpush1.bf16.msra.mxu0 0
      %1572 = vmatprep.subr.bf16.mxu0 0
      %1573 = vmatpush1.bf16.msra.mxu0 0
      %1574 = vmatprep.subr.bf16.mxu0 0
      %1575 = vmatpush1.bf16.msra.mxu0 0
      %1576 = vmatprep.subr.bf16.mxu0 0
      %1577 = vmatpush1.bf16.msra.mxu0 0
      %1578 = vmatprep.subr.bf16.mxu0 0
      %1579 = vmatpush1.bf16.msra.mxu0 0
      %1580 = vmatprep.subr.bf16.mxu0 0
      %1581 = vmatpush1.bf16.msra.mxu0 0
      %1582 = vmatprep.subr.bf16.mxu0 0
      %1583 = vmatpush1.bf16.msra.mxu0 0
      %1584 = vmatprep.subr.bf16.mxu0 0
      %1585 = vmatpush1.bf16.msra.mxu0 0
      %1586 = vmatprep.mubr.bf16.mxu0 0
      %1587 = vmatmul.mubr.bf16.gmra.mrb[0].mxu0 %v1435
      %v1588 = vpop.f32.mrb[0].mxu0
      %v1589 = vadd.f32 0.0, %v1588
      %v1590 = vpop.f32.mrb[0].mxu0
      %v1591 = vpop.f32.mrb[0].mxu0
      %v1592 = vadd.f32 0.0, %v1591
      %v1593 = vpop.f32.mrb[0].mxu0
      %1594 = vmatprep.mubr.bf16.mxu0 0
      %1595 = vmatmul.mubr.bf16.gmra.mrb[0].mxu0 %v1437
      %v1596 = vpop.f32.mrb[0].mxu0
      %v1597 = vadd.f32 0.0, %v1596
      %v1598 = vpop.f32.mrb[0].mxu0
      %v1599 = vpop.f32.mrb[0].mxu0
      %v1600 = vadd.f32 0.0, %v1599
      %v1601 = vpop.f32.mrb[0].mxu0
      %1602 = vmatprep.mubr.bf16.mxu0 0
      %1603 = vmatmul.mubr.bf16.gmra.mrb[0].mxu0 %v1439
      %v1604 = vpop.f32.mrb[0].mxu0
      %v1605 = vadd.f32 0.0, %v1604
      %v1606 = vpop.f32.mrb[0].mxu0
      %v1607 = vpop.f32.mrb[0].mxu0
      %v1608 = vadd.f32 0.0, %v1607
      %v1609 = vpop.f32.mrb[0].mxu0
      %1610 = vmatprep.mubr.bf16.mxu0 0
      %1611 = vmatmul.mubr.bf16.gmra.mrb[0].mxu0 %v1441
      %v1612 = vpop.f32.mrb[0].mxu0
      %v1613 = vadd.f32 0.0, %v1612
      %v1614 = vpop.f32.mrb[0].mxu0
      %v1615 = vpop.f32.mrb[0].mxu0
      %v1616 = vadd.f32 0.0, %v1615
      %v1617 = vpop.f32.mrb[0].mxu0
      %1618 = vmatprep.mubr.bf16.mxu0 0
      %1619 = vmatmul.mubr.bf16.gmra.mrb[0].mxu0 %v1443
      %v1620 = vpop.f32.mrb[0].mxu0
      %v1621 = vadd.f32 0.0, %v1620
      %v1622 = vpop.f32.mrb[0].mxu0
      %v1623 = vpop.f32.mrb[0].mxu0
      %v1624 = vadd.f32 0.0, %v1623
      %v1625 = vpop.f32.mrb[0].mxu0
      %1626 = vmatprep.mubr.bf16.mxu0 0
      %1627 = vmatmul.mubr.bf16.gmra.mrb[0].mxu0 %v1445
      %v1628 = vpop.f32.mrb[0].mxu0
      %v1629 = vadd.f32 0.0, %v1628
      %v1630 = vpop.f32.mrb[0].mxu0
      %v1631 = vpop.f32.mrb[0].mxu0
      %v1632 = vadd.f32 0.0, %v1631
      %v1633 = vpop.f32.mrb[0].mxu0
      %1634 = vmatprep.mubr.bf16.mxu0 0
      %1635 = vmatmul.mubr.bf16.gmra.mrb[0].mxu0 %v1447
      %v1636 = vpop.f32.mrb[0].mxu0
      %v1637 = vadd.f32 0.0, %v1636
      %v1638 = vpop.f32.mrb[0].mxu0
      %v1639 = vpop.f32.mrb[0].mxu0
      %v1640 = vadd.f32 0.0, %v1639
      %v1641 = vpop.f32.mrb[0].mxu0
      %1642 = vmatprep.mubr.bf16.mxu0 0
      %1643 = vmatmul.mubr.bf16.gmra.mrb[0].mxu0 %v1449
      %v1644 = vpop.f32.mrb[0].mxu0
      %v1645 = vadd.f32 0.0, %v1644
      %v1646 = vpop.f32.mrb[0].mxu0
      %v1647 = vpop.f32.mrb[0].mxu0
      %v1648 = vadd.f32 0.0, %v1647
      %v1649 = vpop.f32.mrb[0].mxu0
      %1650 = vmatprep.mubr.bf16.mxu0 0
      %1651 = vmatmul.mubr.bf16.gmra.mrb[0].mxu0 %v1451
      %v1652 = vpop.f32.mrb[0].mxu0
      %v1653 = vadd.f32 0.0, %v1652
      %v1654 = vpop.f32.mrb[0].mxu0
      %v1655 = vpop.f32.mrb[0].mxu0
      %v1656 = vadd.f32 0.0, %v1655
      %v1657 = vpop.f32.mrb[0].mxu0
      %1658 = vmatprep.mubr.bf16.mxu0 0
      %1659 = vmatmul.mubr.bf16.gmra.mrb[0].mxu0 %v1453
      %v1660 = vpop.f32.mrb[0].mxu0
      %v1661 = vadd.f32 0.0, %v1660
      %v1662 = vpop.f32.mrb[0].mxu0
      %v1663 = vpop.f32.mrb[0].mxu0
      %v1664 = vadd.f32 0.0, %v1663
      %v1665 = vpop.f32.mrb[0].mxu0
      %1666 = vmatprep.mubr.bf16.mxu0 0
      %1667 = vmatmul.mubr.bf16.gmra.mrb[0].mxu0 %v1455
      %v1668 = vpop.f32.mrb[0].mxu0
      %v1669 = vadd.f32 0.0, %v1668
      %v1670 = vpop.f32.mrb[0].mxu0
      %v1671 = vpop.f32.mrb[0].mxu0
      %v1672 = vadd.f32 0.0, %v1671
      %v1673 = vpop.f32.mrb[0].mxu0
      %1674 = vmatprep.mubr.bf16.mxu0 0
      %1675 = vmatmul.mubr.bf16.gmra.mrb[0].mxu0 %v1457
      %v1676 = vpop.f32.mrb[0].mxu0
      %v1677 = vadd.f32 0.0, %v1676
      %v1678 = vpop.f32.mrb[0].mxu0
      %v1679 = vpop.f32.mrb[0].mxu0
      %v1680 = vadd.f32 0.0, %v1679
      %v1681 = vpop.f32.mrb[0].mxu0
      %1682 = vmatprep.mubr.bf16.mxu0 0
      %1683 = vmatmul.mubr.bf16.gmra.mrb[0].mxu0 %v1459
      %v1684 = vpop.f32.mrb[0].mxu0
      %v1685 = vadd.f32 0.0, %v1684
      %v1686 = vpop.f32.mrb[0].mxu0
      %v1687 = vpop.f32.mrb[0].mxu0
      %v1688 = vadd.f32 0.0, %v1687
      %v1689 = vpop.f32.mrb[0].mxu0
      %1690 = vmatprep.mubr.bf16.mxu0 0
      %1691 = vmatmul.mubr.bf16.gmra.mrb[0].mxu0 %v1461
      %v1692 = vpop.f32.mrb[0].mxu0
      %v1693 = vadd.f32 0.0, %v1692
      %v1694 = vpop.f32.mrb[0].mxu0
      %v1695 = vpop.f32.mrb[0].mxu0
      %v1696 = vadd.f32 0.0, %v1695
      %v1697 = vpop.f32.mrb[0].mxu0
      %1698 = vmatprep.mubr.bf16.mxu0 0
      %1699 = vmatmul.mubr.bf16.gmra.mrb[0].mxu0 %v1463
      %v1700 = vpop.f32.mrb[0].mxu0
      %v1701 = vadd.f32 0.0, %v1700
      %v1702 = vpop.f32.mrb[0].mxu0
      %v1703 = vpop.f32.mrb[0].mxu0
      %v1704 = vadd.f32 0.0, %v1703
      %v1705 = vpop.f32.mrb[0].mxu0
      %1706 = vmatprep.mubr.bf16.mxu0 0
      %1707 = vmatmul.mubr.bf16.gmra.mrb[0].mxu0 %v1465
      %v1708 = vpop.f32.mrb[0].mxu0
      %v1709 = vadd.f32 0.0, %v1708
      %v1710 = vpop.f32.mrb[0].mxu0
      %v1711 = vpop.f32.mrb[0].mxu0
      %v1712 = vadd.f32 0.0, %v1711
      %v1713 = vpop.f32.mrb[0].mxu0
      %1714 = vmatprep.mubr.bf16.mxu0 0
      %1715 = vmatmul.mubr.bf16.gmra.mrb[0].mxu0 %v1467
      %v1716 = vpop.f32.mrb[0].mxu0
      %v1717 = vadd.f32 0.0, %v1716
      %v1718 = vpop.f32.mrb[0].mxu0
      %v1719 = vpop.f32.mrb[0].mxu0
      %v1720 = vadd.f32 0.0, %v1719
      %v1721 = vpop.f32.mrb[0].mxu0
      %1722 = vmatprep.mubr.bf16.mxu0 0
      %1723 = vmatmul.mubr.bf16.gmra.mrb[0].mxu0 %v1469
      %v1724 = vpop.f32.mrb[0].mxu0
      %v1725 = vadd.f32 0.0, %v1724
      %v1726 = vpop.f32.mrb[0].mxu0
      %v1727 = vpop.f32.mrb[0].mxu0
      %v1728 = vadd.f32 0.0, %v1727
      %v1729 = vpop.f32.mrb[0].mxu0
      %1730 = vmatprep.mubr.bf16.mxu0 0
      %1731 = vmatmul.mubr.bf16.gmra.mrb[0].mxu0 %v1471
      %v1732 = vpop.f32.mrb[0].mxu0
      %v1733 = vadd.f32 0.0, %v1732
      %v1734 = vpop.f32.mrb[0].mxu0
      %v1735 = vpop.f32.mrb[0].mxu0
      %v1736 = vadd.f32 0.0, %v1735
      %v1737 = vpop.f32.mrb[0].mxu0
      %1738 = vmatprep.mubr.bf16.mxu0 0
      %1739 = vmatmul.mubr.bf16.gmra.mrb[0].mxu0 %v1473
      %v1740 = vpop.f32.mrb[0].mxu0
      %v1741 = vadd.f32 0.0, %v1740
      %v1742 = vpop.f32.mrb[0].mxu0
      %v1743 = vpop.f32.mrb[0].mxu0
      %v1744 = vadd.f32 0.0, %v1743
      %v1745 = vpop.f32.mrb[0].mxu0
      %1746 = vmatprep.mubr.bf16.mxu0 0
      %1747 = vmatmul.mubr.bf16.gmra.mrb[0].mxu0 %v1475
      %v1748 = vpop.f32.mrb[0].mxu0
      %v1749 = vadd.f32 0.0, %v1748
      %v1750 = vpop.f32.mrb[0].mxu0
      %v1751 = vpop.f32.mrb[0].mxu0
      %v1752 = vadd.f32 0.0, %v1751
      %v1753 = vpop.f32.mrb[0].mxu0
      %1754 = vmatprep.mubr.bf16.mxu0 0
      %1755 = vmatmul.mubr.bf16.gmra.mrb[0].mxu0 %v1477
      %v1756 = vpop.f32.mrb[0].mxu0
      %v1757 = vadd.f32 0.0, %v1756
      %v1758 = vpop.f32.mrb[0].mxu0
      %v1759 = vpop.f32.mrb[0].mxu0
      %v1760 = vadd.f32 0.0, %v1759
      %v1761 = vpop.f32.mrb[0].mxu0
      %1762 = vmatprep.mubr.bf16.mxu0 0
      %1763 = vmatmul.mubr.bf16.gmra.mrb[0].mxu0 %v1479
      %v1764 = vpop.f32.mrb[0].mxu0
      %v1765 = vadd.f32 0.0, %v1764
      %v1766 = vpop.f32.mrb[0].mxu0
      %v1767 = vpop.f32.mrb[0].mxu0
      %v1768 = vadd.f32 0.0, %v1767
      %v1769 = vpop.f32.mrb[0].mxu0
      %1770 = vmatprep.mubr.bf16.mxu0 0
      %1771 = vmatmul.mubr.bf16.gmra.mrb[0].mxu0 %v1481
      %v1772 = vpop.f32.mrb[0].mxu0
      %v1773 = vadd.f32 0.0, %v1772
      %v1774 = vpop.f32.mrb[0].mxu0
      %v1775 = vpop.f32.mrb[0].mxu0
      %v1776 = vadd.f32 0.0, %v1775
      %v1777 = vpop.f32.mrb[0].mxu0
      %1778 = vdwg.mxu0
      %v1779 = vadd.f32 %v1221, %v1589
      %v1780 = vadd.f32 %v1224, %v1592
      %v1781 = vadd.f32 %v1229, %v1597
      %v1782 = vadd.f32 %v1232, %v1600
      %v1783 = vadd.f32 %v1237, %v1605
      %v1784 = vadd.f32 %v1240, %v1608
      %v1785 = vadd.f32 %v1245, %v1613
      %v1786 = vadd.f32 %v1248, %v1616
      %v1787 = vadd.f32 %v1253, %v1621
      %v1788 = vadd.f32 %v1256, %v1624
      %v1789 = vadd.f32 %v1261, %v1629
      %v1790 = vadd.f32 %v1264, %v1632
      %v1791 = vadd.f32 %v1269, %v1637
      %v1792 = vadd.f32 %v1272, %v1640
      %v1793 = vadd.f32 %v1277, %v1645
      %v1794 = vadd.f32 %v1280, %v1648
      %v1795 = vadd.f32 %v1285, %v1653
      %v1796 = vadd.f32 %v1288, %v1656
      %v1797 = vadd.f32 %v1293, %v1661
      %v1798 = vadd.f32 %v1296, %v1664
      %v1799 = vadd.f32 %v1301, %v1669
      %v1800 = vadd.f32 %v1304, %v1672
      %v1801 = vadd.f32 %v1309, %v1677
      %v1802 = vadd.f32 %v1312, %v1680
      %v1803 = vadd.f32 %v1317, %v1685
      %v1804 = vadd.f32 %v1320, %v1688
      %v1805 = vadd.f32 %v1325, %v1693
      %v1806 = vadd.f32 %v1328, %v1696
      %v1807 = vadd.f32 %v1333, %v1701
      %v1808 = vadd.f32 %v1336, %v1704
      %v1809 = vadd.f32 %v1341, %v1709
      %v1810 = vadd.f32 %v1344, %v1712
      %v1811 = vadd.f32 %v1349, %v1717
      %v1812 = vadd.f32 %v1352, %v1720
      %v1813 = vadd.f32 %v1357, %v1725
      %v1814 = vadd.f32 %v1360, %v1728
      %v1815 = vadd.f32 %v1365, %v1733
      %v1816 = vadd.f32 %v1368, %v1736
      %v1817 = vadd.f32 %v1373, %v1741
      %v1818 = vadd.f32 %v1376, %v1744
      %v1819 = vadd.f32 %v1381, %v1749
      %v1820 = vadd.f32 %v1384, %v1752
      %v1821 = vadd.f32 %v1389, %v1757
      %v1822 = vadd.f32 %v1392, %v1760
      %v1823 = vadd.f32 %v1397, %v1765
      %v1824 = vadd.f32 %v1400, %v1768
      %v1825 = vadd.f32 %v1405, %v1773
      %v1826 = vadd.f32 %v1408, %v1776
      %v1827 = vld [vmem:[%s408 + $0xc] sm:$0xf]
      %v1828 = vld [vmem:[%s408 + $0x10] sm:$0xf]
      %v1829 = vld [vmem:[%s408 + $0x14] sm:$0xf]
      %v1830 = vld [vmem:[%s408 + $0x18] sm:$0xf]
      %v1831 = vld [vmem:[%s408 + $0x1c] sm:$0xf]
      %v1832 = vld [vmem:[%s408 + $0x20] sm:$0xf]
      %v1833 = vld [vmem:[%s408 + $0x24] sm:$0xf]
      %v1834 = vld [vmem:[%s408 + $0x28] sm:$0xf]
      %v1835 = vld [vmem:[%s408 + $0x2c] sm:$0xf]
      %v1836 = vld [vmem:[%s408 + $0x30] sm:$0xf]
      %v1837 = vld [vmem:[%s408 + $0x34] sm:$0xf]
      %v1838 = vld [vmem:[%s408 + $0x38] sm:$0xf]
      %v1839 = vld [vmem:[%s408 + $0x3c] sm:$0xf]
      %v1840 = vld [vmem:[%s408 + $0x40] sm:$0xf]
      %v1841 = vld [vmem:[%s408 + $0x44] sm:$0xf]
      %v1842 = vld [vmem:[%s408 + $0x48] sm:$0xf]
      %v1843 = vld [vmem:[%s408 + $0x4c] sm:$0xf]
      %v1844 = vld [vmem:[%s408 + $0x50] sm:$0xf]
      %v1845 = vld [vmem:[%s408 + $0x54] sm:$0xf]
      %v1846 = vld [vmem:[%s408 + $0x58] sm:$0xf]
      %v1847 = vld [vmem:[%s408 + $0x5c] sm:$0xf]
      %v1848 = vld [vmem:[%s408 + $0x60] sm:$0xf]
      %v1849 = vld [vmem:[%s408 + $0x64] sm:$0xf]
      %v1850 = vld [vmem:[%s408 + $0x68] sm:$0xf]
      %v1851 = vld [vmem:[%s408 + $0x6c] sm:$0xf]
      %v1852 = vld [vmem:[%s408 + $0x70] sm:$0xf]
      %v1853 = vld [vmem:[%s408 + $0x74] sm:$0xf]
      %v1854 = vld [vmem:[%s408 + $0x78] sm:$0xf]
      %v1855 = vld [vmem:[%s408 + $0x7c] sm:$0xf]
      %v1856 = vld [vmem:[%s408 + $0x80] sm:$0xf]
      %v1857 = vld [vmem:[%s408 + $0x84] sm:$0xf]
      %v1858 = vld [vmem:[%s408 + $0x88] sm:$0xf]
      %v1859 = vld [vmem:[%s408 + $0x8c] sm:$0xf]
      %v1860 = vld [vmem:[%s408 + $0x90] sm:$0xf]
      %v1861 = vld [vmem:[%s408 + $0x94] sm:$0xf]
      %v1862 = vld [vmem:[%s408 + $0x98] sm:$0xf]
      %v1863 = vld [vmem:[%s408 + $0x9c] sm:$0xf]
      %v1864 = vld [vmem:[%s408 + $0xa0] sm:$0xf]
      %v1865 = vld [vmem:[%s408 + $0xa4] sm:$0xf]
      %v1866 = vld [vmem:[%s408 + $0xa8] sm:$0xf]
      %v1867 = vld [vmem:[%s408 + $0xac] sm:$0xf]
      %v1868 = vld [vmem:[%s408 + $0xb0] sm:$0xf]
      %v1869 = vld [vmem:[%s408 + $0xb4] sm:$0xf]
      %v1870 = vld [vmem:[%s408 + $0xb8] sm:$0xf]
      %v1871 = vld [vmem:[%s408 + $0xbc] sm:$0xf]
      %v1872 = vld [vmem:[%s408 + $0xc0] sm:$0xf]
      %v1873 = vld [vmem:[%s408 + $0xc4] sm:$0xf]
      %v1874 = vld [vmem:[%s408 + $0xc8] sm:$0xf]
      %s1875 = scalar_lea.vmem %s2, 192
      %v1876 = vld [vmem:[%s1875] sm:$0xf]
      %v1877 = vld [vmem:[%s1875 + $0x4] sm:$0xf]
      %v1878 = vld [vmem:[%s1875 + $0x8] sm:$0xf]
      %v1879 = vld [vmem:[%s1875 + $0xc] sm:$0xf]
      %v1880 = vld [vmem:[%s1875 + $0x10] sm:$0xf]
      %v1881 = vld [vmem:[%s1875 + $0x14] sm:$0xf]
      %v1882 = vld [vmem:[%s1875 + $0x18] sm:$0xf]
      %v1883 = vld [vmem:[%s1875 + $0x1c] sm:$0xf]
      %v1884 = vld [vmem:[%s1875 + $0x20] sm:$0xf]
      %v1885 = vld [vmem:[%s1875 + $0x24] sm:$0xf]
      %v1886 = vld [vmem:[%s1875 + $0x28] sm:$0xf]
      %v1887 = vld [vmem:[%s1875 + $0x2c] sm:$0xf]
      %v1888 = vld [vmem:[%s1875 + $0x30] sm:$0xf]
      %v1889 = vld [vmem:[%s1875 + $0x34] sm:$0xf]
      %v1890 = vld [vmem:[%s1875 + $0x38] sm:$0xf]
      %v1891 = vld [vmem:[%s1875 + $0x3c] sm:$0xf]
      %v1940 = vunpack.c.l.b16 %v1827
      %v1941 = vunpack.c.l.b16 %v1828
      %v1942 = vunpack.c.l.b16 %v1829
      %v1943 = vunpack.c.l.b16 %v1830
      %v1944 = vunpack.c.l.b16 %v1831
      %v1945 = vunpack.c.l.b16 %v1832
      %v1946 = vunpack.c.l.b16 %v1833
      %v1947 = vunpack.c.l.b16 %v1834
      %v1948 = vunpack.c.l.b16 %v1835
      %v1949 = vunpack.c.l.b16 %v1836
      %v1950 = vunpack.c.l.b16 %v1837
      %v1951 = vunpack.c.l.b16 %v1838
      %v1952 = vunpack.c.l.b16 %v1839
      %v1953 = vunpack.c.l.b16 %v1840
      %v1954 = vunpack.c.l.b16 %v1841
      %v1955 = vunpack.c.l.b16 %v1842
      %v1956 = vunpack.c.l.b16 %v1843
      %v1957 = vunpack.c.l.b16 %v1844
      %v1958 = vunpack.c.l.b16 %v1845
      %v1959 = vunpack.c.l.b16 %v1846
      %v1960 = vunpack.c.l.b16 %v1847
      %v1961 = vunpack.c.l.b16 %v1848
      %v1962 = vunpack.c.l.b16 %v1849
      %v1963 = vunpack.c.l.b16 %v1850
      %v1964 = vunpack.c.l.b16 %v1851
      %v1965 = vunpack.c.l.b16 %v1852
      %v1966 = vunpack.c.l.b16 %v1853
      %v1967 = vunpack.c.l.b16 %v1854
      %v1968 = vunpack.c.l.b16 %v1855
      %v1969 = vunpack.c.l.b16 %v1856
      %v1970 = vunpack.c.l.b16 %v1857
      %v1971 = vunpack.c.l.b16 %v1858
      %v1972 = vunpack.c.l.b16 %v1859
      %v1973 = vunpack.c.l.b16 %v1860
      %v1974 = vunpack.c.l.b16 %v1861
      %v1975 = vunpack.c.l.b16 %v1862
      %v1976 = vunpack.c.l.b16 %v1863
      %v1977 = vunpack.c.l.b16 %v1864
      %v1978 = vunpack.c.l.b16 %v1865
      %v1979 = vunpack.c.l.b16 %v1866
      %v1980 = vunpack.c.l.b16 %v1867
      %v1981 = vunpack.c.l.b16 %v1868
      %v1982 = vunpack.c.l.b16 %v1869
      %v1983 = vunpack.c.l.b16 %v1870
      %v1984 = vunpack.c.l.b16 %v1871
      %v1985 = vunpack.c.l.b16 %v1872
      %v1986 = vunpack.c.l.b16 %v1873
      %v1987 = vunpack.c.l.b16 %v1874
      %v1988 = vpack.c.b16 %v1941, %v1940
      %v1989 = vpack.c.b16 %v1943, %v1942
      %v1990 = vpack.c.b16 %v1945, %v1944
      %v1991 = vpack.c.b16 %v1947, %v1946
      %v1992 = vpack.c.b16 %v1949, %v1948
      %v1993 = vpack.c.b16 %v1951, %v1950
      %v1994 = vpack.c.b16 %v1953, %v1952
      %v1995 = vpack.c.b16 %v1955, %v1954
      %v1996 = vpack.c.b16 %v1957, %v1956
      %v1997 = vpack.c.b16 %v1959, %v1958
      %v1998 = vpack.c.b16 %v1961, %v1960
      %v1999 = vpack.c.b16 %v1963, %v1962
      %v2000 = vpack.c.b16 %v1965, %v1964
      %v2001 = vpack.c.b16 %v1967, %v1966
      %v2002 = vpack.c.b16 %v1969, %v1968
      %v2003 = vpack.c.b16 %v1971, %v1970
      %v2004 = vpack.c.b16 %v1973, %v1972
      %v2005 = vpack.c.b16 %v1975, %v1974
      %v2006 = vpack.c.b16 %v1977, %v1976
      %v2007 = vpack.c.b16 %v1979, %v1978
      %v2008 = vpack.c.b16 %v1981, %v1980
      %v2009 = vpack.c.b16 %v1983, %v1982
      %v2010 = vpack.c.b16 %v1985, %v1984
      %v2011 = vpack.c.b16 %v1987, %v1986
      %v2052 = vunpack.c.l.b16 %v1876
      %v2053 = vunpack.c.l.b16 %v1877
      %v2054 = vunpack.c.l.b16 %v1878
      %v2055 = vunpack.c.l.b16 %v1879
      %v2056 = vunpack.c.l.b16 %v1880
      %v2057 = vunpack.c.l.b16 %v1881
      %v2058 = vunpack.c.l.b16 %v1882
      %v2059 = vunpack.c.l.b16 %v1883
      %v2060 = vunpack.c.l.b16 %v1884
      %v2061 = vunpack.c.l.b16 %v1885
      %v2062 = vunpack.c.l.b16 %v1886
      %v2063 = vunpack.c.l.b16 %v1887
      %v2064 = vunpack.c.l.b16 %v1888
      %v2065 = vunpack.c.l.b16 %v1889
      %v2066 = vunpack.c.l.b16 %v1890
      %v2067 = vunpack.c.l.b16 %v1891
      %v2068 = vpack.c.b16 %v2053, %v2052
      %v2069 = vpack.c.b16 %v2055, %v2054
      %v2070 = vpack.c.b16 %v2057, %v2056
      %v2071 = vpack.c.b16 %v2059, %v2058
      %v2072 = vpack.c.b16 %v2061, %v2060
      %v2073 = vpack.c.b16 %v2063, %v2062
      %v2074 = vpack.c.b16 %v2065, %v2064
      %v2075 = vpack.c.b16 %v2067, %v2066
      %2084 = vmatprep.subr.bf16.mxu0 0
      %2085 = vmatpush1.bf16.msra.mxu0 %v2068
      %2086 = vmatprep.subr.bf16.mxu0 0
      %2087 = vmatpush1.bf16.msra.mxu0 %v2069
      %2088 = vmatprep.subr.bf16.mxu0 0
      %2089 = vmatpush1.bf16.msra.mxu0 %v2070
      %2090 = vmatprep.subr.bf16.mxu0 0
      %2091 = vmatpush1.bf16.msra.mxu0 %v2071
      %2092 = vmatprep.subr.bf16.mxu0 0
      %2093 = vmatpush1.bf16.msra.mxu0 %v2072
      %2094 = vmatprep.subr.bf16.mxu0 0
      %2095 = vmatpush1.bf16.msra.mxu0 %v2073
      %2096 = vmatprep.subr.bf16.mxu0 0
      %2097 = vmatpush1.bf16.msra.mxu0 %v2074
      %2098 = vmatprep.subr.bf16.mxu0 0
      %2099 = vmatpush1.bf16.msra.mxu0 %v2075
      %2100 = vmatprep.subr.bf16.mxu0 0
      %2101 = vmatpush1.bf16.msra.mxu0 0
      %2102 = vmatprep.subr.bf16.mxu0 0
      %2103 = vmatpush1.bf16.msra.mxu0 0
      %2104 = vmatprep.subr.bf16.mxu0 0
      %2105 = vmatpush1.bf16.msra.mxu0 0
      %2106 = vmatprep.subr.bf16.mxu0 0
      %2107 = vmatpush1.bf16.msra.mxu0 0
      %2108 = vmatprep.subr.bf16.mxu0 0
      %2109 = vmatpush1.bf16.msra.mxu0 0
      %2110 = vmatprep.subr.bf16.mxu0 0
      %2111 = vmatpush1.bf16.msra.mxu0 0
      %2112 = vmatprep.subr.bf16.mxu0 0
      %2113 = vmatpush1.bf16.msra.mxu0 0
      %2114 = vmatprep.subr.bf16.mxu0 0
      %2115 = vmatpush1.bf16.msra.mxu0 0
      %2116 = vmatprep.mubr.bf16.mxu0 0
      %2117 = vmatmul.mubr.bf16.gmra.mrb[0].mxu0 %v1988
      %v2118 = vpop.f32.mrb[0].mxu0
      %v2119 = vadd.f32 0.0, %v2118
      %v2120 = vpop.f32.mrb[0].mxu0
      %v2121 = vpop.f32.mrb[0].mxu0
      %v2122 = vadd.f32 0.0, %v2121
      %v2123 = vpop.f32.mrb[0].mxu0
      %2124 = vmatprep.mubr.bf16.mxu0 0
      %2125 = vmatmul.mubr.bf16.gmra.mrb[0].mxu0 %v1989
      %v2126 = vpop.f32.mrb[0].mxu0
      %v2127 = vadd.f32 0.0, %v2126
      %v2128 = vpop.f32.mrb[0].mxu0
      %v2129 = vpop.f32.mrb[0].mxu0
      %v2130 = vadd.f32 0.0, %v2129
      %v2131 = vpop.f32.mrb[0].mxu0
      %2132 = vmatprep.mubr.bf16.mxu0 0
      %2133 = vmatmul.mubr.bf16.gmra.mrb[0].mxu0 %v1990
      %v2134 = vpop.f32.mrb[0].mxu0
      %v2135 = vadd.f32 0.0, %v2134
      %v2136 = vpop.f32.mrb[0].mxu0
      %v2137 = vpop.f32.mrb[0].mxu0
      %v2138 = vadd.f32 0.0, %v2137
      %v2139 = vpop.f32.mrb[0].mxu0
      %2140 = vmatprep.mubr.bf16.mxu0 0
      %2141 = vmatmul.mubr.bf16.gmra.mrb[0].mxu0 %v1991
      %v2142 = vpop.f32.mrb[0].mxu0
      %v2143 = vadd.f32 0.0, %v2142
      %v2144 = vpop.f32.mrb[0].mxu0
      %v2145 = vpop.f32.mrb[0].mxu0
      %v2146 = vadd.f32 0.0, %v2145
      %v2147 = vpop.f32.mrb[0].mxu0
      %2148 = vmatprep.mubr.bf16.mxu0 0
      %2149 = vmatmul.mubr.bf16.gmra.mrb[0].mxu0 %v1992
      %v2150 = vpop.f32.mrb[0].mxu0
      %v2151 = vadd.f32 0.0, %v2150
      %v2152 = vpop.f32.mrb[0].mxu0
      %v2153 = vpop.f32.mrb[0].mxu0
      %v2154 = vadd.f32 0.0, %v2153
      %v2155 = vpop.f32.mrb[0].mxu0
      %2156 = vmatprep.mubr.bf16.mxu0 0
      %2157 = vmatmul.mubr.bf16.gmra.mrb[0].mxu0 %v1993
      %v2158 = vpop.f32.mrb[0].mxu0
      %v2159 = vadd.f32 0.0, %v2158
      %v2160 = vpop.f32.mrb[0].mxu0
      %v2161 = vpop.f32.mrb[0].mxu0
      %v2162 = vadd.f32 0.0, %v2161
      %v2163 = vpop.f32.mrb[0].mxu0
      %2164 = vmatprep.mubr.bf16.mxu0 0
      %2165 = vmatmul.mubr.bf16.gmra.mrb[0].mxu0 %v1994
      %v2166 = vpop.f32.mrb[0].mxu0
      %v2167 = vadd.f32 0.0, %v2166
      %v2168 = vpop.f32.mrb[0].mxu0
      %v2169 = vpop.f32.mrb[0].mxu0
      %v2170 = vadd.f32 0.0, %v2169
      %v2171 = vpop.f32.mrb[0].mxu0
      %2172 = vmatprep.mubr.bf16.mxu0 0
      %2173 = vmatmul.mubr.bf16.gmra.mrb[0].mxu0 %v1995
      %v2174 = vpop.f32.mrb[0].mxu0
      %v2175 = vadd.f32 0.0, %v2174
      %v2176 = vpop.f32.mrb[0].mxu0
      %v2177 = vpop.f32.mrb[0].mxu0
      %v2178 = vadd.f32 0.0, %v2177
      %v2179 = vpop.f32.mrb[0].mxu0
      %2180 = vmatprep.mubr.bf16.mxu0 0
      %2181 = vmatmul.mubr.bf16.gmra.mrb[0].mxu0 %v1996
      %v2182 = vpop.f32.mrb[0].mxu0
      %v2183 = vadd.f32 0.0, %v2182
      %v2184 = vpop.f32.mrb[0].mxu0
      %v2185 = vpop.f32.mrb[0].mxu0
      %v2186 = vadd.f32 0.0, %v2185
      %v2187 = vpop.f32.mrb[0].mxu0
      %2188 = vmatprep.mubr.bf16.mxu0 0
      %2189 = vmatmul.mubr.bf16.gmra.mrb[0].mxu0 %v1997
      %v2190 = vpop.f32.mrb[0].mxu0
      %v2191 = vadd.f32 0.0, %v2190
      %v2192 = vpop.f32.mrb[0].mxu0
      %v2193 = vpop.f32.mrb[0].mxu0
      %v2194 = vadd.f32 0.0, %v2193
      %v2195 = vpop.f32.mrb[0].mxu0
      %2196 = vmatprep.mubr.bf16.mxu0 0
      %2197 = vmatmul.mubr.bf16.gmra.mrb[0].mxu0 %v1998
      %v2198 = vpop.f32.mrb[0].mxu0
      %v2199 = vadd.f32 0.0, %v2198
      %v2200 = vpop.f32.mrb[0].mxu0
      %v2201 = vpop.f32.mrb[0].mxu0
      %v2202 = vadd.f32 0.0, %v2201
      %v2203 = vpop.f32.mrb[0].mxu0
      %2204 = vmatprep.mubr.bf16.mxu0 0
      %2205 = vmatmul.mubr.bf16.gmra.mrb[0].mxu0 %v1999
      %v2206 = vpop.f32.mrb[0].mxu0
      %v2207 = vadd.f32 0.0, %v2206
      %v2208 = vpop.f32.mrb[0].mxu0
      %v2209 = vpop.f32.mrb[0].mxu0
      %v2210 = vadd.f32 0.0, %v2209
      %v2211 = vpop.f32.mrb[0].mxu0
      %2212 = vmatprep.mubr.bf16.mxu0 0
      %2213 = vmatmul.mubr.bf16.gmra.mrb[0].mxu0 %v2000
      %v2214 = vpop.f32.mrb[0].mxu0
      %v2215 = vadd.f32 0.0, %v2214
      %v2216 = vpop.f32.mrb[0].mxu0
      %v2217 = vpop.f32.mrb[0].mxu0
      %v2218 = vadd.f32 0.0, %v2217
      %v2219 = vpop.f32.mrb[0].mxu0
      %2220 = vmatprep.mubr.bf16.mxu0 0
      %2221 = vmatmul.mubr.bf16.gmra.mrb[0].mxu0 %v2001
      %v2222 = vpop.f32.mrb[0].mxu0
      %v2223 = vadd.f32 0.0, %v2222
      %v2224 = vpop.f32.mrb[0].mxu0
      %v2225 = vpop.f32.mrb[0].mxu0
      %v2226 = vadd.f32 0.0, %v2225
      %v2227 = vpop.f32.mrb[0].mxu0
      %2228 = vmatprep.mubr.bf16.mxu0 0
      %2229 = vmatmul.mubr.bf16.gmra.mrb[0].mxu0 %v2002
      %v2230 = vpop.f32.mrb[0].mxu0
      %v2231 = vadd.f32 0.0, %v2230
      %v2232 = vpop.f32.mrb[0].mxu0
      %v2233 = vpop.f32.mrb[0].mxu0
      %v2234 = vadd.f32 0.0, %v2233
      %v2235 = vpop.f32.mrb[0].mxu0
      %2236 = vmatprep.mubr.bf16.mxu0 0
      %2237 = vmatmul.mubr.bf16.gmra.mrb[0].mxu0 %v2003
      %v2238 = vpop.f32.mrb[0].mxu0
      %v2239 = vadd.f32 0.0, %v2238
      %v2240 = vpop.f32.mrb[0].mxu0
      %v2241 = vpop.f32.mrb[0].mxu0
      %v2242 = vadd.f32 0.0, %v2241
      %v2243 = vpop.f32.mrb[0].mxu0
      %2244 = vmatprep.mubr.bf16.mxu0 0
      %2245 = vmatmul.mubr.bf16.gmra.mrb[0].mxu0 %v2004
      %v2246 = vpop.f32.mrb[0].mxu0
      %v2247 = vadd.f32 0.0, %v2246
      %v2248 = vpop.f32.mrb[0].mxu0
      %v2249 = vpop.f32.mrb[0].mxu0
      %v2250 = vadd.f32 0.0, %v2249
      %v2251 = vpop.f32.mrb[0].mxu0
      %2252 = vmatprep.mubr.bf16.mxu0 0
      %2253 = vmatmul.mubr.bf16.gmra.mrb[0].mxu0 %v2005
      %v2254 = vpop.f32.mrb[0].mxu0
      %v2255 = vadd.f32 0.0, %v2254
      %v2256 = vpop.f32.mrb[0].mxu0
      %v2257 = vpop.f32.mrb[0].mxu0
      %v2258 = vadd.f32 0.0, %v2257
      %v2259 = vpop.f32.mrb[0].mxu0
      %2260 = vmatprep.mubr.bf16.mxu0 0
      %2261 = vmatmul.mubr.bf16.gmra.mrb[0].mxu0 %v2006
      %v2262 = vpop.f32.mrb[0].mxu0
      %v2263 = vadd.f32 0.0, %v2262
      %v2264 = vpop.f32.mrb[0].mxu0
      %v2265 = vpop.f32.mrb[0].mxu0
      %v2266 = vadd.f32 0.0, %v2265
      %v2267 = vpop.f32.mrb[0].mxu0
      %2268 = vmatprep.mubr.bf16.mxu0 0
      %2269 = vmatmul.mubr.bf16.gmra.mrb[0].mxu0 %v2007
      %v2270 = vpop.f32.mrb[0].mxu0
      %v2271 = vadd.f32 0.0, %v2270
      %v2272 = vpop.f32.mrb[0].mxu0
      %v2273 = vpop.f32.mrb[0].mxu0
      %v2274 = vadd.f32 0.0, %v2273
      %v2275 = vpop.f32.mrb[0].mxu0
      %2276 = vmatprep.mubr.bf16.mxu0 0
      %2277 = vmatmul.mubr.bf16.gmra.mrb[0].mxu0 %v2008
      %v2278 = vpop.f32.mrb[0].mxu0
      %v2279 = vadd.f32 0.0, %v2278
      %v2280 = vpop.f32.mrb[0].mxu0
      %v2281 = vpop.f32.mrb[0].mxu0
      %v2282 = vadd.f32 0.0, %v2281
      %v2283 = vpop.f32.mrb[0].mxu0
      %2284 = vmatprep.mubr.bf16.mxu0 0
      %2285 = vmatmul.mubr.bf16.gmra.mrb[0].mxu0 %v2009
      %v2286 = vpop.f32.mrb[0].mxu0
      %v2287 = vadd.f32 0.0, %v2286
      %v2288 = vpop.f32.mrb[0].mxu0
      %v2289 = vpop.f32.mrb[0].mxu0
      %v2290 = vadd.f32 0.0, %v2289
      %v2291 = vpop.f32.mrb[0].mxu0
      %2292 = vmatprep.mubr.bf16.mxu0 0
      %2293 = vmatmul.mubr.bf16.gmra.mrb[0].mxu0 %v2010
      %v2294 = vpop.f32.mrb[0].mxu0
      %v2295 = vadd.f32 0.0, %v2294
      %v2296 = vpop.f32.mrb[0].mxu0
      %v2297 = vpop.f32.mrb[0].mxu0
      %v2298 = vadd.f32 0.0, %v2297
      %v2299 = vpop.f32.mrb[0].mxu0
      %2300 = vmatprep.mubr.bf16.mxu0 0
      %2301 = vmatmul.mubr.bf16.gmra.mrb[0].mxu0 %v2011
      %v2302 = vpop.f32.mrb[0].mxu0
      %v2303 = vadd.f32 0.0, %v2302
      %v2304 = vpop.f32.mrb[0].mxu0
      %v2305 = vpop.f32.mrb[0].mxu0
      %v2306 = vadd.f32 0.0, %v2305
      %v2307 = vpop.f32.mrb[0].mxu0
      %2308 = vdwg.mxu0
      %v2309 = vadd.f32 %v1779, %v2119
      %v2310 = vadd.f32 %v1780, %v2122
      %v2311 = vadd.f32 %v1781, %v2127
      %v2312 = vadd.f32 %v1782, %v2130
      %v2313 = vadd.f32 %v1783, %v2135
      %v2314 = vadd.f32 %v1784, %v2138
      %v2315 = vadd.f32 %v1785, %v2143
      %v2316 = vadd.f32 %v1786, %v2146
      %v2317 = vadd.f32 %v1787, %v2151
      %v2318 = vadd.f32 %v1788, %v2154
      %v2319 = vadd.f32 %v1789, %v2159
      %v2320 = vadd.f32 %v1790, %v2162
      %v2321 = vadd.f32 %v1791, %v2167
      %v2322 = vadd.f32 %v1792, %v2170
      %v2323 = vadd.f32 %v1793, %v2175
      %v2324 = vadd.f32 %v1794, %v2178
      %v2325 = vadd.f32 %v1795, %v2183
      %v2326 = vadd.f32 %v1796, %v2186
      %v2327 = vadd.f32 %v1797, %v2191
      %v2328 = vadd.f32 %v1798, %v2194
      %v2329 = vadd.f32 %v1799, %v2199
      %v2330 = vadd.f32 %v1800, %v2202
      %v2331 = vadd.f32 %v1801, %v2207
      %v2332 = vadd.f32 %v1802, %v2210
      %v2333 = vadd.f32 %v1803, %v2215
      %v2334 = vadd.f32 %v1804, %v2218
      %v2335 = vadd.f32 %v1805, %v2223
      %v2336 = vadd.f32 %v1806, %v2226
      %v2337 = vadd.f32 %v1807, %v2231
      %v2338 = vadd.f32 %v1808, %v2234
      %v2339 = vadd.f32 %v1809, %v2239
      %v2340 = vadd.f32 %v1810, %v2242
      %v2341 = vadd.f32 %v1811, %v2247
      %v2342 = vadd.f32 %v1812, %v2250
      %v2343 = vadd.f32 %v1813, %v2255
      %v2344 = vadd.f32 %v1814, %v2258
      %v2345 = vadd.f32 %v1815, %v2263
      %v2346 = vadd.f32 %v1816, %v2266
      %v2347 = vadd.f32 %v1817, %v2271
      %v2348 = vadd.f32 %v1818, %v2274
      %v2349 = vadd.f32 %v1819, %v2279
      %v2350 = vadd.f32 %v1820, %v2282
      %v2351 = vadd.f32 %v1821, %v2287
      %v2352 = vadd.f32 %v1822, %v2290
      %v2353 = vadd.f32 %v1823, %v2295
      %v2354 = vadd.f32 %v1824, %v2298
      %v2355 = vadd.f32 %v1825, %v2303
      %v2356 = vadd.f32 %v1826, %v2306
      %v2357 = vld [vmem:[%s408 + $0xc] sm:$0xf]
      %v2358 = vld [vmem:[%s408 + $0x10] sm:$0xf]
      %v2359 = vld [vmem:[%s408 + $0x14] sm:$0xf]
      %v2360 = vld [vmem:[%s408 + $0x18] sm:$0xf]
      %v2361 = vld [vmem:[%s408 + $0x1c] sm:$0xf]
      %v2362 = vld [vmem:[%s408 + $0x20] sm:$0xf]
      %v2363 = vld [vmem:[%s408 + $0x24] sm:$0xf]
      %v2364 = vld [vmem:[%s408 + $0x28] sm:$0xf]
      %v2365 = vld [vmem:[%s408 + $0x2c] sm:$0xf]
      %v2366 = vld [vmem:[%s408 + $0x30] sm:$0xf]
      %v2367 = vld [vmem:[%s408 + $0x34] sm:$0xf]
      %v2368 = vld [vmem:[%s408 + $0x38] sm:$0xf]
      %v2369 = vld [vmem:[%s408 + $0x3c] sm:$0xf]
      %v2370 = vld [vmem:[%s408 + $0x40] sm:$0xf]
      %v2371 = vld [vmem:[%s408 + $0x44] sm:$0xf]
      %v2372 = vld [vmem:[%s408 + $0x48] sm:$0xf]
      %v2373 = vld [vmem:[%s408 + $0x4c] sm:$0xf]
      %v2374 = vld [vmem:[%s408 + $0x50] sm:$0xf]
      %v2375 = vld [vmem:[%s408 + $0x54] sm:$0xf]
      %v2376 = vld [vmem:[%s408 + $0x58] sm:$0xf]
      %v2377 = vld [vmem:[%s408 + $0x5c] sm:$0xf]
      %v2378 = vld [vmem:[%s408 + $0x60] sm:$0xf]
      %v2379 = vld [vmem:[%s408 + $0x64] sm:$0xf]
      %v2380 = vld [vmem:[%s408 + $0x68] sm:$0xf]
      %v2381 = vld [vmem:[%s408 + $0x6c] sm:$0xf]
      %v2382 = vld [vmem:[%s408 + $0x70] sm:$0xf]
      %v2383 = vld [vmem:[%s408 + $0x74] sm:$0xf]
      %v2384 = vld [vmem:[%s408 + $0x78] sm:$0xf]
      %v2385 = vld [vmem:[%s408 + $0x7c] sm:$0xf]
      %v2386 = vld [vmem:[%s408 + $0x80] sm:$0xf]
      %v2387 = vld [vmem:[%s408 + $0x84] sm:$0xf]
      %v2388 = vld [vmem:[%s408 + $0x88] sm:$0xf]
      %v2389 = vld [vmem:[%s408 + $0x8c] sm:$0xf]
      %v2390 = vld [vmem:[%s408 + $0x90] sm:$0xf]
      %v2391 = vld [vmem:[%s408 + $0x94] sm:$0xf]
      %v2392 = vld [vmem:[%s408 + $0x98] sm:$0xf]
      %v2393 = vld [vmem:[%s408 + $0x9c] sm:$0xf]
      %v2394 = vld [vmem:[%s408 + $0xa0] sm:$0xf]
      %v2395 = vld [vmem:[%s408 + $0xa4] sm:$0xf]
      %v2396 = vld [vmem:[%s408 + $0xa8] sm:$0xf]
      %v2397 = vld [vmem:[%s408 + $0xac] sm:$0xf]
      %v2398 = vld [vmem:[%s408 + $0xb0] sm:$0xf]
      %v2399 = vld [vmem:[%s408 + $0xb4] sm:$0xf]
      %v2400 = vld [vmem:[%s408 + $0xb8] sm:$0xf]
      %v2401 = vld [vmem:[%s408 + $0xbc] sm:$0xf]
      %v2402 = vld [vmem:[%s408 + $0xc0] sm:$0xf]
      %v2403 = vld [vmem:[%s408 + $0xc4] sm:$0xf]
      %v2404 = vld [vmem:[%s408 + $0xc8] sm:$0xf]
      %v2405 = vld [vmem:[%s408 + $0xcc] sm:$0x1]
      %s2406 = scalar_lea.vmem %s2, 256
      %v2407 = vld [vmem:[%s2406] sm:$0xf]
      %v2408 = vld [vmem:[%s2406 + $0x4] sm:$0xf]
      %v2409 = vld [vmem:[%s2406 + $0x8] sm:$0xf]
      %v2410 = vld [vmem:[%s2406 + $0xc] sm:$0xf]
      %v2411 = vld [vmem:[%s2406 + $0x10] sm:$0xf]
      %v2412 = vld [vmem:[%s2406 + $0x14] sm:$0xf]
      %v2413 = vld [vmem:[%s2406 + $0x18] sm:$0xf]
      %v2414 = vld [vmem:[%s2406 + $0x1c] sm:$0xf]
      %v2415 = vld [vmem:[%s2406 + $0x20] sm:$0xf]
      %v2416 = vld [vmem:[%s2406 + $0x24] sm:$0xf]
      %v2417 = vld [vmem:[%s2406 + $0x28] sm:$0xf]
      %v2418 = vld [vmem:[%s2406 + $0x2c] sm:$0xf]
      %v2419 = vld [vmem:[%s2406 + $0x30] sm:$0xf]
      %v2420 = vld [vmem:[%s2406 + $0x34] sm:$0xf]
      %v2421 = vld [vmem:[%s2406 + $0x38] sm:$0xf]
      %v2422 = vld [vmem:[%s2406 + $0x3c] sm:$0xf]
      %v2472 = vunpack.c.l.b16 %v2357
      %v2473 = vunpack.c.l.b16 %v2358
      %v2474 = vunpack.c.l.b16 %v2359
      %v2475 = vunpack.c.l.b16 %v2360
      %v2476 = vunpack.c.l.b16 %v2361
      %v2477 = vunpack.c.l.b16 %v2362
      %v2478 = vunpack.c.l.b16 %v2363
      %v2479 = vunpack.c.l.b16 %v2364
      %v2480 = vunpack.c.l.b16 %v2365
      %v2481 = vunpack.c.l.b16 %v2366
      %v2482 = vunpack.c.l.b16 %v2367
      %v2483 = vunpack.c.l.b16 %v2368
      %v2484 = vunpack.c.l.b16 %v2369
      %v2485 = vunpack.c.l.b16 %v2370
      %v2486 = vunpack.c.l.b16 %v2371
      %v2487 = vunpack.c.l.b16 %v2372
      %v2488 = vunpack.c.l.b16 %v2373
      %v2489 = vunpack.c.l.b16 %v2374
      %v2490 = vunpack.c.l.b16 %v2375
      %v2491 = vunpack.c.l.b16 %v2376
      %v2492 = vunpack.c.l.b16 %v2377
      %v2493 = vunpack.c.l.b16 %v2378
      %v2494 = vunpack.c.l.b16 %v2379
      %v2495 = vunpack.c.l.b16 %v2380
      %v2496 = vunpack.c.l.b16 %v2381
      %v2497 = vunpack.c.l.b16 %v2382
      %v2498 = vunpack.c.l.b16 %v2383
      %v2499 = vunpack.c.l.b16 %v2384
      %v2500 = vunpack.c.l.b16 %v2385
      %v2501 = vunpack.c.l.b16 %v2386
      %v2502 = vunpack.c.l.b16 %v2387
      %v2503 = vunpack.c.l.b16 %v2388
      %v2504 = vunpack.c.l.b16 %v2389
      %v2505 = vunpack.c.l.b16 %v2390
      %v2506 = vunpack.c.l.b16 %v2391
      %v2507 = vunpack.c.l.b16 %v2392
      %v2508 = vunpack.c.l.b16 %v2393
      %v2509 = vunpack.c.l.b16 %v2394
      %v2510 = vunpack.c.l.b16 %v2395
      %v2511 = vunpack.c.l.b16 %v2396
      %v2512 = vunpack.c.l.b16 %v2397
      %v2513 = vunpack.c.l.b16 %v2398
      %v2514 = vunpack.c.l.b16 %v2399
      %v2515 = vunpack.c.l.b16 %v2400
      %v2516 = vunpack.c.l.b16 %v2401
      %v2517 = vunpack.c.l.b16 %v2402
      %v2518 = vunpack.c.l.b16 %v2403
      %v2519 = vunpack.c.l.b16 %v2404
      %v2520 = vunpack.c.l.b16 %v2405
      %v2521 = vpack.c.b16 %v2473, %v2472
      %v2522 = vpack.c.b16 %v2475, %v2474
      %v2523 = vpack.c.b16 %v2477, %v2476
      %v2524 = vpack.c.b16 %v2479, %v2478
      %v2525 = vpack.c.b16 %v2481, %v2480
      %v2526 = vpack.c.b16 %v2483, %v2482
      %v2527 = vpack.c.b16 %v2485, %v2484
      %v2528 = vpack.c.b16 %v2487, %v2486
      %v2529 = vpack.c.b16 %v2489, %v2488
      %v2530 = vpack.c.b16 %v2491, %v2490
      %v2531 = vpack.c.b16 %v2493, %v2492
      %v2532 = vpack.c.b16 %v2495, %v2494
      %v2533 = vpack.c.b16 %v2497, %v2496
      %v2534 = vpack.c.b16 %v2499, %v2498
      %v2535 = vpack.c.b16 %v2501, %v2500
      %v2536 = vpack.c.b16 %v2503, %v2502
      %v2537 = vpack.c.b16 %v2505, %v2504
      %v2538 = vpack.c.b16 %v2507, %v2506
      %v2539 = vpack.c.b16 %v2509, %v2508
      %v2540 = vpack.c.b16 %v2511, %v2510
      %v2541 = vpack.c.b16 %v2513, %v2512
      %v2542 = vpack.c.b16 %v2515, %v2514
      %v2543 = vpack.c.b16 %v2517, %v2516
      %v2544 = vpack.c.b16 %v2519, %v2518
      %v2545 = vpack.c.b16 %v2520, %v2520
      %v2547 = vshrl.u32 %v2521, 16
      %v2549 = vshll.u32 %v2521, 16
      %v2551 = vrot.slane %v2549, 1
      %v2552 = vor.u32 %v2547, %v2551
      %v2554 = vshll.u32 %v2522, 16
      %v2556 = vrot.slane %v2554, 1
      %v2557 = vsel %vm620, %v2552, %v2556
      %v2558 = vshrl.u32 %v2522, 16
      %v2560 = vor.u32 %v2558, %v2556
      %v2562 = vshll.u32 %v2523, 16
      %v2564 = vrot.slane %v2562, 1
      %v2565 = vsel %vm620, %v2560, %v2564
      %v2566 = vshrl.u32 %v2523, 16
      %v2568 = vor.u32 %v2566, %v2564
      %v2570 = vshll.u32 %v2524, 16
      %v2572 = vrot.slane %v2570, 1
      %v2573 = vsel %vm620, %v2568, %v2572
      %v2574 = vshrl.u32 %v2524, 16
      %v2576 = vor.u32 %v2574, %v2572
      %v2578 = vshll.u32 %v2525, 16
      %v2580 = vrot.slane %v2578, 1
      %v2581 = vsel %vm620, %v2576, %v2580
      %v2582 = vshrl.u32 %v2525, 16
      %v2584 = vor.u32 %v2582, %v2580
      %v2586 = vshll.u32 %v2526, 16
      %v2588 = vrot.slane %v2586, 1
      %v2589 = vsel %vm620, %v2584, %v2588
      %v2590 = vshrl.u32 %v2526, 16
      %v2592 = vor.u32 %v2590, %v2588
      %v2594 = vshll.u32 %v2527, 16
      %v2596 = vrot.slane %v2594, 1
      %v2597 = vsel %vm620, %v2592, %v2596
      %v2598 = vshrl.u32 %v2527, 16
      %v2600 = vor.u32 %v2598, %v2596
      %v2602 = vshll.u32 %v2528, 16
      %v2604 = vrot.slane %v2602, 1
      %v2605 = vsel %vm620, %v2600, %v2604
      %v2606 = vshrl.u32 %v2528, 16
      %v2608 = vor.u32 %v2606, %v2604
      %v2610 = vshll.u32 %v2529, 16
      %v2612 = vrot.slane %v2610, 1
      %v2613 = vsel %vm620, %v2608, %v2612
      %v2614 = vshrl.u32 %v2529, 16
      %v2616 = vor.u32 %v2614, %v2612
      %v2618 = vshll.u32 %v2530, 16
      %v2620 = vrot.slane %v2618, 1
      %v2621 = vsel %vm620, %v2616, %v2620
      %v2622 = vshrl.u32 %v2530, 16
      %v2624 = vor.u32 %v2622, %v2620
      %v2626 = vshll.u32 %v2531, 16
      %v2628 = vrot.slane %v2626, 1
      %v2629 = vsel %vm620, %v2624, %v2628
      %v2630 = vshrl.u32 %v2531, 16
      %v2632 = vor.u32 %v2630, %v2628
      %v2634 = vshll.u32 %v2532, 16
      %v2636 = vrot.slane %v2634, 1
      %v2637 = vsel %vm620, %v2632, %v2636
      %v2638 = vshrl.u32 %v2532, 16
      %v2640 = vor.u32 %v2638, %v2636
      %v2642 = vshll.u32 %v2533, 16
      %v2644 = vrot.slane %v2642, 1
      %v2645 = vsel %vm620, %v2640, %v2644
      %v2646 = vshrl.u32 %v2533, 16
      %v2648 = vor.u32 %v2646, %v2644
      %v2650 = vshll.u32 %v2534, 16
      %v2652 = vrot.slane %v2650, 1
      %v2653 = vsel %vm620, %v2648, %v2652
      %v2654 = vshrl.u32 %v2534, 16
      %v2656 = vor.u32 %v2654, %v2652
      %v2658 = vshll.u32 %v2535, 16
      %v2660 = vrot.slane %v2658, 1
      %v2661 = vsel %vm620, %v2656, %v2660
      %v2662 = vshrl.u32 %v2535, 16
      %v2664 = vor.u32 %v2662, %v2660
      %v2666 = vshll.u32 %v2536, 16
      %v2668 = vrot.slane %v2666, 1
      %v2669 = vsel %vm620, %v2664, %v2668
      %v2670 = vshrl.u32 %v2536, 16
      %v2672 = vor.u32 %v2670, %v2668
      %v2674 = vshll.u32 %v2537, 16
      %v2676 = vrot.slane %v2674, 1
      %v2677 = vsel %vm620, %v2672, %v2676
      %v2678 = vshrl.u32 %v2537, 16
      %v2680 = vor.u32 %v2678, %v2676
      %v2682 = vshll.u32 %v2538, 16
      %v2684 = vrot.slane %v2682, 1
      %v2685 = vsel %vm620, %v2680, %v2684
      %v2686 = vshrl.u32 %v2538, 16
      %v2688 = vor.u32 %v2686, %v2684
      %v2690 = vshll.u32 %v2539, 16
      %v2692 = vrot.slane %v2690, 1
      %v2693 = vsel %vm620, %v2688, %v2692
      %v2694 = vshrl.u32 %v2539, 16
      %v2696 = vor.u32 %v2694, %v2692
      %v2698 = vshll.u32 %v2540, 16
      %v2700 = vrot.slane %v2698, 1
      %v2701 = vsel %vm620, %v2696, %v2700
      %v2702 = vshrl.u32 %v2540, 16
      %v2704 = vor.u32 %v2702, %v2700
      %v2706 = vshll.u32 %v2541, 16
      %v2708 = vrot.slane %v2706, 1
      %v2709 = vsel %vm620, %v2704, %v2708
      %v2710 = vshrl.u32 %v2541, 16
      %v2712 = vor.u32 %v2710, %v2708
      %v2714 = vshll.u32 %v2542, 16
      %v2716 = vrot.slane %v2714, 1
      %v2717 = vsel %vm620, %v2712, %v2716
      %v2718 = vshrl.u32 %v2542, 16
      %v2720 = vor.u32 %v2718, %v2716
      %v2722 = vshll.u32 %v2543, 16
      %v2724 = vrot.slane %v2722, 1
      %v2725 = vsel %vm620, %v2720, %v2724
      %v2726 = vshrl.u32 %v2543, 16
      %v2728 = vor.u32 %v2726, %v2724
      %v2730 = vshll.u32 %v2544, 16
      %v2732 = vrot.slane %v2730, 1
      %v2733 = vsel %vm620, %v2728, %v2732
      %v2734 = vshrl.u32 %v2544, 16
      %v2736 = vor.u32 %v2734, %v2732
      %v2738 = vshll.u32 %v2545, 16
      %v2740 = vrot.slane %v2738, 1
      %v2741 = vsel %vm620, %v2736, %v2740
      %v2782 = vunpack.c.l.b16 %v2407
      %v2783 = vunpack.c.l.b16 %v2408
      %v2784 = vunpack.c.l.b16 %v2409
      %v2785 = vunpack.c.l.b16 %v2410
      %v2786 = vunpack.c.l.b16 %v2411
      %v2787 = vunpack.c.l.b16 %v2412
      %v2788 = vunpack.c.l.b16 %v2413
      %v2789 = vunpack.c.l.b16 %v2414
      %v2790 = vunpack.c.l.b16 %v2415
      %v2791 = vunpack.c.l.b16 %v2416
      %v2792 = vunpack.c.l.b16 %v2417
      %v2793 = vunpack.c.l.b16 %v2418
      %v2794 = vunpack.c.l.b16 %v2419
      %v2795 = vunpack.c.l.b16 %v2420
      %v2796 = vunpack.c.l.b16 %v2421
      %v2797 = vunpack.c.l.b16 %v2422
      %v2798 = vpack.c.b16 %v2783, %v2782
      %v2799 = vpack.c.b16 %v2785, %v2784
      %v2800 = vpack.c.b16 %v2787, %v2786
      %v2801 = vpack.c.b16 %v2789, %v2788
      %v2802 = vpack.c.b16 %v2791, %v2790
      %v2803 = vpack.c.b16 %v2793, %v2792
      %v2804 = vpack.c.b16 %v2795, %v2794
      %v2805 = vpack.c.b16 %v2797, %v2796
      %2814 = vmatprep.subr.bf16.mxu0 0
      %2815 = vmatpush1.bf16.msra.mxu0 %v2798
      %2816 = vmatprep.subr.bf16.mxu0 0
      %2817 = vmatpush1.bf16.msra.mxu0 %v2799
      %2818 = vmatprep.subr.bf16.mxu0 0
      %2819 = vmatpush1.bf16.msra.mxu0 %v2800
      %2820 = vmatprep.subr.bf16.mxu0 0
      %2821 = vmatpush1.bf16.msra.mxu0 %v2801
      %2822 = vmatprep.subr.bf16.mxu0 0
      %2823 = vmatpush1.bf16.msra.mxu0 %v2802
      %2824 = vmatprep.subr.bf16.mxu0 0
      %2825 = vmatpush1.bf16.msra.mxu0 %v2803
      %2826 = vmatprep.subr.bf16.mxu0 0
      %2827 = vmatpush1.bf16.msra.mxu0 %v2804
      %2828 = vmatprep.subr.bf16.mxu0 0
      %2829 = vmatpush1.bf16.msra.mxu0 %v2805
      %2830 = vmatprep.subr.bf16.mxu0 0
      %2831 = vmatpush1.bf16.msra.mxu0 0
      %2832 = vmatprep.subr.bf16.mxu0 0
      %2833 = vmatpush1.bf16.msra.mxu0 0
      %2834 = vmatprep.subr.bf16.mxu0 0
      %2835 = vmatpush1.bf16.msra.mxu0 0
      %2836 = vmatprep.subr.bf16.mxu0 0
      %2837 = vmatpush1.bf16.msra.mxu0 0
      %2838 = vmatprep.subr.bf16.mxu0 0
      %2839 = vmatpush1.bf16.msra.mxu0 0
      %2840 = vmatprep.subr.bf16.mxu0 0
      %2841 = vmatpush1.bf16.msra.mxu0 0
      %2842 = vmatprep.subr.bf16.mxu0 0
      %2843 = vmatpush1.bf16.msra.mxu0 0
      %2844 = vmatprep.subr.bf16.mxu0 0
      %2845 = vmatpush1.bf16.msra.mxu0 0
      %2846 = vmatprep.mubr.bf16.mxu0 0
      %2847 = vmatmul.mubr.bf16.gmra.mrb[0].mxu0 %v2557
      %v2848 = vpop.f32.mrb[0].mxu0
      %v2849 = vadd.f32 0.0, %v2848
      %v2850 = vpop.f32.mrb[0].mxu0
      %v2851 = vpop.f32.mrb[0].mxu0
      %v2852 = vadd.f32 0.0, %v2851
      %v2853 = vpop.f32.mrb[0].mxu0
      %2854 = vmatprep.mubr.bf16.mxu0 0
      %2855 = vmatmul.mubr.bf16.gmra.mrb[0].mxu0 %v2565
      %v2856 = vpop.f32.mrb[0].mxu0
      %v2857 = vadd.f32 0.0, %v2856
      %v2858 = vpop.f32.mrb[0].mxu0
      %v2859 = vpop.f32.mrb[0].mxu0
      %v2860 = vadd.f32 0.0, %v2859
      %v2861 = vpop.f32.mrb[0].mxu0
      %2862 = vmatprep.mubr.bf16.mxu0 0
      %2863 = vmatmul.mubr.bf16.gmra.mrb[0].mxu0 %v2573
      %v2864 = vpop.f32.mrb[0].mxu0
      %v2865 = vadd.f32 0.0, %v2864
      %v2866 = vpop.f32.mrb[0].mxu0
      %v2867 = vpop.f32.mrb[0].mxu0
      %v2868 = vadd.f32 0.0, %v2867
      %v2869 = vpop.f32.mrb[0].mxu0
      %2870 = vmatprep.mubr.bf16.mxu0 0
      %2871 = vmatmul.mubr.bf16.gmra.mrb[0].mxu0 %v2581
      %v2872 = vpop.f32.mrb[0].mxu0
      %v2873 = vadd.f32 0.0, %v2872
      %v2874 = vpop.f32.mrb[0].mxu0
      %v2875 = vpop.f32.mrb[0].mxu0
      %v2876 = vadd.f32 0.0, %v2875
      %v2877 = vpop.f32.mrb[0].mxu0
      %2878 = vmatprep.mubr.bf16.mxu0 0
      %2879 = vmatmul.mubr.bf16.gmra.mrb[0].mxu0 %v2589
      %v2880 = vpop.f32.mrb[0].mxu0
      %v2881 = vadd.f32 0.0, %v2880
      %v2882 = vpop.f32.mrb[0].mxu0
      %v2883 = vpop.f32.mrb[0].mxu0
      %v2884 = vadd.f32 0.0, %v2883
      %v2885 = vpop.f32.mrb[0].mxu0
      %2886 = vmatprep.mubr.bf16.mxu0 0
      %2887 = vmatmul.mubr.bf16.gmra.mrb[0].mxu0 %v2597
      %v2888 = vpop.f32.mrb[0].mxu0
      %v2889 = vadd.f32 0.0, %v2888
      %v2890 = vpop.f32.mrb[0].mxu0
      %v2891 = vpop.f32.mrb[0].mxu0
      %v2892 = vadd.f32 0.0, %v2891
      %v2893 = vpop.f32.mrb[0].mxu0
      %2894 = vmatprep.mubr.bf16.mxu0 0
      %2895 = vmatmul.mubr.bf16.gmra.mrb[0].mxu0 %v2605
      %v2896 = vpop.f32.mrb[0].mxu0
      %v2897 = vadd.f32 0.0, %v2896
      %v2898 = vpop.f32.mrb[0].mxu0
      %v2899 = vpop.f32.mrb[0].mxu0
      %v2900 = vadd.f32 0.0, %v2899
      %v2901 = vpop.f32.mrb[0].mxu0
      %2902 = vmatprep.mubr.bf16.mxu0 0
      %2903 = vmatmul.mubr.bf16.gmra.mrb[0].mxu0 %v2613
      %v2904 = vpop.f32.mrb[0].mxu0
      %v2905 = vadd.f32 0.0, %v2904
      %v2906 = vpop.f32.mrb[0].mxu0
      %v2907 = vpop.f32.mrb[0].mxu0
      %v2908 = vadd.f32 0.0, %v2907
      %v2909 = vpop.f32.mrb[0].mxu0
      %2910 = vmatprep.mubr.bf16.mxu0 0
      %2911 = vmatmul.mubr.bf16.gmra.mrb[0].mxu0 %v2621
      %v2912 = vpop.f32.mrb[0].mxu0
      %v2913 = vadd.f32 0.0, %v2912
      %v2914 = vpop.f32.mrb[0].mxu0
      %v2915 = vpop.f32.mrb[0].mxu0
      %v2916 = vadd.f32 0.0, %v2915
      %v2917 = vpop.f32.mrb[0].mxu0
      %2918 = vmatprep.mubr.bf16.mxu0 0
      %2919 = vmatmul.mubr.bf16.gmra.mrb[0].mxu0 %v2629
      %v2920 = vpop.f32.mrb[0].mxu0
      %v2921 = vadd.f32 0.0, %v2920
      %v2922 = vpop.f32.mrb[0].mxu0
      %v2923 = vpop.f32.mrb[0].mxu0
      %v2924 = vadd.f32 0.0, %v2923
      %v2925 = vpop.f32.mrb[0].mxu0
      %2926 = vmatprep.mubr.bf16.mxu0 0
      %2927 = vmatmul.mubr.bf16.gmra.mrb[0].mxu0 %v2637
      %v2928 = vpop.f32.mrb[0].mxu0
      %v2929 = vadd.f32 0.0, %v2928
      %v2930 = vpop.f32.mrb[0].mxu0
      %v2931 = vpop.f32.mrb[0].mxu0
      %v2932 = vadd.f32 0.0, %v2931
      %v2933 = vpop.f32.mrb[0].mxu0
      %2934 = vmatprep.mubr.bf16.mxu0 0
      %2935 = vmatmul.mubr.bf16.gmra.mrb[0].mxu0 %v2645
      %v2936 = vpop.f32.mrb[0].mxu0
      %v2937 = vadd.f32 0.0, %v2936
      %v2938 = vpop.f32.mrb[0].mxu0
      %v2939 = vpop.f32.mrb[0].mxu0
      %v2940 = vadd.f32 0.0, %v2939
      %v2941 = vpop.f32.mrb[0].mxu0
      %2942 = vmatprep.mubr.bf16.mxu0 0
      %2943 = vmatmul.mubr.bf16.gmra.mrb[0].mxu0 %v2653
      %v2944 = vpop.f32.mrb[0].mxu0
      %v2945 = vadd.f32 0.0, %v2944
      %v2946 = vpop.f32.mrb[0].mxu0
      %v2947 = vpop.f32.mrb[0].mxu0
      %v2948 = vadd.f32 0.0, %v2947
      %v2949 = vpop.f32.mrb[0].mxu0
      %2950 = vmatprep.mubr.bf16.mxu0 0
      %2951 = vmatmul.mubr.bf16.gmra.mrb[0].mxu0 %v2661
      %v2952 = vpop.f32.mrb[0].mxu0
      %v2953 = vadd.f32 0.0, %v2952
      %v2954 = vpop.f32.mrb[0].mxu0
      %v2955 = vpop.f32.mrb[0].mxu0
      %v2956 = vadd.f32 0.0, %v2955
      %v2957 = vpop.f32.mrb[0].mxu0
      %2958 = vmatprep.mubr.bf16.mxu0 0
      %2959 = vmatmul.mubr.bf16.gmra.mrb[0].mxu0 %v2669
      %v2960 = vpop.f32.mrb[0].mxu0
      %v2961 = vadd.f32 0.0, %v2960
      %v2962 = vpop.f32.mrb[0].mxu0
      %v2963 = vpop.f32.mrb[0].mxu0
      %v2964 = vadd.f32 0.0, %v2963
      %v2965 = vpop.f32.mrb[0].mxu0
      %2966 = vmatprep.mubr.bf16.mxu0 0
      %2967 = vmatmul.mubr.bf16.gmra.mrb[0].mxu0 %v2677
      %v2968 = vpop.f32.mrb[0].mxu0
      %v2969 = vadd.f32 0.0, %v2968
      %v2970 = vpop.f32.mrb[0].mxu0
      %v2971 = vpop.f32.mrb[0].mxu0
      %v2972 = vadd.f32 0.0, %v2971
      %v2973 = vpop.f32.mrb[0].mxu0
      %2974 = vmatprep.mubr.bf16.mxu0 0
      %2975 = vmatmul.mubr.bf16.gmra.mrb[0].mxu0 %v2685
      %v2976 = vpop.f32.mrb[0].mxu0
      %v2977 = vadd.f32 0.0, %v2976
      %v2978 = vpop.f32.mrb[0].mxu0
      %v2979 = vpop.f32.mrb[0].mxu0
      %v2980 = vadd.f32 0.0, %v2979
      %v2981 = vpop.f32.mrb[0].mxu0
      %2982 = vmatprep.mubr.bf16.mxu0 0
      %2983 = vmatmul.mubr.bf16.gmra.mrb[0].mxu0 %v2693
      %v2984 = vpop.f32.mrb[0].mxu0
      %v2985 = vadd.f32 0.0, %v2984
      %v2986 = vpop.f32.mrb[0].mxu0
      %v2987 = vpop.f32.mrb[0].mxu0
      %v2988 = vadd.f32 0.0, %v2987
      %v2989 = vpop.f32.mrb[0].mxu0
      %2990 = vmatprep.mubr.bf16.mxu0 0
      %2991 = vmatmul.mubr.bf16.gmra.mrb[0].mxu0 %v2701
      %v2992 = vpop.f32.mrb[0].mxu0
      %v2993 = vadd.f32 0.0, %v2992
      %v2994 = vpop.f32.mrb[0].mxu0
      %v2995 = vpop.f32.mrb[0].mxu0
      %v2996 = vadd.f32 0.0, %v2995
      %v2997 = vpop.f32.mrb[0].mxu0
      %2998 = vmatprep.mubr.bf16.mxu0 0
      %2999 = vmatmul.mubr.bf16.gmra.mrb[0].mxu0 %v2709
      %v3000 = vpop.f32.mrb[0].mxu0
      %v3001 = vadd.f32 0.0, %v3000
      %v3002 = vpop.f32.mrb[0].mxu0
      %v3003 = vpop.f32.mrb[0].mxu0
      %v3004 = vadd.f32 0.0, %v3003
      %v3005 = vpop.f32.mrb[0].mxu0
      %3006 = vmatprep.mubr.bf16.mxu0 0
      %3007 = vmatmul.mubr.bf16.gmra.mrb[0].mxu0 %v2717
      %v3008 = vpop.f32.mrb[0].mxu0
      %v3009 = vadd.f32 0.0, %v3008
      %v3010 = vpop.f32.mrb[0].mxu0
      %v3011 = vpop.f32.mrb[0].mxu0
      %v3012 = vadd.f32 0.0, %v3011
      %v3013 = vpop.f32.mrb[0].mxu0
      %3014 = vmatprep.mubr.bf16.mxu0 0
      %3015 = vmatmul.mubr.bf16.gmra.mrb[0].mxu0 %v2725
      %v3016 = vpop.f32.mrb[0].mxu0
      %v3017 = vadd.f32 0.0, %v3016
      %v3018 = vpop.f32.mrb[0].mxu0
      %v3019 = vpop.f32.mrb[0].mxu0
      %v3020 = vadd.f32 0.0, %v3019
      %v3021 = vpop.f32.mrb[0].mxu0
      %3022 = vmatprep.mubr.bf16.mxu0 0
      %3023 = vmatmul.mubr.bf16.gmra.mrb[0].mxu0 %v2733
      %v3024 = vpop.f32.mrb[0].mxu0
      %v3025 = vadd.f32 0.0, %v3024
      %v3026 = vpop.f32.mrb[0].mxu0
      %v3027 = vpop.f32.mrb[0].mxu0
      %v3028 = vadd.f32 0.0, %v3027
      %v3029 = vpop.f32.mrb[0].mxu0
      %3030 = vmatprep.mubr.bf16.mxu0 0
      %3031 = vmatmul.mubr.bf16.gmra.mrb[0].mxu0 %v2741
      %v3032 = vpop.f32.mrb[0].mxu0
      %v3033 = vadd.f32 0.0, %v3032
      %v3034 = vpop.f32.mrb[0].mxu0
      %v3035 = vpop.f32.mrb[0].mxu0
      %v3036 = vadd.f32 0.0, %v3035
      %v3037 = vpop.f32.mrb[0].mxu0
      %3038 = vdwg.mxu0
      %v3039 = vadd.f32 %v2309, %v2849
      %v3040 = vadd.f32 %v2310, %v2852
      %v3041 = vadd.f32 %v2311, %v2857
      %v3042 = vadd.f32 %v2312, %v2860
      %v3043 = vadd.f32 %v2313, %v2865
      %v3044 = vadd.f32 %v2314, %v2868
      %v3045 = vadd.f32 %v2315, %v2873
      %v3046 = vadd.f32 %v2316, %v2876
      %v3047 = vadd.f32 %v2317, %v2881
      %v3048 = vadd.f32 %v2318, %v2884
      %v3049 = vadd.f32 %v2319, %v2889
      %v3050 = vadd.f32 %v2320, %v2892
      %v3051 = vadd.f32 %v2321, %v2897
      %v3052 = vadd.f32 %v2322, %v2900
      %v3053 = vadd.f32 %v2323, %v2905
      %v3054 = vadd.f32 %v2324, %v2908
      %v3055 = vadd.f32 %v2325, %v2913
      %v3056 = vadd.f32 %v2326, %v2916
      %v3057 = vadd.f32 %v2327, %v2921
      %v3058 = vadd.f32 %v2328, %v2924
      %v3059 = vadd.f32 %v2329, %v2929
      %v3060 = vadd.f32 %v2330, %v2932
      %v3061 = vadd.f32 %v2331, %v2937
      %v3062 = vadd.f32 %v2332, %v2940
      %v3063 = vadd.f32 %v2333, %v2945
      %v3064 = vadd.f32 %v2334, %v2948
      %v3065 = vadd.f32 %v2335, %v2953
      %v3066 = vadd.f32 %v2336, %v2956
      %v3067 = vadd.f32 %v2337, %v2961
      %v3068 = vadd.f32 %v2338, %v2964
      %v3069 = vadd.f32 %v2339, %v2969
      %v3070 = vadd.f32 %v2340, %v2972
      %v3071 = vadd.f32 %v2341, %v2977
      %v3072 = vadd.f32 %v2342, %v2980
      %v3073 = vadd.f32 %v2343, %v2985
      %v3074 = vadd.f32 %v2344, %v2988
      %v3075 = vadd.f32 %v2345, %v2993
      %v3076 = vadd.f32 %v2346, %v2996
      %v3077 = vadd.f32 %v2347, %v3001
      %v3078 = vadd.f32 %v2348, %v3004
      %v3079 = vadd.f32 %v2349, %v3009
      %v3080 = vadd.f32 %v2350, %v3012
      %v3081 = vadd.f32 %v2351, %v3017
      %v3082 = vadd.f32 %v2352, %v3020
      %v3083 = vadd.f32 %v2353, %v3025
      %v3084 = vadd.f32 %v2354, %v3028
      %v3085 = vadd.f32 %v2355, %v3033
      %v3086 = vadd.f32 %v2356, %v3036
      %v3087 = vld [vmem:[%s408 + $0xc] sm:$0xe]
      %s3088 = scalar_lea.vmem %s2, 320
      %v3089 = vld [vmem:[%s3088] sm:$0xf]
      %v3090 = vld [vmem:[%s3088 + $0x4] sm:$0xf]
      %v3091 = vld [vmem:[%s3088 + $0x8] sm:$0xf]
      %v3092 = vld [vmem:[%s3088 + $0xc] sm:$0xf]
      %v3093 = vld [vmem:[%s3088 + $0x10] sm:$0xf]
      %v3094 = vld [vmem:[%s3088 + $0x14] sm:$0xf]
      %v3095 = vld [vmem:[%s3088 + $0x18] sm:$0xf]
      %v3096 = vld [vmem:[%s3088 + $0x1c] sm:$0xf]
      %v3097 = vld [vmem:[%s3088 + $0x20] sm:$0xf]
      %v3098 = vld [vmem:[%s3088 + $0x24] sm:$0xf]
      %v3099 = vld [vmem:[%s3088 + $0x28] sm:$0xf]
      %v3100 = vld [vmem:[%s3088 + $0x2c] sm:$0xf]
      %v3101 = vld [vmem:[%s3088 + $0x30] sm:$0xf]
      %v3102 = vld [vmem:[%s3088 + $0x34] sm:$0xf]
      %v3103 = vld [vmem:[%s3088 + $0x38] sm:$0xf]
      %v3104 = vld [vmem:[%s3088 + $0x3c] sm:$0xf]
      %v3106 = vunpack.c.l.b16 %v3087
      %v3107 = vpack.c.b16 %v2473, %v3106
      %v3108 = vrot.slane %v3107, 1
      %v3109 = vrot.slane %v2522, 1
      %v3110 = vsel %vm1432, %v3108, %v3109
      %v3111 = vrot.slane %v2523, 1
      %v3112 = vsel %vm1432, %v3109, %v3111
      %v3113 = vrot.slane %v2524, 1
      %v3114 = vsel %vm1432, %v3111, %v3113
      %v3115 = vrot.slane %v2525, 1
      %v3116 = vsel %vm1432, %v3113, %v3115
      %v3117 = vrot.slane %v2526, 1
      %v3118 = vsel %vm1432, %v3115, %v3117
      %v3119 = vrot.slane %v2527, 1
      %v3120 = vsel %vm1432, %v3117, %v3119
      %v3121 = vrot.slane %v2528, 1
      %v3122 = vsel %vm1432, %v3119, %v3121
      %v3123 = vrot.slane %v2529, 1
      %v3124 = vsel %vm1432, %v3121, %v3123
      %v3125 = vrot.slane %v2530, 1
      %v3126 = vsel %vm1432, %v3123, %v3125
      %v3127 = vrot.slane %v2531, 1
      %v3128 = vsel %vm1432, %v3125, %v3127
      %v3129 = vrot.slane %v2532, 1
      %v3130 = vsel %vm1432, %v3127, %v3129
      %v3131 = vrot.slane %v2533, 1
      %v3132 = vsel %vm1432, %v3129, %v3131
      %v3133 = vrot.slane %v2534, 1
      %v3134 = vsel %vm1432, %v3131, %v3133
      %v3135 = vrot.slane %v2535, 1
      %v3136 = vsel %vm1432, %v3133, %v3135
      %v3137 = vrot.slane %v2536, 1
      %v3138 = vsel %vm1432, %v3135, %v3137
      %v3139 = vrot.slane %v2537, 1
      %v3140 = vsel %vm1432, %v3137, %v3139
      %v3141 = vrot.slane %v2538, 1
      %v3142 = vsel %vm1432, %v3139, %v3141
      %v3143 = vrot.slane %v2539, 1
      %v3144 = vsel %vm1432, %v3141, %v3143
      %v3145 = vrot.slane %v2540, 1
      %v3146 = vsel %vm1432, %v3143, %v3145
      %v3147 = vrot.slane %v2541, 1
      %v3148 = vsel %vm1432, %v3145, %v3147
      %v3149 = vrot.slane %v2542, 1
      %v3150 = vsel %vm1432, %v3147, %v3149
      %v3151 = vrot.slane %v2543, 1
      %v3152 = vsel %vm1432, %v3149, %v3151
      %v3153 = vrot.slane %v2544, 1
      %v3154 = vsel %vm1432, %v3151, %v3153
      %v3155 = vrot.slane %v2545, 1
      %v3156 = vsel %vm1432, %v3153, %v3155
      %v3197 = vunpack.c.l.b16 %v3089
      %v3198 = vunpack.c.l.b16 %v3090
      %v3199 = vunpack.c.l.b16 %v3091
      %v3200 = vunpack.c.l.b16 %v3092
      %v3201 = vunpack.c.l.b16 %v3093
      %v3202 = vunpack.c.l.b16 %v3094
      %v3203 = vunpack.c.l.b16 %v3095
      %v3204 = vunpack.c.l.b16 %v3096
      %v3205 = vunpack.c.l.b16 %v3097
      %v3206 = vunpack.c.l.b16 %v3098
      %v3207 = vunpack.c.l.b16 %v3099
      %v3208 = vunpack.c.l.b16 %v3100
      %v3209 = vunpack.c.l.b16 %v3101
      %v3210 = vunpack.c.l.b16 %v3102
      %v3211 = vunpack.c.l.b16 %v3103
      %v3212 = vunpack.c.l.b16 %v3104
      %v3213 = vpack.c.b16 %v3198, %v3197
      %v3214 = vpack.c.b16 %v3200, %v3199
      %v3215 = vpack.c.b16 %v3202, %v3201
      %v3216 = vpack.c.b16 %v3204, %v3203
      %v3217 = vpack.c.b16 %v3206, %v3205
      %v3218 = vpack.c.b16 %v3208, %v3207
      %v3219 = vpack.c.b16 %v3210, %v3209
      %v3220 = vpack.c.b16 %v3212, %v3211
      %3229 = vmatprep.subr.bf16.mxu0 0
      %3230 = vmatpush1.bf16.msra.mxu0 %v3213
      %3231 = vmatprep.subr.bf16.mxu0 0
      %3232 = vmatpush1.bf16.msra.mxu0 %v3214
      %3233 = vmatprep.subr.bf16.mxu0 0
      %3234 = vmatpush1.bf16.msra.mxu0 %v3215
      %3235 = vmatprep.subr.bf16.mxu0 0
      %3236 = vmatpush1.bf16.msra.mxu0 %v3216
      %3237 = vmatprep.subr.bf16.mxu0 0
      %3238 = vmatpush1.bf16.msra.mxu0 %v3217
      %3239 = vmatprep.subr.bf16.mxu0 0
      %3240 = vmatpush1.bf16.msra.mxu0 %v3218
      %3241 = vmatprep.subr.bf16.mxu0 0
      %3242 = vmatpush1.bf16.msra.mxu0 %v3219
      %3243 = vmatprep.subr.bf16.mxu0 0
      %3244 = vmatpush1.bf16.msra.mxu0 %v3220
      %3245 = vmatprep.subr.bf16.mxu0 0
      %3246 = vmatpush1.bf16.msra.mxu0 0
      %3247 = vmatprep.subr.bf16.mxu0 0
      %3248 = vmatpush1.bf16.msra.mxu0 0
      %3249 = vmatprep.subr.bf16.mxu0 0
      %3250 = vmatpush1.bf16.msra.mxu0 0
      %3251 = vmatprep.subr.bf16.mxu0 0
      %3252 = vmatpush1.bf16.msra.mxu0 0
      %3253 = vmatprep.subr.bf16.mxu0 0
      %3254 = vmatpush1.bf16.msra.mxu0 0
      %3255 = vmatprep.subr.bf16.mxu0 0
      %3256 = vmatpush1.bf16.msra.mxu0 0
      %3257 = vmatprep.subr.bf16.mxu0 0
      %3258 = vmatpush1.bf16.msra.mxu0 0
      %3259 = vmatprep.subr.bf16.mxu0 0
      %3260 = vmatpush1.bf16.msra.mxu0 0
      %3261 = vmatprep.mubr.bf16.mxu0 0
      %3262 = vmatmul.mubr.bf16.gmra.mrb[0].mxu0 %v3110
      %v3263 = vpop.f32.mrb[0].mxu0
      %v3264 = vadd.f32 0.0, %v3263
      %v3265 = vpop.f32.mrb[0].mxu0
      %v3266 = vpop.f32.mrb[0].mxu0
      %v3267 = vadd.f32 0.0, %v3266
      %v3268 = vpop.f32.mrb[0].mxu0
      %3269 = vmatprep.mubr.bf16.mxu0 0
      %3270 = vmatmul.mubr.bf16.gmra.mrb[0].mxu0 %v3112
      %v3271 = vpop.f32.mrb[0].mxu0
      %v3272 = vadd.f32 0.0, %v3271
      %v3273 = vpop.f32.mrb[0].mxu0
      %v3274 = vpop.f32.mrb[0].mxu0
      %v3275 = vadd.f32 0.0, %v3274
      %v3276 = vpop.f32.mrb[0].mxu0
      %3277 = vmatprep.mubr.bf16.mxu0 0
      %3278 = vmatmul.mubr.bf16.gmra.mrb[0].mxu0 %v3114
      %v3279 = vpop.f32.mrb[0].mxu0
      %v3280 = vadd.f32 0.0, %v3279
      %v3281 = vpop.f32.mrb[0].mxu0
      %v3282 = vpop.f32.mrb[0].mxu0
      %v3283 = vadd.f32 0.0, %v3282
      %v3284 = vpop.f32.mrb[0].mxu0
      %3285 = vmatprep.mubr.bf16.mxu0 0
      %3286 = vmatmul.mubr.bf16.gmra.mrb[0].mxu0 %v3116
      %v3287 = vpop.f32.mrb[0].mxu0
      %v3288 = vadd.f32 0.0, %v3287
      %v3289 = vpop.f32.mrb[0].mxu0
      %v3290 = vpop.f32.mrb[0].mxu0
      %v3291 = vadd.f32 0.0, %v3290
      %v3292 = vpop.f32.mrb[0].mxu0
      %3293 = vmatprep.mubr.bf16.mxu0 0
      %3294 = vmatmul.mubr.bf16.gmra.mrb[0].mxu0 %v3118
      %v3295 = vpop.f32.mrb[0].mxu0
      %v3296 = vadd.f32 0.0, %v3295
      %v3297 = vpop.f32.mrb[0].mxu0
      %v3298 = vpop.f32.mrb[0].mxu0
      %v3299 = vadd.f32 0.0, %v3298
      %v3300 = vpop.f32.mrb[0].mxu0
      %3301 = vmatprep.mubr.bf16.mxu0 0
      %3302 = vmatmul.mubr.bf16.gmra.mrb[0].mxu0 %v3120
      %v3303 = vpop.f32.mrb[0].mxu0
      %v3304 = vadd.f32 0.0, %v3303
      %v3305 = vpop.f32.mrb[0].mxu0
      %v3306 = vpop.f32.mrb[0].mxu0
      %v3307 = vadd.f32 0.0, %v3306
      %v3308 = vpop.f32.mrb[0].mxu0
      %3309 = vmatprep.mubr.bf16.mxu0 0
      %3310 = vmatmul.mubr.bf16.gmra.mrb[0].mxu0 %v3122
      %v3311 = vpop.f32.mrb[0].mxu0
      %v3312 = vadd.f32 0.0, %v3311
      %v3313 = vpop.f32.mrb[0].mxu0
      %v3314 = vpop.f32.mrb[0].mxu0
      %v3315 = vadd.f32 0.0, %v3314
      %v3316 = vpop.f32.mrb[0].mxu0
      %3317 = vmatprep.mubr.bf16.mxu0 0
      %3318 = vmatmul.mubr.bf16.gmra.mrb[0].mxu0 %v3124
      %v3319 = vpop.f32.mrb[0].mxu0
      %v3320 = vadd.f32 0.0, %v3319
      %v3321 = vpop.f32.mrb[0].mxu0
      %v3322 = vpop.f32.mrb[0].mxu0
      %v3323 = vadd.f32 0.0, %v3322
      %v3324 = vpop.f32.mrb[0].mxu0
      %3325 = vmatprep.mubr.bf16.mxu0 0
      %3326 = vmatmul.mubr.bf16.gmra.mrb[0].mxu0 %v3126
      %v3327 = vpop.f32.mrb[0].mxu0
      %v3328 = vadd.f32 0.0, %v3327
      %v3329 = vpop.f32.mrb[0].mxu0
      %v3330 = vpop.f32.mrb[0].mxu0
      %v3331 = vadd.f32 0.0, %v3330
      %v3332 = vpop.f32.mrb[0].mxu0
      %3333 = vmatprep.mubr.bf16.mxu0 0
      %3334 = vmatmul.mubr.bf16.gmra.mrb[0].mxu0 %v3128
      %v3335 = vpop.f32.mrb[0].mxu0
      %v3336 = vadd.f32 0.0, %v3335
      %v3337 = vpop.f32.mrb[0].mxu0
      %v3338 = vpop.f32.mrb[0].mxu0
      %v3339 = vadd.f32 0.0, %v3338
      %v3340 = vpop.f32.mrb[0].mxu0
      %3341 = vmatprep.mubr.bf16.mxu0 0
      %3342 = vmatmul.mubr.bf16.gmra.mrb[0].mxu0 %v3130
      %v3343 = vpop.f32.mrb[0].mxu0
      %v3344 = vadd.f32 0.0, %v3343
      %v3345 = vpop.f32.mrb[0].mxu0
      %v3346 = vpop.f32.mrb[0].mxu0
      %v3347 = vadd.f32 0.0, %v3346
      %v3348 = vpop.f32.mrb[0].mxu0
      %3349 = vmatprep.mubr.bf16.mxu0 0
      %3350 = vmatmul.mubr.bf16.gmra.mrb[0].mxu0 %v3132
      %v3351 = vpop.f32.mrb[0].mxu0
      %v3352 = vadd.f32 0.0, %v3351
      %v3353 = vpop.f32.mrb[0].mxu0
      %v3354 = vpop.f32.mrb[0].mxu0
      %v3355 = vadd.f32 0.0, %v3354
      %v3356 = vpop.f32.mrb[0].mxu0
      %3357 = vmatprep.mubr.bf16.mxu0 0
      %3358 = vmatmul.mubr.bf16.gmra.mrb[0].mxu0 %v3134
      %v3359 = vpop.f32.mrb[0].mxu0
      %v3360 = vadd.f32 0.0, %v3359
      %v3361 = vpop.f32.mrb[0].mxu0
      %v3362 = vpop.f32.mrb[0].mxu0
      %v3363 = vadd.f32 0.0, %v3362
      %v3364 = vpop.f32.mrb[0].mxu0
      %3365 = vmatprep.mubr.bf16.mxu0 0
      %3366 = vmatmul.mubr.bf16.gmra.mrb[0].mxu0 %v3136
      %v3367 = vpop.f32.mrb[0].mxu0
      %v3368 = vadd.f32 0.0, %v3367
      %v3369 = vpop.f32.mrb[0].mxu0
      %v3370 = vpop.f32.mrb[0].mxu0
      %v3371 = vadd.f32 0.0, %v3370
      %v3372 = vpop.f32.mrb[0].mxu0
      %3373 = vmatprep.mubr.bf16.mxu0 0
      %3374 = vmatmul.mubr.bf16.gmra.mrb[0].mxu0 %v3138
      %v3375 = vpop.f32.mrb[0].mxu0
      %v3376 = vadd.f32 0.0, %v3375
      %v3377 = vpop.f32.mrb[0].mxu0
      %v3378 = vpop.f32.mrb[0].mxu0
      %v3379 = vadd.f32 0.0, %v3378
      %v3380 = vpop.f32.mrb[0].mxu0
      %3381 = vmatprep.mubr.bf16.mxu0 0
      %3382 = vmatmul.mubr.bf16.gmra.mrb[0].mxu0 %v3140
      %v3383 = vpop.f32.mrb[0].mxu0
      %v3384 = vadd.f32 0.0, %v3383
      %v3385 = vpop.f32.mrb[0].mxu0
      %v3386 = vpop.f32.mrb[0].mxu0
      %v3387 = vadd.f32 0.0, %v3386
      %v3388 = vpop.f32.mrb[0].mxu0
      %3389 = vmatprep.mubr.bf16.mxu0 0
      %3390 = vmatmul.mubr.bf16.gmra.mrb[0].mxu0 %v3142
      %v3391 = vpop.f32.mrb[0].mxu0
      %v3392 = vadd.f32 0.0, %v3391
      %v3393 = vpop.f32.mrb[0].mxu0
      %v3394 = vpop.f32.mrb[0].mxu0
      %v3395 = vadd.f32 0.0, %v3394
      %v3396 = vpop.f32.mrb[0].mxu0
      %3397 = vmatprep.mubr.bf16.mxu0 0
      %3398 = vmatmul.mubr.bf16.gmra.mrb[0].mxu0 %v3144
      %v3399 = vpop.f32.mrb[0].mxu0
      %v3400 = vadd.f32 0.0, %v3399
      %v3401 = vpop.f32.mrb[0].mxu0
      %v3402 = vpop.f32.mrb[0].mxu0
      %v3403 = vadd.f32 0.0, %v3402
      %v3404 = vpop.f32.mrb[0].mxu0
      %3405 = vmatprep.mubr.bf16.mxu0 0
      %3406 = vmatmul.mubr.bf16.gmra.mrb[0].mxu0 %v3146
      %v3407 = vpop.f32.mrb[0].mxu0
      %v3408 = vadd.f32 0.0, %v3407
      %v3409 = vpop.f32.mrb[0].mxu0
      %v3410 = vpop.f32.mrb[0].mxu0
      %v3411 = vadd.f32 0.0, %v3410
      %v3412 = vpop.f32.mrb[0].mxu0
      %3413 = vmatprep.mubr.bf16.mxu0 0
      %3414 = vmatmul.mubr.bf16.gmra.mrb[0].mxu0 %v3148
      %v3415 = vpop.f32.mrb[0].mxu0
      %v3416 = vadd.f32 0.0, %v3415
      %v3417 = vpop.f32.mrb[0].mxu0
      %v3418 = vpop.f32.mrb[0].mxu0
      %v3419 = vadd.f32 0.0, %v3418
      %v3420 = vpop.f32.mrb[0].mxu0
      %3421 = vmatprep.mubr.bf16.mxu0 0
      %3422 = vmatmul.mubr.bf16.gmra.mrb[0].mxu0 %v3150
      %v3423 = vpop.f32.mrb[0].mxu0
      %v3424 = vadd.f32 0.0, %v3423
      %v3425 = vpop.f32.mrb[0].mxu0
      %v3426 = vpop.f32.mrb[0].mxu0
      %v3427 = vadd.f32 0.0, %v3426
      %v3428 = vpop.f32.mrb[0].mxu0
      %3429 = vmatprep.mubr.bf16.mxu0 0
      %3430 = vmatmul.mubr.bf16.gmra.mrb[0].mxu0 %v3152
      %v3431 = vpop.f32.mrb[0].mxu0
      %v3432 = vadd.f32 0.0, %v3431
      %v3433 = vpop.f32.mrb[0].mxu0
      %v3434 = vpop.f32.mrb[0].mxu0
      %v3435 = vadd.f32 0.0, %v3434
      %v3436 = vpop.f32.mrb[0].mxu0
      %3437 = vmatprep.mubr.bf16.mxu0 0
      %3438 = vmatmul.mubr.bf16.gmra.mrb[0].mxu0 %v3154
      %v3439 = vpop.f32.mrb[0].mxu0
      %v3440 = vadd.f32 0.0, %v3439
      %v3441 = vpop.f32.mrb[0].mxu0
      %v3442 = vpop.f32.mrb[0].mxu0
      %v3443 = vadd.f32 0.0, %v3442
      %v3444 = vpop.f32.mrb[0].mxu0
      %3445 = vmatprep.mubr.bf16.mxu0 0
      %3446 = vmatmul.mubr.bf16.gmra.mrb[0].mxu0 %v3156
      %v3447 = vpop.f32.mrb[0].mxu0
      %v3448 = vadd.f32 0.0, %v3447
      %v3449 = vpop.f32.mrb[0].mxu0
      %v3450 = vpop.f32.mrb[0].mxu0
      %v3451 = vadd.f32 0.0, %v3450
      %v3452 = vpop.f32.mrb[0].mxu0
      %3453 = vdwg.mxu0
      %v3454 = vadd.f32 %v3039, %v3264
      %v3455 = vadd.f32 %v3040, %v3267
      %v3456 = vadd.f32 %v3041, %v3272
      %v3457 = vadd.f32 %v3042, %v3275
      %v3458 = vadd.f32 %v3043, %v3280
      %v3459 = vadd.f32 %v3044, %v3283
      %v3460 = vadd.f32 %v3045, %v3288
      %v3461 = vadd.f32 %v3046, %v3291
      %v3462 = vadd.f32 %v3047, %v3296
      %v3463 = vadd.f32 %v3048, %v3299
      %v3464 = vadd.f32 %v3049, %v3304
      %v3465 = vadd.f32 %v3050, %v3307
      %v3466 = vadd.f32 %v3051, %v3312
      %v3467 = vadd.f32 %v3052, %v3315
      %v3468 = vadd.f32 %v3053, %v3320
      %v3469 = vadd.f32 %v3054, %v3323
      %v3470 = vadd.f32 %v3055, %v3328
      %v3471 = vadd.f32 %v3056, %v3331
      %v3472 = vadd.f32 %v3057, %v3336
      %v3473 = vadd.f32 %v3058, %v3339
      %v3474 = vadd.f32 %v3059, %v3344
      %v3475 = vadd.f32 %v3060, %v3347
      %v3476 = vadd.f32 %v3061, %v3352
      %v3477 = vadd.f32 %v3062, %v3355
      %v3478 = vadd.f32 %v3063, %v3360
      %v3479 = vadd.f32 %v3064, %v3363
      %v3480 = vadd.f32 %v3065, %v3368
      %v3481 = vadd.f32 %v3066, %v3371
      %v3482 = vadd.f32 %v3067, %v3376
      %v3483 = vadd.f32 %v3068, %v3379
      %v3484 = vadd.f32 %v3069, %v3384
      %v3485 = vadd.f32 %v3070, %v3387
      %v3486 = vadd.f32 %v3071, %v3392
      %v3487 = vadd.f32 %v3072, %v3395
      %v3488 = vadd.f32 %v3073, %v3400
      %v3489 = vadd.f32 %v3074, %v3403
      %v3490 = vadd.f32 %v3075, %v3408
      %v3491 = vadd.f32 %v3076, %v3411
      %v3492 = vadd.f32 %v3077, %v3416
      %v3493 = vadd.f32 %v3078, %v3419
      %v3494 = vadd.f32 %v3079, %v3424
      %v3495 = vadd.f32 %v3080, %v3427
      %v3496 = vadd.f32 %v3081, %v3432
      %v3497 = vadd.f32 %v3082, %v3435
      %v3498 = vadd.f32 %v3083, %v3440
      %v3499 = vadd.f32 %v3084, %v3443
      %v3500 = vadd.f32 %v3085, %v3448
      %v3501 = vadd.f32 %v3086, %v3451
      %v3502 = vld [vmem:[%s408 + $0x18] sm:$0xf]
      %v3503 = vld [vmem:[%s408 + $0x1c] sm:$0xf]
      %v3504 = vld [vmem:[%s408 + $0x20] sm:$0xf]
      %v3505 = vld [vmem:[%s408 + $0x24] sm:$0xf]
      %v3506 = vld [vmem:[%s408 + $0x28] sm:$0xf]
      %v3507 = vld [vmem:[%s408 + $0x2c] sm:$0xf]
      %v3508 = vld [vmem:[%s408 + $0x30] sm:$0xf]
      %v3509 = vld [vmem:[%s408 + $0x34] sm:$0xf]
      %v3510 = vld [vmem:[%s408 + $0x38] sm:$0xf]
      %v3511 = vld [vmem:[%s408 + $0x3c] sm:$0xf]
      %v3512 = vld [vmem:[%s408 + $0x40] sm:$0xf]
      %v3513 = vld [vmem:[%s408 + $0x44] sm:$0xf]
      %v3514 = vld [vmem:[%s408 + $0x48] sm:$0xf]
      %v3515 = vld [vmem:[%s408 + $0x4c] sm:$0xf]
      %v3516 = vld [vmem:[%s408 + $0x50] sm:$0xf]
      %v3517 = vld [vmem:[%s408 + $0x54] sm:$0xf]
      %v3518 = vld [vmem:[%s408 + $0x58] sm:$0xf]
      %v3519 = vld [vmem:[%s408 + $0x5c] sm:$0xf]
      %v3520 = vld [vmem:[%s408 + $0x60] sm:$0xf]
      %v3521 = vld [vmem:[%s408 + $0x64] sm:$0xf]
      %v3522 = vld [vmem:[%s408 + $0x68] sm:$0xf]
      %v3523 = vld [vmem:[%s408 + $0x6c] sm:$0xf]
      %v3524 = vld [vmem:[%s408 + $0x70] sm:$0xf]
      %v3525 = vld [vmem:[%s408 + $0x74] sm:$0xf]
      %v3526 = vld [vmem:[%s408 + $0x78] sm:$0xf]
      %v3527 = vld [vmem:[%s408 + $0x7c] sm:$0xf]
      %v3528 = vld [vmem:[%s408 + $0x80] sm:$0xf]
      %v3529 = vld [vmem:[%s408 + $0x84] sm:$0xf]
      %v3530 = vld [vmem:[%s408 + $0x88] sm:$0xf]
      %v3531 = vld [vmem:[%s408 + $0x8c] sm:$0xf]
      %v3532 = vld [vmem:[%s408 + $0x90] sm:$0xf]
      %v3533 = vld [vmem:[%s408 + $0x94] sm:$0xf]
      %v3534 = vld [vmem:[%s408 + $0x98] sm:$0xf]
      %v3535 = vld [vmem:[%s408 + $0x9c] sm:$0xf]
      %v3536 = vld [vmem:[%s408 + $0xa0] sm:$0xf]
      %v3537 = vld [vmem:[%s408 + $0xa4] sm:$0xf]
      %v3538 = vld [vmem:[%s408 + $0xa8] sm:$0xf]
      %v3539 = vld [vmem:[%s408 + $0xac] sm:$0xf]
      %v3540 = vld [vmem:[%s408 + $0xb0] sm:$0xf]
      %v3541 = vld [vmem:[%s408 + $0xb4] sm:$0xf]
      %v3542 = vld [vmem:[%s408 + $0xb8] sm:$0xf]
      %v3543 = vld [vmem:[%s408 + $0xbc] sm:$0xf]
      %v3544 = vld [vmem:[%s408 + $0xc0] sm:$0xf]
      %v3545 = vld [vmem:[%s408 + $0xc4] sm:$0xf]
      %v3546 = vld [vmem:[%s408 + $0xc8] sm:$0xf]
      %v3547 = vld [vmem:[%s408 + $0xcc] sm:$0xf]
      %v3548 = vld [vmem:[%s408 + $0xd0] sm:$0xf]
      %v3549 = vld [vmem:[%s408 + $0xd4] sm:$0xf]
      %s3550 = scalar_lea.vmem %s2, 384
      %v3551 = vld [vmem:[%s3550] sm:$0xf]
      %v3552 = vld [vmem:[%s3550 + $0x4] sm:$0xf]
      %v3553 = vld [vmem:[%s3550 + $0x8] sm:$0xf]
      %v3554 = vld [vmem:[%s3550 + $0xc] sm:$0xf]
      %v3555 = vld [vmem:[%s3550 + $0x10] sm:$0xf]
      %v3556 = vld [vmem:[%s3550 + $0x14] sm:$0xf]
      %v3557 = vld [vmem:[%s3550 + $0x18] sm:$0xf]
      %v3558 = vld [vmem:[%s3550 + $0x1c] sm:$0xf]
      %v3559 = vld [vmem:[%s3550 + $0x20] sm:$0xf]
      %v3560 = vld [vmem:[%s3550 + $0x24] sm:$0xf]
      %v3561 = vld [vmem:[%s3550 + $0x28] sm:$0xf]
      %v3562 = vld [vmem:[%s3550 + $0x2c] sm:$0xf]
      %v3563 = vld [vmem:[%s3550 + $0x30] sm:$0xf]
      %v3564 = vld [vmem:[%s3550 + $0x34] sm:$0xf]
      %v3565 = vld [vmem:[%s3550 + $0x38] sm:$0xf]
      %v3566 = vld [vmem:[%s3550 + $0x3c] sm:$0xf]
      %v3615 = vunpack.c.l.b16 %v3502
      %v3616 = vunpack.c.l.b16 %v3503
      %v3617 = vunpack.c.l.b16 %v3504
      %v3618 = vunpack.c.l.b16 %v3505
      %v3619 = vunpack.c.l.b16 %v3506
      %v3620 = vunpack.c.l.b16 %v3507
      %v3621 = vunpack.c.l.b16 %v3508
      %v3622 = vunpack.c.l.b16 %v3509
      %v3623 = vunpack.c.l.b16 %v3510
      %v3624 = vunpack.c.l.b16 %v3511
      %v3625 = vunpack.c.l.b16 %v3512
      %v3626 = vunpack.c.l.b16 %v3513
      %v3627 = vunpack.c.l.b16 %v3514
      %v3628 = vunpack.c.l.b16 %v3515
      %v3629 = vunpack.c.l.b16 %v3516
      %v3630 = vunpack.c.l.b16 %v3517
      %v3631 = vunpack.c.l.b16 %v3518
      %v3632 = vunpack.c.l.b16 %v3519
      %v3633 = vunpack.c.l.b16 %v3520
      %v3634 = vunpack.c.l.b16 %v3521
      %v3635 = vunpack.c.l.b16 %v3522
      %v3636 = vunpack.c.l.b16 %v3523
      %v3637 = vunpack.c.l.b16 %v3524
      %v3638 = vunpack.c.l.b16 %v3525
      %v3639 = vunpack.c.l.b16 %v3526
      %v3640 = vunpack.c.l.b16 %v3527
      %v3641 = vunpack.c.l.b16 %v3528
      %v3642 = vunpack.c.l.b16 %v3529
      %v3643 = vunpack.c.l.b16 %v3530
      %v3644 = vunpack.c.l.b16 %v3531
      %v3645 = vunpack.c.l.b16 %v3532
      %v3646 = vunpack.c.l.b16 %v3533
      %v3647 = vunpack.c.l.b16 %v3534
      %v3648 = vunpack.c.l.b16 %v3535
      %v3649 = vunpack.c.l.b16 %v3536
      %v3650 = vunpack.c.l.b16 %v3537
      %v3651 = vunpack.c.l.b16 %v3538
      %v3652 = vunpack.c.l.b16 %v3539
      %v3653 = vunpack.c.l.b16 %v3540
      %v3654 = vunpack.c.l.b16 %v3541
      %v3655 = vunpack.c.l.b16 %v3542
      %v3656 = vunpack.c.l.b16 %v3543
      %v3657 = vunpack.c.l.b16 %v3544
      %v3658 = vunpack.c.l.b16 %v3545
      %v3659 = vunpack.c.l.b16 %v3546
      %v3660 = vunpack.c.l.b16 %v3547
      %v3661 = vunpack.c.l.b16 %v3548
      %v3662 = vunpack.c.l.b16 %v3549
      %v3663 = vpack.c.b16 %v3616, %v3615
      %v3664 = vpack.c.b16 %v3618, %v3617
      %v3665 = vpack.c.b16 %v3620, %v3619
      %v3666 = vpack.c.b16 %v3622, %v3621
      %v3667 = vpack.c.b16 %v3624, %v3623
      %v3668 = vpack.c.b16 %v3626, %v3625
      %v3669 = vpack.c.b16 %v3628, %v3627
      %v3670 = vpack.c.b16 %v3630, %v3629
      %v3671 = vpack.c.b16 %v3632, %v3631
      %v3672 = vpack.c.b16 %v3634, %v3633
      %v3673 = vpack.c.b16 %v3636, %v3635
      %v3674 = vpack.c.b16 %v3638, %v3637
      %v3675 = vpack.c.b16 %v3640, %v3639
      %v3676 = vpack.c.b16 %v3642, %v3641
      %v3677 = vpack.c.b16 %v3644, %v3643
      %v3678 = vpack.c.b16 %v3646, %v3645
      %v3679 = vpack.c.b16 %v3648, %v3647
      %v3680 = vpack.c.b16 %v3650, %v3649
      %v3681 = vpack.c.b16 %v3652, %v3651
      %v3682 = vpack.c.b16 %v3654, %v3653
      %v3683 = vpack.c.b16 %v3656, %v3655
      %v3684 = vpack.c.b16 %v3658, %v3657
      %v3685 = vpack.c.b16 %v3660, %v3659
      %v3686 = vpack.c.b16 %v3662, %v3661
      %v3727 = vunpack.c.l.b16 %v3551
      %v3728 = vunpack.c.l.b16 %v3552
      %v3729 = vunpack.c.l.b16 %v3553
      %v3730 = vunpack.c.l.b16 %v3554
      %v3731 = vunpack.c.l.b16 %v3555
      %v3732 = vunpack.c.l.b16 %v3556
      %v3733 = vunpack.c.l.b16 %v3557
      %v3734 = vunpack.c.l.b16 %v3558
      %v3735 = vunpack.c.l.b16 %v3559
      %v3736 = vunpack.c.l.b16 %v3560
      %v3737 = vunpack.c.l.b16 %v3561
      %v3738 = vunpack.c.l.b16 %v3562
      %v3739 = vunpack.c.l.b16 %v3563
      %v3740 = vunpack.c.l.b16 %v3564
      %v3741 = vunpack.c.l.b16 %v3565
      %v3742 = vunpack.c.l.b16 %v3566
      %v3743 = vpack.c.b16 %v3728, %v3727
      %v3744 = vpack.c.b16 %v3730, %v3729
      %v3745 = vpack.c.b16 %v3732, %v3731
      %v3746 = vpack.c.b16 %v3734, %v3733
      %v3747 = vpack.c.b16 %v3736, %v3735
      %v3748 = vpack.c.b16 %v3738, %v3737
      %v3749 = vpack.c.b16 %v3740, %v3739
      %v3750 = vpack.c.b16 %v3742, %v3741
      %3759 = vmatprep.subr.bf16.mxu0 0
      %3760 = vmatpush1.bf16.msra.mxu0 %v3743
      %3761 = vmatprep.subr.bf16.mxu0 0
      %3762 = vmatpush1.bf16.msra.mxu0 %v3744
      %3763 = vmatprep.subr.bf16.mxu0 0
      %3764 = vmatpush1.bf16.msra.mxu0 %v3745
      %3765 = vmatprep.subr.bf16.mxu0 0
      %3766 = vmatpush1.bf16.msra.mxu0 %v3746
      %3767 = vmatprep.subr.bf16.mxu0 0
      %3768 = vmatpush1.bf16.msra.mxu0 %v3747
      %3769 = vmatprep.subr.bf16.mxu0 0
      %3770 = vmatpush1.bf16.msra.mxu0 %v3748
      %3771 = vmatprep.subr.bf16.mxu0 0
      %3772 = vmatpush1.bf16.msra.mxu0 %v3749
      %3773 = vmatprep.subr.bf16.mxu0 0
      %3774 = vmatpush1.bf16.msra.mxu0 %v3750
      %3775 = vmatprep.subr.bf16.mxu0 0
      %3776 = vmatpush1.bf16.msra.mxu0 0
      %3777 = vmatprep.subr.bf16.mxu0 0
      %3778 = vmatpush1.bf16.msra.mxu0 0
      %3779 = vmatprep.subr.bf16.mxu0 0
      %3780 = vmatpush1.bf16.msra.mxu0 0
      %3781 = vmatprep.subr.bf16.mxu0 0
      %3782 = vmatpush1.bf16.msra.mxu0 0
      %3783 = vmatprep.subr.bf16.mxu0 0
      %3784 = vmatpush1.bf16.msra.mxu0 0
      %3785 = vmatprep.subr.bf16.mxu0 0
      %3786 = vmatpush1.bf16.msra.mxu0 0
      %3787 = vmatprep.subr.bf16.mxu0 0
      %3788 = vmatpush1.bf16.msra.mxu0 0
      %3789 = vmatprep.subr.bf16.mxu0 0
      %3790 = vmatpush1.bf16.msra.mxu0 0
      %3791 = vmatprep.mubr.bf16.mxu0 0
      %3792 = vmatmul.mubr.bf16.gmra.mrb[0].mxu0 %v3663
      %v3793 = vpop.f32.mrb[0].mxu0
      %v3794 = vadd.f32 0.0, %v3793
      %v3795 = vpop.f32.mrb[0].mxu0
      %v3796 = vpop.f32.mrb[0].mxu0
      %v3797 = vadd.f32 0.0, %v3796
      %v3798 = vpop.f32.mrb[0].mxu0
      %3799 = vmatprep.mubr.bf16.mxu0 0
      %3800 = vmatmul.mubr.bf16.gmra.mrb[0].mxu0 %v3664
      %v3801 = vpop.f32.mrb[0].mxu0
      %v3802 = vadd.f32 0.0, %v3801
      %v3803 = vpop.f32.mrb[0].mxu0
      %v3804 = vpop.f32.mrb[0].mxu0
      %v3805 = vadd.f32 0.0, %v3804
      %v3806 = vpop.f32.mrb[0].mxu0
      %3807 = vmatprep.mubr.bf16.mxu0 0
      %3808 = vmatmul.mubr.bf16.gmra.mrb[0].mxu0 %v3665
      %v3809 = vpop.f32.mrb[0].mxu0
      %v3810 = vadd.f32 0.0, %v3809
      %v3811 = vpop.f32.mrb[0].mxu0
      %v3812 = vpop.f32.mrb[0].mxu0
      %v3813 = vadd.f32 0.0, %v3812
      %v3814 = vpop.f32.mrb[0].mxu0
      %3815 = vmatprep.mubr.bf16.mxu0 0
      %3816 = vmatmul.mubr.bf16.gmra.mrb[0].mxu0 %v3666
      %v3817 = vpop.f32.mrb[0].mxu0
      %v3818 = vadd.f32 0.0, %v3817
      %v3819 = vpop.f32.mrb[0].mxu0
      %v3820 = vpop.f32.mrb[0].mxu0
      %v3821 = vadd.f32 0.0, %v3820
      %v3822 = vpop.f32.mrb[0].mxu0
      %3823 = vmatprep.mubr.bf16.mxu0 0
      %3824 = vmatmul.mubr.bf16.gmra.mrb[0].mxu0 %v3667
      %v3825 = vpop.f32.mrb[0].mxu0
      %v3826 = vadd.f32 0.0, %v3825
      %v3827 = vpop.f32.mrb[0].mxu0
      %v3828 = vpop.f32.mrb[0].mxu0
      %v3829 = vadd.f32 0.0, %v3828
      %v3830 = vpop.f32.mrb[0].mxu0
      %3831 = vmatprep.mubr.bf16.mxu0 0
      %3832 = vmatmul.mubr.bf16.gmra.mrb[0].mxu0 %v3668
      %v3833 = vpop.f32.mrb[0].mxu0
      %v3834 = vadd.f32 0.0, %v3833
      %v3835 = vpop.f32.mrb[0].mxu0
      %v3836 = vpop.f32.mrb[0].mxu0
      %v3837 = vadd.f32 0.0, %v3836
      %v3838 = vpop.f32.mrb[0].mxu0
      %3839 = vmatprep.mubr.bf16.mxu0 0
      %3840 = vmatmul.mubr.bf16.gmra.mrb[0].mxu0 %v3669
      %v3841 = vpop.f32.mrb[0].mxu0
      %v3842 = vadd.f32 0.0, %v3841
      %v3843 = vpop.f32.mrb[0].mxu0
      %v3844 = vpop.f32.mrb[0].mxu0
      %v3845 = vadd.f32 0.0, %v3844
      %v3846 = vpop.f32.mrb[0].mxu0
      %3847 = vmatprep.mubr.bf16.mxu0 0
      %3848 = vmatmul.mubr.bf16.gmra.mrb[0].mxu0 %v3670
      %v3849 = vpop.f32.mrb[0].mxu0
      %v3850 = vadd.f32 0.0, %v3849
      %v3851 = vpop.f32.mrb[0].mxu0
      %v3852 = vpop.f32.mrb[0].mxu0
      %v3853 = vadd.f32 0.0, %v3852
      %v3854 = vpop.f32.mrb[0].mxu0
      %3855 = vmatprep.mubr.bf16.mxu0 0
      %3856 = vmatmul.mubr.bf16.gmra.mrb[0].mxu0 %v3671
      %v3857 = vpop.f32.mrb[0].mxu0
      %v3858 = vadd.f32 0.0, %v3857
      %v3859 = vpop.f32.mrb[0].mxu0
      %v3860 = vpop.f32.mrb[0].mxu0
      %v3861 = vadd.f32 0.0, %v3860
      %v3862 = vpop.f32.mrb[0].mxu0
      %3863 = vmatprep.mubr.bf16.mxu0 0
      %3864 = vmatmul.mubr.bf16.gmra.mrb[0].mxu0 %v3672
      %v3865 = vpop.f32.mrb[0].mxu0
      %v3866 = vadd.f32 0.0, %v3865
      %v3867 = vpop.f32.mrb[0].mxu0
      %v3868 = vpop.f32.mrb[0].mxu0
      %v3869 = vadd.f32 0.0, %v3868
      %v3870 = vpop.f32.mrb[0].mxu0
      %3871 = vmatprep.mubr.bf16.mxu0 0
      %3872 = vmatmul.mubr.bf16.gmra.mrb[0].mxu0 %v3673
      %v3873 = vpop.f32.mrb[0].mxu0
      %v3874 = vadd.f32 0.0, %v3873
      %v3875 = vpop.f32.mrb[0].mxu0
      %v3876 = vpop.f32.mrb[0].mxu0
      %v3877 = vadd.f32 0.0, %v3876
      %v3878 = vpop.f32.mrb[0].mxu0
      %3879 = vmatprep.mubr.bf16.mxu0 0
      %3880 = vmatmul.mubr.bf16.gmra.mrb[0].mxu0 %v3674
      %v3881 = vpop.f32.mrb[0].mxu0
      %v3882 = vadd.f32 0.0, %v3881
      %v3883 = vpop.f32.mrb[0].mxu0
      %v3884 = vpop.f32.mrb[0].mxu0
      %v3885 = vadd.f32 0.0, %v3884
      %v3886 = vpop.f32.mrb[0].mxu0
      %3887 = vmatprep.mubr.bf16.mxu0 0
      %3888 = vmatmul.mubr.bf16.gmra.mrb[0].mxu0 %v3675
      %v3889 = vpop.f32.mrb[0].mxu0
      %v3890 = vadd.f32 0.0, %v3889
      %v3891 = vpop.f32.mrb[0].mxu0
      %v3892 = vpop.f32.mrb[0].mxu0
      %v3893 = vadd.f32 0.0, %v3892
      %v3894 = vpop.f32.mrb[0].mxu0
      %3895 = vmatprep.mubr.bf16.mxu0 0
      %3896 = vmatmul.mubr.bf16.gmra.mrb[0].mxu0 %v3676
      %v3897 = vpop.f32.mrb[0].mxu0
      %v3898 = vadd.f32 0.0, %v3897
      %v3899 = vpop.f32.mrb[0].mxu0
      %v3900 = vpop.f32.mrb[0].mxu0
      %v3901 = vadd.f32 0.0, %v3900
      %v3902 = vpop.f32.mrb[0].mxu0
      %3903 = vmatprep.mubr.bf16.mxu0 0
      %3904 = vmatmul.mubr.bf16.gmra.mrb[0].mxu0 %v3677
      %v3905 = vpop.f32.mrb[0].mxu0
      %v3906 = vadd.f32 0.0, %v3905
      %v3907 = vpop.f32.mrb[0].mxu0
      %v3908 = vpop.f32.mrb[0].mxu0
      %v3909 = vadd.f32 0.0, %v3908
      %v3910 = vpop.f32.mrb[0].mxu0
      %3911 = vmatprep.mubr.bf16.mxu0 0
      %3912 = vmatmul.mubr.bf16.gmra.mrb[0].mxu0 %v3678
      %v3913 = vpop.f32.mrb[0].mxu0
      %v3914 = vadd.f32 0.0, %v3913
      %v3915 = vpop.f32.mrb[0].mxu0
      %v3916 = vpop.f32.mrb[0].mxu0
      %v3917 = vadd.f32 0.0, %v3916
      %v3918 = vpop.f32.mrb[0].mxu0
      %3919 = vmatprep.mubr.bf16.mxu0 0
      %3920 = vmatmul.mubr.bf16.gmra.mrb[0].mxu0 %v3679
      %v3921 = vpop.f32.mrb[0].mxu0
      %v3922 = vadd.f32 0.0, %v3921
      %v3923 = vpop.f32.mrb[0].mxu0
      %v3924 = vpop.f32.mrb[0].mxu0
      %v3925 = vadd.f32 0.0, %v3924
      %v3926 = vpop.f32.mrb[0].mxu0
      %3927 = vmatprep.mubr.bf16.mxu0 0
      %3928 = vmatmul.mubr.bf16.gmra.mrb[0].mxu0 %v3680
      %v3929 = vpop.f32.mrb[0].mxu0
      %v3930 = vadd.f32 0.0, %v3929
      %v3931 = vpop.f32.mrb[0].mxu0
      %v3932 = vpop.f32.mrb[0].mxu0
      %v3933 = vadd.f32 0.0, %v3932
      %v3934 = vpop.f32.mrb[0].mxu0
      %3935 = vmatprep.mubr.bf16.mxu0 0
      %3936 = vmatmul.mubr.bf16.gmra.mrb[0].mxu0 %v3681
      %v3937 = vpop.f32.mrb[0].mxu0
      %v3938 = vadd.f32 0.0, %v3937
      %v3939 = vpop.f32.mrb[0].mxu0
      %v3940 = vpop.f32.mrb[0].mxu0
      %v3941 = vadd.f32 0.0, %v3940
      %v3942 = vpop.f32.mrb[0].mxu0
      %3943 = vmatprep.mubr.bf16.mxu0 0
      %3944 = vmatmul.mubr.bf16.gmra.mrb[0].mxu0 %v3682
      %v3945 = vpop.f32.mrb[0].mxu0
      %v3946 = vadd.f32 0.0, %v3945
      %v3947 = vpop.f32.mrb[0].mxu0
      %v3948 = vpop.f32.mrb[0].mxu0
      %v3949 = vadd.f32 0.0, %v3948
      %v3950 = vpop.f32.mrb[0].mxu0
      %3951 = vmatprep.mubr.bf16.mxu0 0
      %3952 = vmatmul.mubr.bf16.gmra.mrb[0].mxu0 %v3683
      %v3953 = vpop.f32.mrb[0].mxu0
      %v3954 = vadd.f32 0.0, %v3953
      %v3955 = vpop.f32.mrb[0].mxu0
      %v3956 = vpop.f32.mrb[0].mxu0
      %v3957 = vadd.f32 0.0, %v3956
      %v3958 = vpop.f32.mrb[0].mxu0
      %3959 = vmatprep.mubr.bf16.mxu0 0
      %3960 = vmatmul.mubr.bf16.gmra.mrb[0].mxu0 %v3684
      %v3961 = vpop.f32.mrb[0].mxu0
      %v3962 = vadd.f32 0.0, %v3961
      %v3963 = vpop.f32.mrb[0].mxu0
      %v3964 = vpop.f32.mrb[0].mxu0
      %v3965 = vadd.f32 0.0, %v3964
      %v3966 = vpop.f32.mrb[0].mxu0
      %3967 = vmatprep.mubr.bf16.mxu0 0
      %3968 = vmatmul.mubr.bf16.gmra.mrb[0].mxu0 %v3685
      %v3969 = vpop.f32.mrb[0].mxu0
      %v3970 = vadd.f32 0.0, %v3969
      %v3971 = vpop.f32.mrb[0].mxu0
      %v3972 = vpop.f32.mrb[0].mxu0
      %v3973 = vadd.f32 0.0, %v3972
      %v3974 = vpop.f32.mrb[0].mxu0
      %3975 = vmatprep.mubr.bf16.mxu0 0
      %3976 = vmatmul.mubr.bf16.gmra.mrb[0].mxu0 %v3686
      %v3977 = vpop.f32.mrb[0].mxu0
      %v3978 = vadd.f32 0.0, %v3977
      %v3979 = vpop.f32.mrb[0].mxu0
      %v3980 = vpop.f32.mrb[0].mxu0
      %v3981 = vadd.f32 0.0, %v3980
      %v3982 = vpop.f32.mrb[0].mxu0
      %3983 = vdwg.mxu0
      %v3984 = vadd.f32 %v3454, %v3794
      %v3985 = vadd.f32 %v3455, %v3797
      %v3986 = vadd.f32 %v3456, %v3802
      %v3987 = vadd.f32 %v3457, %v3805
      %v3988 = vadd.f32 %v3458, %v3810
      %v3989 = vadd.f32 %v3459, %v3813
      %v3990 = vadd.f32 %v3460, %v3818
      %v3991 = vadd.f32 %v3461, %v3821
      %v3992 = vadd.f32 %v3462, %v3826
      %v3993 = vadd.f32 %v3463, %v3829
      %v3994 = vadd.f32 %v3464, %v3834
      %v3995 = vadd.f32 %v3465, %v3837
      %v3996 = vadd.f32 %v3466, %v3842
      %v3997 = vadd.f32 %v3467, %v3845
      %v3998 = vadd.f32 %v3468, %v3850
      %v3999 = vadd.f32 %v3469, %v3853
      %v4000 = vadd.f32 %v3470, %v3858
      %v4001 = vadd.f32 %v3471, %v3861
      %v4002 = vadd.f32 %v3472, %v3866
      %v4003 = vadd.f32 %v3473, %v3869
      %v4004 = vadd.f32 %v3474, %v3874
      %v4005 = vadd.f32 %v3475, %v3877
      %v4006 = vadd.f32 %v3476, %v3882
      %v4007 = vadd.f32 %v3477, %v3885
      %v4008 = vadd.f32 %v3478, %v3890
      %v4009 = vadd.f32 %v3479, %v3893
      %v4010 = vadd.f32 %v3480, %v3898
      %v4011 = vadd.f32 %v3481, %v3901
      %v4012 = vadd.f32 %v3482, %v3906
      %v4013 = vadd.f32 %v3483, %v3909
      %v4014 = vadd.f32 %v3484, %v3914
      %v4015 = vadd.f32 %v3485, %v3917
      %v4016 = vadd.f32 %v3486, %v3922
      %v4017 = vadd.f32 %v3487, %v3925
      %v4018 = vadd.f32 %v3488, %v3930
      %v4019 = vadd.f32 %v3489, %v3933
      %v4020 = vadd.f32 %v3490, %v3938
      %v4021 = vadd.f32 %v3491, %v3941
      %v4022 = vadd.f32 %v3492, %v3946
      %v4023 = vadd.f32 %v3493, %v3949
      %v4024 = vadd.f32 %v3494, %v3954
      %v4025 = vadd.f32 %v3495, %v3957
      %v4026 = vadd.f32 %v3496, %v3962
      %v4027 = vadd.f32 %v3497, %v3965
      %v4028 = vadd.f32 %v3498, %v3970
      %v4029 = vadd.f32 %v3499, %v3973
      %v4030 = vadd.f32 %v3500, %v3978
      %v4031 = vadd.f32 %v3501, %v3981
      %v4032 = vld [vmem:[%s408 + $0x18] sm:$0xf]
      %v4033 = vld [vmem:[%s408 + $0x1c] sm:$0xf]
      %v4034 = vld [vmem:[%s408 + $0x20] sm:$0xf]
      %v4035 = vld [vmem:[%s408 + $0x24] sm:$0xf]
      %v4036 = vld [vmem:[%s408 + $0x28] sm:$0xf]
      %v4037 = vld [vmem:[%s408 + $0x2c] sm:$0xf]
      %v4038 = vld [vmem:[%s408 + $0x30] sm:$0xf]
      %v4039 = vld [vmem:[%s408 + $0x34] sm:$0xf]
      %v4040 = vld [vmem:[%s408 + $0x38] sm:$0xf]
      %v4041 = vld [vmem:[%s408 + $0x3c] sm:$0xf]
      %v4042 = vld [vmem:[%s408 + $0x40] sm:$0xf]
      %v4043 = vld [vmem:[%s408 + $0x44] sm:$0xf]
      %v4044 = vld [vmem:[%s408 + $0x48] sm:$0xf]
      %v4045 = vld [vmem:[%s408 + $0x4c] sm:$0xf]
      %v4046 = vld [vmem:[%s408 + $0x50] sm:$0xf]
      %v4047 = vld [vmem:[%s408 + $0x54] sm:$0xf]
      %v4048 = vld [vmem:[%s408 + $0x58] sm:$0xf]
      %v4049 = vld [vmem:[%s408 + $0x5c] sm:$0xf]
      %v4050 = vld [vmem:[%s408 + $0x60] sm:$0xf]
      %v4051 = vld [vmem:[%s408 + $0x64] sm:$0xf]
      %v4052 = vld [vmem:[%s408 + $0x68] sm:$0xf]
      %v4053 = vld [vmem:[%s408 + $0x6c] sm:$0xf]
      %v4054 = vld [vmem:[%s408 + $0x70] sm:$0xf]
      %v4055 = vld [vmem:[%s408 + $0x74] sm:$0xf]
      %v4056 = vld [vmem:[%s408 + $0x78] sm:$0xf]
      %v4057 = vld [vmem:[%s408 + $0x7c] sm:$0xf]
      %v4058 = vld [vmem:[%s408 + $0x80] sm:$0xf]
      %v4059 = vld [vmem:[%s408 + $0x84] sm:$0xf]
      %v4060 = vld [vmem:[%s408 + $0x88] sm:$0xf]
      %v4061 = vld [vmem:[%s408 + $0x8c] sm:$0xf]
      %v4062 = vld [vmem:[%s408 + $0x90] sm:$0xf]
      %v4063 = vld [vmem:[%s408 + $0x94] sm:$0xf]
      %v4064 = vld [vmem:[%s408 + $0x98] sm:$0xf]
      %v4065 = vld [vmem:[%s408 + $0x9c] sm:$0xf]
      %v4066 = vld [vmem:[%s408 + $0xa0] sm:$0xf]
      %v4067 = vld [vmem:[%s408 + $0xa4] sm:$0xf]
      %v4068 = vld [vmem:[%s408 + $0xa8] sm:$0xf]
      %v4069 = vld [vmem:[%s408 + $0xac] sm:$0xf]
      %v4070 = vld [vmem:[%s408 + $0xb0] sm:$0xf]
      %v4071 = vld [vmem:[%s408 + $0xb4] sm:$0xf]
      %v4072 = vld [vmem:[%s408 + $0xb8] sm:$0xf]
      %v4073 = vld [vmem:[%s408 + $0xbc] sm:$0xf]
      %v4074 = vld [vmem:[%s408 + $0xc0] sm:$0xf]
      %v4075 = vld [vmem:[%s408 + $0xc4] sm:$0xf]
      %v4076 = vld [vmem:[%s408 + $0xc8] sm:$0xf]
      %v4077 = vld [vmem:[%s408 + $0xcc] sm:$0xf]
      %v4078 = vld [vmem:[%s408 + $0xd0] sm:$0xf]
      %v4079 = vld [vmem:[%s408 + $0xd4] sm:$0xf]
      %v4080 = vld [vmem:[%s408 + $0xd8] sm:$0x1]
      %s4081 = scalar_lea.vmem %s2, 448
      %v4082 = vld [vmem:[%s4081] sm:$0xf]
      %v4083 = vld [vmem:[%s4081 + $0x4] sm:$0xf]
      %v4084 = vld [vmem:[%s4081 + $0x8] sm:$0xf]
      %v4085 = vld [vmem:[%s4081 + $0xc] sm:$0xf]
      %v4086 = vld [vmem:[%s4081 + $0x10] sm:$0xf]
      %v4087 = vld [vmem:[%s4081 + $0x14] sm:$0xf]
      %v4088 = vld [vmem:[%s4081 + $0x18] sm:$0xf]
      %v4089 = vld [vmem:[%s4081 + $0x1c] sm:$0xf]
      %v4090 = vld [vmem:[%s4081 + $0x20] sm:$0xf]
      %v4091 = vld [vmem:[%s4081 + $0x24] sm:$0xf]
      %v4092 = vld [vmem:[%s4081 + $0x28] sm:$0xf]
      %v4093 = vld [vmem:[%s4081 + $0x2c] sm:$0xf]
      %v4094 = vld [vmem:[%s4081 + $0x30] sm:$0xf]
      %v4095 = vld [vmem:[%s4081 + $0x34] sm:$0xf]
      %v4096 = vld [vmem:[%s4081 + $0x38] sm:$0xf]
      %v4097 = vld [vmem:[%s4081 + $0x3c] sm:$0xf]
      %v4147 = vunpack.c.l.b16 %v4032
      %v4148 = vunpack.c.l.b16 %v4033
      %v4149 = vunpack.c.l.b16 %v4034
      %v4150 = vunpack.c.l.b16 %v4035
      %v4151 = vunpack.c.l.b16 %v4036
      %v4152 = vunpack.c.l.b16 %v4037
      %v4153 = vunpack.c.l.b16 %v4038
      %v4154 = vunpack.c.l.b16 %v4039
      %v4155 = vunpack.c.l.b16 %v4040
      %v4156 = vunpack.c.l.b16 %v4041
      %v4157 = vunpack.c.l.b16 %v4042
      %v4158 = vunpack.c.l.b16 %v4043
      %v4159 = vunpack.c.l.b16 %v4044
      %v4160 = vunpack.c.l.b16 %v4045
      %v4161 = vunpack.c.l.b16 %v4046
      %v4162 = vunpack.c.l.b16 %v4047
      %v4163 = vunpack.c.l.b16 %v4048
      %v4164 = vunpack.c.l.b16 %v4049
      %v4165 = vunpack.c.l.b16 %v4050
      %v4166 = vunpack.c.l.b16 %v4051
      %v4167 = vunpack.c.l.b16 %v4052
      %v4168 = vunpack.c.l.b16 %v4053
      %v4169 = vunpack.c.l.b16 %v4054
      %v4170 = vunpack.c.l.b16 %v4055
      %v4171 = vunpack.c.l.b16 %v4056
      %v4172 = vunpack.c.l.b16 %v4057
      %v4173 = vunpack.c.l.b16 %v4058
      %v4174 = vunpack.c.l.b16 %v4059
      %v4175 = vunpack.c.l.b16 %v4060
      %v4176 = vunpack.c.l.b16 %v4061
      %v4177 = vunpack.c.l.b16 %v4062
      %v4178 = vunpack.c.l.b16 %v4063
      %v4179 = vunpack.c.l.b16 %v4064
      %v4180 = vunpack.c.l.b16 %v4065
      %v4181 = vunpack.c.l.b16 %v4066
      %v4182 = vunpack.c.l.b16 %v4067
      %v4183 = vunpack.c.l.b16 %v4068
      %v4184 = vunpack.c.l.b16 %v4069
      %v4185 = vunpack.c.l.b16 %v4070
      %v4186 = vunpack.c.l.b16 %v4071
      %v4187 = vunpack.c.l.b16 %v4072
      %v4188 = vunpack.c.l.b16 %v4073
      %v4189 = vunpack.c.l.b16 %v4074
      %v4190 = vunpack.c.l.b16 %v4075
      %v4191 = vunpack.c.l.b16 %v4076
      %v4192 = vunpack.c.l.b16 %v4077
      %v4193 = vunpack.c.l.b16 %v4078
      %v4194 = vunpack.c.l.b16 %v4079
      %v4195 = vunpack.c.l.b16 %v4080
      %v4196 = vpack.c.b16 %v4148, %v4147
      %v4197 = vpack.c.b16 %v4150, %v4149
      %v4198 = vpack.c.b16 %v4152, %v4151
      %v4199 = vpack.c.b16 %v4154, %v4153
      %v4200 = vpack.c.b16 %v4156, %v4155
      %v4201 = vpack.c.b16 %v4158, %v4157
      %v4202 = vpack.c.b16 %v4160, %v4159
      %v4203 = vpack.c.b16 %v4162, %v4161
      %v4204 = vpack.c.b16 %v4164, %v4163
      %v4205 = vpack.c.b16 %v4166, %v4165
      %v4206 = vpack.c.b16 %v4168, %v4167
      %v4207 = vpack.c.b16 %v4170, %v4169
      %v4208 = vpack.c.b16 %v4172, %v4171
      %v4209 = vpack.c.b16 %v4174, %v4173
      %v4210 = vpack.c.b16 %v4176, %v4175
      %v4211 = vpack.c.b16 %v4178, %v4177
      %v4212 = vpack.c.b16 %v4180, %v4179
      %v4213 = vpack.c.b16 %v4182, %v4181
      %v4214 = vpack.c.b16 %v4184, %v4183
      %v4215 = vpack.c.b16 %v4186, %v4185
      %v4216 = vpack.c.b16 %v4188, %v4187
      %v4217 = vpack.c.b16 %v4190, %v4189
      %v4218 = vpack.c.b16 %v4192, %v4191
      %v4219 = vpack.c.b16 %v4194, %v4193
      %v4220 = vpack.c.b16 %v4195, %v4195
      %v4222 = vshrl.u32 %v4196, 16
      %v4224 = vshll.u32 %v4196, 16
      %v4226 = vrot.slane %v4224, 1
      %v4227 = vor.u32 %v4222, %v4226
      %v4229 = vshll.u32 %v4197, 16
      %v4231 = vrot.slane %v4229, 1
      %v4232 = vsel %vm620, %v4227, %v4231
      %v4233 = vshrl.u32 %v4197, 16
      %v4235 = vor.u32 %v4233, %v4231
      %v4237 = vshll.u32 %v4198, 16
      %v4239 = vrot.slane %v4237, 1
      %v4240 = vsel %vm620, %v4235, %v4239
      %v4241 = vshrl.u32 %v4198, 16
      %v4243 = vor.u32 %v4241, %v4239
      %v4245 = vshll.u32 %v4199, 16
      %v4247 = vrot.slane %v4245, 1
      %v4248 = vsel %vm620, %v4243, %v4247
      %v4249 = vshrl.u32 %v4199, 16
      %v4251 = vor.u32 %v4249, %v4247
      %v4253 = vshll.u32 %v4200, 16
      %v4255 = vrot.slane %v4253, 1
      %v4256 = vsel %vm620, %v4251, %v4255
      %v4257 = vshrl.u32 %v4200, 16
      %v4259 = vor.u32 %v4257, %v4255
      %v4261 = vshll.u32 %v4201, 16
      %v4263 = vrot.slane %v4261, 1
      %v4264 = vsel %vm620, %v4259, %v4263
      %v4265 = vshrl.u32 %v4201, 16
      %v4267 = vor.u32 %v4265, %v4263
      %v4269 = vshll.u32 %v4202, 16
      %v4271 = vrot.slane %v4269, 1
      %v4272 = vsel %vm620, %v4267, %v4271
      %v4273 = vshrl.u32 %v4202, 16
      %v4275 = vor.u32 %v4273, %v4271
      %v4277 = vshll.u32 %v4203, 16
      %v4279 = vrot.slane %v4277, 1
      %v4280 = vsel %vm620, %v4275, %v4279
      %v4281 = vshrl.u32 %v4203, 16
      %v4283 = vor.u32 %v4281, %v4279
      %v4285 = vshll.u32 %v4204, 16
      %v4287 = vrot.slane %v4285, 1
      %v4288 = vsel %vm620, %v4283, %v4287
      %v4289 = vshrl.u32 %v4204, 16
      %v4291 = vor.u32 %v4289, %v4287
      %v4293 = vshll.u32 %v4205, 16
      %v4295 = vrot.slane %v4293, 1
      %v4296 = vsel %vm620, %v4291, %v4295
      %v4297 = vshrl.u32 %v4205, 16
      %v4299 = vor.u32 %v4297, %v4295
      %v4301 = vshll.u32 %v4206, 16
      %v4303 = vrot.slane %v4301, 1
      %v4304 = vsel %vm620, %v4299, %v4303
      %v4305 = vshrl.u32 %v4206, 16
      %v4307 = vor.u32 %v4305, %v4303
      %v4309 = vshll.u32 %v4207, 16
      %v4311 = vrot.slane %v4309, 1
      %v4312 = vsel %vm620, %v4307, %v4311
      %v4313 = vshrl.u32 %v4207, 16
      %v4315 = vor.u32 %v4313, %v4311
      %v4317 = vshll.u32 %v4208, 16
      %v4319 = vrot.slane %v4317, 1
      %v4320 = vsel %vm620, %v4315, %v4319
      %v4321 = vshrl.u32 %v4208, 16
      %v4323 = vor.u32 %v4321, %v4319
      %v4325 = vshll.u32 %v4209, 16
      %v4327 = vrot.slane %v4325, 1
      %v4328 = vsel %vm620, %v4323, %v4327
      %v4329 = vshrl.u32 %v4209, 16
      %v4331 = vor.u32 %v4329, %v4327
      %v4333 = vshll.u32 %v4210, 16
      %v4335 = vrot.slane %v4333, 1
      %v4336 = vsel %vm620, %v4331, %v4335
      %v4337 = vshrl.u32 %v4210, 16
      %v4339 = vor.u32 %v4337, %v4335
      %v4341 = vshll.u32 %v4211, 16
      %v4343 = vrot.slane %v4341, 1
      %v4344 = vsel %vm620, %v4339, %v4343
      %v4345 = vshrl.u32 %v4211, 16
      %v4347 = vor.u32 %v4345, %v4343
      %v4349 = vshll.u32 %v4212, 16
      %v4351 = vrot.slane %v4349, 1
      %v4352 = vsel %vm620, %v4347, %v4351
      %v4353 = vshrl.u32 %v4212, 16
      %v4355 = vor.u32 %v4353, %v4351
      %v4357 = vshll.u32 %v4213, 16
      %v4359 = vrot.slane %v4357, 1
      %v4360 = vsel %vm620, %v4355, %v4359
      %v4361 = vshrl.u32 %v4213, 16
      %v4363 = vor.u32 %v4361, %v4359
      %v4365 = vshll.u32 %v4214, 16
      %v4367 = vrot.slane %v4365, 1
      %v4368 = vsel %vm620, %v4363, %v4367
      %v4369 = vshrl.u32 %v4214, 16
      %v4371 = vor.u32 %v4369, %v4367
      %v4373 = vshll.u32 %v4215, 16
      %v4375 = vrot.slane %v4373, 1
      %v4376 = vsel %vm620, %v4371, %v4375
      %v4377 = vshrl.u32 %v4215, 16
      %v4379 = vor.u32 %v4377, %v4375
      %v4381 = vshll.u32 %v4216, 16
      %v4383 = vrot.slane %v4381, 1
      %v4384 = vsel %vm620, %v4379, %v4383
      %v4385 = vshrl.u32 %v4216, 16
      %v4387 = vor.u32 %v4385, %v4383
      %v4389 = vshll.u32 %v4217, 16
      %v4391 = vrot.slane %v4389, 1
      %v4392 = vsel %vm620, %v4387, %v4391
      %v4393 = vshrl.u32 %v4217, 16
      %v4395 = vor.u32 %v4393, %v4391
      %v4397 = vshll.u32 %v4218, 16
      %v4399 = vrot.slane %v4397, 1
      %v4400 = vsel %vm620, %v4395, %v4399
      %v4401 = vshrl.u32 %v4218, 16
      %v4403 = vor.u32 %v4401, %v4399
      %v4405 = vshll.u32 %v4219, 16
      %v4407 = vrot.slane %v4405, 1
      %v4408 = vsel %vm620, %v4403, %v4407
      %v4409 = vshrl.u32 %v4219, 16
      %v4411 = vor.u32 %v4409, %v4407
      %v4413 = vshll.u32 %v4220, 16
      %v4415 = vrot.slane %v4413, 1
      %v4416 = vsel %vm620, %v4411, %v4415
      %v4457 = vunpack.c.l.b16 %v4082
      %v4458 = vunpack.c.l.b16 %v4083
      %v4459 = vunpack.c.l.b16 %v4084
      %v4460 = vunpack.c.l.b16 %v4085
      %v4461 = vunpack.c.l.b16 %v4086
      %v4462 = vunpack.c.l.b16 %v4087
      %v4463 = vunpack.c.l.b16 %v4088
      %v4464 = vunpack.c.l.b16 %v4089
      %v4465 = vunpack.c.l.b16 %v4090
      %v4466 = vunpack.c.l.b16 %v4091
      %v4467 = vunpack.c.l.b16 %v4092
      %v4468 = vunpack.c.l.b16 %v4093
      %v4469 = vunpack.c.l.b16 %v4094
      %v4470 = vunpack.c.l.b16 %v4095
      %v4471 = vunpack.c.l.b16 %v4096
      %v4472 = vunpack.c.l.b16 %v4097
      %v4473 = vpack.c.b16 %v4458, %v4457
      %v4474 = vpack.c.b16 %v4460, %v4459
      %v4475 = vpack.c.b16 %v4462, %v4461
      %v4476 = vpack.c.b16 %v4464, %v4463
      %v4477 = vpack.c.b16 %v4466, %v4465
      %v4478 = vpack.c.b16 %v4468, %v4467
      %v4479 = vpack.c.b16 %v4470, %v4469
      %v4480 = vpack.c.b16 %v4472, %v4471
      %4489 = vmatprep.subr.bf16.mxu0 0
      %4490 = vmatpush1.bf16.msra.mxu0 %v4473
      %4491 = vmatprep.subr.bf16.mxu0 0
      %4492 = vmatpush1.bf16.msra.mxu0 %v4474
      %4493 = vmatprep.subr.bf16.mxu0 0
      %4494 = vmatpush1.bf16.msra.mxu0 %v4475
      %4495 = vmatprep.subr.bf16.mxu0 0
      %4496 = vmatpush1.bf16.msra.mxu0 %v4476
      %4497 = vmatprep.subr.bf16.mxu0 0
      %4498 = vmatpush1.bf16.msra.mxu0 %v4477
      %4499 = vmatprep.subr.bf16.mxu0 0
      %4500 = vmatpush1.bf16.msra.mxu0 %v4478
      %4501 = vmatprep.subr.bf16.mxu0 0
      %4502 = vmatpush1.bf16.msra.mxu0 %v4479
      %4503 = vmatprep.subr.bf16.mxu0 0
      %4504 = vmatpush1.bf16.msra.mxu0 %v4480
      %4505 = vmatprep.subr.bf16.mxu0 0
      %4506 = vmatpush1.bf16.msra.mxu0 0
      %4507 = vmatprep.subr.bf16.mxu0 0
      %4508 = vmatpush1.bf16.msra.mxu0 0
      %4509 = vmatprep.subr.bf16.mxu0 0
      %4510 = vmatpush1.bf16.msra.mxu0 0
      %4511 = vmatprep.subr.bf16.mxu0 0
      %4512 = vmatpush1.bf16.msra.mxu0 0
      %4513 = vmatprep.subr.bf16.mxu0 0
      %4514 = vmatpush1.bf16.msra.mxu0 0
      %4515 = vmatprep.subr.bf16.mxu0 0
      %4516 = vmatpush1.bf16.msra.mxu0 0
      %4517 = vmatprep.subr.bf16.mxu0 0
      %4518 = vmatpush1.bf16.msra.mxu0 0
      %4519 = vmatprep.subr.bf16.mxu0 0
      %4520 = vmatpush1.bf16.msra.mxu0 0
      %4521 = vmatprep.mubr.bf16.mxu0 0
      %4522 = vmatmul.mubr.bf16.gmra.mrb[0].mxu0 %v4232
      %v4523 = vpop.f32.mrb[0].mxu0
      %v4524 = vadd.f32 0.0, %v4523
      %v4525 = vpop.f32.mrb[0].mxu0
      %v4526 = vpop.f32.mrb[0].mxu0
      %v4527 = vadd.f32 0.0, %v4526
      %v4528 = vpop.f32.mrb[0].mxu0
      %4529 = vmatprep.mubr.bf16.mxu0 0
      %4530 = vmatmul.mubr.bf16.gmra.mrb[0].mxu0 %v4240
      %v4531 = vpop.f32.mrb[0].mxu0
      %v4532 = vadd.f32 0.0, %v4531
      %v4533 = vpop.f32.mrb[0].mxu0
      %v4534 = vpop.f32.mrb[0].mxu0
      %v4535 = vadd.f32 0.0, %v4534
      %v4536 = vpop.f32.mrb[0].mxu0
      %4537 = vmatprep.mubr.bf16.mxu0 0
      %4538 = vmatmul.mubr.bf16.gmra.mrb[0].mxu0 %v4248
      %v4539 = vpop.f32.mrb[0].mxu0
      %v4540 = vadd.f32 0.0, %v4539
      %v4541 = vpop.f32.mrb[0].mxu0
      %v4542 = vpop.f32.mrb[0].mxu0
      %v4543 = vadd.f32 0.0, %v4542
      %v4544 = vpop.f32.mrb[0].mxu0
      %4545 = vmatprep.mubr.bf16.mxu0 0
      %4546 = vmatmul.mubr.bf16.gmra.mrb[0].mxu0 %v4256
      %v4547 = vpop.f32.mrb[0].mxu0
      %v4548 = vadd.f32 0.0, %v4547
      %v4549 = vpop.f32.mrb[0].mxu0
      %v4550 = vpop.f32.mrb[0].mxu0
      %v4551 = vadd.f32 0.0, %v4550
      %v4552 = vpop.f32.mrb[0].mxu0
      %4553 = vmatprep.mubr.bf16.mxu0 0
      %4554 = vmatmul.mubr.bf16.gmra.mrb[0].mxu0 %v4264
      %v4555 = vpop.f32.mrb[0].mxu0
      %v4556 = vadd.f32 0.0, %v4555
      %v4557 = vpop.f32.mrb[0].mxu0
      %v4558 = vpop.f32.mrb[0].mxu0
      %v4559 = vadd.f32 0.0, %v4558
      %v4560 = vpop.f32.mrb[0].mxu0
      %4561 = vmatprep.mubr.bf16.mxu0 0
      %4562 = vmatmul.mubr.bf16.gmra.mrb[0].mxu0 %v4272
      %v4563 = vpop.f32.mrb[0].mxu0
      %v4564 = vadd.f32 0.0, %v4563
      %v4565 = vpop.f32.mrb[0].mxu0
      %v4566 = vpop.f32.mrb[0].mxu0
      %v4567 = vadd.f32 0.0, %v4566
      %v4568 = vpop.f32.mrb[0].mxu0
      %4569 = vmatprep.mubr.bf16.mxu0 0
      %4570 = vmatmul.mubr.bf16.gmra.mrb[0].mxu0 %v4280
      %v4571 = vpop.f32.mrb[0].mxu0
      %v4572 = vadd.f32 0.0, %v4571
      %v4573 = vpop.f32.mrb[0].mxu0
      %v4574 = vpop.f32.mrb[0].mxu0
      %v4575 = vadd.f32 0.0, %v4574
      %v4576 = vpop.f32.mrb[0].mxu0
      %4577 = vmatprep.mubr.bf16.mxu0 0
      %4578 = vmatmul.mubr.bf16.gmra.mrb[0].mxu0 %v4288
      %v4579 = vpop.f32.mrb[0].mxu0
      %v4580 = vadd.f32 0.0, %v4579
      %v4581 = vpop.f32.mrb[0].mxu0
      %v4582 = vpop.f32.mrb[0].mxu0
      %v4583 = vadd.f32 0.0, %v4582
      %v4584 = vpop.f32.mrb[0].mxu0
      %4585 = vmatprep.mubr.bf16.mxu0 0
      %4586 = vmatmul.mubr.bf16.gmra.mrb[0].mxu0 %v4296
      %v4587 = vpop.f32.mrb[0].mxu0
      %v4588 = vadd.f32 0.0, %v4587
      %v4589 = vpop.f32.mrb[0].mxu0
      %v4590 = vpop.f32.mrb[0].mxu0
      %v4591 = vadd.f32 0.0, %v4590
      %v4592 = vpop.f32.mrb[0].mxu0
      %4593 = vmatprep.mubr.bf16.mxu0 0
      %4594 = vmatmul.mubr.bf16.gmra.mrb[0].mxu0 %v4304
      %v4595 = vpop.f32.mrb[0].mxu0
      %v4596 = vadd.f32 0.0, %v4595
      %v4597 = vpop.f32.mrb[0].mxu0
      %v4598 = vpop.f32.mrb[0].mxu0
      %v4599 = vadd.f32 0.0, %v4598
      %v4600 = vpop.f32.mrb[0].mxu0
      %4601 = vmatprep.mubr.bf16.mxu0 0
      %4602 = vmatmul.mubr.bf16.gmra.mrb[0].mxu0 %v4312
      %v4603 = vpop.f32.mrb[0].mxu0
      %v4604 = vadd.f32 0.0, %v4603
      %v4605 = vpop.f32.mrb[0].mxu0
      %v4606 = vpop.f32.mrb[0].mxu0
      %v4607 = vadd.f32 0.0, %v4606
      %v4608 = vpop.f32.mrb[0].mxu0
      %4609 = vmatprep.mubr.bf16.mxu0 0
      %4610 = vmatmul.mubr.bf16.gmra.mrb[0].mxu0 %v4320
      %v4611 = vpop.f32.mrb[0].mxu0
      %v4612 = vadd.f32 0.0, %v4611
      %v4613 = vpop.f32.mrb[0].mxu0
      %v4614 = vpop.f32.mrb[0].mxu0
      %v4615 = vadd.f32 0.0, %v4614
      %v4616 = vpop.f32.mrb[0].mxu0
      %4617 = vmatprep.mubr.bf16.mxu0 0
      %4618 = vmatmul.mubr.bf16.gmra.mrb[0].mxu0 %v4328
      %v4619 = vpop.f32.mrb[0].mxu0
      %v4620 = vadd.f32 0.0, %v4619
      %v4621 = vpop.f32.mrb[0].mxu0
      %v4622 = vpop.f32.mrb[0].mxu0
      %v4623 = vadd.f32 0.0, %v4622
      %v4624 = vpop.f32.mrb[0].mxu0
      %4625 = vmatprep.mubr.bf16.mxu0 0
      %4626 = vmatmul.mubr.bf16.gmra.mrb[0].mxu0 %v4336
      %v4627 = vpop.f32.mrb[0].mxu0
      %v4628 = vadd.f32 0.0, %v4627
      %v4629 = vpop.f32.mrb[0].mxu0
      %v4630 = vpop.f32.mrb[0].mxu0
      %v4631 = vadd.f32 0.0, %v4630
      %v4632 = vpop.f32.mrb[0].mxu0
      %4633 = vmatprep.mubr.bf16.mxu0 0
      %4634 = vmatmul.mubr.bf16.gmra.mrb[0].mxu0 %v4344
      %v4635 = vpop.f32.mrb[0].mxu0
      %v4636 = vadd.f32 0.0, %v4635
      %v4637 = vpop.f32.mrb[0].mxu0
      %v4638 = vpop.f32.mrb[0].mxu0
      %v4639 = vadd.f32 0.0, %v4638
      %v4640 = vpop.f32.mrb[0].mxu0
      %4641 = vmatprep.mubr.bf16.mxu0 0
      %4642 = vmatmul.mubr.bf16.gmra.mrb[0].mxu0 %v4352
      %v4643 = vpop.f32.mrb[0].mxu0
      %v4644 = vadd.f32 0.0, %v4643
      %v4645 = vpop.f32.mrb[0].mxu0
      %v4646 = vpop.f32.mrb[0].mxu0
      %v4647 = vadd.f32 0.0, %v4646
      %v4648 = vpop.f32.mrb[0].mxu0
      %4649 = vmatprep.mubr.bf16.mxu0 0
      %4650 = vmatmul.mubr.bf16.gmra.mrb[0].mxu0 %v4360
      %v4651 = vpop.f32.mrb[0].mxu0
      %v4652 = vadd.f32 0.0, %v4651
      %v4653 = vpop.f32.mrb[0].mxu0
      %v4654 = vpop.f32.mrb[0].mxu0
      %v4655 = vadd.f32 0.0, %v4654
      %v4656 = vpop.f32.mrb[0].mxu0
      %4657 = vmatprep.mubr.bf16.mxu0 0
      %4658 = vmatmul.mubr.bf16.gmra.mrb[0].mxu0 %v4368
      %v4659 = vpop.f32.mrb[0].mxu0
      %v4660 = vadd.f32 0.0, %v4659
      %v4661 = vpop.f32.mrb[0].mxu0
      %v4662 = vpop.f32.mrb[0].mxu0
      %v4663 = vadd.f32 0.0, %v4662
      %v4664 = vpop.f32.mrb[0].mxu0
      %4665 = vmatprep.mubr.bf16.mxu0 0
      %4666 = vmatmul.mubr.bf16.gmra.mrb[0].mxu0 %v4376
      %v4667 = vpop.f32.mrb[0].mxu0
      %v4668 = vadd.f32 0.0, %v4667
      %v4669 = vpop.f32.mrb[0].mxu0
      %v4670 = vpop.f32.mrb[0].mxu0
      %v4671 = vadd.f32 0.0, %v4670
      %v4672 = vpop.f32.mrb[0].mxu0
      %4673 = vmatprep.mubr.bf16.mxu0 0
      %4674 = vmatmul.mubr.bf16.gmra.mrb[0].mxu0 %v4384
      %v4675 = vpop.f32.mrb[0].mxu0
      %v4676 = vadd.f32 0.0, %v4675
      %v4677 = vpop.f32.mrb[0].mxu0
      %v4678 = vpop.f32.mrb[0].mxu0
      %v4679 = vadd.f32 0.0, %v4678
      %v4680 = vpop.f32.mrb[0].mxu0
      %4681 = vmatprep.mubr.bf16.mxu0 0
      %4682 = vmatmul.mubr.bf16.gmra.mrb[0].mxu0 %v4392
      %v4683 = vpop.f32.mrb[0].mxu0
      %v4684 = vadd.f32 0.0, %v4683
      %v4685 = vpop.f32.mrb[0].mxu0
      %v4686 = vpop.f32.mrb[0].mxu0
      %v4687 = vadd.f32 0.0, %v4686
      %v4688 = vpop.f32.mrb[0].mxu0
      %4689 = vmatprep.mubr.bf16.mxu0 0
      %4690 = vmatmul.mubr.bf16.gmra.mrb[0].mxu0 %v4400
      %v4691 = vpop.f32.mrb[0].mxu0
      %v4692 = vadd.f32 0.0, %v4691
      %v4693 = vpop.f32.mrb[0].mxu0
      %v4694 = vpop.f32.mrb[0].mxu0
      %v4695 = vadd.f32 0.0, %v4694
      %v4696 = vpop.f32.mrb[0].mxu0
      %4697 = vmatprep.mubr.bf16.mxu0 0
      %4698 = vmatmul.mubr.bf16.gmra.mrb[0].mxu0 %v4408
      %v4699 = vpop.f32.mrb[0].mxu0
      %v4700 = vadd.f32 0.0, %v4699
      %v4701 = vpop.f32.mrb[0].mxu0
      %v4702 = vpop.f32.mrb[0].mxu0
      %v4703 = vadd.f32 0.0, %v4702
      %v4704 = vpop.f32.mrb[0].mxu0
      %4705 = vmatprep.mubr.bf16.mxu0 0
      %4706 = vmatmul.mubr.bf16.gmra.mrb[0].mxu0 %v4416
      %v4707 = vpop.f32.mrb[0].mxu0
      %v4708 = vadd.f32 0.0, %v4707
      %v4709 = vpop.f32.mrb[0].mxu0
      %v4710 = vpop.f32.mrb[0].mxu0
      %v4711 = vadd.f32 0.0, %v4710
      %v4712 = vpop.f32.mrb[0].mxu0
      %4713 = vdwg.mxu0
      %v4714 = vadd.f32 %v3984, %v4524
      %v4715 = vadd.f32 %v3985, %v4527
      %v4716 = vadd.f32 %v3986, %v4532
      %v4717 = vadd.f32 %v3987, %v4535
      %v4718 = vadd.f32 %v3988, %v4540
      %v4719 = vadd.f32 %v3989, %v4543
      %v4720 = vadd.f32 %v3990, %v4548
      %v4721 = vadd.f32 %v3991, %v4551
      %v4722 = vadd.f32 %v3992, %v4556
      %v4723 = vadd.f32 %v3993, %v4559
      %v4724 = vadd.f32 %v3994, %v4564
      %v4725 = vadd.f32 %v3995, %v4567
      %v4726 = vadd.f32 %v3996, %v4572
      %v4727 = vadd.f32 %v3997, %v4575
      %v4728 = vadd.f32 %v3998, %v4580
      %v4729 = vadd.f32 %v3999, %v4583
      %v4730 = vadd.f32 %v4000, %v4588
      %v4731 = vadd.f32 %v4001, %v4591
      %v4732 = vadd.f32 %v4002, %v4596
      %v4733 = vadd.f32 %v4003, %v4599
      %v4734 = vadd.f32 %v4004, %v4604
      %v4735 = vadd.f32 %v4005, %v4607
      %v4736 = vadd.f32 %v4006, %v4612
      %v4737 = vadd.f32 %v4007, %v4615
      %v4738 = vadd.f32 %v4008, %v4620
      %v4739 = vadd.f32 %v4009, %v4623
      %v4740 = vadd.f32 %v4010, %v4628
      %v4741 = vadd.f32 %v4011, %v4631
      %v4742 = vadd.f32 %v4012, %v4636
      %v4743 = vadd.f32 %v4013, %v4639
      %v4744 = vadd.f32 %v4014, %v4644
      %v4745 = vadd.f32 %v4015, %v4647
      %v4746 = vadd.f32 %v4016, %v4652
      %v4747 = vadd.f32 %v4017, %v4655
      %v4748 = vadd.f32 %v4018, %v4660
      %v4749 = vadd.f32 %v4019, %v4663
      %v4750 = vadd.f32 %v4020, %v4668
      %v4751 = vadd.f32 %v4021, %v4671
      %v4752 = vadd.f32 %v4022, %v4676
      %v4753 = vadd.f32 %v4023, %v4679
      %v4754 = vadd.f32 %v4024, %v4684
      %v4755 = vadd.f32 %v4025, %v4687
      %v4756 = vadd.f32 %v4026, %v4692
      %v4757 = vadd.f32 %v4027, %v4695
      %v4758 = vadd.f32 %v4028, %v4700
      %v4759 = vadd.f32 %v4029, %v4703
      %v4760 = vadd.f32 %v4030, %v4708
      %v4761 = vadd.f32 %v4031, %v4711
      %v4762 = vld [vmem:[%s408 + $0x18] sm:$0xe]
      %s4763 = scalar_lea.vmem %s2, 512
      %v4764 = vld [vmem:[%s4763] sm:$0xf]
      %v4765 = vld [vmem:[%s4763 + $0x4] sm:$0xf]
      %v4766 = vld [vmem:[%s4763 + $0x8] sm:$0xf]
      %v4767 = vld [vmem:[%s4763 + $0xc] sm:$0xf]
      %v4768 = vld [vmem:[%s4763 + $0x10] sm:$0xf]
      %v4769 = vld [vmem:[%s4763 + $0x14] sm:$0xf]
      %v4770 = vld [vmem:[%s4763 + $0x18] sm:$0xf]
      %v4771 = vld [vmem:[%s4763 + $0x1c] sm:$0xf]
      %v4772 = vld [vmem:[%s4763 + $0x20] sm:$0xf]
      %v4773 = vld [vmem:[%s4763 + $0x24] sm:$0xf]
      %v4774 = vld [vmem:[%s4763 + $0x28] sm:$0xf]
      %v4775 = vld [vmem:[%s4763 + $0x2c] sm:$0xf]
      %v4776 = vld [vmem:[%s4763 + $0x30] sm:$0xf]
      %v4777 = vld [vmem:[%s4763 + $0x34] sm:$0xf]
      %v4778 = vld [vmem:[%s4763 + $0x38] sm:$0xf]
      %v4779 = vld [vmem:[%s4763 + $0x3c] sm:$0xf]
      %v4781 = vunpack.c.l.b16 %v4762
      %v4782 = vpack.c.b16 %v4148, %v4781
      %v4783 = vrot.slane %v4782, 1
      %v4784 = vrot.slane %v4197, 1
      %v4785 = vsel %vm1432, %v4783, %v4784
      %v4786 = vrot.slane %v4198, 1
      %v4787 = vsel %vm1432, %v4784, %v4786
      %v4788 = vrot.slane %v4199, 1
      %v4789 = vsel %vm1432, %v4786, %v4788
      %v4790 = vrot.slane %v4200, 1
      %v4791 = vsel %vm1432, %v4788, %v4790
      %v4792 = vrot.slane %v4201, 1
      %v4793 = vsel %vm1432, %v4790, %v4792
      %v4794 = vrot.slane %v4202, 1
      %v4795 = vsel %vm1432, %v4792, %v4794
      %v4796 = vrot.slane %v4203, 1
      %v4797 = vsel %vm1432, %v4794, %v4796
      %v4798 = vrot.slane %v4204, 1
      %v4799 = vsel %vm1432, %v4796, %v4798
      %v4800 = vrot.slane %v4205, 1
      %v4801 = vsel %vm1432, %v4798, %v4800
      %v4802 = vrot.slane %v4206, 1
      %v4803 = vsel %vm1432, %v4800, %v4802
      %v4804 = vrot.slane %v4207, 1
      %v4805 = vsel %vm1432, %v4802, %v4804
      %v4806 = vrot.slane %v4208, 1
      %v4807 = vsel %vm1432, %v4804, %v4806
      %v4808 = vrot.slane %v4209, 1
      %v4809 = vsel %vm1432, %v4806, %v4808
      %v4810 = vrot.slane %v4210, 1
      %v4811 = vsel %vm1432, %v4808, %v4810
      %v4812 = vrot.slane %v4211, 1
      %v4813 = vsel %vm1432, %v4810, %v4812
      %v4814 = vrot.slane %v4212, 1
      %v4815 = vsel %vm1432, %v4812, %v4814
      %v4816 = vrot.slane %v4213, 1
      %v4817 = vsel %vm1432, %v4814, %v4816
      %v4818 = vrot.slane %v4214, 1
      %v4819 = vsel %vm1432, %v4816, %v4818
      %v4820 = vrot.slane %v4215, 1
      %v4821 = vsel %vm1432, %v4818, %v4820
      %v4822 = vrot.slane %v4216, 1
      %v4823 = vsel %vm1432, %v4820, %v4822
      %v4824 = vrot.slane %v4217, 1
      %v4825 = vsel %vm1432, %v4822, %v4824
      %v4826 = vrot.slane %v4218, 1
      %v4827 = vsel %vm1432, %v4824, %v4826
      %v4828 = vrot.slane %v4219, 1
      %v4829 = vsel %vm1432, %v4826, %v4828
      %v4830 = vrot.slane %v4220, 1
      %v4831 = vsel %vm1432, %v4828, %v4830
      %v4872 = vunpack.c.l.b16 %v4764
      %v4873 = vunpack.c.l.b16 %v4765
      %v4874 = vunpack.c.l.b16 %v4766
      %v4875 = vunpack.c.l.b16 %v4767
      %v4876 = vunpack.c.l.b16 %v4768
      %v4877 = vunpack.c.l.b16 %v4769
      %v4878 = vunpack.c.l.b16 %v4770
      %v4879 = vunpack.c.l.b16 %v4771
      %v4880 = vunpack.c.l.b16 %v4772
      %v4881 = vunpack.c.l.b16 %v4773
      %v4882 = vunpack.c.l.b16 %v4774
      %v4883 = vunpack.c.l.b16 %v4775
      %v4884 = vunpack.c.l.b16 %v4776
      %v4885 = vunpack.c.l.b16 %v4777
      %v4886 = vunpack.c.l.b16 %v4778
      %v4887 = vunpack.c.l.b16 %v4779
      %v4888 = vpack.c.b16 %v4873, %v4872
      %v4889 = vpack.c.b16 %v4875, %v4874
      %v4890 = vpack.c.b16 %v4877, %v4876
      %v4891 = vpack.c.b16 %v4879, %v4878
      %v4892 = vpack.c.b16 %v4881, %v4880
      %v4893 = vpack.c.b16 %v4883, %v4882
      %v4894 = vpack.c.b16 %v4885, %v4884
      %v4895 = vpack.c.b16 %v4887, %v4886
      %4904 = vmatprep.subr.bf16.mxu0 0
      %4905 = vmatpush1.bf16.msra.mxu0 %v4888
      %4906 = vmatprep.subr.bf16.mxu0 0
      %4907 = vmatpush1.bf16.msra.mxu0 %v4889
      %4908 = vmatprep.subr.bf16.mxu0 0
      %4909 = vmatpush1.bf16.msra.mxu0 %v4890
      %4910 = vmatprep.subr.bf16.mxu0 0
      %4911 = vmatpush1.bf16.msra.mxu0 %v4891
      %4912 = vmatprep.subr.bf16.mxu0 0
      %4913 = vmatpush1.bf16.msra.mxu0 %v4892
      %4914 = vmatprep.subr.bf16.mxu0 0
      %4915 = vmatpush1.bf16.msra.mxu0 %v4893
      %4916 = vmatprep.subr.bf16.mxu0 0
      %4917 = vmatpush1.bf16.msra.mxu0 %v4894
      %4918 = vmatprep.subr.bf16.mxu0 0
      %4919 = vmatpush1.bf16.msra.mxu0 %v4895
      %4920 = vmatprep.subr.bf16.mxu0 0
      %4921 = vmatpush1.bf16.msra.mxu0 0
      %4922 = vmatprep.subr.bf16.mxu0 0
      %4923 = vmatpush1.bf16.msra.mxu0 0
      %4924 = vmatprep.subr.bf16.mxu0 0
      %4925 = vmatpush1.bf16.msra.mxu0 0
      %4926 = vmatprep.subr.bf16.mxu0 0
      %4927 = vmatpush1.bf16.msra.mxu0 0
      %4928 = vmatprep.subr.bf16.mxu0 0
      %4929 = vmatpush1.bf16.msra.mxu0 0
      %4930 = vmatprep.subr.bf16.mxu0 0
      %4931 = vmatpush1.bf16.msra.mxu0 0
      %4932 = vmatprep.subr.bf16.mxu0 0
      %4933 = vmatpush1.bf16.msra.mxu0 0
      %4934 = vmatprep.subr.bf16.mxu0 0
      %4935 = vmatpush1.bf16.msra.mxu0 0
      %4936 = vmatprep.mubr.bf16.mxu0 0
      %4937 = vmatmul.mubr.bf16.gmra.mrb[0].mxu0 %v4785
      %v4938 = vpop.f32.mrb[0].mxu0
      %v4939 = vadd.f32 0.0, %v4938
      %v4940 = vpop.f32.mrb[0].mxu0
      %v4941 = vpop.f32.mrb[0].mxu0
      %v4942 = vadd.f32 0.0, %v4941
      %v4943 = vpop.f32.mrb[0].mxu0
      %4944 = vmatprep.mubr.bf16.mxu0 0
      %4945 = vmatmul.mubr.bf16.gmra.mrb[0].mxu0 %v4787
      %v4946 = vpop.f32.mrb[0].mxu0
      %v4947 = vadd.f32 0.0, %v4946
      %v4948 = vpop.f32.mrb[0].mxu0
      %v4949 = vpop.f32.mrb[0].mxu0
      %v4950 = vadd.f32 0.0, %v4949
      %v4951 = vpop.f32.mrb[0].mxu0
      %4952 = vmatprep.mubr.bf16.mxu0 0
      %4953 = vmatmul.mubr.bf16.gmra.mrb[0].mxu0 %v4789
      %v4954 = vpop.f32.mrb[0].mxu0
      %v4955 = vadd.f32 0.0, %v4954
      %v4956 = vpop.f32.mrb[0].mxu0
      %v4957 = vpop.f32.mrb[0].mxu0
      %v4958 = vadd.f32 0.0, %v4957
      %v4959 = vpop.f32.mrb[0].mxu0
      %4960 = vmatprep.mubr.bf16.mxu0 0
      %4961 = vmatmul.mubr.bf16.gmra.mrb[0].mxu0 %v4791
      %v4962 = vpop.f32.mrb[0].mxu0
      %v4963 = vadd.f32 0.0, %v4962
      %v4964 = vpop.f32.mrb[0].mxu0
      %v4965 = vpop.f32.mrb[0].mxu0
      %v4966 = vadd.f32 0.0, %v4965
      %v4967 = vpop.f32.mrb[0].mxu0
      %4968 = vmatprep.mubr.bf16.mxu0 0
      %4969 = vmatmul.mubr.bf16.gmra.mrb[0].mxu0 %v4793
      %v4970 = vpop.f32.mrb[0].mxu0
      %v4971 = vadd.f32 0.0, %v4970
      %v4972 = vpop.f32.mrb[0].mxu0
      %v4973 = vpop.f32.mrb[0].mxu0
      %v4974 = vadd.f32 0.0, %v4973
      %v4975 = vpop.f32.mrb[0].mxu0
      %4976 = vmatprep.mubr.bf16.mxu0 0
      %4977 = vmatmul.mubr.bf16.gmra.mrb[0].mxu0 %v4795
      %v4978 = vpop.f32.mrb[0].mxu0
      %v4979 = vadd.f32 0.0, %v4978
      %v4980 = vpop.f32.mrb[0].mxu0
      %v4981 = vpop.f32.mrb[0].mxu0
      %v4982 = vadd.f32 0.0, %v4981
      %v4983 = vpop.f32.mrb[0].mxu0
      %4984 = vmatprep.mubr.bf16.mxu0 0
      %4985 = vmatmul.mubr.bf16.gmra.mrb[0].mxu0 %v4797
      %v4986 = vpop.f32.mrb[0].mxu0
      %v4987 = vadd.f32 0.0, %v4986
      %v4988 = vpop.f32.mrb[0].mxu0
      %v4989 = vpop.f32.mrb[0].mxu0
      %v4990 = vadd.f32 0.0, %v4989
      %v4991 = vpop.f32.mrb[0].mxu0
      %4992 = vmatprep.mubr.bf16.mxu0 0
      %4993 = vmatmul.mubr.bf16.gmra.mrb[0].mxu0 %v4799
      %v4994 = vpop.f32.mrb[0].mxu0
      %v4995 = vadd.f32 0.0, %v4994
      %v4996 = vpop.f32.mrb[0].mxu0
      %v4997 = vpop.f32.mrb[0].mxu0
      %v4998 = vadd.f32 0.0, %v4997
      %v4999 = vpop.f32.mrb[0].mxu0
      %5000 = vmatprep.mubr.bf16.mxu0 0
      %5001 = vmatmul.mubr.bf16.gmra.mrb[0].mxu0 %v4801
      %v5002 = vpop.f32.mrb[0].mxu0
      %v5003 = vadd.f32 0.0, %v5002
      %v5004 = vpop.f32.mrb[0].mxu0
      %v5005 = vpop.f32.mrb[0].mxu0
      %v5006 = vadd.f32 0.0, %v5005
      %v5007 = vpop.f32.mrb[0].mxu0
      %5008 = vmatprep.mubr.bf16.mxu0 0
      %5009 = vmatmul.mubr.bf16.gmra.mrb[0].mxu0 %v4803
      %v5010 = vpop.f32.mrb[0].mxu0
      %v5011 = vadd.f32 0.0, %v5010
      %v5012 = vpop.f32.mrb[0].mxu0
      %v5013 = vpop.f32.mrb[0].mxu0
      %v5014 = vadd.f32 0.0, %v5013
      %v5015 = vpop.f32.mrb[0].mxu0
      %5016 = vmatprep.mubr.bf16.mxu0 0
      %5017 = vmatmul.mubr.bf16.gmra.mrb[0].mxu0 %v4805
      %v5018 = vpop.f32.mrb[0].mxu0
      %v5019 = vadd.f32 0.0, %v5018
      %v5020 = vpop.f32.mrb[0].mxu0
      %v5021 = vpop.f32.mrb[0].mxu0
      %v5022 = vadd.f32 0.0, %v5021
      %v5023 = vpop.f32.mrb[0].mxu0
      %5024 = vmatprep.mubr.bf16.mxu0 0
      %5025 = vmatmul.mubr.bf16.gmra.mrb[0].mxu0 %v4807
      %v5026 = vpop.f32.mrb[0].mxu0
      %v5027 = vadd.f32 0.0, %v5026
      %v5028 = vpop.f32.mrb[0].mxu0
      %v5029 = vpop.f32.mrb[0].mxu0
      %v5030 = vadd.f32 0.0, %v5029
      %v5031 = vpop.f32.mrb[0].mxu0
      %5032 = vmatprep.mubr.bf16.mxu0 0
      %5033 = vmatmul.mubr.bf16.gmra.mrb[0].mxu0 %v4809
      %v5034 = vpop.f32.mrb[0].mxu0
      %v5035 = vadd.f32 0.0, %v5034
      %v5036 = vpop.f32.mrb[0].mxu0
      %v5037 = vpop.f32.mrb[0].mxu0
      %v5038 = vadd.f32 0.0, %v5037
      %v5039 = vpop.f32.mrb[0].mxu0
      %5040 = vmatprep.mubr.bf16.mxu0 0
      %5041 = vmatmul.mubr.bf16.gmra.mrb[0].mxu0 %v4811
      %v5042 = vpop.f32.mrb[0].mxu0
      %v5043 = vadd.f32 0.0, %v5042
      %v5044 = vpop.f32.mrb[0].mxu0
      %v5045 = vpop.f32.mrb[0].mxu0
      %v5046 = vadd.f32 0.0, %v5045
      %v5047 = vpop.f32.mrb[0].mxu0
      %5048 = vmatprep.mubr.bf16.mxu0 0
      %5049 = vmatmul.mubr.bf16.gmra.mrb[0].mxu0 %v4813
      %v5050 = vpop.f32.mrb[0].mxu0
      %v5051 = vadd.f32 0.0, %v5050
      %v5052 = vpop.f32.mrb[0].mxu0
      %v5053 = vpop.f32.mrb[0].mxu0
      %v5054 = vadd.f32 0.0, %v5053
      %v5055 = vpop.f32.mrb[0].mxu0
      %5056 = vmatprep.mubr.bf16.mxu0 0
      %5057 = vmatmul.mubr.bf16.gmra.mrb[0].mxu0 %v4815
      %v5058 = vpop.f32.mrb[0].mxu0
      %v5059 = vadd.f32 0.0, %v5058
      %v5060 = vpop.f32.mrb[0].mxu0
      %v5061 = vpop.f32.mrb[0].mxu0
      %v5062 = vadd.f32 0.0, %v5061
      %v5063 = vpop.f32.mrb[0].mxu0
      %5064 = vmatprep.mubr.bf16.mxu0 0
      %5065 = vmatmul.mubr.bf16.gmra.mrb[0].mxu0 %v4817
      %v5066 = vpop.f32.mrb[0].mxu0
      %v5067 = vadd.f32 0.0, %v5066
      %v5068 = vpop.f32.mrb[0].mxu0
      %v5069 = vpop.f32.mrb[0].mxu0
      %v5070 = vadd.f32 0.0, %v5069
      %v5071 = vpop.f32.mrb[0].mxu0
      %5072 = vmatprep.mubr.bf16.mxu0 0
      %5073 = vmatmul.mubr.bf16.gmra.mrb[0].mxu0 %v4819
      %v5074 = vpop.f32.mrb[0].mxu0
      %v5075 = vadd.f32 0.0, %v5074
      %v5076 = vpop.f32.mrb[0].mxu0
      %v5077 = vpop.f32.mrb[0].mxu0
      %v5078 = vadd.f32 0.0, %v5077
      %v5079 = vpop.f32.mrb[0].mxu0
      %5080 = vmatprep.mubr.bf16.mxu0 0
      %5081 = vmatmul.mubr.bf16.gmra.mrb[0].mxu0 %v4821
      %v5082 = vpop.f32.mrb[0].mxu0
      %v5083 = vadd.f32 0.0, %v5082
      %v5084 = vpop.f32.mrb[0].mxu0
      %v5085 = vpop.f32.mrb[0].mxu0
      %v5086 = vadd.f32 0.0, %v5085
      %v5087 = vpop.f32.mrb[0].mxu0
      %5088 = vmatprep.mubr.bf16.mxu0 0
      %5089 = vmatmul.mubr.bf16.gmra.mrb[0].mxu0 %v4823
      %v5090 = vpop.f32.mrb[0].mxu0
      %v5091 = vadd.f32 0.0, %v5090
      %v5092 = vpop.f32.mrb[0].mxu0
      %v5093 = vpop.f32.mrb[0].mxu0
      %v5094 = vadd.f32 0.0, %v5093
      %v5095 = vpop.f32.mrb[0].mxu0
      %5096 = vmatprep.mubr.bf16.mxu0 0
      %5097 = vmatmul.mubr.bf16.gmra.mrb[0].mxu0 %v4825
      %v5098 = vpop.f32.mrb[0].mxu0
      %v5099 = vadd.f32 0.0, %v5098
      %v5100 = vpop.f32.mrb[0].mxu0
      %v5101 = vpop.f32.mrb[0].mxu0
      %v5102 = vadd.f32 0.0, %v5101
      %v5103 = vpop.f32.mrb[0].mxu0
      %5104 = vmatprep.mubr.bf16.mxu0 0
      %5105 = vmatmul.mubr.bf16.gmra.mrb[0].mxu0 %v4827
      %v5106 = vpop.f32.mrb[0].mxu0
      %v5107 = vadd.f32 0.0, %v5106
      %v5108 = vpop.f32.mrb[0].mxu0
      %v5109 = vpop.f32.mrb[0].mxu0
      %v5110 = vadd.f32 0.0, %v5109
      %v5111 = vpop.f32.mrb[0].mxu0
      %5112 = vmatprep.mubr.bf16.mxu0 0
      %5113 = vmatmul.mubr.bf16.gmra.mrb[0].mxu0 %v4829
      %v5114 = vpop.f32.mrb[0].mxu0
      %v5115 = vadd.f32 0.0, %v5114
      %v5116 = vpop.f32.mrb[0].mxu0
      %v5117 = vpop.f32.mrb[0].mxu0
      %v5118 = vadd.f32 0.0, %v5117
      %v5119 = vpop.f32.mrb[0].mxu0
      %5120 = vmatprep.mubr.bf16.mxu0 0
      %5121 = vmatmul.mubr.bf16.gmra.mrb[0].mxu0 %v4831
      %v5122 = vpop.f32.mrb[0].mxu0
      %v5123 = vadd.f32 0.0, %v5122
      %v5124 = vpop.f32.mrb[0].mxu0
      %v5125 = vpop.f32.mrb[0].mxu0
      %v5126 = vadd.f32 0.0, %v5125
      %v5127 = vpop.f32.mrb[0].mxu0
      %5128 = vdwg.mxu0
      %v5129 = vadd.f32 %v4714, %v4939
      %v5130 = vadd.f32 %v4715, %v4942
      %v5131 = vadd.f32 %v4716, %v4947
      %v5132 = vadd.f32 %v4717, %v4950
      %v5133 = vadd.f32 %v4718, %v4955
      %v5134 = vadd.f32 %v4719, %v4958
      %v5135 = vadd.f32 %v4720, %v4963
      %v5136 = vadd.f32 %v4721, %v4966
      %v5137 = vadd.f32 %v4722, %v4971
      %v5138 = vadd.f32 %v4723, %v4974
      %v5139 = vadd.f32 %v4724, %v4979
      %v5140 = vadd.f32 %v4725, %v4982
      %v5141 = vadd.f32 %v4726, %v4987
      %v5142 = vadd.f32 %v4727, %v4990
      %v5143 = vadd.f32 %v4728, %v4995
      %v5144 = vadd.f32 %v4729, %v4998
      %v5145 = vadd.f32 %v4730, %v5003
      %v5146 = vadd.f32 %v4731, %v5006
      %v5147 = vadd.f32 %v4732, %v5011
      %v5148 = vadd.f32 %v4733, %v5014
      %v5149 = vadd.f32 %v4734, %v5019
      %v5150 = vadd.f32 %v4735, %v5022
      %v5151 = vadd.f32 %v4736, %v5027
      %v5152 = vadd.f32 %v4737, %v5030
      %v5153 = vadd.f32 %v4738, %v5035
      %v5154 = vadd.f32 %v4739, %v5038
      %v5155 = vadd.f32 %v4740, %v5043
      %v5156 = vadd.f32 %v4741, %v5046
      %v5157 = vadd.f32 %v4742, %v5051
      %v5158 = vadd.f32 %v4743, %v5054
      %v5159 = vadd.f32 %v4744, %v5059
      %v5160 = vadd.f32 %v4745, %v5062
      %v5161 = vadd.f32 %v4746, %v5067
      %v5162 = vadd.f32 %v4747, %v5070
      %v5163 = vadd.f32 %v4748, %v5075
      %v5164 = vadd.f32 %v4749, %v5078
      %v5165 = vadd.f32 %v4750, %v5083
      %v5166 = vadd.f32 %v4751, %v5086
      %v5167 = vadd.f32 %v4752, %v5091
      %v5168 = vadd.f32 %v4753, %v5094
      %v5169 = vadd.f32 %v4754, %v5099
      %v5170 = vadd.f32 %v4755, %v5102
      %v5171 = vadd.f32 %v4756, %v5107
      %v5172 = vadd.f32 %v4757, %v5110
      %v5173 = vadd.f32 %v4758, %v5115
      %v5174 = vadd.f32 %v4759, %v5118
      %v5175 = vadd.f32 %v4760, %v5123
      %v5176 = vadd.f32 %v4761, %v5126
      %v5177 = vld [vmem:[%s3] sm:$0x1]
      %v5179 = vlaneseq
      %v5180 = vshrl.u32 %v5179, 7
      %v5181 = vsub.s32 0, %v5180
      %v5182 = vrot.slane %v5177, %v5181
      %v5184 = vadd.f32 %v5129, %v5182
      %v5185 = vadd.f32 %v5130, %v5182
      %v5186 = vadd.f32 %v5131, %v5182
      %v5187 = vadd.f32 %v5132, %v5182
      %v5188 = vadd.f32 %v5133, %v5182
      %v5189 = vadd.f32 %v5134, %v5182
      %v5190 = vadd.f32 %v5135, %v5182
      %v5191 = vadd.f32 %v5136, %v5182
      %v5192 = vadd.f32 %v5137, %v5182
      %v5193 = vadd.f32 %v5138, %v5182
      %v5194 = vadd.f32 %v5139, %v5182
      %v5195 = vadd.f32 %v5140, %v5182
      %v5196 = vadd.f32 %v5141, %v5182
      %v5197 = vadd.f32 %v5142, %v5182
      %v5198 = vadd.f32 %v5143, %v5182
      %v5199 = vadd.f32 %v5144, %v5182
      %v5200 = vadd.f32 %v5145, %v5182
      %v5201 = vadd.f32 %v5146, %v5182
      %v5202 = vadd.f32 %v5147, %v5182
      %v5203 = vadd.f32 %v5148, %v5182
      %v5204 = vadd.f32 %v5149, %v5182
      %v5205 = vadd.f32 %v5150, %v5182
      %v5206 = vadd.f32 %v5151, %v5182
      %v5207 = vadd.f32 %v5152, %v5182
      %v5208 = vadd.f32 %v5153, %v5182
      %v5209 = vadd.f32 %v5154, %v5182
      %v5210 = vadd.f32 %v5155, %v5182
      %v5211 = vadd.f32 %v5156, %v5182
      %v5212 = vadd.f32 %v5157, %v5182
      %v5213 = vadd.f32 %v5158, %v5182
      %v5214 = vadd.f32 %v5159, %v5182
      %v5215 = vadd.f32 %v5160, %v5182
      %v5216 = vadd.f32 %v5161, %v5182
      %v5217 = vadd.f32 %v5162, %v5182
      %v5218 = vadd.f32 %v5163, %v5182
      %v5219 = vadd.f32 %v5164, %v5182
      %v5220 = vadd.f32 %v5165, %v5182
      %v5221 = vadd.f32 %v5166, %v5182
      %v5222 = vadd.f32 %v5167, %v5182
      %v5223 = vadd.f32 %v5168, %v5182
      %v5224 = vadd.f32 %v5169, %v5182
      %v5225 = vadd.f32 %v5170, %v5182
      %v5226 = vadd.f32 %v5171, %v5182
      %v5227 = vadd.f32 %v5172, %v5182
      %v5228 = vadd.f32 %v5173, %v5182
      %v5229 = vadd.f32 %v5174, %v5182
      %v5230 = vadd.f32 %v5175, %v5182
      %v5231 = vadd.f32 %v5176, %v5182
      %v5232 = vld [vmem:[%s4] sm:$0x1]
      %v5233 = vld [vmem:[%s5] sm:$0x1]
      %5234 = vadd.xlane.f32.xlu0 %v5184
      %v5235 = vpop.xlane.xlu0 %5234
      %5236 = vadd.xlane.f32.xlu0 %v5185
      %v5237 = vpop.xlane.xlu0 %5236
      %5238 = vadd.xlane.f32.xlu0 %v5186
      %v5239 = vpop.xlane.xlu0 %5238
      %5240 = vadd.xlane.f32.xlu0 %v5187
      %v5241 = vpop.xlane.xlu0 %5240
      %5242 = vadd.xlane.f32.xlu0 %v5188
      %v5243 = vpop.xlane.xlu0 %5242
      %5244 = vadd.xlane.f32.xlu0 %v5189
      %v5245 = vpop.xlane.xlu0 %5244
      %5246 = vadd.xlane.f32.xlu0 %v5190
      %v5247 = vpop.xlane.xlu0 %5246
      %5248 = vadd.xlane.f32.xlu0 %v5191
      %v5249 = vpop.xlane.xlu0 %5248
      %5250 = vadd.xlane.f32.xlu0 %v5192
      %v5251 = vpop.xlane.xlu0 %5250
      %5252 = vadd.xlane.f32.xlu0 %v5193
      %v5253 = vpop.xlane.xlu0 %5252
      %5254 = vadd.xlane.f32.xlu0 %v5194
      %v5255 = vpop.xlane.xlu0 %5254
      %5256 = vadd.xlane.f32.xlu0 %v5195
      %v5257 = vpop.xlane.xlu0 %5256
      %5258 = vadd.xlane.f32.xlu0 %v5196
      %v5259 = vpop.xlane.xlu0 %5258
      %5260 = vadd.xlane.f32.xlu0 %v5197
      %v5261 = vpop.xlane.xlu0 %5260
      %5262 = vadd.xlane.f32.xlu0 %v5198
      %v5263 = vpop.xlane.xlu0 %5262
      %5264 = vadd.xlane.f32.xlu0 %v5199
      %v5265 = vpop.xlane.xlu0 %5264
      %5266 = vadd.xlane.f32.xlu0 %v5200
      %v5267 = vpop.xlane.xlu0 %5266
      %5268 = vadd.xlane.f32.xlu0 %v5201
      %v5269 = vpop.xlane.xlu0 %5268
      %5270 = vadd.xlane.f32.xlu0 %v5202
      %v5271 = vpop.xlane.xlu0 %5270
      %5272 = vadd.xlane.f32.xlu0 %v5203
      %v5273 = vpop.xlane.xlu0 %5272
      %5274 = vadd.xlane.f32.xlu0 %v5204
      %v5275 = vpop.xlane.xlu0 %5274
      %5276 = vadd.xlane.f32.xlu0 %v5205
      %v5277 = vpop.xlane.xlu0 %5276
      %5278 = vadd.xlane.f32.xlu0 %v5206
      %v5279 = vpop.xlane.xlu0 %5278
      %5280 = vadd.xlane.f32.xlu0 %v5207
      %v5281 = vpop.xlane.xlu0 %5280
      %5282 = vadd.xlane.f32.xlu0 %v5208
      %v5283 = vpop.xlane.xlu0 %5282
      %5284 = vadd.xlane.f32.xlu0 %v5209
      %v5285 = vpop.xlane.xlu0 %5284
      %5286 = vadd.xlane.f32.xlu0 %v5210
      %v5287 = vpop.xlane.xlu0 %5286
      %5288 = vadd.xlane.f32.xlu0 %v5211
      %v5289 = vpop.xlane.xlu0 %5288
      %5290 = vadd.xlane.f32.xlu0 %v5212
      %v5291 = vpop.xlane.xlu0 %5290
      %5292 = vadd.xlane.f32.xlu0 %v5213
      %v5293 = vpop.xlane.xlu0 %5292
      %5294 = vadd.xlane.f32.xlu0 %v5214
      %v5295 = vpop.xlane.xlu0 %5294
      %5296 = vadd.xlane.f32.xlu0 %v5215
      %v5297 = vpop.xlane.xlu0 %5296
      %5298 = vadd.xlane.f32.xlu0 %v5216
      %v5299 = vpop.xlane.xlu0 %5298
      %5300 = vadd.xlane.f32.xlu0 %v5217
      %v5301 = vpop.xlane.xlu0 %5300
      %5302 = vadd.xlane.f32.xlu0 %v5218
      %v5303 = vpop.xlane.xlu0 %5302
      %5304 = vadd.xlane.f32.xlu0 %v5219
      %v5305 = vpop.xlane.xlu0 %5304
      %5306 = vadd.xlane.f32.xlu0 %v5220
      %v5307 = vpop.xlane.xlu0 %5306
      %5308 = vadd.xlane.f32.xlu0 %v5221
      %v5309 = vpop.xlane.xlu0 %5308
      %5310 = vadd.xlane.f32.xlu0 %v5222
      %v5311 = vpop.xlane.xlu0 %5310
      %5312 = vadd.xlane.f32.xlu0 %v5223
      %v5313 = vpop.xlane.xlu0 %5312
      %5314 = vadd.xlane.f32.xlu0 %v5224
      %v5315 = vpop.xlane.xlu0 %5314
      %5316 = vadd.xlane.f32.xlu0 %v5225
      %v5317 = vpop.xlane.xlu0 %5316
      %5318 = vadd.xlane.f32.xlu0 %v5226
      %v5319 = vpop.xlane.xlu0 %5318
      %5320 = vadd.xlane.f32.xlu0 %v5227
      %v5321 = vpop.xlane.xlu0 %5320
      %5322 = vadd.xlane.f32.xlu0 %v5228
      %v5323 = vpop.xlane.xlu0 %5322
      %5324 = vadd.xlane.f32.xlu0 %v5229
      %v5325 = vpop.xlane.xlu0 %5324
      %5326 = vadd.xlane.f32.xlu0 %v5230
      %v5327 = vpop.xlane.xlu0 %5326
      %5328 = vadd.xlane.f32.xlu0 %v5231
      %v5329 = vpop.xlane.xlu0 %5328
      %v5330 = vmul.f32 %v5235, 0.125
      %v5331 = vmul.f32 %v5237, 0.125
      %v5332 = vmul.f32 %v5239, 0.125
      %v5333 = vmul.f32 %v5241, 0.125
      %v5334 = vmul.f32 %v5243, 0.125
      %v5335 = vmul.f32 %v5245, 0.125
      %v5336 = vmul.f32 %v5247, 0.125
      %v5337 = vmul.f32 %v5249, 0.125
      %v5338 = vmul.f32 %v5251, 0.125
      %v5339 = vmul.f32 %v5253, 0.125
      %v5340 = vmul.f32 %v5255, 0.125
      %v5341 = vmul.f32 %v5257, 0.125
      %v5342 = vmul.f32 %v5259, 0.125
      %v5343 = vmul.f32 %v5261, 0.125
      %v5344 = vmul.f32 %v5263, 0.125
      %v5345 = vmul.f32 %v5265, 0.125
      %v5346 = vmul.f32 %v5267, 0.125
      %v5347 = vmul.f32 %v5269, 0.125
      %v5348 = vmul.f32 %v5271, 0.125
      %v5349 = vmul.f32 %v5273, 0.125
      %v5350 = vmul.f32 %v5275, 0.125
      %v5351 = vmul.f32 %v5277, 0.125
      %v5352 = vmul.f32 %v5279, 0.125
      %v5353 = vmul.f32 %v5281, 0.125
      %v5354 = vmul.f32 %v5283, 0.125
      %v5355 = vmul.f32 %v5285, 0.125
      %v5356 = vmul.f32 %v5287, 0.125
      %v5357 = vmul.f32 %v5289, 0.125
      %v5358 = vmul.f32 %v5291, 0.125
      %v5359 = vmul.f32 %v5293, 0.125
      %v5360 = vmul.f32 %v5295, 0.125
      %v5361 = vmul.f32 %v5297, 0.125
      %v5362 = vmul.f32 %v5299, 0.125
      %v5363 = vmul.f32 %v5301, 0.125
      %v5364 = vmul.f32 %v5303, 0.125
      %v5365 = vmul.f32 %v5305, 0.125
      %v5366 = vmul.f32 %v5307, 0.125
      %v5367 = vmul.f32 %v5309, 0.125
      %v5368 = vmul.f32 %v5311, 0.125
      %v5369 = vmul.f32 %v5313, 0.125
      %v5370 = vmul.f32 %v5315, 0.125
      %v5371 = vmul.f32 %v5317, 0.125
      %v5372 = vmul.f32 %v5319, 0.125
      %v5373 = vmul.f32 %v5321, 0.125
      %v5374 = vmul.f32 %v5323, 0.125
      %v5375 = vmul.f32 %v5325, 0.125
      %v5376 = vmul.f32 %v5327, 0.125
      %v5377 = vmul.f32 %v5329, 0.125
      %v5378 = vmul.f32 %v5184, %v5184
      %v5379 = vmul.f32 %v5185, %v5185
      %v5380 = vmul.f32 %v5186, %v5186
      %v5381 = vmul.f32 %v5187, %v5187
      %v5382 = vmul.f32 %v5188, %v5188
      %v5383 = vmul.f32 %v5189, %v5189
      %v5384 = vmul.f32 %v5190, %v5190
      %v5385 = vmul.f32 %v5191, %v5191
      %v5386 = vmul.f32 %v5192, %v5192
      %v5387 = vmul.f32 %v5193, %v5193
      %v5388 = vmul.f32 %v5194, %v5194
      %v5389 = vmul.f32 %v5195, %v5195
      %v5390 = vmul.f32 %v5196, %v5196
      %v5391 = vmul.f32 %v5197, %v5197
      %v5392 = vmul.f32 %v5198, %v5198
      %v5393 = vmul.f32 %v5199, %v5199
      %v5394 = vmul.f32 %v5200, %v5200
      %v5395 = vmul.f32 %v5201, %v5201
      %v5396 = vmul.f32 %v5202, %v5202
      %v5397 = vmul.f32 %v5203, %v5203
      %v5398 = vmul.f32 %v5204, %v5204
      %v5399 = vmul.f32 %v5205, %v5205
      %v5400 = vmul.f32 %v5206, %v5206
      %v5401 = vmul.f32 %v5207, %v5207
      %v5402 = vmul.f32 %v5208, %v5208
      %v5403 = vmul.f32 %v5209, %v5209
      %v5404 = vmul.f32 %v5210, %v5210
      %v5405 = vmul.f32 %v5211, %v5211
      %v5406 = vmul.f32 %v5212, %v5212
      %v5407 = vmul.f32 %v5213, %v5213
      %v5408 = vmul.f32 %v5214, %v5214
      %v5409 = vmul.f32 %v5215, %v5215
      %v5410 = vmul.f32 %v5216, %v5216
      %v5411 = vmul.f32 %v5217, %v5217
      %v5412 = vmul.f32 %v5218, %v5218
      %v5413 = vmul.f32 %v5219, %v5219
      %v5414 = vmul.f32 %v5220, %v5220
      %v5415 = vmul.f32 %v5221, %v5221
      %v5416 = vmul.f32 %v5222, %v5222
      %v5417 = vmul.f32 %v5223, %v5223
      %v5418 = vmul.f32 %v5224, %v5224
      %v5419 = vmul.f32 %v5225, %v5225
      %v5420 = vmul.f32 %v5226, %v5226
      %v5421 = vmul.f32 %v5227, %v5227
      %v5422 = vmul.f32 %v5228, %v5228
      %v5423 = vmul.f32 %v5229, %v5229
      %v5424 = vmul.f32 %v5230, %v5230
      %v5425 = vmul.f32 %v5231, %v5231
      %5426 = vadd.xlane.f32.xlu0 %v5378
      %v5427 = vpop.xlane.xlu0 %5426
      %5428 = vadd.xlane.f32.xlu0 %v5379
      %v5429 = vpop.xlane.xlu0 %5428
      %5430 = vadd.xlane.f32.xlu0 %v5380
      %v5431 = vpop.xlane.xlu0 %5430
      %5432 = vadd.xlane.f32.xlu0 %v5381
      %v5433 = vpop.xlane.xlu0 %5432
      %5434 = vadd.xlane.f32.xlu0 %v5382
      %v5435 = vpop.xlane.xlu0 %5434
      %5436 = vadd.xlane.f32.xlu0 %v5383
      %v5437 = vpop.xlane.xlu0 %5436
      %5438 = vadd.xlane.f32.xlu0 %v5384
      %v5439 = vpop.xlane.xlu0 %5438
      %5440 = vadd.xlane.f32.xlu0 %v5385
      %v5441 = vpop.xlane.xlu0 %5440
      %5442 = vadd.xlane.f32.xlu0 %v5386
      %v5443 = vpop.xlane.xlu0 %5442
      %5444 = vadd.xlane.f32.xlu0 %v5387
      %v5445 = vpop.xlane.xlu0 %5444
      %5446 = vadd.xlane.f32.xlu0 %v5388
      %v5447 = vpop.xlane.xlu0 %5446
      %5448 = vadd.xlane.f32.xlu0 %v5389
      %v5449 = vpop.xlane.xlu0 %5448
      %5450 = vadd.xlane.f32.xlu0 %v5390
      %v5451 = vpop.xlane.xlu0 %5450
      %5452 = vadd.xlane.f32.xlu0 %v5391
      %v5453 = vpop.xlane.xlu0 %5452
      %5454 = vadd.xlane.f32.xlu0 %v5392
      %v5455 = vpop.xlane.xlu0 %5454
      %5456 = vadd.xlane.f32.xlu0 %v5393
      %v5457 = vpop.xlane.xlu0 %5456
      %5458 = vadd.xlane.f32.xlu0 %v5394
      %v5459 = vpop.xlane.xlu0 %5458
      %5460 = vadd.xlane.f32.xlu0 %v5395
      %v5461 = vpop.xlane.xlu0 %5460
      %5462 = vadd.xlane.f32.xlu0 %v5396
      %v5463 = vpop.xlane.xlu0 %5462
      %5464 = vadd.xlane.f32.xlu0 %v5397
      %v5465 = vpop.xlane.xlu0 %5464
      %5466 = vadd.xlane.f32.xlu0 %v5398
      %v5467 = vpop.xlane.xlu0 %5466
      %5468 = vadd.xlane.f32.xlu0 %v5399
      %v5469 = vpop.xlane.xlu0 %5468
      %5470 = vadd.xlane.f32.xlu0 %v5400
      %v5471 = vpop.xlane.xlu0 %5470
      %5472 = vadd.xlane.f32.xlu0 %v5401
      %v5473 = vpop.xlane.xlu0 %5472
      %5474 = vadd.xlane.f32.xlu0 %v5402
      %v5475 = vpop.xlane.xlu0 %5474
      %5476 = vadd.xlane.f32.xlu0 %v5403
      %v5477 = vpop.xlane.xlu0 %5476
      %5478 = vadd.xlane.f32.xlu0 %v5404
      %v5479 = vpop.xlane.xlu0 %5478
      %5480 = vadd.xlane.f32.xlu0 %v5405
      %v5481 = vpop.xlane.xlu0 %5480
      %5482 = vadd.xlane.f32.xlu0 %v5406
      %v5483 = vpop.xlane.xlu0 %5482
      %5484 = vadd.xlane.f32.xlu0 %v5407
      %v5485 = vpop.xlane.xlu0 %5484
      %5486 = vadd.xlane.f32.xlu0 %v5408
      %v5487 = vpop.xlane.xlu0 %5486
      %5488 = vadd.xlane.f32.xlu0 %v5409
      %v5489 = vpop.xlane.xlu0 %5488
      %5490 = vadd.xlane.f32.xlu0 %v5410
      %v5491 = vpop.xlane.xlu0 %5490
      %5492 = vadd.xlane.f32.xlu0 %v5411
      %v5493 = vpop.xlane.xlu0 %5492
      %5494 = vadd.xlane.f32.xlu0 %v5412
      %v5495 = vpop.xlane.xlu0 %5494
      %5496 = vadd.xlane.f32.xlu0 %v5413
      %v5497 = vpop.xlane.xlu0 %5496
      %5498 = vadd.xlane.f32.xlu0 %v5414
      %v5499 = vpop.xlane.xlu0 %5498
      %5500 = vadd.xlane.f32.xlu0 %v5415
      %v5501 = vpop.xlane.xlu0 %5500
      %5502 = vadd.xlane.f32.xlu0 %v5416
      %v5503 = vpop.xlane.xlu0 %5502
      %5504 = vadd.xlane.f32.xlu0 %v5417
      %v5505 = vpop.xlane.xlu0 %5504
      %5506 = vadd.xlane.f32.xlu0 %v5418
      %v5507 = vpop.xlane.xlu0 %5506
      %5508 = vadd.xlane.f32.xlu0 %v5419
      %v5509 = vpop.xlane.xlu0 %5508
      %5510 = vadd.xlane.f32.xlu0 %v5420
      %v5511 = vpop.xlane.xlu0 %5510
      %5512 = vadd.xlane.f32.xlu0 %v5421
      %v5513 = vpop.xlane.xlu0 %5512
      %5514 = vadd.xlane.f32.xlu0 %v5422
      %v5515 = vpop.xlane.xlu0 %5514
      %5516 = vadd.xlane.f32.xlu0 %v5423
      %v5517 = vpop.xlane.xlu0 %5516
      %5518 = vadd.xlane.f32.xlu0 %v5424
      %v5519 = vpop.xlane.xlu0 %5518
      %5520 = vadd.xlane.f32.xlu0 %v5425
      %v5521 = vpop.xlane.xlu0 %5520
      %v5522 = vmul.f32 %v5427, 0.125
      %v5523 = vmul.f32 %v5429, 0.125
      %v5524 = vmul.f32 %v5431, 0.125
      %v5525 = vmul.f32 %v5433, 0.125
      %v5526 = vmul.f32 %v5435, 0.125
      %v5527 = vmul.f32 %v5437, 0.125
      %v5528 = vmul.f32 %v5439, 0.125
      %v5529 = vmul.f32 %v5441, 0.125
      %v5530 = vmul.f32 %v5443, 0.125
      %v5531 = vmul.f32 %v5445, 0.125
      %v5532 = vmul.f32 %v5447, 0.125
      %v5533 = vmul.f32 %v5449, 0.125
      %v5534 = vmul.f32 %v5451, 0.125
      %v5535 = vmul.f32 %v5453, 0.125
      %v5536 = vmul.f32 %v5455, 0.125
      %v5537 = vmul.f32 %v5457, 0.125
      %v5538 = vmul.f32 %v5459, 0.125
      %v5539 = vmul.f32 %v5461, 0.125
      %v5540 = vmul.f32 %v5463, 0.125
      %v5541 = vmul.f32 %v5465, 0.125
      %v5542 = vmul.f32 %v5467, 0.125
      %v5543 = vmul.f32 %v5469, 0.125
      %v5544 = vmul.f32 %v5471, 0.125
      %v5545 = vmul.f32 %v5473, 0.125
      %v5546 = vmul.f32 %v5475, 0.125
      %v5547 = vmul.f32 %v5477, 0.125
      %v5548 = vmul.f32 %v5479, 0.125
      %v5549 = vmul.f32 %v5481, 0.125
      %v5550 = vmul.f32 %v5483, 0.125
      %v5551 = vmul.f32 %v5485, 0.125
      %v5552 = vmul.f32 %v5487, 0.125
      %v5553 = vmul.f32 %v5489, 0.125
      %v5554 = vmul.f32 %v5491, 0.125
      %v5555 = vmul.f32 %v5493, 0.125
      %v5556 = vmul.f32 %v5495, 0.125
      %v5557 = vmul.f32 %v5497, 0.125
      %v5558 = vmul.f32 %v5499, 0.125
      %v5559 = vmul.f32 %v5501, 0.125
      %v5560 = vmul.f32 %v5503, 0.125
      %v5561 = vmul.f32 %v5505, 0.125
      %v5562 = vmul.f32 %v5507, 0.125
      %v5563 = vmul.f32 %v5509, 0.125
      %v5564 = vmul.f32 %v5511, 0.125
      %v5565 = vmul.f32 %v5513, 0.125
      %v5566 = vmul.f32 %v5515, 0.125
      %v5567 = vmul.f32 %v5517, 0.125
      %v5568 = vmul.f32 %v5519, 0.125
      %v5569 = vmul.f32 %v5521, 0.125
      %v5570 = vmul.f32 %v5330, %v5330
      %v5571 = vmul.f32 %v5331, %v5331
      %v5572 = vmul.f32 %v5332, %v5332
      %v5573 = vmul.f32 %v5333, %v5333
      %v5574 = vmul.f32 %v5334, %v5334
      %v5575 = vmul.f32 %v5335, %v5335
      %v5576 = vmul.f32 %v5336, %v5336
      %v5577 = vmul.f32 %v5337, %v5337
      %v5578 = vmul.f32 %v5338, %v5338
      %v5579 = vmul.f32 %v5339, %v5339
      %v5580 = vmul.f32 %v5340, %v5340
      %v5581 = vmul.f32 %v5341, %v5341
      %v5582 = vmul.f32 %v5342, %v5342
      %v5583 = vmul.f32 %v5343, %v5343
      %v5584 = vmul.f32 %v5344, %v5344
      %v5585 = vmul.f32 %v5345, %v5345
      %v5586 = vmul.f32 %v5346, %v5346
      %v5587 = vmul.f32 %v5347, %v5347
      %v5588 = vmul.f32 %v5348, %v5348
      %v5589 = vmul.f32 %v5349, %v5349
      %v5590 = vmul.f32 %v5350, %v5350
      %v5591 = vmul.f32 %v5351, %v5351
      %v5592 = vmul.f32 %v5352, %v5352
      %v5593 = vmul.f32 %v5353, %v5353
      %v5594 = vmul.f32 %v5354, %v5354
      %v5595 = vmul.f32 %v5355, %v5355
      %v5596 = vmul.f32 %v5356, %v5356
      %v5597 = vmul.f32 %v5357, %v5357
      %v5598 = vmul.f32 %v5358, %v5358
      %v5599 = vmul.f32 %v5359, %v5359
      %v5600 = vmul.f32 %v5360, %v5360
      %v5601 = vmul.f32 %v5361, %v5361
      %v5602 = vmul.f32 %v5362, %v5362
      %v5603 = vmul.f32 %v5363, %v5363
      %v5604 = vmul.f32 %v5364, %v5364
      %v5605 = vmul.f32 %v5365, %v5365
      %v5606 = vmul.f32 %v5366, %v5366
      %v5607 = vmul.f32 %v5367, %v5367
      %v5608 = vmul.f32 %v5368, %v5368
      %v5609 = vmul.f32 %v5369, %v5369
      %v5610 = vmul.f32 %v5370, %v5370
      %v5611 = vmul.f32 %v5371, %v5371
      %v5612 = vmul.f32 %v5372, %v5372
      %v5613 = vmul.f32 %v5373, %v5373
      %v5614 = vmul.f32 %v5374, %v5374
      %v5615 = vmul.f32 %v5375, %v5375
      %v5616 = vmul.f32 %v5376, %v5376
      %v5617 = vmul.f32 %v5377, %v5377
      %v5618 = vsub.f32 %v5522, %v5570
      %v5619 = vsub.f32 %v5523, %v5571
      %v5620 = vsub.f32 %v5524, %v5572
      %v5621 = vsub.f32 %v5525, %v5573
      %v5622 = vsub.f32 %v5526, %v5574
      %v5623 = vsub.f32 %v5527, %v5575
      %v5624 = vsub.f32 %v5528, %v5576
      %v5625 = vsub.f32 %v5529, %v5577
      %v5626 = vsub.f32 %v5530, %v5578
      %v5627 = vsub.f32 %v5531, %v5579
      %v5628 = vsub.f32 %v5532, %v5580
      %v5629 = vsub.f32 %v5533, %v5581
      %v5630 = vsub.f32 %v5534, %v5582
      %v5631 = vsub.f32 %v5535, %v5583
      %v5632 = vsub.f32 %v5536, %v5584
      %v5633 = vsub.f32 %v5537, %v5585
      %v5634 = vsub.f32 %v5538, %v5586
      %v5635 = vsub.f32 %v5539, %v5587
      %v5636 = vsub.f32 %v5540, %v5588
      %v5637 = vsub.f32 %v5541, %v5589
      %v5638 = vsub.f32 %v5542, %v5590
      %v5639 = vsub.f32 %v5543, %v5591
      %v5640 = vsub.f32 %v5544, %v5592
      %v5641 = vsub.f32 %v5545, %v5593
      %v5642 = vsub.f32 %v5546, %v5594
      %v5643 = vsub.f32 %v5547, %v5595
      %v5644 = vsub.f32 %v5548, %v5596
      %v5645 = vsub.f32 %v5549, %v5597
      %v5646 = vsub.f32 %v5550, %v5598
      %v5647 = vsub.f32 %v5551, %v5599
      %v5648 = vsub.f32 %v5552, %v5600
      %v5649 = vsub.f32 %v5553, %v5601
      %v5650 = vsub.f32 %v5554, %v5602
      %v5651 = vsub.f32 %v5555, %v5603
      %v5652 = vsub.f32 %v5556, %v5604
      %v5653 = vsub.f32 %v5557, %v5605
      %v5654 = vsub.f32 %v5558, %v5606
      %v5655 = vsub.f32 %v5559, %v5607
      %v5656 = vsub.f32 %v5560, %v5608
      %v5657 = vsub.f32 %v5561, %v5609
      %v5658 = vsub.f32 %v5562, %v5610
      %v5659 = vsub.f32 %v5563, %v5611
      %v5660 = vsub.f32 %v5564, %v5612
      %v5661 = vsub.f32 %v5565, %v5613
      %v5662 = vsub.f32 %v5566, %v5614
      %v5663 = vsub.f32 %v5567, %v5615
      %v5664 = vsub.f32 %v5568, %v5616
      %v5665 = vsub.f32 %v5569, %v5617
      %v5666 = vsub.f32 %v5184, %v5330
      %v5667 = vsub.f32 %v5185, %v5331
      %v5668 = vsub.f32 %v5186, %v5332
      %v5669 = vsub.f32 %v5187, %v5333
      %v5670 = vsub.f32 %v5188, %v5334
      %v5671 = vsub.f32 %v5189, %v5335
      %v5672 = vsub.f32 %v5190, %v5336
      %v5673 = vsub.f32 %v5191, %v5337
      %v5674 = vsub.f32 %v5192, %v5338
      %v5675 = vsub.f32 %v5193, %v5339
      %v5676 = vsub.f32 %v5194, %v5340
      %v5677 = vsub.f32 %v5195, %v5341
      %v5678 = vsub.f32 %v5196, %v5342
      %v5679 = vsub.f32 %v5197, %v5343
      %v5680 = vsub.f32 %v5198, %v5344
      %v5681 = vsub.f32 %v5199, %v5345
      %v5682 = vsub.f32 %v5200, %v5346
      %v5683 = vsub.f32 %v5201, %v5347
      %v5684 = vsub.f32 %v5202, %v5348
      %v5685 = vsub.f32 %v5203, %v5349
      %v5686 = vsub.f32 %v5204, %v5350
      %v5687 = vsub.f32 %v5205, %v5351
      %v5688 = vsub.f32 %v5206, %v5352
      %v5689 = vsub.f32 %v5207, %v5353
      %v5690 = vsub.f32 %v5208, %v5354
      %v5691 = vsub.f32 %v5209, %v5355
      %v5692 = vsub.f32 %v5210, %v5356
      %v5693 = vsub.f32 %v5211, %v5357
      %v5694 = vsub.f32 %v5212, %v5358
      %v5695 = vsub.f32 %v5213, %v5359
      %v5696 = vsub.f32 %v5214, %v5360
      %v5697 = vsub.f32 %v5215, %v5361
      %v5698 = vsub.f32 %v5216, %v5362
      %v5699 = vsub.f32 %v5217, %v5363
      %v5700 = vsub.f32 %v5218, %v5364
      %v5701 = vsub.f32 %v5219, %v5365
      %v5702 = vsub.f32 %v5220, %v5366
      %v5703 = vsub.f32 %v5221, %v5367
      %v5704 = vsub.f32 %v5222, %v5368
      %v5705 = vsub.f32 %v5223, %v5369
      %v5706 = vsub.f32 %v5224, %v5370
      %v5707 = vsub.f32 %v5225, %v5371
      %v5708 = vsub.f32 %v5226, %v5372
      %v5709 = vsub.f32 %v5227, %v5373
      %v5710 = vsub.f32 %v5228, %v5374
      %v5711 = vsub.f32 %v5229, %v5375
      %v5712 = vsub.f32 %v5230, %v5376
      %v5713 = vsub.f32 %v5231, %v5377
      %v5714 = vadd.f32 %v5618, 1e-05
      %v5715 = vadd.f32 %v5619, 1e-05
      %v5716 = vadd.f32 %v5620, 1e-05
      %v5717 = vadd.f32 %v5621, 1e-05
      %v5718 = vadd.f32 %v5622, 1e-05
      %v5719 = vadd.f32 %v5623, 1e-05
      %v5720 = vadd.f32 %v5624, 1e-05
      %v5721 = vadd.f32 %v5625, 1e-05
      %v5722 = vadd.f32 %v5626, 1e-05
      %v5723 = vadd.f32 %v5627, 1e-05
      %v5724 = vadd.f32 %v5628, 1e-05
      %v5725 = vadd.f32 %v5629, 1e-05
      %v5726 = vadd.f32 %v5630, 1e-05
      %v5727 = vadd.f32 %v5631, 1e-05
      %v5728 = vadd.f32 %v5632, 1e-05
      %v5729 = vadd.f32 %v5633, 1e-05
      %v5730 = vadd.f32 %v5634, 1e-05
      %v5731 = vadd.f32 %v5635, 1e-05
      %v5732 = vadd.f32 %v5636, 1e-05
      %v5733 = vadd.f32 %v5637, 1e-05
      %v5734 = vadd.f32 %v5638, 1e-05
      %v5735 = vadd.f32 %v5639, 1e-05
      %v5736 = vadd.f32 %v5640, 1e-05
      %v5737 = vadd.f32 %v5641, 1e-05
      %v5738 = vadd.f32 %v5642, 1e-05
      %v5739 = vadd.f32 %v5643, 1e-05
      %v5740 = vadd.f32 %v5644, 1e-05
      %v5741 = vadd.f32 %v5645, 1e-05
      %v5742 = vadd.f32 %v5646, 1e-05
      %v5743 = vadd.f32 %v5647, 1e-05
      %v5744 = vadd.f32 %v5648, 1e-05
      %v5745 = vadd.f32 %v5649, 1e-05
      %v5746 = vadd.f32 %v5650, 1e-05
      %v5747 = vadd.f32 %v5651, 1e-05
      %v5748 = vadd.f32 %v5652, 1e-05
      %v5749 = vadd.f32 %v5653, 1e-05
      %v5750 = vadd.f32 %v5654, 1e-05
      %v5751 = vadd.f32 %v5655, 1e-05
      %v5752 = vadd.f32 %v5656, 1e-05
      %v5753 = vadd.f32 %v5657, 1e-05
      %v5754 = vadd.f32 %v5658, 1e-05
      %v5755 = vadd.f32 %v5659, 1e-05
      %v5756 = vadd.f32 %v5660, 1e-05
      %v5757 = vadd.f32 %v5661, 1e-05
      %v5758 = vadd.f32 %v5662, 1e-05
      %v5759 = vadd.f32 %v5663, 1e-05
      %v5760 = vadd.f32 %v5664, 1e-05
      %v5761 = vadd.f32 %v5665, 1e-05
      %v5762 = vrsqrt.pop %v5714
      %v5763 = vrsqrt.pop %v5715
      %v5764 = vrsqrt.pop %v5716
      %v5765 = vrsqrt.pop %v5717
      %v5766 = vrsqrt.pop %v5718
      %v5767 = vrsqrt.pop %v5719
      %v5768 = vrsqrt.pop %v5720
      %v5769 = vrsqrt.pop %v5721
      %v5770 = vrsqrt.pop %v5722
      %v5771 = vrsqrt.pop %v5723
      %v5772 = vrsqrt.pop %v5724
      %v5773 = vrsqrt.pop %v5725
      %v5774 = vrsqrt.pop %v5726
      %v5775 = vrsqrt.pop %v5727
      %v5776 = vrsqrt.pop %v5728
      %v5777 = vrsqrt.pop %v5729
      %v5778 = vrsqrt.pop %v5730
      %v5779 = vrsqrt.pop %v5731
      %v5780 = vrsqrt.pop %v5732
      %v5781 = vrsqrt.pop %v5733
      %v5782 = vrsqrt.pop %v5734
      %v5783 = vrsqrt.pop %v5735
      %v5784 = vrsqrt.pop %v5736
      %v5785 = vrsqrt.pop %v5737
      %v5786 = vrsqrt.pop %v5738
      %v5787 = vrsqrt.pop %v5739
      %v5788 = vrsqrt.pop %v5740
      %v5789 = vrsqrt.pop %v5741
      %v5790 = vrsqrt.pop %v5742
      %v5791 = vrsqrt.pop %v5743
      %v5792 = vrsqrt.pop %v5744
      %v5793 = vrsqrt.pop %v5745
      %v5794 = vrsqrt.pop %v5746
      %v5795 = vrsqrt.pop %v5747
      %v5796 = vrsqrt.pop %v5748
      %v5797 = vrsqrt.pop %v5749
      %v5798 = vrsqrt.pop %v5750
      %v5799 = vrsqrt.pop %v5751
      %v5800 = vrsqrt.pop %v5752
      %v5801 = vrsqrt.pop %v5753
      %v5802 = vrsqrt.pop %v5754
      %v5803 = vrsqrt.pop %v5755
      %v5804 = vrsqrt.pop %v5756
      %v5805 = vrsqrt.pop %v5757
      %v5806 = vrsqrt.pop %v5758
      %v5807 = vrsqrt.pop %v5759
      %v5808 = vrsqrt.pop %v5760
      %v5809 = vrsqrt.pop %v5761
      %v5810 = vmul.f32 %v5666, %v5762
      %v5811 = vmul.f32 %v5667, %v5763
      %v5812 = vmul.f32 %v5668, %v5764
      %v5813 = vmul.f32 %v5669, %v5765
      %v5814 = vmul.f32 %v5670, %v5766
      %v5815 = vmul.f32 %v5671, %v5767
      %v5816 = vmul.f32 %v5672, %v5768
      %v5817 = vmul.f32 %v5673, %v5769
      %v5818 = vmul.f32 %v5674, %v5770
      %v5819 = vmul.f32 %v5675, %v5771
      %v5820 = vmul.f32 %v5676, %v5772
      %v5821 = vmul.f32 %v5677, %v5773
      %v5822 = vmul.f32 %v5678, %v5774
      %v5823 = vmul.f32 %v5679, %v5775
      %v5824 = vmul.f32 %v5680, %v5776
      %v5825 = vmul.f32 %v5681, %v5777
      %v5826 = vmul.f32 %v5682, %v5778
      %v5827 = vmul.f32 %v5683, %v5779
      %v5828 = vmul.f32 %v5684, %v5780
      %v5829 = vmul.f32 %v5685, %v5781
      %v5830 = vmul.f32 %v5686, %v5782
      %v5831 = vmul.f32 %v5687, %v5783
      %v5832 = vmul.f32 %v5688, %v5784
      %v5833 = vmul.f32 %v5689, %v5785
      %v5834 = vmul.f32 %v5690, %v5786
      %v5835 = vmul.f32 %v5691, %v5787
      %v5836 = vmul.f32 %v5692, %v5788
      %v5837 = vmul.f32 %v5693, %v5789
      %v5838 = vmul.f32 %v5694, %v5790
      %v5839 = vmul.f32 %v5695, %v5791
      %v5840 = vmul.f32 %v5696, %v5792
      %v5841 = vmul.f32 %v5697, %v5793
      %v5842 = vmul.f32 %v5698, %v5794
      %v5843 = vmul.f32 %v5699, %v5795
      %v5844 = vmul.f32 %v5700, %v5796
      %v5845 = vmul.f32 %v5701, %v5797
      %v5846 = vmul.f32 %v5702, %v5798
      %v5847 = vmul.f32 %v5703, %v5799
      %v5848 = vmul.f32 %v5704, %v5800
      %v5849 = vmul.f32 %v5705, %v5801
      %v5850 = vmul.f32 %v5706, %v5802
      %v5851 = vmul.f32 %v5707, %v5803
      %v5852 = vmul.f32 %v5708, %v5804
      %v5853 = vmul.f32 %v5709, %v5805
      %v5854 = vmul.f32 %v5710, %v5806
      %v5855 = vmul.f32 %v5711, %v5807
      %v5856 = vmul.f32 %v5712, %v5808
      %v5857 = vmul.f32 %v5713, %v5809
      %v5859 = vlaneseq
      %v5860 = vshrl.u32 %v5859, 7
      %v5861 = vsub.s32 0, %v5860
      %v5862 = vrot.slane %v5232, %v5861
      %v5864 = vmul.f32 %v5810, %v5862
      %v5865 = vmul.f32 %v5811, %v5862
      %v5866 = vmul.f32 %v5812, %v5862
      %v5867 = vmul.f32 %v5813, %v5862
      %v5868 = vmul.f32 %v5814, %v5862
      %v5869 = vmul.f32 %v5815, %v5862
      %v5870 = vmul.f32 %v5816, %v5862
      %v5871 = vmul.f32 %v5817, %v5862
      %v5872 = vmul.f32 %v5818, %v5862
      %v5873 = vmul.f32 %v5819, %v5862
      %v5874 = vmul.f32 %v5820, %v5862
      %v5875 = vmul.f32 %v5821, %v5862
      %v5876 = vmul.f32 %v5822, %v5862
      %v5877 = vmul.f32 %v5823, %v5862
      %v5878 = vmul.f32 %v5824, %v5862
      %v5879 = vmul.f32 %v5825, %v5862
      %v5880 = vmul.f32 %v5826, %v5862
      %v5881 = vmul.f32 %v5827, %v5862
      %v5882 = vmul.f32 %v5828, %v5862
      %v5883 = vmul.f32 %v5829, %v5862
      %v5884 = vmul.f32 %v5830, %v5862
      %v5885 = vmul.f32 %v5831, %v5862
      %v5886 = vmul.f32 %v5832, %v5862
      %v5887 = vmul.f32 %v5833, %v5862
      %v5888 = vmul.f32 %v5834, %v5862
      %v5889 = vmul.f32 %v5835, %v5862
      %v5890 = vmul.f32 %v5836, %v5862
      %v5891 = vmul.f32 %v5837, %v5862
      %v5892 = vmul.f32 %v5838, %v5862
      %v5893 = vmul.f32 %v5839, %v5862
      %v5894 = vmul.f32 %v5840, %v5862
      %v5895 = vmul.f32 %v5841, %v5862
      %v5896 = vmul.f32 %v5842, %v5862
      %v5897 = vmul.f32 %v5843, %v5862
      %v5898 = vmul.f32 %v5844, %v5862
      %v5899 = vmul.f32 %v5845, %v5862
      %v5900 = vmul.f32 %v5846, %v5862
      %v5901 = vmul.f32 %v5847, %v5862
      %v5902 = vmul.f32 %v5848, %v5862
      %v5903 = vmul.f32 %v5849, %v5862
      %v5904 = vmul.f32 %v5850, %v5862
      %v5905 = vmul.f32 %v5851, %v5862
      %v5906 = vmul.f32 %v5852, %v5862
      %v5907 = vmul.f32 %v5853, %v5862
      %v5908 = vmul.f32 %v5854, %v5862
      %v5909 = vmul.f32 %v5855, %v5862
      %v5910 = vmul.f32 %v5856, %v5862
      %v5911 = vmul.f32 %v5857, %v5862
      %v5913 = vlaneseq
      %v5914 = vshrl.u32 %v5913, 7
      %v5915 = vsub.s32 0, %v5914
      %v5916 = vrot.slane %v5233, %v5915
      %v5918 = vadd.f32 %v5864, %v5916
      %v5919 = vadd.f32 %v5865, %v5916
      %v5920 = vadd.f32 %v5866, %v5916
      %v5921 = vadd.f32 %v5867, %v5916
      %v5922 = vadd.f32 %v5868, %v5916
      %v5923 = vadd.f32 %v5869, %v5916
      %v5924 = vadd.f32 %v5870, %v5916
      %v5925 = vadd.f32 %v5871, %v5916
      %v5926 = vadd.f32 %v5872, %v5916
      %v5927 = vadd.f32 %v5873, %v5916
      %v5928 = vadd.f32 %v5874, %v5916
      %v5929 = vadd.f32 %v5875, %v5916
      %v5930 = vadd.f32 %v5876, %v5916
      %v5931 = vadd.f32 %v5877, %v5916
      %v5932 = vadd.f32 %v5878, %v5916
      %v5933 = vadd.f32 %v5879, %v5916
      %v5934 = vadd.f32 %v5880, %v5916
      %v5935 = vadd.f32 %v5881, %v5916
      %v5936 = vadd.f32 %v5882, %v5916
      %v5937 = vadd.f32 %v5883, %v5916
      %v5938 = vadd.f32 %v5884, %v5916
      %v5939 = vadd.f32 %v5885, %v5916
      %v5940 = vadd.f32 %v5886, %v5916
      %v5941 = vadd.f32 %v5887, %v5916
      %v5942 = vadd.f32 %v5888, %v5916
      %v5943 = vadd.f32 %v5889, %v5916
      %v5944 = vadd.f32 %v5890, %v5916
      %v5945 = vadd.f32 %v5891, %v5916
      %v5946 = vadd.f32 %v5892, %v5916
      %v5947 = vadd.f32 %v5893, %v5916
      %v5948 = vadd.f32 %v5894, %v5916
      %v5949 = vadd.f32 %v5895, %v5916
      %v5950 = vadd.f32 %v5896, %v5916
      %v5951 = vadd.f32 %v5897, %v5916
      %v5952 = vadd.f32 %v5898, %v5916
      %v5953 = vadd.f32 %v5899, %v5916
      %v5954 = vadd.f32 %v5900, %v5916
      %v5955 = vadd.f32 %v5901, %v5916
      %v5956 = vadd.f32 %v5902, %v5916
      %v5957 = vadd.f32 %v5903, %v5916
      %v5958 = vadd.f32 %v5904, %v5916
      %v5959 = vadd.f32 %v5905, %v5916
      %v5960 = vadd.f32 %v5906, %v5916
      %v5961 = vadd.f32 %v5907, %v5916
      %v5962 = vadd.f32 %v5908, %v5916
      %v5963 = vadd.f32 %v5909, %v5916
      %v5964 = vadd.f32 %v5910, %v5916
      %v5965 = vadd.f32 %v5911, %v5916
      %v5966 = vmul.f32 %v5918, 0.5
      %v5967 = vmul.f32 %v5919, 0.5
      %v5968 = vmul.f32 %v5920, 0.5
      %v5969 = vmul.f32 %v5921, 0.5
      %v5970 = vmul.f32 %v5922, 0.5
      %v5971 = vmul.f32 %v5923, 0.5
      %v5972 = vmul.f32 %v5924, 0.5
      %v5973 = vmul.f32 %v5925, 0.5
      %v5974 = vmul.f32 %v5926, 0.5
      %v5975 = vmul.f32 %v5927, 0.5
      %v5976 = vmul.f32 %v5928, 0.5
      %v5977 = vmul.f32 %v5929, 0.5
      %v5978 = vmul.f32 %v5930, 0.5
      %v5979 = vmul.f32 %v5931, 0.5
      %v5980 = vmul.f32 %v5932, 0.5
      %v5981 = vmul.f32 %v5933, 0.5
      %v5982 = vmul.f32 %v5934, 0.5
      %v5983 = vmul.f32 %v5935, 0.5
      %v5984 = vmul.f32 %v5936, 0.5
      %v5985 = vmul.f32 %v5937, 0.5
      %v5986 = vmul.f32 %v5938, 0.5
      %v5987 = vmul.f32 %v5939, 0.5
      %v5988 = vmul.f32 %v5940, 0.5
      %v5989 = vmul.f32 %v5941, 0.5
      %v5990 = vmul.f32 %v5942, 0.5
      %v5991 = vmul.f32 %v5943, 0.5
      %v5992 = vmul.f32 %v5944, 0.5
      %v5993 = vmul.f32 %v5945, 0.5
      %v5994 = vmul.f32 %v5946, 0.5
      %v5995 = vmul.f32 %v5947, 0.5
      %v5996 = vmul.f32 %v5948, 0.5
      %v5997 = vmul.f32 %v5949, 0.5
      %v5998 = vmul.f32 %v5950, 0.5
      %v5999 = vmul.f32 %v5951, 0.5
      %v6000 = vmul.f32 %v5952, 0.5
      %v6001 = vmul.f32 %v5953, 0.5
      %v6002 = vmul.f32 %v5954, 0.5
      %v6003 = vmul.f32 %v5955, 0.5
      %v6004 = vmul.f32 %v5956, 0.5
      %v6005 = vmul.f32 %v5957, 0.5
      %v6006 = vmul.f32 %v5958, 0.5
      %v6007 = vmul.f32 %v5959, 0.5
      %v6008 = vmul.f32 %v5960, 0.5
      %v6009 = vmul.f32 %v5961, 0.5
      %v6010 = vmul.f32 %v5962, 0.5
      %v6011 = vmul.f32 %v5963, 0.5
      %v6012 = vmul.f32 %v5964, 0.5
      %v6013 = vmul.f32 %v5965, 0.5
      %v6014 = vmul.f32 %v5918, 0.70710677
      %v6015 = vmul.f32 %v5919, 0.70710677
      %v6016 = vmul.f32 %v5920, 0.70710677
      %v6017 = vmul.f32 %v5921, 0.70710677
      %v6018 = vmul.f32 %v5922, 0.70710677
      %v6019 = vmul.f32 %v5923, 0.70710677
      %v6020 = vmul.f32 %v5924, 0.70710677
      %v6021 = vmul.f32 %v5925, 0.70710677
      %v6022 = vmul.f32 %v5926, 0.70710677
      %v6023 = vmul.f32 %v5927, 0.70710677
      %v6024 = vmul.f32 %v5928, 0.70710677
      %v6025 = vmul.f32 %v5929, 0.70710677
      %v6026 = vmul.f32 %v5930, 0.70710677
      %v6027 = vmul.f32 %v5931, 0.70710677
      %v6028 = vmul.f32 %v5932, 0.70710677
      %v6029 = vmul.f32 %v5933, 0.70710677
      %v6030 = vmul.f32 %v5934, 0.70710677
      %v6031 = vmul.f32 %v5935, 0.70710677
      %v6032 = vmul.f32 %v5936, 0.70710677
      %v6033 = vmul.f32 %v5937, 0.70710677
      %v6034 = vmul.f32 %v5938, 0.70710677
      %v6035 = vmul.f32 %v5939, 0.70710677
      %v6036 = vmul.f32 %v5940, 0.70710677
      %v6037 = vmul.f32 %v5941, 0.70710677
      %v6038 = vmul.f32 %v5942, 0.70710677
      %v6039 = vmul.f32 %v5943, 0.70710677
      %v6040 = vmul.f32 %v5944, 0.70710677
      %v6041 = vmul.f32 %v5945, 0.70710677
      %v6042 = vmul.f32 %v5946, 0.70710677
      %v6043 = vmul.f32 %v5947, 0.70710677
      %v6044 = vmul.f32 %v5948, 0.70710677
      %v6045 = vmul.f32 %v5949, 0.70710677
      %v6046 = vmul.f32 %v5950, 0.70710677
      %v6047 = vmul.f32 %v5951, 0.70710677
      %v6048 = vmul.f32 %v5952, 0.70710677
      %v6049 = vmul.f32 %v5953, 0.70710677
      %v6050 = vmul.f32 %v5954, 0.70710677
      %v6051 = vmul.f32 %v5955, 0.70710677
      %v6052 = vmul.f32 %v5956, 0.70710677
      %v6053 = vmul.f32 %v5957, 0.70710677
      %v6054 = vmul.f32 %v5958, 0.70710677
      %v6055 = vmul.f32 %v5959, 0.70710677
      %v6056 = vmul.f32 %v5960, 0.70710677
      %v6057 = vmul.f32 %v5961, 0.70710677
      %v6058 = vmul.f32 %v5962, 0.70710677
      %v6059 = vmul.f32 %v5963, 0.70710677
      %v6060 = vmul.f32 %v5964, 0.70710677
      %v6061 = vmul.f32 %v5965, 0.70710677
      %v6062 = verf.f32.pop %v6014
      %v6063 = verf.f32.pop %v6015
      %v6064 = verf.f32.pop %v6016
      %v6065 = verf.f32.pop %v6017
      %v6066 = verf.f32.pop %v6018
      %v6067 = verf.f32.pop %v6019
      %v6068 = verf.f32.pop %v6020
      %v6069 = verf.f32.pop %v6021
      %v6070 = verf.f32.pop %v6022
      %v6071 = verf.f32.pop %v6023
      %v6072 = verf.f32.pop %v6024
      %v6073 = verf.f32.pop %v6025
      %v6074 = verf.f32.pop %v6026
      %v6075 = verf.f32.pop %v6027
      %v6076 = verf.f32.pop %v6028
      %v6077 = verf.f32.pop %v6029
      %v6078 = verf.f32.pop %v6030
      %v6079 = verf.f32.pop %v6031
      %v6080 = verf.f32.pop %v6032
      %v6081 = verf.f32.pop %v6033
      %v6082 = verf.f32.pop %v6034
      %v6083 = verf.f32.pop %v6035
      %v6084 = verf.f32.pop %v6036
      %v6085 = verf.f32.pop %v6037
      %v6086 = verf.f32.pop %v6038
      %v6087 = verf.f32.pop %v6039
      %v6088 = verf.f32.pop %v6040
      %v6089 = verf.f32.pop %v6041
      %v6090 = verf.f32.pop %v6042
      %v6091 = verf.f32.pop %v6043
      %v6092 = verf.f32.pop %v6044
      %v6093 = verf.f32.pop %v6045
      %v6094 = verf.f32.pop %v6046
      %v6095 = verf.f32.pop %v6047
      %v6096 = verf.f32.pop %v6048
      %v6097 = verf.f32.pop %v6049
      %v6098 = verf.f32.pop %v6050
      %v6099 = verf.f32.pop %v6051
      %v6100 = verf.f32.pop %v6052
      %v6101 = verf.f32.pop %v6053
      %v6102 = verf.f32.pop %v6054
      %v6103 = verf.f32.pop %v6055
      %v6104 = verf.f32.pop %v6056
      %v6105 = verf.f32.pop %v6057
      %v6106 = verf.f32.pop %v6058
      %v6107 = verf.f32.pop %v6059
      %v6108 = verf.f32.pop %v6060
      %v6109 = verf.f32.pop %v6061
      %v6110 = vadd.f32 %v6062, 1.0
      %v6111 = vadd.f32 %v6063, 1.0
      %v6112 = vadd.f32 %v6064, 1.0
      %v6113 = vadd.f32 %v6065, 1.0
      %v6114 = vadd.f32 %v6066, 1.0
      %v6115 = vadd.f32 %v6067, 1.0
      %v6116 = vadd.f32 %v6068, 1.0
      %v6117 = vadd.f32 %v6069, 1.0
      %v6118 = vadd.f32 %v6070, 1.0
      %v6119 = vadd.f32 %v6071, 1.0
      %v6120 = vadd.f32 %v6072, 1.0
      %v6121 = vadd.f32 %v6073, 1.0
      %v6122 = vadd.f32 %v6074, 1.0
      %v6123 = vadd.f32 %v6075, 1.0
      %v6124 = vadd.f32 %v6076, 1.0
      %v6125 = vadd.f32 %v6077, 1.0
      %v6126 = vadd.f32 %v6078, 1.0
      %v6127 = vadd.f32 %v6079, 1.0
      %v6128 = vadd.f32 %v6080, 1.0
      %v6129 = vadd.f32 %v6081, 1.0
      %v6130 = vadd.f32 %v6082, 1.0
      %v6131 = vadd.f32 %v6083, 1.0
      %v6132 = vadd.f32 %v6084, 1.0
      %v6133 = vadd.f32 %v6085, 1.0
      %v6134 = vadd.f32 %v6086, 1.0
      %v6135 = vadd.f32 %v6087, 1.0
      %v6136 = vadd.f32 %v6088, 1.0
      %v6137 = vadd.f32 %v6089, 1.0
      %v6138 = vadd.f32 %v6090, 1.0
      %v6139 = vadd.f32 %v6091, 1.0
      %v6140 = vadd.f32 %v6092, 1.0
      %v6141 = vadd.f32 %v6093, 1.0
      %v6142 = vadd.f32 %v6094, 1.0
      %v6143 = vadd.f32 %v6095, 1.0
      %v6144 = vadd.f32 %v6096, 1.0
      %v6145 = vadd.f32 %v6097, 1.0
      %v6146 = vadd.f32 %v6098, 1.0
      %v6147 = vadd.f32 %v6099, 1.0
      %v6148 = vadd.f32 %v6100, 1.0
      %v6149 = vadd.f32 %v6101, 1.0
      %v6150 = vadd.f32 %v6102, 1.0
      %v6151 = vadd.f32 %v6103, 1.0
      %v6152 = vadd.f32 %v6104, 1.0
      %v6153 = vadd.f32 %v6105, 1.0
      %v6154 = vadd.f32 %v6106, 1.0
      %v6155 = vadd.f32 %v6107, 1.0
      %v6156 = vadd.f32 %v6108, 1.0
      %v6157 = vadd.f32 %v6109, 1.0
      %v6158 = vmul.f32 %v5966, %v6110
      %v6159 = vmul.f32 %v5967, %v6111
      %v6160 = vmul.f32 %v5968, %v6112
      %v6161 = vmul.f32 %v5969, %v6113
      %v6162 = vmul.f32 %v5970, %v6114
      %v6163 = vmul.f32 %v5971, %v6115
      %v6164 = vmul.f32 %v5972, %v6116
      %v6165 = vmul.f32 %v5973, %v6117
      %v6166 = vmul.f32 %v5974, %v6118
      %v6167 = vmul.f32 %v5975, %v6119
      %v6168 = vmul.f32 %v5976, %v6120
      %v6169 = vmul.f32 %v5977, %v6121
      %v6170 = vmul.f32 %v5978, %v6122
      %v6171 = vmul.f32 %v5979, %v6123
      %v6172 = vmul.f32 %v5980, %v6124
      %v6173 = vmul.f32 %v5981, %v6125
      %v6174 = vmul.f32 %v5982, %v6126
      %v6175 = vmul.f32 %v5983, %v6127
      %v6176 = vmul.f32 %v5984, %v6128
      %v6177 = vmul.f32 %v5985, %v6129
      %v6178 = vmul.f32 %v5986, %v6130
      %v6179 = vmul.f32 %v5987, %v6131
      %v6180 = vmul.f32 %v5988, %v6132
      %v6181 = vmul.f32 %v5989, %v6133
      %v6182 = vmul.f32 %v5990, %v6134
      %v6183 = vmul.f32 %v5991, %v6135
      %v6184 = vmul.f32 %v5992, %v6136
      %v6185 = vmul.f32 %v5993, %v6137
      %v6186 = vmul.f32 %v5994, %v6138
      %v6187 = vmul.f32 %v5995, %v6139
      %v6188 = vmul.f32 %v5996, %v6140
      %v6189 = vmul.f32 %v5997, %v6141
      %v6190 = vmul.f32 %v5998, %v6142
      %v6191 = vmul.f32 %v5999, %v6143
      %v6192 = vmul.f32 %v6000, %v6144
      %v6193 = vmul.f32 %v6001, %v6145
      %v6194 = vmul.f32 %v6002, %v6146
      %v6195 = vmul.f32 %v6003, %v6147
      %v6196 = vmul.f32 %v6004, %v6148
      %v6197 = vmul.f32 %v6005, %v6149
      %v6198 = vmul.f32 %v6006, %v6150
      %v6199 = vmul.f32 %v6007, %v6151
      %v6200 = vmul.f32 %v6008, %v6152
      %v6201 = vmul.f32 %v6009, %v6153
      %v6202 = vmul.f32 %v6010, %v6154
      %v6203 = vmul.f32 %v6011, %v6155
      %v6204 = vmul.f32 %v6012, %v6156
      %v6205 = vmul.f32 %v6013, %v6157
      %v6206 = vld [vmem:[%s1] sm:$0xff]
      %v6207 = vld [vmem:[%s1 + $0x8] sm:$0xff]
      %v6208 = vld [vmem:[%s1 + $0x10] sm:$0xff]
      %6210 = vset.pattern.permute.xlu0 0
      %6211 = vperm.xlu0 %6210, %v6206
      %v6212 = vpop.permute.xlu0 %6211
      %6215 = vset.pattern.permute.xlu0 0
      %6216 = vperm.xlu0 %6215, %v6207
      %v6217 = vpop.permute.xlu0 %6216
      %6220 = vset.pattern.permute.xlu0 0
      %6221 = vperm.xlu0 %6220, %v6208
      %v6222 = vpop.permute.xlu0 %6221
      %v6224 = vmul.f32 %v6158, %v6212
      %v6225 = vmul.f32 %v6159, %v6217
      %v6226 = vmul.f32 %v6160, %v6222
      %v6227 = vmul.f32 %v6161, %v6212
      %v6228 = vmul.f32 %v6162, %v6217
      %v6229 = vmul.f32 %v6163, %v6222
      %v6230 = vmul.f32 %v6164, %v6212
      %v6231 = vmul.f32 %v6165, %v6217
      %v6232 = vmul.f32 %v6166, %v6222
      %v6233 = vmul.f32 %v6167, %v6212
      %v6234 = vmul.f32 %v6168, %v6217
      %v6235 = vmul.f32 %v6169, %v6222
      %v6236 = vmul.f32 %v6170, %v6212
      %v6237 = vmul.f32 %v6171, %v6217
      %v6238 = vmul.f32 %v6172, %v6222
      %v6239 = vmul.f32 %v6173, %v6212
      %v6240 = vmul.f32 %v6174, %v6217
      %v6241 = vmul.f32 %v6175, %v6222
      %v6242 = vmul.f32 %v6176, %v6212
      %v6243 = vmul.f32 %v6177, %v6217
      %v6244 = vmul.f32 %v6178, %v6222
      %v6245 = vmul.f32 %v6179, %v6212
      %v6246 = vmul.f32 %v6180, %v6217
      %v6247 = vmul.f32 %v6181, %v6222
      %v6248 = vmul.f32 %v6182, %v6212
      %v6249 = vmul.f32 %v6183, %v6217
      %v6250 = vmul.f32 %v6184, %v6222
      %v6251 = vmul.f32 %v6185, %v6212
      %v6252 = vmul.f32 %v6186, %v6217
      %v6253 = vmul.f32 %v6187, %v6222
      %v6254 = vmul.f32 %v6188, %v6212
      %v6255 = vmul.f32 %v6189, %v6217
      %v6256 = vmul.f32 %v6190, %v6222
      %v6257 = vmul.f32 %v6191, %v6212
      %v6258 = vmul.f32 %v6192, %v6217
      %v6259 = vmul.f32 %v6193, %v6222
      %v6260 = vmul.f32 %v6194, %v6212
      %v6261 = vmul.f32 %v6195, %v6217
      %v6262 = vmul.f32 %v6196, %v6222
      %v6263 = vmul.f32 %v6197, %v6212
      %v6264 = vmul.f32 %v6198, %v6217
      %v6265 = vmul.f32 %v6199, %v6222
      %v6266 = vmul.f32 %v6200, %v6212
      %v6267 = vmul.f32 %v6201, %v6217
      %v6268 = vmul.f32 %v6202, %v6222
      %v6269 = vmul.f32 %v6203, %v6212
      %v6270 = vmul.f32 %v6204, %v6217
      %v6271 = vmul.f32 %v6205, %v6222
      %6272 = vst [vmem:[#allocation2] sm:$0xff] 0
      %6273 = vst [vmem:[#allocation2 + $0x8] sm:$0xff] 0
      %6274 = vst [vmem:[#allocation2 + $0xd0] sm:$0xff] 0
      %6275 = vst [vmem:[#allocation2 + $0xd8] sm:$0xff] 0
      %v6276 = vpack.c.bf16 %v6225, %v6224
      %v6277 = vpack.c.bf16 %v6227, %v6226
      %v6278 = vpack.c.bf16 %v6229, %v6228
      %v6279 = vpack.c.bf16 %v6231, %v6230
      %v6280 = vpack.c.bf16 %v6233, %v6232
      %v6281 = vpack.c.bf16 %v6235, %v6234
      %v6282 = vpack.c.bf16 %v6237, %v6236
      %v6283 = vpack.c.bf16 %v6239, %v6238
      %v6284 = vpack.c.bf16 %v6241, %v6240
      %v6285 = vpack.c.bf16 %v6243, %v6242
      %v6286 = vpack.c.bf16 %v6245, %v6244
      %v6287 = vpack.c.bf16 %v6247, %v6246
      %v6288 = vpack.c.bf16 %v6249, %v6248
      %v6289 = vpack.c.bf16 %v6251, %v6250
      %v6290 = vpack.c.bf16 %v6253, %v6252
      %v6291 = vpack.c.bf16 %v6255, %v6254
      %v6292 = vpack.c.bf16 %v6257, %v6256
      %v6293 = vpack.c.bf16 %v6259, %v6258
      %v6294 = vpack.c.bf16 %v6261, %v6260
      %v6295 = vpack.c.bf16 %v6263, %v6262
      %v6296 = vpack.c.bf16 %v6265, %v6264
      %v6297 = vpack.c.bf16 %v6267, %v6266
      %v6298 = vpack.c.bf16 %v6269, %v6268
      %v6299 = vpack.c.bf16 %v6271, %v6270
      %6300 = vst [vmem:[#allocation2 + $0x10] sm:$0xff] %v6276
      %6301 = vst [vmem:[#allocation2 + $0x18] sm:$0xff] %v6277
      %6302 = vst [vmem:[#allocation2 + $0x20] sm:$0xff] %v6278
      %6303 = vst [vmem:[#allocation2 + $0x28] sm:$0xff] %v6279
      %6304 = vst [vmem:[#allocation2 + $0x30] sm:$0xff] %v6280
      %6305 = vst [vmem:[#allocation2 + $0x38] sm:$0xff] %v6281
      %6306 = vst [vmem:[#allocation2 + $0x40] sm:$0xff] %v6282
      %6307 = vst [vmem:[#allocation2 + $0x48] sm:$0xff] %v6283
      %6308 = vst [vmem:[#allocation2 + $0x50] sm:$0xff] %v6284
      %6309 = vst [vmem:[#allocation2 + $0x58] sm:$0xff] %v6285
      %6310 = vst [vmem:[#allocation2 + $0x60] sm:$0xff] %v6286
      %6311 = vst [vmem:[#allocation2 + $0x68] sm:$0xff] %v6287
      %6312 = vst [vmem:[#allocation2 + $0x70] sm:$0xff] %v6288
      %6313 = vst [vmem:[#allocation2 + $0x78] sm:$0xff] %v6289
      %6314 = vst [vmem:[#allocation2 + $0x80] sm:$0xff] %v6290
      %6315 = vst [vmem:[#allocation2 + $0x88] sm:$0xff] %v6291
      %6316 = vst [vmem:[#allocation2 + $0x90] sm:$0xff] %v6292
      %6317 = vst [vmem:[#allocation2 + $0x98] sm:$0xff] %v6293
      %6318 = vst [vmem:[#allocation2 + $0xa0] sm:$0xff] %v6294
      %6319 = vst [vmem:[#allocation2 + $0xa8] sm:$0xff] %v6295
      %6320 = vst [vmem:[#allocation2 + $0xb0] sm:$0xff] %v6296
      %6321 = vst [vmem:[#allocation2 + $0xb8] sm:$0xff] %v6297
      %6322 = vst [vmem:[#allocation2 + $0xc0] sm:$0xff] %v6298
      %6323 = vst [vmem:[#allocation2 + $0xc8] sm:$0xff] %v6299
      %v6324 = vld [vmem:[#allocation2] sm:$0xf8]
      %v6325 = vld [vmem:[#allocation2 + $0x8] sm:$0xff]
      %v6326 = vld [vmem:[#allocation2 + $0x10] sm:$0xff]
      %v6327 = vld [vmem:[#allocation2 + $0x18] sm:$0xff]
      %v6328 = vld [vmem:[#allocation2 + $0x20] sm:$0xff]
      %v6329 = vld [vmem:[#allocation2 + $0x28] sm:$0xff]
      %v6330 = vld [vmem:[#allocation2 + $0x30] sm:$0xff]
      %v6331 = vld [vmem:[#allocation2 + $0x38] sm:$0xff]
      %v6332 = vld [vmem:[#allocation2 + $0x40] sm:$0xff]
      %v6333 = vld [vmem:[#allocation2 + $0x48] sm:$0xff]
      %v6334 = vld [vmem:[#allocation2 + $0x50] sm:$0xff]
      %v6335 = vld [vmem:[#allocation2 + $0x58] sm:$0xff]
      %v6336 = vld [vmem:[#allocation2 + $0x60] sm:$0xff]
      %v6337 = vld [vmem:[#allocation2 + $0x68] sm:$0xff]
      %v6338 = vld [vmem:[#allocation2 + $0x70] sm:$0xff]
      %v6339 = vld [vmem:[#allocation2 + $0x78] sm:$0xff]
      %v6340 = vld [vmem:[#allocation2 + $0x80] sm:$0xff]
      %v6341 = vld [vmem:[#allocation2 + $0x88] sm:$0xff]
      %v6342 = vld [vmem:[#allocation2 + $0x90] sm:$0xff]
      %v6343 = vld [vmem:[#allocation2 + $0x98] sm:$0xff]
      %v6344 = vld [vmem:[#allocation2 + $0xa0] sm:$0xff]
      %v6345 = vld [vmem:[#allocation2 + $0xa8] sm:$0xff]
      %v6346 = vld [vmem:[#allocation2 + $0xb0] sm:$0xff]
      %v6347 = vld [vmem:[#allocation2 + $0xb8] sm:$0xff]
      %v6348 = vld [vmem:[#allocation2 + $0xc0] sm:$0xf]
      %v6349 = vld [vmem:[%s6] sm:$0xf]
      %v6350 = vld [vmem:[%s6 + $0x4] sm:$0xf]
      %v6351 = vld [vmem:[%s6 + $0x8] sm:$0xf]
      %v6352 = vld [vmem:[%s6 + $0xc] sm:$0xf]
      %v6353 = vld [vmem:[%s6 + $0x10] sm:$0xf]
      %v6354 = vld [vmem:[%s6 + $0x14] sm:$0xf]
      %v6355 = vld [vmem:[%s6 + $0x18] sm:$0xf]
      %v6356 = vld [vmem:[%s6 + $0x1c] sm:$0xf]
      %v6357 = vld [vmem:[%s6 + $0x20] sm:$0xf]
      %v6358 = vld [vmem:[%s6 + $0x24] sm:$0xf]
      %v6359 = vld [vmem:[%s6 + $0x28] sm:$0xf]
      %v6360 = vld [vmem:[%s6 + $0x2c] sm:$0xf]
      %v6361 = vld [vmem:[%s6 + $0x30] sm:$0xf]
      %v6362 = vld [vmem:[%s6 + $0x34] sm:$0xf]
      %v6363 = vld [vmem:[%s6 + $0x38] sm:$0xf]
      %v6364 = vld [vmem:[%s6 + $0x3c] sm:$0xf]
      %v6365 = vld [vmem:[#allocation2] sm:$0xf0]
      %s6366 = scalar_lea.vmem %s6, 64
      %v6367 = vld [vmem:[%s6366] sm:$0xf]
      %v6368 = vld [vmem:[%s6366 + $0x4] sm:$0xf]
      %v6369 = vld [vmem:[%s6366 + $0x8] sm:$0xf]
      %v6370 = vld [vmem:[%s6366 + $0xc] sm:$0xf]
      %v6371 = vld [vmem:[%s6366 + $0x10] sm:$0xf]
      %v6372 = vld [vmem:[%s6366 + $0x14] sm:$0xf]
      %v6373 = vld [vmem:[%s6366 + $0x18] sm:$0xf]
      %v6374 = vld [vmem:[%s6366 + $0x1c] sm:$0xf]
      %v6375 = vld [vmem:[%s6366 + $0x20] sm:$0xf]
      %v6376 = vld [vmem:[%s6366 + $0x24] sm:$0xf]
      %v6377 = vld [vmem:[%s6366 + $0x28] sm:$0xf]
      %v6378 = vld [vmem:[%s6366 + $0x2c] sm:$0xf]
      %v6379 = vld [vmem:[%s6366 + $0x30] sm:$0xf]
      %v6380 = vld [vmem:[%s6366 + $0x34] sm:$0xf]
      %v6381 = vld [vmem:[%s6366 + $0x38] sm:$0xf]
      %v6382 = vld [vmem:[%s6366 + $0x3c] sm:$0xf]
      %vm6408 = vcmask 1043456
      %v6409 = vrot.slane %v6365, 4
      %v6410 = vrot.slane %v6325, 4
      %v6411 = vsel %vm6408, %v6409, %v6410
      %v6412 = vrot.slane %v6326, 4
      %v6413 = vsel %vm6408, %v6410, %v6412
      %v6414 = vrot.slane %v6327, 4
      %v6415 = vsel %vm6408, %v6412, %v6414
      %v6416 = vrot.slane %v6328, 4
      %v6417 = vsel %vm6408, %v6414, %v6416
      %v6418 = vrot.slane %v6329, 4
      %v6419 = vsel %vm6408, %v6416, %v6418
      %v6420 = vrot.slane %v6330, 4
      %v6421 = vsel %vm6408, %v6418, %v6420
      %v6422 = vrot.slane %v6331, 4
      %v6423 = vsel %vm6408, %v6420, %v6422
      %v6424 = vrot.slane %v6332, 4
      %v6425 = vsel %vm6408, %v6422, %v6424
      %v6426 = vrot.slane %v6333, 4
      %v6427 = vsel %vm6408, %v6424, %v6426
      %v6428 = vrot.slane %v6334, 4
      %v6429 = vsel %vm6408, %v6426, %v6428
      %v6430 = vrot.slane %v6335, 4
      %v6431 = vsel %vm6408, %v6428, %v6430
      %v6432 = vrot.slane %v6336, 4
      %v6433 = vsel %vm6408, %v6430, %v6432
      %v6434 = vrot.slane %v6337, 4
      %v6435 = vsel %vm6408, %v6432, %v6434
      %v6436 = vrot.slane %v6338, 4
      %v6437 = vsel %vm6408, %v6434, %v6436
      %v6438 = vrot.slane %v6339, 4
      %v6439 = vsel %vm6408, %v6436, %v6438
      %v6440 = vrot.slane %v6340, 4
      %v6441 = vsel %vm6408, %v6438, %v6440
      %v6442 = vrot.slane %v6341, 4
      %v6443 = vsel %vm6408, %v6440, %v6442
      %v6444 = vrot.slane %v6342, 4
      %v6445 = vsel %vm6408, %v6442, %v6444
      %v6446 = vrot.slane %v6343, 4
      %v6447 = vsel %vm6408, %v6444, %v6446
      %v6448 = vrot.slane %v6344, 4
      %v6449 = vsel %vm6408, %v6446, %v6448
      %v6450 = vrot.slane %v6345, 4
      %v6451 = vsel %vm6408, %v6448, %v6450
      %v6452 = vrot.slane %v6346, 4
      %v6453 = vsel %vm6408, %v6450, %v6452
      %v6454 = vrot.slane %v6347, 4
      %v6455 = vsel %vm6408, %v6452, %v6454
      %v6456 = vrot.slane %v6348, 4
      %v6457 = vsel %vm6408, %v6454, %v6456
      %v6498 = vunpack.c.l.b16 %v6367
      %v6499 = vunpack.c.l.b16 %v6368
      %v6500 = vunpack.c.l.b16 %v6369
      %v6501 = vunpack.c.l.b16 %v6370
      %v6502 = vunpack.c.l.b16 %v6371
      %v6503 = vunpack.c.l.b16 %v6372
      %v6504 = vunpack.c.l.b16 %v6373
      %v6505 = vunpack.c.l.b16 %v6374
      %v6506 = vunpack.c.l.b16 %v6375
      %v6507 = vunpack.c.l.b16 %v6376
      %v6508 = vunpack.c.l.b16 %v6377
      %v6509 = vunpack.c.l.b16 %v6378
      %v6510 = vunpack.c.l.b16 %v6379
      %v6511 = vunpack.c.l.b16 %v6380
      %v6512 = vunpack.c.l.b16 %v6381
      %v6513 = vunpack.c.l.b16 %v6382
      %v6514 = vpack.c.b16 %v6499, %v6498
      %v6515 = vpack.c.b16 %v6501, %v6500
      %v6516 = vpack.c.b16 %v6503, %v6502
      %v6517 = vpack.c.b16 %v6505, %v6504
      %v6518 = vpack.c.b16 %v6507, %v6506
      %v6519 = vpack.c.b16 %v6509, %v6508
      %v6520 = vpack.c.b16 %v6511, %v6510
      %v6521 = vpack.c.b16 %v6513, %v6512
      %6530 = vmatprep.subr.bf16.mxu0 0
      %6531 = vmatpush1.bf16.msra.mxu0 %v6514
      %6532 = vmatprep.subr.bf16.mxu0 0
      %6533 = vmatpush1.bf16.msra.mxu0 %v6515
      %6534 = vmatprep.subr.bf16.mxu0 0
      %6535 = vmatpush1.bf16.msra.mxu0 %v6516
      %6536 = vmatprep.subr.bf16.mxu0 0
      %6537 = vmatpush1.bf16.msra.mxu0 %v6517
      %6538 = vmatprep.subr.bf16.mxu0 0
      %6539 = vmatpush1.bf16.msra.mxu0 %v6518
      %6540 = vmatprep.subr.bf16.mxu0 0
      %6541 = vmatpush1.bf16.msra.mxu0 %v6519
      %6542 = vmatprep.subr.bf16.mxu0 0
      %6543 = vmatpush1.bf16.msra.mxu0 %v6520
      %6544 = vmatprep.subr.bf16.mxu0 0
      %6545 = vmatpush1.bf16.msra.mxu0 %v6521
      %6546 = vmatprep.subr.bf16.mxu0 0
      %6547 = vmatpush1.bf16.msra.mxu0 0
      %6548 = vmatprep.subr.bf16.mxu0 0
      %6549 = vmatpush1.bf16.msra.mxu0 0
      %6550 = vmatprep.subr.bf16.mxu0 0
      %6551 = vmatpush1.bf16.msra.mxu0 0
      %6552 = vmatprep.subr.bf16.mxu0 0
      %6553 = vmatpush1.bf16.msra.mxu0 0
      %6554 = vmatprep.subr.bf16.mxu0 0
      %6555 = vmatpush1.bf16.msra.mxu0 0
      %6556 = vmatprep.subr.bf16.mxu0 0
      %6557 = vmatpush1.bf16.msra.mxu0 0
      %6558 = vmatprep.subr.bf16.mxu0 0
      %6559 = vmatpush1.bf16.msra.mxu0 0
      %6560 = vmatprep.subr.bf16.mxu0 0
      %6561 = vmatpush1.bf16.msra.mxu0 0
      %6562 = vmatprep.mubr.bf16.mxu0 0
      %6563 = vmatmul.mubr.bf16.gmra.mrb[0].mxu0 %v6411
      %v6564 = vpop.f32.mrb[0].mxu0
      %v6565 = vadd.f32 0.0, %v6564
      %v6566 = vpop.f32.mrb[0].mxu0
      %v6567 = vpop.f32.mrb[0].mxu0
      %v6568 = vadd.f32 0.0, %v6567
      %v6569 = vpop.f32.mrb[0].mxu0
      %6570 = vmatprep.mubr.bf16.mxu0 0
      %6571 = vmatmul.mubr.bf16.gmra.mrb[0].mxu0 %v6413
      %v6572 = vpop.f32.mrb[0].mxu0
      %v6573 = vpop.f32.mrb[0].mxu0
      %v6574 = vpop.f32.mrb[0].mxu0
      %v6575 = vadd.f32 0.0, %v6574
      %v6576 = vpop.f32.mrb[0].mxu0
      %6577 = vmatprep.mubr.bf16.mxu0 0
      %6578 = vmatmul.mubr.bf16.gmra.mrb[0].mxu0 %v6415
      %v6579 = vpop.f32.mrb[0].mxu0
      %v6580 = vadd.f32 0.0, %v6579
      %v6581 = vpop.f32.mrb[0].mxu0
      %v6582 = vpop.f32.mrb[0].mxu0
      %v6583 = vpop.f32.mrb[0].mxu0
      %6584 = vmatprep.mubr.bf16.mxu0 0
      %6585 = vmatmul.mubr.bf16.gmra.mrb[0].mxu0 %v6417
      %v6586 = vpop.f32.mrb[0].mxu0
      %v6587 = vadd.f32 0.0, %v6586
      %v6588 = vpop.f32.mrb[0].mxu0
      %v6589 = vpop.f32.mrb[0].mxu0
      %v6590 = vadd.f32 0.0, %v6589
      %v6591 = vpop.f32.mrb[0].mxu0
      %6592 = vmatprep.mubr.bf16.mxu0 0
      %6593 = vmatmul.mubr.bf16.gmra.mrb[0].mxu0 %v6419
      %v6594 = vpop.f32.mrb[0].mxu0
      %v6595 = vpop.f32.mrb[0].mxu0
      %v6596 = vpop.f32.mrb[0].mxu0
      %v6597 = vadd.f32 0.0, %v6596
      %v6598 = vpop.f32.mrb[0].mxu0
      %6599 = vmatprep.mubr.bf16.mxu0 0
      %6600 = vmatmul.mubr.bf16.gmra.mrb[0].mxu0 %v6421
      %v6601 = vpop.f32.mrb[0].mxu0
      %v6602 = vadd.f32 0.0, %v6601
      %v6603 = vpop.f32.mrb[0].mxu0
      %v6604 = vpop.f32.mrb[0].mxu0
      %v6605 = vpop.f32.mrb[0].mxu0
      %6606 = vmatprep.mubr.bf16.mxu0 0
      %6607 = vmatmul.mubr.bf16.gmra.mrb[0].mxu0 %v6423
      %v6608 = vpop.f32.mrb[0].mxu0
      %v6609 = vadd.f32 0.0, %v6608
      %v6610 = vpop.f32.mrb[0].mxu0
      %v6611 = vpop.f32.mrb[0].mxu0
      %v6612 = vadd.f32 0.0, %v6611
      %v6613 = vpop.f32.mrb[0].mxu0
      %6614 = vmatprep.mubr.bf16.mxu0 0
      %6615 = vmatmul.mubr.bf16.gmra.mrb[0].mxu0 %v6425
      %v6616 = vpop.f32.mrb[0].mxu0
      %v6617 = vpop.f32.mrb[0].mxu0
      %v6618 = vpop.f32.mrb[0].mxu0
      %v6619 = vadd.f32 0.0, %v6618
      %v6620 = vpop.f32.mrb[0].mxu0
      %6621 = vmatprep.mubr.bf16.mxu0 0
      %6622 = vmatmul.mubr.bf16.gmra.mrb[0].mxu0 %v6427
      %v6623 = vpop.f32.mrb[0].mxu0
      %v6624 = vadd.f32 0.0, %v6623
      %v6625 = vpop.f32.mrb[0].mxu0
      %v6626 = vpop.f32.mrb[0].mxu0
      %v6627 = vpop.f32.mrb[0].mxu0
      %6628 = vmatprep.mubr.bf16.mxu0 0
      %6629 = vmatmul.mubr.bf16.gmra.mrb[0].mxu0 %v6429
      %v6630 = vpop.f32.mrb[0].mxu0
      %v6631 = vadd.f32 0.0, %v6630
      %v6632 = vpop.f32.mrb[0].mxu0
      %v6633 = vpop.f32.mrb[0].mxu0
      %v6634 = vadd.f32 0.0, %v6633
      %v6635 = vpop.f32.mrb[0].mxu0
      %6636 = vmatprep.mubr.bf16.mxu0 0
      %6637 = vmatmul.mubr.bf16.gmra.mrb[0].mxu0 %v6431
      %v6638 = vpop.f32.mrb[0].mxu0
      %v6639 = vpop.f32.mrb[0].mxu0
      %v6640 = vpop.f32.mrb[0].mxu0
      %v6641 = vadd.f32 0.0, %v6640
      %v6642 = vpop.f32.mrb[0].mxu0
      %6643 = vmatprep.mubr.bf16.mxu0 0
      %6644 = vmatmul.mubr.bf16.gmra.mrb[0].mxu0 %v6433
      %v6645 = vpop.f32.mrb[0].mxu0
      %v6646 = vadd.f32 0.0, %v6645
      %v6647 = vpop.f32.mrb[0].mxu0
      %v6648 = vpop.f32.mrb[0].mxu0
      %v6649 = vpop.f32.mrb[0].mxu0
      %6650 = vmatprep.mubr.bf16.mxu0 0
      %6651 = vmatmul.mubr.bf16.gmra.mrb[0].mxu0 %v6435
      %v6652 = vpop.f32.mrb[0].mxu0
      %v6653 = vadd.f32 0.0, %v6652
      %v6654 = vpop.f32.mrb[0].mxu0
      %v6655 = vpop.f32.mrb[0].mxu0
      %v6656 = vadd.f32 0.0, %v6655
      %v6657 = vpop.f32.mrb[0].mxu0
      %6658 = vmatprep.mubr.bf16.mxu0 0
      %6659 = vmatmul.mubr.bf16.gmra.mrb[0].mxu0 %v6437
      %v6660 = vpop.f32.mrb[0].mxu0
      %v6661 = vpop.f32.mrb[0].mxu0
      %v6662 = vpop.f32.mrb[0].mxu0
      %v6663 = vadd.f32 0.0, %v6662
      %v6664 = vpop.f32.mrb[0].mxu0
      %6665 = vmatprep.mubr.bf16.mxu0 0
      %6666 = vmatmul.mubr.bf16.gmra.mrb[0].mxu0 %v6439
      %v6667 = vpop.f32.mrb[0].mxu0
      %v6668 = vadd.f32 0.0, %v6667
      %v6669 = vpop.f32.mrb[0].mxu0
      %v6670 = vpop.f32.mrb[0].mxu0
      %v6671 = vpop.f32.mrb[0].mxu0
      %6672 = vmatprep.mubr.bf16.mxu0 0
      %6673 = vmatmul.mubr.bf16.gmra.mrb[0].mxu0 %v6441
      %v6674 = vpop.f32.mrb[0].mxu0
      %v6675 = vadd.f32 0.0, %v6674
      %v6676 = vpop.f32.mrb[0].mxu0
      %v6677 = vpop.f32.mrb[0].mxu0
      %v6678 = vadd.f32 0.0, %v6677
      %v6679 = vpop.f32.mrb[0].mxu0
      %6680 = vmatprep.mubr.bf16.mxu0 0
      %6681 = vmatmul.mubr.bf16.gmra.mrb[0].mxu0 %v6443
      %v6682 = vpop.f32.mrb[0].mxu0
      %v6683 = vpop.f32.mrb[0].mxu0
      %v6684 = vpop.f32.mrb[0].mxu0
      %v6685 = vadd.f32 0.0, %v6684
      %v6686 = vpop.f32.mrb[0].mxu0
      %6687 = vmatprep.mubr.bf16.mxu0 0
      %6688 = vmatmul.mubr.bf16.gmra.mrb[0].mxu0 %v6445
      %v6689 = vpop.f32.mrb[0].mxu0
      %v6690 = vadd.f32 0.0, %v6689
      %v6691 = vpop.f32.mrb[0].mxu0
      %v6692 = vpop.f32.mrb[0].mxu0
      %v6693 = vpop.f32.mrb[0].mxu0
      %6694 = vmatprep.mubr.bf16.mxu0 0
      %6695 = vmatmul.mubr.bf16.gmra.mrb[0].mxu0 %v6447
      %v6696 = vpop.f32.mrb[0].mxu0
      %v6697 = vadd.f32 0.0, %v6696
      %v6698 = vpop.f32.mrb[0].mxu0
      %v6699 = vpop.f32.mrb[0].mxu0
      %v6700 = vadd.f32 0.0, %v6699
      %v6701 = vpop.f32.mrb[0].mxu0
      %6702 = vmatprep.mubr.bf16.mxu0 0
      %6703 = vmatmul.mubr.bf16.gmra.mrb[0].mxu0 %v6449
      %v6704 = vpop.f32.mrb[0].mxu0
      %v6705 = vpop.f32.mrb[0].mxu0
      %v6706 = vpop.f32.mrb[0].mxu0
      %v6707 = vadd.f32 0.0, %v6706
      %v6708 = vpop.f32.mrb[0].mxu0
      %6709 = vmatprep.mubr.bf16.mxu0 0
      %6710 = vmatmul.mubr.bf16.gmra.mrb[0].mxu0 %v6451
      %v6711 = vpop.f32.mrb[0].mxu0
      %v6712 = vadd.f32 0.0, %v6711
      %v6713 = vpop.f32.mrb[0].mxu0
      %v6714 = vpop.f32.mrb[0].mxu0
      %v6715 = vpop.f32.mrb[0].mxu0
      %6716 = vmatprep.mubr.bf16.mxu0 0
      %6717 = vmatmul.mubr.bf16.gmra.mrb[0].mxu0 %v6453
      %v6718 = vpop.f32.mrb[0].mxu0
      %v6719 = vadd.f32 0.0, %v6718
      %v6720 = vpop.f32.mrb[0].mxu0
      %v6721 = vpop.f32.mrb[0].mxu0
      %v6722 = vadd.f32 0.0, %v6721
      %v6723 = vpop.f32.mrb[0].mxu0
      %6724 = vmatprep.mubr.bf16.mxu0 0
      %6725 = vmatmul.mubr.bf16.gmra.mrb[0].mxu0 %v6455
      %v6726 = vpop.f32.mrb[0].mxu0
      %v6727 = vpop.f32.mrb[0].mxu0
      %v6728 = vpop.f32.mrb[0].mxu0
      %v6729 = vadd.f32 0.0, %v6728
      %v6730 = vpop.f32.mrb[0].mxu0
      %6731 = vmatprep.mubr.bf16.mxu0 0
      %6732 = vmatmul.mubr.bf16.gmra.mrb[0].mxu0 %v6457
      %v6733 = vpop.f32.mrb[0].mxu0
      %v6734 = vadd.f32 0.0, %v6733
      %v6735 = vpop.f32.mrb[0].mxu0
      %v6736 = vpop.f32.mrb[0].mxu0
      %v6737 = vpop.f32.mrb[0].mxu0
      %6738 = vdwg.mxu0
      %vm6739 = vsmask.f32 4352
      %v6741 = vshrl.u32 %v6324, 16
      %v6743 = vrot.slane %v6741, 3
      %v6744 = vshll.u32 %v6324, 16
      %v6746 = vrot.slane %v6744, 4
      %v6747 = vor.u32 %v6743, %v6746
      %v6749 = vshrl.u32 %v6325, 16
      %v6751 = vrot.slane %v6749, 3
      %v6752 = vshll.u32 %v6325, 16
      %v6754 = vrot.slane %v6752, 4
      %v6755 = vor.u32 %v6751, %v6754
      %v6756 = vsel %vm6739, %v6747, %v6755
      %v6758 = vshrl.u32 %v6326, 16
      %v6760 = vrot.slane %v6758, 3
      %v6761 = vshll.u32 %v6326, 16
      %v6763 = vrot.slane %v6761, 4
      %v6764 = vor.u32 %v6760, %v6763
      %v6765 = vsel %vm6739, %v6755, %v6764
      %v6767 = vshrl.u32 %v6327, 16
      %v6769 = vrot.slane %v6767, 3
      %v6770 = vshll.u32 %v6327, 16
      %v6772 = vrot.slane %v6770, 4
      %v6773 = vor.u32 %v6769, %v6772
      %v6774 = vsel %vm6739, %v6764, %v6773
      %v6776 = vshrl.u32 %v6328, 16
      %v6778 = vrot.slane %v6776, 3
      %v6779 = vshll.u32 %v6328, 16
      %v6781 = vrot.slane %v6779, 4
      %v6782 = vor.u32 %v6778, %v6781
      %v6783 = vsel %vm6739, %v6773, %v6782
      %v6785 = vshrl.u32 %v6329, 16
      %v6787 = vrot.slane %v6785, 3
      %v6788 = vshll.u32 %v6329, 16
      %v6790 = vrot.slane %v6788, 4
      %v6791 = vor.u32 %v6787, %v6790
      %v6792 = vsel %vm6739, %v6782, %v6791
      %v6794 = vshrl.u32 %v6330, 16
      %v6796 = vrot.slane %v6794, 3
      %v6797 = vshll.u32 %v6330, 16
      %v6799 = vrot.slane %v6797, 4
      %v6800 = vor.u32 %v6796, %v6799
      %v6801 = vsel %vm6739, %v6791, %v6800
      %v6803 = vshrl.u32 %v6331, 16
      %v6805 = vrot.slane %v6803, 3
      %v6806 = vshll.u32 %v6331, 16
      %v6808 = vrot.slane %v6806, 4
      %v6809 = vor.u32 %v6805, %v6808
      %v6810 = vsel %vm6739, %v6800, %v6809
      %v6812 = vshrl.u32 %v6332, 16
      %v6814 = vrot.slane %v6812, 3
      %v6815 = vshll.u32 %v6332, 16
      %v6817 = vrot.slane %v6815, 4
      %v6818 = vor.u32 %v6814, %v6817
      %v6819 = vsel %vm6739, %v6809, %v6818
      %v6821 = vshrl.u32 %v6333, 16
      %v6823 = vrot.slane %v6821, 3
      %v6824 = vshll.u32 %v6333, 16
      %v6826 = vrot.slane %v6824, 4
      %v6827 = vor.u32 %v6823, %v6826
      %v6828 = vsel %vm6739, %v6818, %v6827
      %v6830 = vshrl.u32 %v6334, 16
      %v6832 = vrot.slane %v6830, 3
      %v6833 = vshll.u32 %v6334, 16
      %v6835 = vrot.slane %v6833, 4
      %v6836 = vor.u32 %v6832, %v6835
      %v6837 = vsel %vm6739, %v6827, %v6836
      %v6839 = vshrl.u32 %v6335, 16
      %v6841 = vrot.slane %v6839, 3
      %v6842 = vshll.u32 %v6335, 16
      %v6844 = vrot.slane %v6842, 4
      %v6845 = vor.u32 %v6841, %v6844
      %v6846 = vsel %vm6739, %v6836, %v6845
      %v6848 = vshrl.u32 %v6336, 16
      %v6850 = vrot.slane %v6848, 3
      %v6851 = vshll.u32 %v6336, 16
      %v6853 = vrot.slane %v6851, 4
      %v6854 = vor.u32 %v6850, %v6853
      %v6855 = vsel %vm6739, %v6845, %v6854
      %v6857 = vshrl.u32 %v6337, 16
      %v6859 = vrot.slane %v6857, 3
      %v6860 = vshll.u32 %v6337, 16
      %v6862 = vrot.slane %v6860, 4
      %v6863 = vor.u32 %v6859, %v6862
      %v6864 = vsel %vm6739, %v6854, %v6863
      %v6866 = vshrl.u32 %v6338, 16
      %v6868 = vrot.slane %v6866, 3
      %v6869 = vshll.u32 %v6338, 16
      %v6871 = vrot.slane %v6869, 4
      %v6872 = vor.u32 %v6868, %v6871
      %v6873 = vsel %vm6739, %v6863, %v6872
      %v6875 = vshrl.u32 %v6339, 16
      %v6877 = vrot.slane %v6875, 3
      %v6878 = vshll.u32 %v6339, 16
      %v6880 = vrot.slane %v6878, 4
      %v6881 = vor.u32 %v6877, %v6880
      %v6882 = vsel %vm6739, %v6872, %v6881
      %v6884 = vshrl.u32 %v6340, 16
      %v6886 = vrot.slane %v6884, 3
      %v6887 = vshll.u32 %v6340, 16
      %v6889 = vrot.slane %v6887, 4
      %v6890 = vor.u32 %v6886, %v6889
      %v6891 = vsel %vm6739, %v6881, %v6890
      %v6893 = vshrl.u32 %v6341, 16
      %v6895 = vrot.slane %v6893, 3
      %v6896 = vshll.u32 %v6341, 16
      %v6898 = vrot.slane %v6896, 4
      %v6899 = vor.u32 %v6895, %v6898
      %v6900 = vsel %vm6739, %v6890, %v6899
      %v6902 = vshrl.u32 %v6342, 16
      %v6904 = vrot.slane %v6902, 3
      %v6905 = vshll.u32 %v6342, 16
      %v6907 = vrot.slane %v6905, 4
      %v6908 = vor.u32 %v6904, %v6907
      %v6909 = vsel %vm6739, %v6899, %v6908
      %v6911 = vshrl.u32 %v6343, 16
      %v6913 = vrot.slane %v6911, 3
      %v6914 = vshll.u32 %v6343, 16
      %v6916 = vrot.slane %v6914, 4
      %v6917 = vor.u32 %v6913, %v6916
      %v6918 = vsel %vm6739, %v6908, %v6917
      %v6920 = vshrl.u32 %v6344, 16
      %v6922 = vrot.slane %v6920, 3
      %v6923 = vshll.u32 %v6344, 16
      %v6925 = vrot.slane %v6923, 4
      %v6926 = vor.u32 %v6922, %v6925
      %v6927 = vsel %vm6739, %v6917, %v6926
      %v6929 = vshrl.u32 %v6345, 16
      %v6931 = vrot.slane %v6929, 3
      %v6932 = vshll.u32 %v6345, 16
      %v6934 = vrot.slane %v6932, 4
      %v6935 = vor.u32 %v6931, %v6934
      %v6936 = vsel %vm6739, %v6926, %v6935
      %v6938 = vshrl.u32 %v6346, 16
      %v6940 = vrot.slane %v6938, 3
      %v6941 = vshll.u32 %v6346, 16
      %v6943 = vrot.slane %v6941, 4
      %v6944 = vor.u32 %v6940, %v6943
      %v6945 = vsel %vm6739, %v6935, %v6944
      %v6947 = vshrl.u32 %v6347, 16
      %v6949 = vrot.slane %v6947, 3
      %v6950 = vshll.u32 %v6347, 16
      %v6952 = vrot.slane %v6950, 4
      %v6953 = vor.u32 %v6949, %v6952
      %v6954 = vsel %vm6739, %v6944, %v6953
      %v6956 = vshrl.u32 %v6348, 16
      %v6958 = vrot.slane %v6956, 3
      %v6959 = vshll.u32 %v6348, 16
      %v6961 = vrot.slane %v6959, 4
      %v6962 = vor.u32 %v6958, %v6961
      %v6963 = vsel %vm6739, %v6953, %v6962
      %v7004 = vunpack.c.l.b16 %v6349
      %v7005 = vunpack.c.l.b16 %v6350
      %v7006 = vunpack.c.l.b16 %v6351
      %v7007 = vunpack.c.l.b16 %v6352
      %v7008 = vunpack.c.l.b16 %v6353
      %v7009 = vunpack.c.l.b16 %v6354
      %v7010 = vunpack.c.l.b16 %v6355
      %v7011 = vunpack.c.l.b16 %v6356
      %v7012 = vunpack.c.l.b16 %v6357
      %v7013 = vunpack.c.l.b16 %v6358
      %v7014 = vunpack.c.l.b16 %v6359
      %v7015 = vunpack.c.l.b16 %v6360
      %v7016 = vunpack.c.l.b16 %v6361
      %v7017 = vunpack.c.l.b16 %v6362
      %v7018 = vunpack.c.l.b16 %v6363
      %v7019 = vunpack.c.l.b16 %v6364
      %v7020 = vpack.c.b16 %v7005, %v7004
      %v7021 = vpack.c.b16 %v7007, %v7006
      %v7022 = vpack.c.b16 %v7009, %v7008
      %v7023 = vpack.c.b16 %v7011, %v7010
      %v7024 = vpack.c.b16 %v7013, %v7012
      %v7025 = vpack.c.b16 %v7015, %v7014
      %v7026 = vpack.c.b16 %v7017, %v7016
      %v7027 = vpack.c.b16 %v7019, %v7018
      %7036 = vmatprep.subr.bf16.mxu0 0
      %7037 = vmatpush1.bf16.msra.mxu0 %v7020
      %7038 = vmatprep.subr.bf16.mxu0 0
      %7039 = vmatpush1.bf16.msra.mxu0 %v7021
      %7040 = vmatprep.subr.bf16.mxu0 0
      %7041 = vmatpush1.bf16.msra.mxu0 %v7022
      %7042 = vmatprep.subr.bf16.mxu0 0
      %7043 = vmatpush1.bf16.msra.mxu0 %v7023
      %7044 = vmatprep.subr.bf16.mxu0 0
      %7045 = vmatpush1.bf16.msra.mxu0 %v7024
      %7046 = vmatprep.subr.bf16.mxu0 0
      %7047 = vmatpush1.bf16.msra.mxu0 %v7025
      %7048 = vmatprep.subr.bf16.mxu0 0
      %7049 = vmatpush1.bf16.msra.mxu0 %v7026
      %7050 = vmatprep.subr.bf16.mxu0 0
      %7051 = vmatpush1.bf16.msra.mxu0 %v7027
      %7052 = vmatprep.subr.bf16.mxu0 0
      %7053 = vmatpush1.bf16.msra.mxu0 0
      %7054 = vmatprep.subr.bf16.mxu0 0
      %7055 = vmatpush1.bf16.msra.mxu0 0
      %7056 = vmatprep.subr.bf16.mxu0 0
      %7057 = vmatpush1.bf16.msra.mxu0 0
      %7058 = vmatprep.subr.bf16.mxu0 0
      %7059 = vmatpush1.bf16.msra.mxu0 0
      %7060 = vmatprep.subr.bf16.mxu0 0
      %7061 = vmatpush1.bf16.msra.mxu0 0
      %7062 = vmatprep.subr.bf16.mxu0 0
      %7063 = vmatpush1.bf16.msra.mxu0 0
      %7064 = vmatprep.subr.bf16.mxu0 0
      %7065 = vmatpush1.bf16.msra.mxu0 0
      %7066 = vmatprep.subr.bf16.mxu0 0
      %7067 = vmatpush1.bf16.msra.mxu0 0
      %7068 = vmatprep.mubr.bf16.mxu0 0
      %7069 = vmatmul.mubr.bf16.gmra.mrb[0].mxu0 %v6756
      %v7070 = vpop.f32.mrb[0].mxu0
      %v7071 = vadd.f32 %v6565, %v7070
      %v7072 = vpop.f32.mrb[0].mxu0
      %v7073 = vpop.f32.mrb[0].mxu0
      %v7074 = vadd.f32 %v6568, %v7073
      %v7075 = vpop.f32.mrb[0].mxu0
      %7076 = vmatprep.mubr.bf16.mxu0 0
      %7077 = vmatmul.mubr.bf16.gmra.mrb[0].mxu0 %v6765
      %v7078 = vpop.f32.mrb[0].mxu0
      %v7079 = vpop.f32.mrb[0].mxu0
      %v7080 = vpop.f32.mrb[0].mxu0
      %v7081 = vadd.f32 %v6575, %v7080
      %v7082 = vpop.f32.mrb[0].mxu0
      %7083 = vmatprep.mubr.bf16.mxu0 0
      %7084 = vmatmul.mubr.bf16.gmra.mrb[0].mxu0 %v6774
      %v7085 = vpop.f32.mrb[0].mxu0
      %v7086 = vadd.f32 %v6580, %v7085
      %v7087 = vpop.f32.mrb[0].mxu0
      %v7088 = vpop.f32.mrb[0].mxu0
      %v7089 = vpop.f32.mrb[0].mxu0
      %7090 = vmatprep.mubr.bf16.mxu0 0
      %7091 = vmatmul.mubr.bf16.gmra.mrb[0].mxu0 %v6783
      %v7092 = vpop.f32.mrb[0].mxu0
      %v7093 = vadd.f32 %v6587, %v7092
      %v7094 = vpop.f32.mrb[0].mxu0
      %v7095 = vpop.f32.mrb[0].mxu0
      %v7096 = vadd.f32 %v6590, %v7095
      %v7097 = vpop.f32.mrb[0].mxu0
      %7098 = vmatprep.mubr.bf16.mxu0 0
      %7099 = vmatmul.mubr.bf16.gmra.mrb[0].mxu0 %v6792
      %v7100 = vpop.f32.mrb[0].mxu0
      %v7101 = vpop.f32.mrb[0].mxu0
      %v7102 = vpop.f32.mrb[0].mxu0
      %v7103 = vadd.f32 %v6597, %v7102
      %v7104 = vpop.f32.mrb[0].mxu0
      %7105 = vmatprep.mubr.bf16.mxu0 0
      %7106 = vmatmul.mubr.bf16.gmra.mrb[0].mxu0 %v6801
      %v7107 = vpop.f32.mrb[0].mxu0
      %v7108 = vadd.f32 %v6602, %v7107
      %v7109 = vpop.f32.mrb[0].mxu0
      %v7110 = vpop.f32.mrb[0].mxu0
      %v7111 = vpop.f32.mrb[0].mxu0
      %7112 = vmatprep.mubr.bf16.mxu0 0
      %7113 = vmatmul.mubr.bf16.gmra.mrb[0].mxu0 %v6810
      %v7114 = vpop.f32.mrb[0].mxu0
      %v7115 = vadd.f32 %v6609, %v7114
      %v7116 = vpop.f32.mrb[0].mxu0
      %v7117 = vpop.f32.mrb[0].mxu0
      %v7118 = vadd.f32 %v6612, %v7117
      %v7119 = vpop.f32.mrb[0].mxu0
      %7120 = vmatprep.mubr.bf16.mxu0 0
      %7121 = vmatmul.mubr.bf16.gmra.mrb[0].mxu0 %v6819
      %v7122 = vpop.f32.mrb[0].mxu0
      %v7123 = vpop.f32.mrb[0].mxu0
      %v7124 = vpop.f32.mrb[0].mxu0
      %v7125 = vadd.f32 %v6619, %v7124
      %v7126 = vpop.f32.mrb[0].mxu0
      %7127 = vmatprep.mubr.bf16.mxu0 0
      %7128 = vmatmul.mubr.bf16.gmra.mrb[0].mxu0 %v6828
      %v7129 = vpop.f32.mrb[0].mxu0
      %v7130 = vadd.f32 %v6624, %v7129
      %v7131 = vpop.f32.mrb[0].mxu0
      %v7132 = vpop.f32.mrb[0].mxu0
      %v7133 = vpop.f32.mrb[0].mxu0
      %7134 = vmatprep.mubr.bf16.mxu0 0
      %7135 = vmatmul.mubr.bf16.gmra.mrb[0].mxu0 %v6837
      %v7136 = vpop.f32.mrb[0].mxu0
      %v7137 = vadd.f32 %v6631, %v7136
      %v7138 = vpop.f32.mrb[0].mxu0
      %v7139 = vpop.f32.mrb[0].mxu0
      %v7140 = vadd.f32 %v6634, %v7139
      %v7141 = vpop.f32.mrb[0].mxu0
      %7142 = vmatprep.mubr.bf16.mxu0 0
      %7143 = vmatmul.mubr.bf16.gmra.mrb[0].mxu0 %v6846
      %v7144 = vpop.f32.mrb[0].mxu0
      %v7145 = vpop.f32.mrb[0].mxu0
      %v7146 = vpop.f32.mrb[0].mxu0
      %v7147 = vadd.f32 %v6641, %v7146
      %v7148 = vpop.f32.mrb[0].mxu0
      %7149 = vmatprep.mubr.bf16.mxu0 0
      %7150 = vmatmul.mubr.bf16.gmra.mrb[0].mxu0 %v6855
      %v7151 = vpop.f32.mrb[0].mxu0
      %v7152 = vadd.f32 %v6646, %v7151
      %v7153 = vpop.f32.mrb[0].mxu0
      %v7154 = vpop.f32.mrb[0].mxu0
      %v7155 = vpop.f32.mrb[0].mxu0
      %7156 = vmatprep.mubr.bf16.mxu0 0
      %7157 = vmatmul.mubr.bf16.gmra.mrb[0].mxu0 %v6864
      %v7158 = vpop.f32.mrb[0].mxu0
      %v7159 = vadd.f32 %v6653, %v7158
      %v7160 = vpop.f32.mrb[0].mxu0
      %v7161 = vpop.f32.mrb[0].mxu0
      %v7162 = vadd.f32 %v6656, %v7161
      %v7163 = vpop.f32.mrb[0].mxu0
      %7164 = vmatprep.mubr.bf16.mxu0 0
      %7165 = vmatmul.mubr.bf16.gmra.mrb[0].mxu0 %v6873
      %v7166 = vpop.f32.mrb[0].mxu0
      %v7167 = vpop.f32.mrb[0].mxu0
      %v7168 = vpop.f32.mrb[0].mxu0
      %v7169 = vadd.f32 %v6663, %v7168
      %v7170 = vpop.f32.mrb[0].mxu0
      %7171 = vmatprep.mubr.bf16.mxu0 0
      %7172 = vmatmul.mubr.bf16.gmra.mrb[0].mxu0 %v6882
      %v7173 = vpop.f32.mrb[0].mxu0
      %v7174 = vadd.f32 %v6668, %v7173
      %v7175 = vpop.f32.mrb[0].mxu0
      %v7176 = vpop.f32.mrb[0].mxu0
      %v7177 = vpop.f32.mrb[0].mxu0
      %7178 = vmatprep.mubr.bf16.mxu0 0
      %7179 = vmatmul.mubr.bf16.gmra.mrb[0].mxu0 %v6891
      %v7180 = vpop.f32.mrb[0].mxu0
      %v7181 = vadd.f32 %v6675, %v7180
      %v7182 = vpop.f32.mrb[0].mxu0
      %v7183 = vpop.f32.mrb[0].mxu0
      %v7184 = vadd.f32 %v6678, %v7183
      %v7185 = vpop.f32.mrb[0].mxu0
      %7186 = vmatprep.mubr.bf16.mxu0 0
      %7187 = vmatmul.mubr.bf16.gmra.mrb[0].mxu0 %v6900
      %v7188 = vpop.f32.mrb[0].mxu0
      %v7189 = vpop.f32.mrb[0].mxu0
      %v7190 = vpop.f32.mrb[0].mxu0
      %v7191 = vadd.f32 %v6685, %v7190
      %v7192 = vpop.f32.mrb[0].mxu0
      %7193 = vmatprep.mubr.bf16.mxu0 0
      %7194 = vmatmul.mubr.bf16.gmra.mrb[0].mxu0 %v6909
      %v7195 = vpop.f32.mrb[0].mxu0
      %v7196 = vadd.f32 %v6690, %v7195
      %v7197 = vpop.f32.mrb[0].mxu0
      %v7198 = vpop.f32.mrb[0].mxu0
      %v7199 = vpop.f32.mrb[0].mxu0
      %7200 = vmatprep.mubr.bf16.mxu0 0
      %7201 = vmatmul.mubr.bf16.gmra.mrb[0].mxu0 %v6918
      %v7202 = vpop.f32.mrb[0].mxu0
      %v7203 = vadd.f32 %v6697, %v7202
      %v7204 = vpop.f32.mrb[0].mxu0
      %v7205 = vpop.f32.mrb[0].mxu0
      %v7206 = vadd.f32 %v6700, %v7205
      %v7207 = vpop.f32.mrb[0].mxu0
      %7208 = vmatprep.mubr.bf16.mxu0 0
      %7209 = vmatmul.mubr.bf16.gmra.mrb[0].mxu0 %v6927
      %v7210 = vpop.f32.mrb[0].mxu0
      %v7211 = vpop.f32.mrb[0].mxu0
      %v7212 = vpop.f32.mrb[0].mxu0
      %v7213 = vadd.f32 %v6707, %v7212
      %v7214 = vpop.f32.mrb[0].mxu0
      %7215 = vmatprep.mubr.bf16.mxu0 0
      %7216 = vmatmul.mubr.bf16.gmra.mrb[0].mxu0 %v6936
      %v7217 = vpop.f32.mrb[0].mxu0
      %v7218 = vadd.f32 %v6712, %v7217
      %v7219 = vpop.f32.mrb[0].mxu0
      %v7220 = vpop.f32.mrb[0].mxu0
      %v7221 = vpop.f32.mrb[0].mxu0
      %7222 = vmatprep.mubr.bf16.mxu0 0
      %7223 = vmatmul.mubr.bf16.gmra.mrb[0].mxu0 %v6945
      %v7224 = vpop.f32.mrb[0].mxu0
      %v7225 = vadd.f32 %v6719, %v7224
      %v7226 = vpop.f32.mrb[0].mxu0
      %v7227 = vpop.f32.mrb[0].mxu0
      %v7228 = vadd.f32 %v6722, %v7227
      %v7229 = vpop.f32.mrb[0].mxu0
      %7230 = vmatprep.mubr.bf16.mxu0 0
      %7231 = vmatmul.mubr.bf16.gmra.mrb[0].mxu0 %v6954
      %v7232 = vpop.f32.mrb[0].mxu0
      %v7233 = vpop.f32.mrb[0].mxu0
      %v7234 = vpop.f32.mrb[0].mxu0
      %v7235 = vadd.f32 %v6729, %v7234
      %v7236 = vpop.f32.mrb[0].mxu0
      %7237 = vmatprep.mubr.bf16.mxu0 0
      %7238 = vmatmul.mubr.bf16.gmra.mrb[0].mxu0 %v6963
      %v7239 = vpop.f32.mrb[0].mxu0
      %v7240 = vadd.f32 %v6734, %v7239
      %v7241 = vpop.f32.mrb[0].mxu0
      %v7242 = vpop.f32.mrb[0].mxu0
      %v7243 = vpop.f32.mrb[0].mxu0
      %7244 = vdwg.mxu0
      %v7245 = vld [vmem:[#allocation2 + $0xc0] sm:$0x1f]
      %s7246 = scalar_lea.vmem %s6, 128
      %v7247 = vld [vmem:[%s7246] sm:$0xf]
      %v7248 = vld [vmem:[%s7246 + $0x4] sm:$0xf]
      %v7249 = vld [vmem:[%s7246 + $0x8] sm:$0xf]
      %v7250 = vld [vmem:[%s7246 + $0xc] sm:$0xf]
      %v7251 = vld [vmem:[%s7246 + $0x10] sm:$0xf]
      %v7252 = vld [vmem:[%s7246 + $0x14] sm:$0xf]
      %v7253 = vld [vmem:[%s7246 + $0x18] sm:$0xf]
      %v7254 = vld [vmem:[%s7246 + $0x1c] sm:$0xf]
      %v7255 = vld [vmem:[%s7246 + $0x20] sm:$0xf]
      %v7256 = vld [vmem:[%s7246 + $0x24] sm:$0xf]
      %v7257 = vld [vmem:[%s7246 + $0x28] sm:$0xf]
      %v7258 = vld [vmem:[%s7246 + $0x2c] sm:$0xf]
      %v7259 = vld [vmem:[%s7246 + $0x30] sm:$0xf]
      %v7260 = vld [vmem:[%s7246 + $0x34] sm:$0xf]
      %v7261 = vld [vmem:[%s7246 + $0x38] sm:$0xf]
      %v7262 = vld [vmem:[%s7246 + $0x3c] sm:$0xf]
      %vm7263 = vsmask.f32 3328
      %v7265 = vshrl.u32 %v6365, 16
      %v7267 = vrot.slane %v7265, 4
      %v7268 = vshll.u32 %v6365, 16
      %v7270 = vrot.slane %v7268, 5
      %v7271 = vor.u32 %v7267, %v7270
      %v7272 = vrot.slane %v6749, 4
      %v7273 = vrot.slane %v6752, 5
      %v7274 = vor.u32 %v7272, %v7273
      %v7275 = vsel %vm7263, %v7271, %v7274
      %v7276 = vrot.slane %v6758, 4
      %v7277 = vrot.slane %v6761, 5
      %v7278 = vor.u32 %v7276, %v7277
      %v7279 = vsel %vm7263, %v7274, %v7278
      %v7280 = vrot.slane %v6767, 4
      %v7281 = vrot.slane %v6770, 5
      %v7282 = vor.u32 %v7280, %v7281
      %v7283 = vsel %vm7263, %v7278, %v7282
      %v7284 = vrot.slane %v6776, 4
      %v7285 = vrot.slane %v6779, 5
      %v7286 = vor.u32 %v7284, %v7285
      %v7287 = vsel %vm7263, %v7282, %v7286
      %v7288 = vrot.slane %v6785, 4
      %v7289 = vrot.slane %v6788, 5
      %v7290 = vor.u32 %v7288, %v7289
      %v7291 = vsel %vm7263, %v7286, %v7290
      %v7292 = vrot.slane %v6794, 4
      %v7293 = vrot.slane %v6797, 5
      %v7294 = vor.u32 %v7292, %v7293
      %v7295 = vsel %vm7263, %v7290, %v7294
      %v7296 = vrot.slane %v6803, 4
      %v7297 = vrot.slane %v6806, 5
      %v7298 = vor.u32 %v7296, %v7297
      %v7299 = vsel %vm7263, %v7294, %v7298
      %v7300 = vrot.slane %v6812, 4
      %v7301 = vrot.slane %v6815, 5
      %v7302 = vor.u32 %v7300, %v7301
      %v7303 = vsel %vm7263, %v7298, %v7302
      %v7304 = vrot.slane %v6821, 4
      %v7305 = vrot.slane %v6824, 5
      %v7306 = vor.u32 %v7304, %v7305
      %v7307 = vsel %vm7263, %v7302, %v7306
      %v7308 = vrot.slane %v6830, 4
      %v7309 = vrot.slane %v6833, 5
      %v7310 = vor.u32 %v7308, %v7309
      %v7311 = vsel %vm7263, %v7306, %v7310
      %v7312 = vrot.slane %v6839, 4
      %v7313 = vrot.slane %v6842, 5
      %v7314 = vor.u32 %v7312, %v7313
      %v7315 = vsel %vm7263, %v7310, %v7314
      %v7316 = vrot.slane %v6848, 4
      %v7317 = vrot.slane %v6851, 5
      %v7318 = vor.u32 %v7316, %v7317
      %v7319 = vsel %vm7263, %v7314, %v7318
      %v7320 = vrot.slane %v6857, 4
      %v7321 = vrot.slane %v6860, 5
      %v7322 = vor.u32 %v7320, %v7321
      %v7323 = vsel %vm7263, %v7318, %v7322
      %v7324 = vrot.slane %v6866, 4
      %v7325 = vrot.slane %v6869, 5
      %v7326 = vor.u32 %v7324, %v7325
      %v7327 = vsel %vm7263, %v7322, %v7326
      %v7328 = vrot.slane %v6875, 4
      %v7329 = vrot.slane %v6878, 5
      %v7330 = vor.u32 %v7328, %v7329
      %v7331 = vsel %vm7263, %v7326, %v7330
      %v7332 = vrot.slane %v6884, 4
      %v7333 = vrot.slane %v6887, 5
      %v7334 = vor.u32 %v7332, %v7333
      %v7335 = vsel %vm7263, %v7330, %v7334
      %v7336 = vrot.slane %v6893, 4
      %v7337 = vrot.slane %v6896, 5
      %v7338 = vor.u32 %v7336, %v7337
      %v7339 = vsel %vm7263, %v7334, %v7338
      %v7340 = vrot.slane %v6902, 4
      %v7341 = vrot.slane %v6905, 5
      %v7342 = vor.u32 %v7340, %v7341
      %v7343 = vsel %vm7263, %v7338, %v7342
      %v7344 = vrot.slane %v6911, 4
      %v7345 = vrot.slane %v6914, 5
      %v7346 = vor.u32 %v7344, %v7345
      %v7347 = vsel %vm7263, %v7342, %v7346
      %v7348 = vrot.slane %v6920, 4
      %v7349 = vrot.slane %v6923, 5
      %v7350 = vor.u32 %v7348, %v7349
      %v7351 = vsel %vm7263, %v7346, %v7350
      %v7352 = vrot.slane %v6929, 4
      %v7353 = vrot.slane %v6932, 5
      %v7354 = vor.u32 %v7352, %v7353
      %v7355 = vsel %vm7263, %v7350, %v7354
      %v7356 = vrot.slane %v6938, 4
      %v7357 = vrot.slane %v6941, 5
      %v7358 = vor.u32 %v7356, %v7357
      %v7359 = vsel %vm7263, %v7354, %v7358
      %v7360 = vrot.slane %v6947, 4
      %v7361 = vrot.slane %v6950, 5
      %v7362 = vor.u32 %v7360, %v7361
      %v7363 = vsel %vm7263, %v7358, %v7362
      %v7365 = vshrl.u32 %v7245, 16
      %v7367 = vrot.slane %v7365, 4
      %v7368 = vshll.u32 %v7245, 16
      %v7370 = vrot.slane %v7368, 5
      %v7371 = vor.u32 %v7367, %v7370
      %v7372 = vsel %vm7263, %v7362, %v7371
      %v7413 = vunpack.c.l.b16 %v7247
      %v7414 = vunpack.c.l.b16 %v7248
      %v7415 = vunpack.c.l.b16 %v7249
      %v7416 = vunpack.c.l.b16 %v7250
      %v7417 = vunpack.c.l.b16 %v7251
      %v7418 = vunpack.c.l.b16 %v7252
      %v7419 = vunpack.c.l.b16 %v7253
      %v7420 = vunpack.c.l.b16 %v7254
      %v7421 = vunpack.c.l.b16 %v7255
      %v7422 = vunpack.c.l.b16 %v7256
      %v7423 = vunpack.c.l.b16 %v7257
      %v7424 = vunpack.c.l.b16 %v7258
      %v7425 = vunpack.c.l.b16 %v7259
      %v7426 = vunpack.c.l.b16 %v7260
      %v7427 = vunpack.c.l.b16 %v7261
      %v7428 = vunpack.c.l.b16 %v7262
      %v7429 = vpack.c.b16 %v7414, %v7413
      %v7430 = vpack.c.b16 %v7416, %v7415
      %v7431 = vpack.c.b16 %v7418, %v7417
      %v7432 = vpack.c.b16 %v7420, %v7419
      %v7433 = vpack.c.b16 %v7422, %v7421
      %v7434 = vpack.c.b16 %v7424, %v7423
      %v7435 = vpack.c.b16 %v7426, %v7425
      %v7436 = vpack.c.b16 %v7428, %v7427
      %7445 = vmatprep.subr.bf16.mxu0 0
      %7446 = vmatpush1.bf16.msra.mxu0 %v7429
      %7447 = vmatprep.subr.bf16.mxu0 0
      %7448 = vmatpush1.bf16.msra.mxu0 %v7430
      %7449 = vmatprep.subr.bf16.mxu0 0
      %7450 = vmatpush1.bf16.msra.mxu0 %v7431
      %7451 = vmatprep.subr.bf16.mxu0 0
      %7452 = vmatpush1.bf16.msra.mxu0 %v7432
      %7453 = vmatprep.subr.bf16.mxu0 0
      %7454 = vmatpush1.bf16.msra.mxu0 %v7433
      %7455 = vmatprep.subr.bf16.mxu0 0
      %7456 = vmatpush1.bf16.msra.mxu0 %v7434
      %7457 = vmatprep.subr.bf16.mxu0 0
      %7458 = vmatpush1.bf16.msra.mxu0 %v7435
      %7459 = vmatprep.subr.bf16.mxu0 0
      %7460 = vmatpush1.bf16.msra.mxu0 %v7436
      %7461 = vmatprep.subr.bf16.mxu0 0
      %7462 = vmatpush1.bf16.msra.mxu0 0
      %7463 = vmatprep.subr.bf16.mxu0 0
      %7464 = vmatpush1.bf16.msra.mxu0 0
      %7465 = vmatprep.subr.bf16.mxu0 0
      %7466 = vmatpush1.bf16.msra.mxu0 0
      %7467 = vmatprep.subr.bf16.mxu0 0
      %7468 = vmatpush1.bf16.msra.mxu0 0
      %7469 = vmatprep.subr.bf16.mxu0 0
      %7470 = vmatpush1.bf16.msra.mxu0 0
      %7471 = vmatprep.subr.bf16.mxu0 0
      %7472 = vmatpush1.bf16.msra.mxu0 0
      %7473 = vmatprep.subr.bf16.mxu0 0
      %7474 = vmatpush1.bf16.msra.mxu0 0
      %7475 = vmatprep.subr.bf16.mxu0 0
      %7476 = vmatpush1.bf16.msra.mxu0 0
      %7477 = vmatprep.mubr.bf16.mxu0 0
      %7478 = vmatmul.mubr.bf16.gmra.mrb[0].mxu0 %v7275
      %v7479 = vpop.f32.mrb[0].mxu0
      %v7480 = vadd.f32 0.0, %v7479
      %v7481 = vpop.f32.mrb[0].mxu0
      %v7482 = vpop.f32.mrb[0].mxu0
      %v7483 = vadd.f32 0.0, %v7482
      %v7484 = vpop.f32.mrb[0].mxu0
      %7485 = vmatprep.mubr.bf16.mxu0 0
      %7486 = vmatmul.mubr.bf16.gmra.mrb[0].mxu0 %v7279
      %v7487 = vpop.f32.mrb[0].mxu0
      %v7488 = vpop.f32.mrb[0].mxu0
      %v7489 = vpop.f32.mrb[0].mxu0
      %v7490 = vadd.f32 0.0, %v7489
      %v7491 = vpop.f32.mrb[0].mxu0
      %7492 = vmatprep.mubr.bf16.mxu0 0
      %7493 = vmatmul.mubr.bf16.gmra.mrb[0].mxu0 %v7283
      %v7494 = vpop.f32.mrb[0].mxu0
      %v7495 = vadd.f32 0.0, %v7494
      %v7496 = vpop.f32.mrb[0].mxu0
      %v7497 = vpop.f32.mrb[0].mxu0
      %v7498 = vpop.f32.mrb[0].mxu0
      %7499 = vmatprep.mubr.bf16.mxu0 0
      %7500 = vmatmul.mubr.bf16.gmra.mrb[0].mxu0 %v7287
      %v7501 = vpop.f32.mrb[0].mxu0
      %v7502 = vadd.f32 0.0, %v7501
      %v7503 = vpop.f32.mrb[0].mxu0
      %v7504 = vpop.f32.mrb[0].mxu0
      %v7505 = vadd.f32 0.0, %v7504
      %v7506 = vpop.f32.mrb[0].mxu0
      %7507 = vmatprep.mubr.bf16.mxu0 0
      %7508 = vmatmul.mubr.bf16.gmra.mrb[0].mxu0 %v7291
      %v7509 = vpop.f32.mrb[0].mxu0
      %v7510 = vpop.f32.mrb[0].mxu0
      %v7511 = vpop.f32.mrb[0].mxu0
      %v7512 = vadd.f32 0.0, %v7511
      %v7513 = vpop.f32.mrb[0].mxu0
      %7514 = vmatprep.mubr.bf16.mxu0 0
      %7515 = vmatmul.mubr.bf16.gmra.mrb[0].mxu0 %v7295
      %v7516 = vpop.f32.mrb[0].mxu0
      %v7517 = vadd.f32 0.0, %v7516
      %v7518 = vpop.f32.mrb[0].mxu0
      %v7519 = vpop.f32.mrb[0].mxu0
      %v7520 = vpop.f32.mrb[0].mxu0
      %7521 = vmatprep.mubr.bf16.mxu0 0
      %7522 = vmatmul.mubr.bf16.gmra.mrb[0].mxu0 %v7299
      %v7523 = vpop.f32.mrb[0].mxu0
      %v7524 = vadd.f32 0.0, %v7523
      %v7525 = vpop.f32.mrb[0].mxu0
      %v7526 = vpop.f32.mrb[0].mxu0
      %v7527 = vadd.f32 0.0, %v7526
      %v7528 = vpop.f32.mrb[0].mxu0
      %7529 = vmatprep.mubr.bf16.mxu0 0
      %7530 = vmatmul.mubr.bf16.gmra.mrb[0].mxu0 %v7303
      %v7531 = vpop.f32.mrb[0].mxu0
      %v7532 = vpop.f32.mrb[0].mxu0
      %v7533 = vpop.f32.mrb[0].mxu0
      %v7534 = vadd.f32 0.0, %v7533
      %v7535 = vpop.f32.mrb[0].mxu0
      %7536 = vmatprep.mubr.bf16.mxu0 0
      %7537 = vmatmul.mubr.bf16.gmra.mrb[0].mxu0 %v7307
      %v7538 = vpop.f32.mrb[0].mxu0
      %v7539 = vadd.f32 0.0, %v7538
      %v7540 = vpop.f32.mrb[0].mxu0
      %v7541 = vpop.f32.mrb[0].mxu0
      %v7542 = vpop.f32.mrb[0].mxu0
      %7543 = vmatprep.mubr.bf16.mxu0 0
      %7544 = vmatmul.mubr.bf16.gmra.mrb[0].mxu0 %v7311
      %v7545 = vpop.f32.mrb[0].mxu0
      %v7546 = vadd.f32 0.0, %v7545
      %v7547 = vpop.f32.mrb[0].mxu0
      %v7548 = vpop.f32.mrb[0].mxu0
      %v7549 = vadd.f32 0.0, %v7548
      %v7550 = vpop.f32.mrb[0].mxu0
      %7551 = vmatprep.mubr.bf16.mxu0 0
      %7552 = vmatmul.mubr.bf16.gmra.mrb[0].mxu0 %v7315
      %v7553 = vpop.f32.mrb[0].mxu0
      %v7554 = vpop.f32.mrb[0].mxu0
      %v7555 = vpop.f32.mrb[0].mxu0
      %v7556 = vadd.f32 0.0, %v7555
      %v7557 = vpop.f32.mrb[0].mxu0
      %7558 = vmatprep.mubr.bf16.mxu0 0
      %7559 = vmatmul.mubr.bf16.gmra.mrb[0].mxu0 %v7319
      %v7560 = vpop.f32.mrb[0].mxu0
      %v7561 = vadd.f32 0.0, %v7560
      %v7562 = vpop.f32.mrb[0].mxu0
      %v7563 = vpop.f32.mrb[0].mxu0
      %v7564 = vpop.f32.mrb[0].mxu0
      %7565 = vmatprep.mubr.bf16.mxu0 0
      %7566 = vmatmul.mubr.bf16.gmra.mrb[0].mxu0 %v7323
      %v7567 = vpop.f32.mrb[0].mxu0
      %v7568 = vadd.f32 0.0, %v7567
      %v7569 = vpop.f32.mrb[0].mxu0
      %v7570 = vpop.f32.mrb[0].mxu0
      %v7571 = vadd.f32 0.0, %v7570
      %v7572 = vpop.f32.mrb[0].mxu0
      %7573 = vmatprep.mubr.bf16.mxu0 0
      %7574 = vmatmul.mubr.bf16.gmra.mrb[0].mxu0 %v7327
      %v7575 = vpop.f32.mrb[0].mxu0
      %v7576 = vpop.f32.mrb[0].mxu0
      %v7577 = vpop.f32.mrb[0].mxu0
      %v7578 = vadd.f32 0.0, %v7577
      %v7579 = vpop.f32.mrb[0].mxu0
      %7580 = vmatprep.mubr.bf16.mxu0 0
      %7581 = vmatmul.mubr.bf16.gmra.mrb[0].mxu0 %v7331
      %v7582 = vpop.f32.mrb[0].mxu0
      %v7583 = vadd.f32 0.0, %v7582
      %v7584 = vpop.f32.mrb[0].mxu0
      %v7585 = vpop.f32.mrb[0].mxu0
      %v7586 = vpop.f32.mrb[0].mxu0
      %7587 = vmatprep.mubr.bf16.mxu0 0
      %7588 = vmatmul.mubr.bf16.gmra.mrb[0].mxu0 %v7335
      %v7589 = vpop.f32.mrb[0].mxu0
      %v7590 = vadd.f32 0.0, %v7589
      %v7591 = vpop.f32.mrb[0].mxu0
      %v7592 = vpop.f32.mrb[0].mxu0
      %v7593 = vadd.f32 0.0, %v7592
      %v7594 = vpop.f32.mrb[0].mxu0
      %7595 = vmatprep.mubr.bf16.mxu0 0
      %7596 = vmatmul.mubr.bf16.gmra.mrb[0].mxu0 %v7339
      %v7597 = vpop.f32.mrb[0].mxu0
      %v7598 = vpop.f32.mrb[0].mxu0
      %v7599 = vpop.f32.mrb[0].mxu0
      %v7600 = vadd.f32 0.0, %v7599
      %v7601 = vpop.f32.mrb[0].mxu0
      %7602 = vmatprep.mubr.bf16.mxu0 0
      %7603 = vmatmul.mubr.bf16.gmra.mrb[0].mxu0 %v7343
      %v7604 = vpop.f32.mrb[0].mxu0
      %v7605 = vadd.f32 0.0, %v7604
      %v7606 = vpop.f32.mrb[0].mxu0
      %v7607 = vpop.f32.mrb[0].mxu0
      %v7608 = vpop.f32.mrb[0].mxu0
      %7609 = vmatprep.mubr.bf16.mxu0 0
      %7610 = vmatmul.mubr.bf16.gmra.mrb[0].mxu0 %v7347
      %v7611 = vpop.f32.mrb[0].mxu0
      %v7612 = vadd.f32 0.0, %v7611
      %v7613 = vpop.f32.mrb[0].mxu0
      %v7614 = vpop.f32.mrb[0].mxu0
      %v7615 = vadd.f32 0.0, %v7614
      %v7616 = vpop.f32.mrb[0].mxu0
      %7617 = vmatprep.mubr.bf16.mxu0 0
      %7618 = vmatmul.mubr.bf16.gmra.mrb[0].mxu0 %v7351
      %v7619 = vpop.f32.mrb[0].mxu0
      %v7620 = vpop.f32.mrb[0].mxu0
      %v7621 = vpop.f32.mrb[0].mxu0
      %v7622 = vadd.f32 0.0, %v7621
      %v7623 = vpop.f32.mrb[0].mxu0
      %7624 = vmatprep.mubr.bf16.mxu0 0
      %7625 = vmatmul.mubr.bf16.gmra.mrb[0].mxu0 %v7355
      %v7626 = vpop.f32.mrb[0].mxu0
      %v7627 = vadd.f32 0.0, %v7626
      %v7628 = vpop.f32.mrb[0].mxu0
      %v7629 = vpop.f32.mrb[0].mxu0
      %v7630 = vpop.f32.mrb[0].mxu0
      %7631 = vmatprep.mubr.bf16.mxu0 0
      %7632 = vmatmul.mubr.bf16.gmra.mrb[0].mxu0 %v7359
      %v7633 = vpop.f32.mrb[0].mxu0
      %v7634 = vadd.f32 0.0, %v7633
      %v7635 = vpop.f32.mrb[0].mxu0
      %v7636 = vpop.f32.mrb[0].mxu0
      %v7637 = vadd.f32 0.0, %v7636
      %v7638 = vpop.f32.mrb[0].mxu0
      %7639 = vmatprep.mubr.bf16.mxu0 0
      %7640 = vmatmul.mubr.bf16.gmra.mrb[0].mxu0 %v7363
      %v7641 = vpop.f32.mrb[0].mxu0
      %v7642 = vpop.f32.mrb[0].mxu0
      %v7643 = vpop.f32.mrb[0].mxu0
      %v7644 = vadd.f32 0.0, %v7643
      %v7645 = vpop.f32.mrb[0].mxu0
      %7646 = vmatprep.mubr.bf16.mxu0 0
      %7647 = vmatmul.mubr.bf16.gmra.mrb[0].mxu0 %v7372
      %v7648 = vpop.f32.mrb[0].mxu0
      %v7649 = vadd.f32 0.0, %v7648
      %v7650 = vpop.f32.mrb[0].mxu0
      %v7651 = vpop.f32.mrb[0].mxu0
      %v7652 = vpop.f32.mrb[0].mxu0
      %7653 = vdwg.mxu0
      %v7654 = vadd.f32 %v7071, %v7480
      %v7655 = vadd.f32 %v7074, %v7483
      %v7656 = vadd.f32 %v7081, %v7490
      %v7657 = vadd.f32 %v7086, %v7495
      %v7658 = vadd.f32 %v7093, %v7502
      %v7659 = vadd.f32 %v7096, %v7505
      %v7660 = vadd.f32 %v7103, %v7512
      %v7661 = vadd.f32 %v7108, %v7517
      %v7662 = vadd.f32 %v7115, %v7524
      %v7663 = vadd.f32 %v7118, %v7527
      %v7664 = vadd.f32 %v7125, %v7534
      %v7665 = vadd.f32 %v7130, %v7539
      %v7666 = vadd.f32 %v7137, %v7546
      %v7667 = vadd.f32 %v7140, %v7549
      %v7668 = vadd.f32 %v7147, %v7556
      %v7669 = vadd.f32 %v7152, %v7561
      %v7670 = vadd.f32 %v7159, %v7568
      %v7671 = vadd.f32 %v7162, %v7571
      %v7672 = vadd.f32 %v7169, %v7578
      %v7673 = vadd.f32 %v7174, %v7583
      %v7674 = vadd.f32 %v7181, %v7590
      %v7675 = vadd.f32 %v7184, %v7593
      %v7676 = vadd.f32 %v7191, %v7600
      %v7677 = vadd.f32 %v7196, %v7605
      %v7678 = vadd.f32 %v7203, %v7612
      %v7679 = vadd.f32 %v7206, %v7615
      %v7680 = vadd.f32 %v7213, %v7622
      %v7681 = vadd.f32 %v7218, %v7627
      %v7682 = vadd.f32 %v7225, %v7634
      %v7683 = vadd.f32 %v7228, %v7637
      %v7684 = vadd.f32 %v7235, %v7644
      %v7685 = vadd.f32 %v7240, %v7649
      %v7686 = vld [vmem:[#allocation2 + $0x8] sm:$0x80]
      %v7687 = vld [vmem:[#allocation2 + $0x10] sm:$0xff]
      %v7688 = vld [vmem:[#allocation2 + $0x18] sm:$0xff]
      %v7689 = vld [vmem:[#allocation2 + $0x20] sm:$0xff]
      %v7690 = vld [vmem:[#allocation2 + $0x28] sm:$0xff]
      %v7691 = vld [vmem:[#allocation2 + $0x30] sm:$0xff]
      %v7692 = vld [vmem:[#allocation2 + $0x38] sm:$0xff]
      %v7693 = vld [vmem:[#allocation2 + $0x40] sm:$0xff]
      %v7694 = vld [vmem:[#allocation2 + $0x48] sm:$0xff]
      %v7695 = vld [vmem:[#allocation2 + $0x50] sm:$0xff]
      %v7696 = vld [vmem:[#allocation2 + $0x58] sm:$0xff]
      %v7697 = vld [vmem:[#allocation2 + $0x60] sm:$0xff]
      %v7698 = vld [vmem:[#allocation2 + $0x68] sm:$0xff]
      %v7699 = vld [vmem:[#allocation2 + $0x70] sm:$0xff]
      %v7700 = vld [vmem:[#allocation2 + $0x78] sm:$0xff]
      %v7701 = vld [vmem:[#allocation2 + $0x80] sm:$0xff]
      %v7702 = vld [vmem:[#allocation2 + $0x88] sm:$0xff]
      %v7703 = vld [vmem:[#allocation2 + $0x90] sm:$0xff]
      %v7704 = vld [vmem:[#allocation2 + $0x98] sm:$0xff]
      %v7705 = vld [vmem:[#allocation2 + $0xa0] sm:$0xff]
      %v7706 = vld [vmem:[#allocation2 + $0xa8] sm:$0xff]
      %v7707 = vld [vmem:[#allocation2 + $0xb0] sm:$0xff]
      %v7708 = vld [vmem:[#allocation2 + $0xb8] sm:$0xff]
      %v7709 = vld [vmem:[#allocation2 + $0xc0] sm:$0xff]
      %v7710 = vld [vmem:[#allocation2 + $0xc8] sm:$0xff]
      %s7711 = scalar_lea.vmem %s6, 192
      %v7712 = vld [vmem:[%s7711] sm:$0xf]
      %v7713 = vld [vmem:[%s7711 + $0x4] sm:$0xf]
      %v7714 = vld [vmem:[%s7711 + $0x8] sm:$0xf]
      %v7715 = vld [vmem:[%s7711 + $0xc] sm:$0xf]
      %v7716 = vld [vmem:[%s7711 + $0x10] sm:$0xf]
      %v7717 = vld [vmem:[%s7711 + $0x14] sm:$0xf]
      %v7718 = vld [vmem:[%s7711 + $0x18] sm:$0xf]
      %v7719 = vld [vmem:[%s7711 + $0x1c] sm:$0xf]
      %v7720 = vld [vmem:[%s7711 + $0x20] sm:$0xf]
      %v7721 = vld [vmem:[%s7711 + $0x24] sm:$0xf]
      %v7722 = vld [vmem:[%s7711 + $0x28] sm:$0xf]
      %v7723 = vld [vmem:[%s7711 + $0x2c] sm:$0xf]
      %v7724 = vld [vmem:[%s7711 + $0x30] sm:$0xf]
      %v7725 = vld [vmem:[%s7711 + $0x34] sm:$0xf]
      %v7726 = vld [vmem:[%s7711 + $0x38] sm:$0xf]
      %v7727 = vld [vmem:[%s7711 + $0x3c] sm:$0xf]
      %vm7728 = vsmask.f32 256
      %v7730 = vshrl.u32 %v7686, 16
      %v7732 = vrot.slane %v7730, 7
      %v7734 = vshrl.u32 %v7687, 16
      %v7736 = vrot.slane %v7734, 7
      %v7737 = vshll.u32 %v7687, 16
      %v7739 = vor.u32 %v7736, %v7737
      %v7740 = vsel %vm7728, %v7732, %v7739
      %v7742 = vshrl.u32 %v7688, 16
      %v7744 = vrot.slane %v7742, 7
      %v7745 = vshll.u32 %v7688, 16
      %v7747 = vor.u32 %v7744, %v7745
      %v7748 = vsel %vm7728, %v7736, %v7747
      %v7750 = vshrl.u32 %v7689, 16
      %v7752 = vrot.slane %v7750, 7
      %v7753 = vshll.u32 %v7689, 16
      %v7755 = vor.u32 %v7752, %v7753
      %v7756 = vsel %vm7728, %v7744, %v7755
      %v7758 = vshrl.u32 %v7690, 16
      %v7760 = vrot.slane %v7758, 7
      %v7761 = vshll.u32 %v7690, 16
      %v7763 = vor.u32 %v7760, %v7761
      %v7764 = vsel %vm7728, %v7752, %v7763
      %v7766 = vshrl.u32 %v7691, 16
      %v7768 = vrot.slane %v7766, 7
      %v7769 = vshll.u32 %v7691, 16
      %v7771 = vor.u32 %v7768, %v7769
      %v7772 = vsel %vm7728, %v7760, %v7771
      %v7774 = vshrl.u32 %v7692, 16
      %v7776 = vrot.slane %v7774, 7
      %v7777 = vshll.u32 %v7692, 16
      %v7779 = vor.u32 %v7776, %v7777
      %v7780 = vsel %vm7728, %v7768, %v7779
      %v7782 = vshrl.u32 %v7693, 16
      %v7784 = vrot.slane %v7782, 7
      %v7785 = vshll.u32 %v7693, 16
      %v7787 = vor.u32 %v7784, %v7785
      %v7788 = vsel %vm7728, %v7776, %v7787
      %v7790 = vshrl.u32 %v7694, 16
      %v7792 = vrot.slane %v7790, 7
      %v7793 = vshll.u32 %v7694, 16
      %v7795 = vor.u32 %v7792, %v7793
      %v7796 = vsel %vm7728, %v7784, %v7795
      %v7798 = vshrl.u32 %v7695, 16
      %v7800 = vrot.slane %v7798, 7
      %v7801 = vshll.u32 %v7695, 16
      %v7803 = vor.u32 %v7800, %v7801
      %v7804 = vsel %vm7728, %v7792, %v7803
      %v7806 = vshrl.u32 %v7696, 16
      %v7808 = vrot.slane %v7806, 7
      %v7809 = vshll.u32 %v7696, 16
      %v7811 = vor.u32 %v7808, %v7809
      %v7812 = vsel %vm7728, %v7800, %v7811
      %v7814 = vshrl.u32 %v7697, 16
      %v7816 = vrot.slane %v7814, 7
      %v7817 = vshll.u32 %v7697, 16
      %v7819 = vor.u32 %v7816, %v7817
      %v7820 = vsel %vm7728, %v7808, %v7819
      %v7822 = vshrl.u32 %v7698, 16
      %v7824 = vrot.slane %v7822, 7
      %v7825 = vshll.u32 %v7698, 16
      %v7827 = vor.u32 %v7824, %v7825
      %v7828 = vsel %vm7728, %v7816, %v7827
      %v7830 = vshrl.u32 %v7699, 16
      %v7832 = vrot.slane %v7830, 7
      %v7833 = vshll.u32 %v7699, 16
      %v7835 = vor.u32 %v7832, %v7833
      %v7836 = vsel %vm7728, %v7824, %v7835
      %v7838 = vshrl.u32 %v7700, 16
      %v7840 = vrot.slane %v7838, 7
      %v7841 = vshll.u32 %v7700, 16
      %v7843 = vor.u32 %v7840, %v7841
      %v7844 = vsel %vm7728, %v7832, %v7843
      %v7846 = vshrl.u32 %v7701, 16
      %v7848 = vrot.slane %v7846, 7
      %v7849 = vshll.u32 %v7701, 16
      %v7851 = vor.u32 %v7848, %v7849
      %v7852 = vsel %vm7728, %v7840, %v7851
      %v7854 = vshrl.u32 %v7702, 16
      %v7856 = vrot.slane %v7854, 7
      %v7857 = vshll.u32 %v7702, 16
      %v7859 = vor.u32 %v7856, %v7857
      %v7860 = vsel %vm7728, %v7848, %v7859
      %v7862 = vshrl.u32 %v7703, 16
      %v7864 = vrot.slane %v7862, 7
      %v7865 = vshll.u32 %v7703, 16
      %v7867 = vor.u32 %v7864, %v7865
      %v7868 = vsel %vm7728, %v7856, %v7867
      %v7870 = vshrl.u32 %v7704, 16
      %v7872 = vrot.slane %v7870, 7
      %v7873 = vshll.u32 %v7704, 16
      %v7875 = vor.u32 %v7872, %v7873
      %v7876 = vsel %vm7728, %v7864, %v7875
      %v7878 = vshrl.u32 %v7705, 16
      %v7880 = vrot.slane %v7878, 7
      %v7881 = vshll.u32 %v7705, 16
      %v7883 = vor.u32 %v7880, %v7881
      %v7884 = vsel %vm7728, %v7872, %v7883
      %v7886 = vshrl.u32 %v7706, 16
      %v7888 = vrot.slane %v7886, 7
      %v7889 = vshll.u32 %v7706, 16
      %v7891 = vor.u32 %v7888, %v7889
      %v7892 = vsel %vm7728, %v7880, %v7891
      %v7894 = vshrl.u32 %v7707, 16
      %v7896 = vrot.slane %v7894, 7
      %v7897 = vshll.u32 %v7707, 16
      %v7899 = vor.u32 %v7896, %v7897
      %v7900 = vsel %vm7728, %v7888, %v7899
      %v7902 = vshrl.u32 %v7708, 16
      %v7904 = vrot.slane %v7902, 7
      %v7905 = vshll.u32 %v7708, 16
      %v7907 = vor.u32 %v7904, %v7905
      %v7908 = vsel %vm7728, %v7896, %v7907
      %v7910 = vshrl.u32 %v7709, 16
      %v7912 = vrot.slane %v7910, 7
      %v7913 = vshll.u32 %v7709, 16
      %v7915 = vor.u32 %v7912, %v7913
      %v7916 = vsel %vm7728, %v7904, %v7915
      %v7918 = vshrl.u32 %v7710, 16
      %v7920 = vrot.slane %v7918, 7
      %v7921 = vshll.u32 %v7710, 16
      %v7923 = vor.u32 %v7920, %v7921
      %v7924 = vsel %vm7728, %v7912, %v7923
      %v7965 = vunpack.c.l.b16 %v7712
      %v7966 = vunpack.c.l.b16 %v7713
      %v7967 = vunpack.c.l.b16 %v7714
      %v7968 = vunpack.c.l.b16 %v7715
      %v7969 = vunpack.c.l.b16 %v7716
      %v7970 = vunpack.c.l.b16 %v7717
      %v7971 = vunpack.c.l.b16 %v7718
      %v7972 = vunpack.c.l.b16 %v7719
      %v7973 = vunpack.c.l.b16 %v7720
      %v7974 = vunpack.c.l.b16 %v7721
      %v7975 = vunpack.c.l.b16 %v7722
      %v7976 = vunpack.c.l.b16 %v7723
      %v7977 = vunpack.c.l.b16 %v7724
      %v7978 = vunpack.c.l.b16 %v7725
      %v7979 = vunpack.c.l.b16 %v7726
      %v7980 = vunpack.c.l.b16 %v7727
      %v7981 = vpack.c.b16 %v7966, %v7965
      %v7982 = vpack.c.b16 %v7968, %v7967
      %v7983 = vpack.c.b16 %v7970, %v7969
      %v7984 = vpack.c.b16 %v7972, %v7971
      %v7985 = vpack.c.b16 %v7974, %v7973
      %v7986 = vpack.c.b16 %v7976, %v7975
      %v7987 = vpack.c.b16 %v7978, %v7977
      %v7988 = vpack.c.b16 %v7980, %v7979
      %7997 = vmatprep.subr.bf16.mxu0 0
      %7998 = vmatpush1.bf16.msra.mxu0 %v7981
      %7999 = vmatprep.subr.bf16.mxu0 0
      %8000 = vmatpush1.bf16.msra.mxu0 %v7982
      %8001 = vmatprep.subr.bf16.mxu0 0
      %8002 = vmatpush1.bf16.msra.mxu0 %v7983
      %8003 = vmatprep.subr.bf16.mxu0 0
      %8004 = vmatpush1.bf16.msra.mxu0 %v7984
      %8005 = vmatprep.subr.bf16.mxu0 0
      %8006 = vmatpush1.bf16.msra.mxu0 %v7985
      %8007 = vmatprep.subr.bf16.mxu0 0
      %8008 = vmatpush1.bf16.msra.mxu0 %v7986
      %8009 = vmatprep.subr.bf16.mxu0 0
      %8010 = vmatpush1.bf16.msra.mxu0 %v7987
      %8011 = vmatprep.subr.bf16.mxu0 0
      %8012 = vmatpush1.bf16.msra.mxu0 %v7988
      %8013 = vmatprep.subr.bf16.mxu0 0
      %8014 = vmatpush1.bf16.msra.mxu0 0
      %8015 = vmatprep.subr.bf16.mxu0 0
      %8016 = vmatpush1.bf16.msra.mxu0 0
      %8017 = vmatprep.subr.bf16.mxu0 0
      %8018 = vmatpush1.bf16.msra.mxu0 0
      %8019 = vmatprep.subr.bf16.mxu0 0
      %8020 = vmatpush1.bf16.msra.mxu0 0
      %8021 = vmatprep.subr.bf16.mxu0 0
      %8022 = vmatpush1.bf16.msra.mxu0 0
      %8023 = vmatprep.subr.bf16.mxu0 0
      %8024 = vmatpush1.bf16.msra.mxu0 0
      %8025 = vmatprep.subr.bf16.mxu0 0
      %8026 = vmatpush1.bf16.msra.mxu0 0
      %8027 = vmatprep.subr.bf16.mxu0 0
      %8028 = vmatpush1.bf16.msra.mxu0 0
      %8029 = vmatprep.mubr.bf16.mxu0 0
      %8030 = vmatmul.mubr.bf16.gmra.mrb[0].mxu0 %v7740
      %v8031 = vpop.f32.mrb[0].mxu0
      %v8032 = vadd.f32 0.0, %v8031
      %v8033 = vpop.f32.mrb[0].mxu0
      %v8034 = vpop.f32.mrb[0].mxu0
      %v8035 = vadd.f32 0.0, %v8034
      %v8036 = vpop.f32.mrb[0].mxu0
      %8037 = vmatprep.mubr.bf16.mxu0 0
      %8038 = vmatmul.mubr.bf16.gmra.mrb[0].mxu0 %v7748
      %v8039 = vpop.f32.mrb[0].mxu0
      %v8040 = vpop.f32.mrb[0].mxu0
      %v8041 = vpop.f32.mrb[0].mxu0
      %v8042 = vadd.f32 0.0, %v8041
      %v8043 = vpop.f32.mrb[0].mxu0
      %8044 = vmatprep.mubr.bf16.mxu0 0
      %8045 = vmatmul.mubr.bf16.gmra.mrb[0].mxu0 %v7756
      %v8046 = vpop.f32.mrb[0].mxu0
      %v8047 = vadd.f32 0.0, %v8046
      %v8048 = vpop.f32.mrb[0].mxu0
      %v8049 = vpop.f32.mrb[0].mxu0
      %v8050 = vpop.f32.mrb[0].mxu0
      %8051 = vmatprep.mubr.bf16.mxu0 0
      %8052 = vmatmul.mubr.bf16.gmra.mrb[0].mxu0 %v7764
      %v8053 = vpop.f32.mrb[0].mxu0
      %v8054 = vadd.f32 0.0, %v8053
      %v8055 = vpop.f32.mrb[0].mxu0
      %v8056 = vpop.f32.mrb[0].mxu0
      %v8057 = vadd.f32 0.0, %v8056
      %v8058 = vpop.f32.mrb[0].mxu0
      %8059 = vmatprep.mubr.bf16.mxu0 0
      %8060 = vmatmul.mubr.bf16.gmra.mrb[0].mxu0 %v7772
      %v8061 = vpop.f32.mrb[0].mxu0
      %v8062 = vpop.f32.mrb[0].mxu0
      %v8063 = vpop.f32.mrb[0].mxu0
      %v8064 = vadd.f32 0.0, %v8063
      %v8065 = vpop.f32.mrb[0].mxu0
      %8066 = vmatprep.mubr.bf16.mxu0 0
      %8067 = vmatmul.mubr.bf16.gmra.mrb[0].mxu0 %v7780
      %v8068 = vpop.f32.mrb[0].mxu0
      %v8069 = vadd.f32 0.0, %v8068
      %v8070 = vpop.f32.mrb[0].mxu0
      %v8071 = vpop.f32.mrb[0].mxu0
      %v8072 = vpop.f32.mrb[0].mxu0
      %8073 = vmatprep.mubr.bf16.mxu0 0
      %8074 = vmatmul.mubr.bf16.gmra.mrb[0].mxu0 %v7788
      %v8075 = vpop.f32.mrb[0].mxu0
      %v8076 = vadd.f32 0.0, %v8075
      %v8077 = vpop.f32.mrb[0].mxu0
      %v8078 = vpop.f32.mrb[0].mxu0
      %v8079 = vadd.f32 0.0, %v8078
      %v8080 = vpop.f32.mrb[0].mxu0
      %8081 = vmatprep.mubr.bf16.mxu0 0
      %8082 = vmatmul.mubr.bf16.gmra.mrb[0].mxu0 %v7796
      %v8083 = vpop.f32.mrb[0].mxu0
      %v8084 = vpop.f32.mrb[0].mxu0
      %v8085 = vpop.f32.mrb[0].mxu0
      %v8086 = vadd.f32 0.0, %v8085
      %v8087 = vpop.f32.mrb[0].mxu0
      %8088 = vmatprep.mubr.bf16.mxu0 0
      %8089 = vmatmul.mubr.bf16.gmra.mrb[0].mxu0 %v7804
      %v8090 = vpop.f32.mrb[0].mxu0
      %v8091 = vadd.f32 0.0, %v8090
      %v8092 = vpop.f32.mrb[0].mxu0
      %v8093 = vpop.f32.mrb[0].mxu0
      %v8094 = vpop.f32.mrb[0].mxu0
      %8095 = vmatprep.mubr.bf16.mxu0 0
      %8096 = vmatmul.mubr.bf16.gmra.mrb[0].mxu0 %v7812
      %v8097 = vpop.f32.mrb[0].mxu0
      %v8098 = vadd.f32 0.0, %v8097
      %v8099 = vpop.f32.mrb[0].mxu0
      %v8100 = vpop.f32.mrb[0].mxu0
      %v8101 = vadd.f32 0.0, %v8100
      %v8102 = vpop.f32.mrb[0].mxu0
      %8103 = vmatprep.mubr.bf16.mxu0 0
      %8104 = vmatmul.mubr.bf16.gmra.mrb[0].mxu0 %v7820
      %v8105 = vpop.f32.mrb[0].mxu0
      %v8106 = vpop.f32.mrb[0].mxu0
      %v8107 = vpop.f32.mrb[0].mxu0
      %v8108 = vadd.f32 0.0, %v8107
      %v8109 = vpop.f32.mrb[0].mxu0
      %8110 = vmatprep.mubr.bf16.mxu0 0
      %8111 = vmatmul.mubr.bf16.gmra.mrb[0].mxu0 %v7828
      %v8112 = vpop.f32.mrb[0].mxu0
      %v8113 = vadd.f32 0.0, %v8112
      %v8114 = vpop.f32.mrb[0].mxu0
      %v8115 = vpop.f32.mrb[0].mxu0
      %v8116 = vpop.f32.mrb[0].mxu0
      %8117 = vmatprep.mubr.bf16.mxu0 0
      %8118 = vmatmul.mubr.bf16.gmra.mrb[0].mxu0 %v7836
      %v8119 = vpop.f32.mrb[0].mxu0
      %v8120 = vadd.f32 0.0, %v8119
      %v8121 = vpop.f32.mrb[0].mxu0
      %v8122 = vpop.f32.mrb[0].mxu0
      %v8123 = vadd.f32 0.0, %v8122
      %v8124 = vpop.f32.mrb[0].mxu0
      %8125 = vmatprep.mubr.bf16.mxu0 0
      %8126 = vmatmul.mubr.bf16.gmra.mrb[0].mxu0 %v7844
      %v8127 = vpop.f32.mrb[0].mxu0
      %v8128 = vpop.f32.mrb[0].mxu0
      %v8129 = vpop.f32.mrb[0].mxu0
      %v8130 = vadd.f32 0.0, %v8129
      %v8131 = vpop.f32.mrb[0].mxu0
      %8132 = vmatprep.mubr.bf16.mxu0 0
      %8133 = vmatmul.mubr.bf16.gmra.mrb[0].mxu0 %v7852
      %v8134 = vpop.f32.mrb[0].mxu0
      %v8135 = vadd.f32 0.0, %v8134
      %v8136 = vpop.f32.mrb[0].mxu0
      %v8137 = vpop.f32.mrb[0].mxu0
      %v8138 = vpop.f32.mrb[0].mxu0
      %8139 = vmatprep.mubr.bf16.mxu0 0
      %8140 = vmatmul.mubr.bf16.gmra.mrb[0].mxu0 %v7860
      %v8141 = vpop.f32.mrb[0].mxu0
      %v8142 = vadd.f32 0.0, %v8141
      %v8143 = vpop.f32.mrb[0].mxu0
      %v8144 = vpop.f32.mrb[0].mxu0
      %v8145 = vadd.f32 0.0, %v8144
      %v8146 = vpop.f32.mrb[0].mxu0
      %8147 = vmatprep.mubr.bf16.mxu0 0
      %8148 = vmatmul.mubr.bf16.gmra.mrb[0].mxu0 %v7868
      %v8149 = vpop.f32.mrb[0].mxu0
      %v8150 = vpop.f32.mrb[0].mxu0
      %v8151 = vpop.f32.mrb[0].mxu0
      %v8152 = vadd.f32 0.0, %v8151
      %v8153 = vpop.f32.mrb[0].mxu0
      %8154 = vmatprep.mubr.bf16.mxu0 0
      %8155 = vmatmul.mubr.bf16.gmra.mrb[0].mxu0 %v7876
      %v8156 = vpop.f32.mrb[0].mxu0
      %v8157 = vadd.f32 0.0, %v8156
      %v8158 = vpop.f32.mrb[0].mxu0
      %v8159 = vpop.f32.mrb[0].mxu0
      %v8160 = vpop.f32.mrb[0].mxu0
      %8161 = vmatprep.mubr.bf16.mxu0 0
      %8162 = vmatmul.mubr.bf16.gmra.mrb[0].mxu0 %v7884
      %v8163 = vpop.f32.mrb[0].mxu0
      %v8164 = vadd.f32 0.0, %v8163
      %v8165 = vpop.f32.mrb[0].mxu0
      %v8166 = vpop.f32.mrb[0].mxu0
      %v8167 = vadd.f32 0.0, %v8166
      %v8168 = vpop.f32.mrb[0].mxu0
      %8169 = vmatprep.mubr.bf16.mxu0 0
      %8170 = vmatmul.mubr.bf16.gmra.mrb[0].mxu0 %v7892
      %v8171 = vpop.f32.mrb[0].mxu0
      %v8172 = vpop.f32.mrb[0].mxu0
      %v8173 = vpop.f32.mrb[0].mxu0
      %v8174 = vadd.f32 0.0, %v8173
      %v8175 = vpop.f32.mrb[0].mxu0
      %8176 = vmatprep.mubr.bf16.mxu0 0
      %8177 = vmatmul.mubr.bf16.gmra.mrb[0].mxu0 %v7900
      %v8178 = vpop.f32.mrb[0].mxu0
      %v8179 = vadd.f32 0.0, %v8178
      %v8180 = vpop.f32.mrb[0].mxu0
      %v8181 = vpop.f32.mrb[0].mxu0
      %v8182 = vpop.f32.mrb[0].mxu0
      %8183 = vmatprep.mubr.bf16.mxu0 0
      %8184 = vmatmul.mubr.bf16.gmra.mrb[0].mxu0 %v7908
      %v8185 = vpop.f32.mrb[0].mxu0
      %v8186 = vadd.f32 0.0, %v8185
      %v8187 = vpop.f32.mrb[0].mxu0
      %v8188 = vpop.f32.mrb[0].mxu0
      %v8189 = vadd.f32 0.0, %v8188
      %v8190 = vpop.f32.mrb[0].mxu0
      %8191 = vmatprep.mubr.bf16.mxu0 0
      %8192 = vmatmul.mubr.bf16.gmra.mrb[0].mxu0 %v7916
      %v8193 = vpop.f32.mrb[0].mxu0
      %v8194 = vpop.f32.mrb[0].mxu0
      %v8195 = vpop.f32.mrb[0].mxu0
      %v8196 = vadd.f32 0.0, %v8195
      %v8197 = vpop.f32.mrb[0].mxu0
      %8198 = vmatprep.mubr.bf16.mxu0 0
      %8199 = vmatmul.mubr.bf16.gmra.mrb[0].mxu0 %v7924
      %v8200 = vpop.f32.mrb[0].mxu0
      %v8201 = vadd.f32 0.0, %v8200
      %v8202 = vpop.f32.mrb[0].mxu0
      %v8203 = vpop.f32.mrb[0].mxu0
      %v8204 = vpop.f32.mrb[0].mxu0
      %8205 = vdwg.mxu0
      %v8206 = vadd.f32 %v7654, %v8032
      %v8207 = vadd.f32 %v7655, %v8035
      %v8208 = vadd.f32 %v7656, %v8042
      %v8209 = vadd.f32 %v7657, %v8047
      %v8210 = vadd.f32 %v7658, %v8054
      %v8211 = vadd.f32 %v7659, %v8057
      %v8212 = vadd.f32 %v7660, %v8064
      %v8213 = vadd.f32 %v7661, %v8069
      %v8214 = vadd.f32 %v7662, %v8076
      %v8215 = vadd.f32 %v7663, %v8079
      %v8216 = vadd.f32 %v7664, %v8086
      %v8217 = vadd.f32 %v7665, %v8091
      %v8218 = vadd.f32 %v7666, %v8098
      %v8219 = vadd.f32 %v7667, %v8101
      %v8220 = vadd.f32 %v7668, %v8108
      %v8221 = vadd.f32 %v7669, %v8113
      %v8222 = vadd.f32 %v7670, %v8120
      %v8223 = vadd.f32 %v7671, %v8123
      %v8224 = vadd.f32 %v7672, %v8130
      %v8225 = vadd.f32 %v7673, %v8135
      %v8226 = vadd.f32 %v7674, %v8142
      %v8227 = vadd.f32 %v7675, %v8145
      %v8228 = vadd.f32 %v7676, %v8152
      %v8229 = vadd.f32 %v7677, %v8157
      %v8230 = vadd.f32 %v7678, %v8164
      %v8231 = vadd.f32 %v7679, %v8167
      %v8232 = vadd.f32 %v7680, %v8174
      %v8233 = vadd.f32 %v7681, %v8179
      %v8234 = vadd.f32 %v7682, %v8186
      %v8235 = vadd.f32 %v7683, %v8189
      %v8236 = vadd.f32 %v7684, %v8196
      %v8237 = vadd.f32 %v7685, %v8201
      %s8238 = scalar_lea.vmem %s6, 256
      %v8239 = vld [vmem:[%s8238] sm:$0xf]
      %v8240 = vld [vmem:[%s8238 + $0x4] sm:$0xf]
      %v8241 = vld [vmem:[%s8238 + $0x8] sm:$0xf]
      %v8242 = vld [vmem:[%s8238 + $0xc] sm:$0xf]
      %v8243 = vld [vmem:[%s8238 + $0x10] sm:$0xf]
      %v8244 = vld [vmem:[%s8238 + $0x14] sm:$0xf]
      %v8245 = vld [vmem:[%s8238 + $0x18] sm:$0xf]
      %v8246 = vld [vmem:[%s8238 + $0x1c] sm:$0xf]
      %v8247 = vld [vmem:[%s8238 + $0x20] sm:$0xf]
      %v8248 = vld [vmem:[%s8238 + $0x24] sm:$0xf]
      %v8249 = vld [vmem:[%s8238 + $0x28] sm:$0xf]
      %v8250 = vld [vmem:[%s8238 + $0x2c] sm:$0xf]
      %v8251 = vld [vmem:[%s8238 + $0x30] sm:$0xf]
      %v8252 = vld [vmem:[%s8238 + $0x34] sm:$0xf]
      %v8253 = vld [vmem:[%s8238 + $0x38] sm:$0xf]
      %v8254 = vld [vmem:[%s8238 + $0x3c] sm:$0xf]
      %v8271 = vunpack.c.l.b16 %v8239
      %v8272 = vunpack.c.l.b16 %v8240
      %v8273 = vunpack.c.l.b16 %v8241
      %v8274 = vunpack.c.l.b16 %v8242
      %v8275 = vunpack.c.l.b16 %v8243
      %v8276 = vunpack.c.l.b16 %v8244
      %v8277 = vunpack.c.l.b16 %v8245
      %v8278 = vunpack.c.l.b16 %v8246
      %v8279 = vunpack.c.l.b16 %v8247
      %v8280 = vunpack.c.l.b16 %v8248
      %v8281 = vunpack.c.l.b16 %v8249
      %v8282 = vunpack.c.l.b16 %v8250
      %v8283 = vunpack.c.l.b16 %v8251
      %v8284 = vunpack.c.l.b16 %v8252
      %v8285 = vunpack.c.l.b16 %v8253
      %v8286 = vunpack.c.l.b16 %v8254
      %v8287 = vpack.c.b16 %v8272, %v8271
      %v8288 = vpack.c.b16 %v8274, %v8273
      %v8289 = vpack.c.b16 %v8276, %v8275
      %v8290 = vpack.c.b16 %v8278, %v8277
      %v8291 = vpack.c.b16 %v8280, %v8279
      %v8292 = vpack.c.b16 %v8282, %v8281
      %v8293 = vpack.c.b16 %v8284, %v8283
      %v8294 = vpack.c.b16 %v8286, %v8285
      %8303 = vmatprep.subr.bf16.mxu0 0
      %8304 = vmatpush1.bf16.msra.mxu0 %v8287
      %8305 = vmatprep.subr.bf16.mxu0 0
      %8306 = vmatpush1.bf16.msra.mxu0 %v8288
      %8307 = vmatprep.subr.bf16.mxu0 0
      %8308 = vmatpush1.bf16.msra.mxu0 %v8289
      %8309 = vmatprep.subr.bf16.mxu0 0
      %8310 = vmatpush1.bf16.msra.mxu0 %v8290
      %8311 = vmatprep.subr.bf16.mxu0 0
      %8312 = vmatpush1.bf16.msra.mxu0 %v8291
      %8313 = vmatprep.subr.bf16.mxu0 0
      %8314 = vmatpush1.bf16.msra.mxu0 %v8292
      %8315 = vmatprep.subr.bf16.mxu0 0
      %8316 = vmatpush1.bf16.msra.mxu0 %v8293
      %8317 = vmatprep.subr.bf16.mxu0 0
      %8318 = vmatpush1.bf16.msra.mxu0 %v8294
      %8319 = vmatprep.subr.bf16.mxu0 0
      %8320 = vmatpush1.bf16.msra.mxu0 0
      %8321 = vmatprep.subr.bf16.mxu0 0
      %8322 = vmatpush1.bf16.msra.mxu0 0
      %8323 = vmatprep.subr.bf16.mxu0 0
      %8324 = vmatpush1.bf16.msra.mxu0 0
      %8325 = vmatprep.subr.bf16.mxu0 0
      %8326 = vmatpush1.bf16.msra.mxu0 0
      %8327 = vmatprep.subr.bf16.mxu0 0
      %8328 = vmatpush1.bf16.msra.mxu0 0
      %8329 = vmatprep.subr.bf16.mxu0 0
      %8330 = vmatpush1.bf16.msra.mxu0 0
      %8331 = vmatprep.subr.bf16.mxu0 0
      %8332 = vmatpush1.bf16.msra.mxu0 0
      %8333 = vmatprep.subr.bf16.mxu0 0
      %8334 = vmatpush1.bf16.msra.mxu0 0
      %8335 = vmatprep.mubr.bf16.mxu0 0
      %8336 = vmatmul.mubr.bf16.gmra.mrb[0].mxu0 %v7687
      %v8337 = vpop.f32.mrb[0].mxu0
      %v8338 = vadd.f32 0.0, %v8337
      %v8339 = vpop.f32.mrb[0].mxu0
      %v8340 = vpop.f32.mrb[0].mxu0
      %v8341 = vadd.f32 0.0, %v8340
      %v8342 = vpop.f32.mrb[0].mxu0
      %8343 = vmatprep.mubr.bf16.mxu0 0
      %8344 = vmatmul.mubr.bf16.gmra.mrb[0].mxu0 %v7688
      %v8345 = vpop.f32.mrb[0].mxu0
      %v8346 = vpop.f32.mrb[0].mxu0
      %v8347 = vpop.f32.mrb[0].mxu0
      %v8348 = vadd.f32 0.0, %v8347
      %v8349 = vpop.f32.mrb[0].mxu0
      %8350 = vmatprep.mubr.bf16.mxu0 0
      %8351 = vmatmul.mubr.bf16.gmra.mrb[0].mxu0 %v7689
      %v8352 = vpop.f32.mrb[0].mxu0
      %v8353 = vadd.f32 0.0, %v8352
      %v8354 = vpop.f32.mrb[0].mxu0
      %v8355 = vpop.f32.mrb[0].mxu0
      %v8356 = vpop.f32.mrb[0].mxu0
      %8357 = vmatprep.mubr.bf16.mxu0 0
      %8358 = vmatmul.mubr.bf16.gmra.mrb[0].mxu0 %v7690
      %v8359 = vpop.f32.mrb[0].mxu0
      %v8360 = vadd.f32 0.0, %v8359
      %v8361 = vpop.f32.mrb[0].mxu0
      %v8362 = vpop.f32.mrb[0].mxu0
      %v8363 = vadd.f32 0.0, %v8362
      %v8364 = vpop.f32.mrb[0].mxu0
      %8365 = vmatprep.mubr.bf16.mxu0 0
      %8366 = vmatmul.mubr.bf16.gmra.mrb[0].mxu0 %v7691
      %v8367 = vpop.f32.mrb[0].mxu0
      %v8368 = vpop.f32.mrb[0].mxu0
      %v8369 = vpop.f32.mrb[0].mxu0
      %v8370 = vadd.f32 0.0, %v8369
      %v8371 = vpop.f32.mrb[0].mxu0
      %8372 = vmatprep.mubr.bf16.mxu0 0
      %8373 = vmatmul.mubr.bf16.gmra.mrb[0].mxu0 %v7692
      %v8374 = vpop.f32.mrb[0].mxu0
      %v8375 = vadd.f32 0.0, %v8374
      %v8376 = vpop.f32.mrb[0].mxu0
      %v8377 = vpop.f32.mrb[0].mxu0
      %v8378 = vpop.f32.mrb[0].mxu0
      %8379 = vmatprep.mubr.bf16.mxu0 0
      %8380 = vmatmul.mubr.bf16.gmra.mrb[0].mxu0 %v7693
      %v8381 = vpop.f32.mrb[0].mxu0
      %v8382 = vadd.f32 0.0, %v8381
      %v8383 = vpop.f32.mrb[0].mxu0
      %v8384 = vpop.f32.mrb[0].mxu0
      %v8385 = vadd.f32 0.0, %v8384
      %v8386 = vpop.f32.mrb[0].mxu0
      %8387 = vmatprep.mubr.bf16.mxu0 0
      %8388 = vmatmul.mubr.bf16.gmra.mrb[0].mxu0 %v7694
      %v8389 = vpop.f32.mrb[0].mxu0
      %v8390 = vpop.f32.mrb[0].mxu0
      %v8391 = vpop.f32.mrb[0].mxu0
      %v8392 = vadd.f32 0.0, %v8391
      %v8393 = vpop.f32.mrb[0].mxu0
      %8394 = vmatprep.mubr.bf16.mxu0 0
      %8395 = vmatmul.mubr.bf16.gmra.mrb[0].mxu0 %v7695
      %v8396 = vpop.f32.mrb[0].mxu0
      %v8397 = vadd.f32 0.0, %v8396
      %v8398 = vpop.f32.mrb[0].mxu0
      %v8399 = vpop.f32.mrb[0].mxu0
      %v8400 = vpop.f32.mrb[0].mxu0
      %8401 = vmatprep.mubr.bf16.mxu0 0
      %8402 = vmatmul.mubr.bf16.gmra.mrb[0].mxu0 %v7696
      %v8403 = vpop.f32.mrb[0].mxu0
      %v8404 = vadd.f32 0.0, %v8403
      %v8405 = vpop.f32.mrb[0].mxu0
      %v8406 = vpop.f32.mrb[0].mxu0
      %v8407 = vadd.f32 0.0, %v8406
      %v8408 = vpop.f32.mrb[0].mxu0
      %8409 = vmatprep.mubr.bf16.mxu0 0
      %8410 = vmatmul.mubr.bf16.gmra.mrb[0].mxu0 %v7697
      %v8411 = vpop.f32.mrb[0].mxu0
      %v8412 = vpop.f32.mrb[0].mxu0
      %v8413 = vpop.f32.mrb[0].mxu0
      %v8414 = vadd.f32 0.0, %v8413
      %v8415 = vpop.f32.mrb[0].mxu0
      %8416 = vmatprep.mubr.bf16.mxu0 0
      %8417 = vmatmul.mubr.bf16.gmra.mrb[0].mxu0 %v7698
      %v8418 = vpop.f32.mrb[0].mxu0
      %v8419 = vadd.f32 0.0, %v8418
      %v8420 = vpop.f32.mrb[0].mxu0
      %v8421 = vpop.f32.mrb[0].mxu0
      %v8422 = vpop.f32.mrb[0].mxu0
      %8423 = vmatprep.mubr.bf16.mxu0 0
      %8424 = vmatmul.mubr.bf16.gmra.mrb[0].mxu0 %v7699
      %v8425 = vpop.f32.mrb[0].mxu0
      %v8426 = vadd.f32 0.0, %v8425
      %v8427 = vpop.f32.mrb[0].mxu0
      %v8428 = vpop.f32.mrb[0].mxu0
      %v8429 = vadd.f32 0.0, %v8428
      %v8430 = vpop.f32.mrb[0].mxu0
      %8431 = vmatprep.mubr.bf16.mxu0 0
      %8432 = vmatmul.mubr.bf16.gmra.mrb[0].mxu0 %v7700
      %v8433 = vpop.f32.mrb[0].mxu0
      %v8434 = vpop.f32.mrb[0].mxu0
      %v8435 = vpop.f32.mrb[0].mxu0
      %v8436 = vadd.f32 0.0, %v8435
      %v8437 = vpop.f32.mrb[0].mxu0
      %8438 = vmatprep.mubr.bf16.mxu0 0
      %8439 = vmatmul.mubr.bf16.gmra.mrb[0].mxu0 %v7701
      %v8440 = vpop.f32.mrb[0].mxu0
      %v8441 = vadd.f32 0.0, %v8440
      %v8442 = vpop.f32.mrb[0].mxu0
      %v8443 = vpop.f32.mrb[0].mxu0
      %v8444 = vpop.f32.mrb[0].mxu0
      %8445 = vmatprep.mubr.bf16.mxu0 0
      %8446 = vmatmul.mubr.bf16.gmra.mrb[0].mxu0 %v7702
      %v8447 = vpop.f32.mrb[0].mxu0
      %v8448 = vadd.f32 0.0, %v8447
      %v8449 = vpop.f32.mrb[0].mxu0
      %v8450 = vpop.f32.mrb[0].mxu0
      %v8451 = vadd.f32 0.0, %v8450
      %v8452 = vpop.f32.mrb[0].mxu0
      %8453 = vmatprep.mubr.bf16.mxu0 0
      %8454 = vmatmul.mubr.bf16.gmra.mrb[0].mxu0 %v7703
      %v8455 = vpop.f32.mrb[0].mxu0
      %v8456 = vpop.f32.mrb[0].mxu0
      %v8457 = vpop.f32.mrb[0].mxu0
      %v8458 = vadd.f32 0.0, %v8457
      %v8459 = vpop.f32.mrb[0].mxu0
      %8460 = vmatprep.mubr.bf16.mxu0 0
      %8461 = vmatmul.mubr.bf16.gmra.mrb[0].mxu0 %v7704
      %v8462 = vpop.f32.mrb[0].mxu0
      %v8463 = vadd.f32 0.0, %v8462
      %v8464 = vpop.f32.mrb[0].mxu0
      %v8465 = vpop.f32.mrb[0].mxu0
      %v8466 = vpop.f32.mrb[0].mxu0
      %8467 = vmatprep.mubr.bf16.mxu0 0
      %8468 = vmatmul.mubr.bf16.gmra.mrb[0].mxu0 %v7705
      %v8469 = vpop.f32.mrb[0].mxu0
      %v8470 = vadd.f32 0.0, %v8469
      %v8471 = vpop.f32.mrb[0].mxu0
      %v8472 = vpop.f32.mrb[0].mxu0
      %v8473 = vadd.f32 0.0, %v8472
      %v8474 = vpop.f32.mrb[0].mxu0
      %8475 = vmatprep.mubr.bf16.mxu0 0
      %8476 = vmatmul.mubr.bf16.gmra.mrb[0].mxu0 %v7706
      %v8477 = vpop.f32.mrb[0].mxu0
      %v8478 = vpop.f32.mrb[0].mxu0
      %v8479 = vpop.f32.mrb[0].mxu0
      %v8480 = vadd.f32 0.0, %v8479
      %v8481 = vpop.f32.mrb[0].mxu0
      %8482 = vmatprep.mubr.bf16.mxu0 0
      %8483 = vmatmul.mubr.bf16.gmra.mrb[0].mxu0 %v7707
      %v8484 = vpop.f32.mrb[0].mxu0
      %v8485 = vadd.f32 0.0, %v8484
      %v8486 = vpop.f32.mrb[0].mxu0
      %v8487 = vpop.f32.mrb[0].mxu0
      %v8488 = vpop.f32.mrb[0].mxu0
      %8489 = vmatprep.mubr.bf16.mxu0 0
      %8490 = vmatmul.mubr.bf16.gmra.mrb[0].mxu0 %v7708
      %v8491 = vpop.f32.mrb[0].mxu0
      %v8492 = vadd.f32 0.0, %v8491
      %v8493 = vpop.f32.mrb[0].mxu0
      %v8494 = vpop.f32.mrb[0].mxu0
      %v8495 = vadd.f32 0.0, %v8494
      %v8496 = vpop.f32.mrb[0].mxu0
      %8497 = vmatprep.mubr.bf16.mxu0 0
      %8498 = vmatmul.mubr.bf16.gmra.mrb[0].mxu0 %v7709
      %v8499 = vpop.f32.mrb[0].mxu0
      %v8500 = vpop.f32.mrb[0].mxu0
      %v8501 = vpop.f32.mrb[0].mxu0
      %v8502 = vadd.f32 0.0, %v8501
      %v8503 = vpop.f32.mrb[0].mxu0
      %8504 = vmatprep.mubr.bf16.mxu0 0
      %8505 = vmatmul.mubr.bf16.gmra.mrb[0].mxu0 %v7710
      %v8506 = vpop.f32.mrb[0].mxu0
      %v8507 = vadd.f32 0.0, %v8506
      %v8508 = vpop.f32.mrb[0].mxu0
      %v8509 = vpop.f32.mrb[0].mxu0
      %v8510 = vpop.f32.mrb[0].mxu0
      %8511 = vdwg.mxu0
      %v8512 = vadd.f32 %v8206, %v8338
      %v8513 = vadd.f32 %v8207, %v8341
      %v8514 = vadd.f32 %v8208, %v8348
      %v8515 = vadd.f32 %v8209, %v8353
      %v8516 = vadd.f32 %v8210, %v8360
      %v8517 = vadd.f32 %v8211, %v8363
      %v8518 = vadd.f32 %v8212, %v8370
      %v8519 = vadd.f32 %v8213, %v8375
      %v8520 = vadd.f32 %v8214, %v8382
      %v8521 = vadd.f32 %v8215, %v8385
      %v8522 = vadd.f32 %v8216, %v8392
      %v8523 = vadd.f32 %v8217, %v8397
      %v8524 = vadd.f32 %v8218, %v8404
      %v8525 = vadd.f32 %v8219, %v8407
      %v8526 = vadd.f32 %v8220, %v8414
      %v8527 = vadd.f32 %v8221, %v8419
      %v8528 = vadd.f32 %v8222, %v8426
      %v8529 = vadd.f32 %v8223, %v8429
      %v8530 = vadd.f32 %v8224, %v8436
      %v8531 = vadd.f32 %v8225, %v8441
      %v8532 = vadd.f32 %v8226, %v8448
      %v8533 = vadd.f32 %v8227, %v8451
      %v8534 = vadd.f32 %v8228, %v8458
      %v8535 = vadd.f32 %v8229, %v8463
      %v8536 = vadd.f32 %v8230, %v8470
      %v8537 = vadd.f32 %v8231, %v8473
      %v8538 = vadd.f32 %v8232, %v8480
      %v8539 = vadd.f32 %v8233, %v8485
      %v8540 = vadd.f32 %v8234, %v8492
      %v8541 = vadd.f32 %v8235, %v8495
      %v8542 = vadd.f32 %v8236, %v8502
      %v8543 = vadd.f32 %v8237, %v8507
      %v8544 = vld [vmem:[#allocation2 + $0x10] sm:$0xff]
      %v8545 = vld [vmem:[#allocation2 + $0x18] sm:$0xff]
      %v8546 = vld [vmem:[#allocation2 + $0x20] sm:$0xff]
      %v8547 = vld [vmem:[#allocation2 + $0x28] sm:$0xff]
      %v8548 = vld [vmem:[#allocation2 + $0x30] sm:$0xff]
      %v8549 = vld [vmem:[#allocation2 + $0x38] sm:$0xff]
      %v8550 = vld [vmem:[#allocation2 + $0x40] sm:$0xff]
      %v8551 = vld [vmem:[#allocation2 + $0x48] sm:$0xff]
      %v8552 = vld [vmem:[#allocation2 + $0x50] sm:$0xff]
      %v8553 = vld [vmem:[#allocation2 + $0x58] sm:$0xff]
      %v8554 = vld [vmem:[#allocation2 + $0x60] sm:$0xff]
      %v8555 = vld [vmem:[#allocation2 + $0x68] sm:$0xff]
      %v8556 = vld [vmem:[#allocation2 + $0x70] sm:$0xff]
      %v8557 = vld [vmem:[#allocation2 + $0x78] sm:$0xff]
      %v8558 = vld [vmem:[#allocation2 + $0x80] sm:$0xff]
      %v8559 = vld [vmem:[#allocation2 + $0x88] sm:$0xff]
      %v8560 = vld [vmem:[#allocation2 + $0x90] sm:$0xff]
      %v8561 = vld [vmem:[#allocation2 + $0x98] sm:$0xff]
      %v8562 = vld [vmem:[#allocation2 + $0xa0] sm:$0xff]
      %v8563 = vld [vmem:[#allocation2 + $0xa8] sm:$0xff]
      %v8564 = vld [vmem:[#allocation2 + $0xb0] sm:$0xff]
      %v8565 = vld [vmem:[#allocation2 + $0xb8] sm:$0xff]
      %v8566 = vld [vmem:[#allocation2 + $0xc0] sm:$0xff]
      %v8567 = vld [vmem:[#allocation2 + $0xc8] sm:$0xff]
      %v8568 = vld [vmem:[#allocation2 + $0xd0] sm:$0x1]
      %s8569 = scalar_lea.vmem %s6, 320
      %v8570 = vld [vmem:[%s8569] sm:$0xf]
      %v8571 = vld [vmem:[%s8569 + $0x4] sm:$0xf]
      %v8572 = vld [vmem:[%s8569 + $0x8] sm:$0xf]
      %v8573 = vld [vmem:[%s8569 + $0xc] sm:$0xf]
      %v8574 = vld [vmem:[%s8569 + $0x10] sm:$0xf]
      %v8575 = vld [vmem:[%s8569 + $0x14] sm:$0xf]
      %v8576 = vld [vmem:[%s8569 + $0x18] sm:$0xf]
      %v8577 = vld [vmem:[%s8569 + $0x1c] sm:$0xf]
      %v8578 = vld [vmem:[%s8569 + $0x20] sm:$0xf]
      %v8579 = vld [vmem:[%s8569 + $0x24] sm:$0xf]
      %v8580 = vld [vmem:[%s8569 + $0x28] sm:$0xf]
      %v8581 = vld [vmem:[%s8569 + $0x2c] sm:$0xf]
      %v8582 = vld [vmem:[%s8569 + $0x30] sm:$0xf]
      %v8583 = vld [vmem:[%s8569 + $0x34] sm:$0xf]
      %v8584 = vld [vmem:[%s8569 + $0x38] sm:$0xf]
      %v8585 = vld [vmem:[%s8569 + $0x3c] sm:$0xf]
      %v8587 = vshrl.u32 %v8544, 16
      %v8589 = vshll.u32 %v8544, 16
      %v8591 = vrot.slane %v8589, 1
      %v8592 = vor.u32 %v8587, %v8591
      %v8594 = vshll.u32 %v8545, 16
      %v8596 = vrot.slane %v8594, 1
      %v8597 = vsel %vm620, %v8592, %v8596
      %v8598 = vshrl.u32 %v8545, 16
      %v8600 = vor.u32 %v8598, %v8596
      %v8602 = vshll.u32 %v8546, 16
      %v8604 = vrot.slane %v8602, 1
      %v8605 = vsel %vm620, %v8600, %v8604
      %v8606 = vshrl.u32 %v8546, 16
      %v8608 = vor.u32 %v8606, %v8604
      %v8610 = vshll.u32 %v8547, 16
      %v8612 = vrot.slane %v8610, 1
      %v8613 = vsel %vm620, %v8608, %v8612
      %v8614 = vshrl.u32 %v8547, 16
      %v8616 = vor.u32 %v8614, %v8612
      %v8618 = vshll.u32 %v8548, 16
      %v8620 = vrot.slane %v8618, 1
      %v8621 = vsel %vm620, %v8616, %v8620
      %v8622 = vshrl.u32 %v8548, 16
      %v8624 = vor.u32 %v8622, %v8620
      %v8626 = vshll.u32 %v8549, 16
      %v8628 = vrot.slane %v8626, 1
      %v8629 = vsel %vm620, %v8624, %v8628
      %v8630 = vshrl.u32 %v8549, 16
      %v8632 = vor.u32 %v8630, %v8628
      %v8634 = vshll.u32 %v8550, 16
      %v8636 = vrot.slane %v8634, 1
      %v8637 = vsel %vm620, %v8632, %v8636
      %v8638 = vshrl.u32 %v8550, 16
      %v8640 = vor.u32 %v8638, %v8636
      %v8642 = vshll.u32 %v8551, 16
      %v8644 = vrot.slane %v8642, 1
      %v8645 = vsel %vm620, %v8640, %v8644
      %v8646 = vshrl.u32 %v8551, 16
      %v8648 = vor.u32 %v8646, %v8644
      %v8650 = vshll.u32 %v8552, 16
      %v8652 = vrot.slane %v8650, 1
      %v8653 = vsel %vm620, %v8648, %v8652
      %v8654 = vshrl.u32 %v8552, 16
      %v8656 = vor.u32 %v8654, %v8652
      %v8658 = vshll.u32 %v8553, 16
      %v8660 = vrot.slane %v8658, 1
      %v8661 = vsel %vm620, %v8656, %v8660
      %v8662 = vshrl.u32 %v8553, 16
      %v8664 = vor.u32 %v8662, %v8660
      %v8666 = vshll.u32 %v8554, 16
      %v8668 = vrot.slane %v8666, 1
      %v8669 = vsel %vm620, %v8664, %v8668
      %v8670 = vshrl.u32 %v8554, 16
      %v8672 = vor.u32 %v8670, %v8668
      %v8674 = vshll.u32 %v8555, 16
      %v8676 = vrot.slane %v8674, 1
      %v8677 = vsel %vm620, %v8672, %v8676
      %v8678 = vshrl.u32 %v8555, 16
      %v8680 = vor.u32 %v8678, %v8676
      %v8682 = vshll.u32 %v8556, 16
      %v8684 = vrot.slane %v8682, 1
      %v8685 = vsel %vm620, %v8680, %v8684
      %v8686 = vshrl.u32 %v8556, 16
      %v8688 = vor.u32 %v8686, %v8684
      %v8690 = vshll.u32 %v8557, 16
      %v8692 = vrot.slane %v8690, 1
      %v8693 = vsel %vm620, %v8688, %v8692
      %v8694 = vshrl.u32 %v8557, 16
      %v8696 = vor.u32 %v8694, %v8692
      %v8698 = vshll.u32 %v8558, 16
      %v8700 = vrot.slane %v8698, 1
      %v8701 = vsel %vm620, %v8696, %v8700
      %v8702 = vshrl.u32 %v8558, 16
      %v8704 = vor.u32 %v8702, %v8700
      %v8706 = vshll.u32 %v8559, 16
      %v8708 = vrot.slane %v8706, 1
      %v8709 = vsel %vm620, %v8704, %v8708
      %v8710 = vshrl.u32 %v8559, 16
      %v8712 = vor.u32 %v8710, %v8708
      %v8714 = vshll.u32 %v8560, 16
      %v8716 = vrot.slane %v8714, 1
      %v8717 = vsel %vm620, %v8712, %v8716
      %v8718 = vshrl.u32 %v8560, 16
      %v8720 = vor.u32 %v8718, %v8716
      %v8722 = vshll.u32 %v8561, 16
      %v8724 = vrot.slane %v8722, 1
      %v8725 = vsel %vm620, %v8720, %v8724
      %v8726 = vshrl.u32 %v8561, 16
      %v8728 = vor.u32 %v8726, %v8724
      %v8730 = vshll.u32 %v8562, 16
      %v8732 = vrot.slane %v8730, 1
      %v8733 = vsel %vm620, %v8728, %v8732
      %v8734 = vshrl.u32 %v8562, 16
      %v8736 = vor.u32 %v8734, %v8732
      %v8738 = vshll.u32 %v8563, 16
      %v8740 = vrot.slane %v8738, 1
      %v8741 = vsel %vm620, %v8736, %v8740
      %v8742 = vshrl.u32 %v8563, 16
      %v8744 = vor.u32 %v8742, %v8740
      %v8746 = vshll.u32 %v8564, 16
      %v8748 = vrot.slane %v8746, 1
      %v8749 = vsel %vm620, %v8744, %v8748
      %v8750 = vshrl.u32 %v8564, 16
      %v8752 = vor.u32 %v8750, %v8748
      %v8754 = vshll.u32 %v8565, 16
      %v8756 = vrot.slane %v8754, 1
      %v8757 = vsel %vm620, %v8752, %v8756
      %v8758 = vshrl.u32 %v8565, 16
      %v8760 = vor.u32 %v8758, %v8756
      %v8762 = vshll.u32 %v8566, 16
      %v8764 = vrot.slane %v8762, 1
      %v8765 = vsel %vm620, %v8760, %v8764
      %v8766 = vshrl.u32 %v8566, 16
      %v8768 = vor.u32 %v8766, %v8764
      %v8770 = vshll.u32 %v8567, 16
      %v8772 = vrot.slane %v8770, 1
      %v8773 = vsel %vm620, %v8768, %v8772
      %v8774 = vshrl.u32 %v8567, 16
      %v8776 = vor.u32 %v8774, %v8772
      %v8778 = vshll.u32 %v8568, 16
      %v8780 = vrot.slane %v8778, 1
      %v8781 = vsel %vm620, %v8776, %v8780
      %v8822 = vunpack.c.l.b16 %v8570
      %v8823 = vunpack.c.l.b16 %v8571
      %v8824 = vunpack.c.l.b16 %v8572
      %v8825 = vunpack.c.l.b16 %v8573
      %v8826 = vunpack.c.l.b16 %v8574
      %v8827 = vunpack.c.l.b16 %v8575
      %v8828 = vunpack.c.l.b16 %v8576
      %v8829 = vunpack.c.l.b16 %v8577
      %v8830 = vunpack.c.l.b16 %v8578
      %v8831 = vunpack.c.l.b16 %v8579
      %v8832 = vunpack.c.l.b16 %v8580
      %v8833 = vunpack.c.l.b16 %v8581
      %v8834 = vunpack.c.l.b16 %v8582
      %v8835 = vunpack.c.l.b16 %v8583
      %v8836 = vunpack.c.l.b16 %v8584
      %v8837 = vunpack.c.l.b16 %v8585
      %v8838 = vpack.c.b16 %v8823, %v8822
      %v8839 = vpack.c.b16 %v8825, %v8824
      %v8840 = vpack.c.b16 %v8827, %v8826
      %v8841 = vpack.c.b16 %v8829, %v8828
      %v8842 = vpack.c.b16 %v8831, %v8830
      %v8843 = vpack.c.b16 %v8833, %v8832
      %v8844 = vpack.c.b16 %v8835, %v8834
      %v8845 = vpack.c.b16 %v8837, %v8836
      %8854 = vmatprep.subr.bf16.mxu0 0
      %8855 = vmatpush1.bf16.msra.mxu0 %v8838
      %8856 = vmatprep.subr.bf16.mxu0 0
      %8857 = vmatpush1.bf16.msra.mxu0 %v8839
      %8858 = vmatprep.subr.bf16.mxu0 0
      %8859 = vmatpush1.bf16.msra.mxu0 %v8840
      %8860 = vmatprep.subr.bf16.mxu0 0
      %8861 = vmatpush1.bf16.msra.mxu0 %v8841
      %8862 = vmatprep.subr.bf16.mxu0 0
      %8863 = vmatpush1.bf16.msra.mxu0 %v8842
      %8864 = vmatprep.subr.bf16.mxu0 0
      %8865 = vmatpush1.bf16.msra.mxu0 %v8843
      %8866 = vmatprep.subr.bf16.mxu0 0
      %8867 = vmatpush1.bf16.msra.mxu0 %v8844
      %8868 = vmatprep.subr.bf16.mxu0 0
      %8869 = vmatpush1.bf16.msra.mxu0 %v8845
      %8870 = vmatprep.subr.bf16.mxu0 0
      %8871 = vmatpush1.bf16.msra.mxu0 0
      %8872 = vmatprep.subr.bf16.mxu0 0
      %8873 = vmatpush1.bf16.msra.mxu0 0
      %8874 = vmatprep.subr.bf16.mxu0 0
      %8875 = vmatpush1.bf16.msra.mxu0 0
      %8876 = vmatprep.subr.bf16.mxu0 0
      %8877 = vmatpush1.bf16.msra.mxu0 0
      %8878 = vmatprep.subr.bf16.mxu0 0
      %8879 = vmatpush1.bf16.msra.mxu0 0
      %8880 = vmatprep.subr.bf16.mxu0 0
      %8881 = vmatpush1.bf16.msra.mxu0 0
      %8882 = vmatprep.subr.bf16.mxu0 0
      %8883 = vmatpush1.bf16.msra.mxu0 0
      %8884 = vmatprep.subr.bf16.mxu0 0
      %8885 = vmatpush1.bf16.msra.mxu0 0
      %8886 = vmatprep.mubr.bf16.mxu0 0
      %8887 = vmatmul.mubr.bf16.gmra.mrb[0].mxu0 %v8597
      %v8888 = vpop.f32.mrb[0].mxu0
      %v8889 = vadd.f32 0.0, %v8888
      %v8890 = vpop.f32.mrb[0].mxu0
      %v8891 = vpop.f32.mrb[0].mxu0
      %v8892 = vadd.f32 0.0, %v8891
      %v8893 = vpop.f32.mrb[0].mxu0
      %8894 = vmatprep.mubr.bf16.mxu0 0
      %8895 = vmatmul.mubr.bf16.gmra.mrb[0].mxu0 %v8605
      %v8896 = vpop.f32.mrb[0].mxu0
      %v8897 = vpop.f32.mrb[0].mxu0
      %v8898 = vpop.f32.mrb[0].mxu0
      %v8899 = vadd.f32 0.0, %v8898
      %v8900 = vpop.f32.mrb[0].mxu0
      %8901 = vmatprep.mubr.bf16.mxu0 0
      %8902 = vmatmul.mubr.bf16.gmra.mrb[0].mxu0 %v8613
      %v8903 = vpop.f32.mrb[0].mxu0
      %v8904 = vadd.f32 0.0, %v8903
      %v8905 = vpop.f32.mrb[0].mxu0
      %v8906 = vpop.f32.mrb[0].mxu0
      %v8907 = vpop.f32.mrb[0].mxu0
      %8908 = vmatprep.mubr.bf16.mxu0 0
      %8909 = vmatmul.mubr.bf16.gmra.mrb[0].mxu0 %v8621
      %v8910 = vpop.f32.mrb[0].mxu0
      %v8911 = vadd.f32 0.0, %v8910
      %v8912 = vpop.f32.mrb[0].mxu0
      %v8913 = vpop.f32.mrb[0].mxu0
      %v8914 = vadd.f32 0.0, %v8913
      %v8915 = vpop.f32.mrb[0].mxu0
      %8916 = vmatprep.mubr.bf16.mxu0 0
      %8917 = vmatmul.mubr.bf16.gmra.mrb[0].mxu0 %v8629
      %v8918 = vpop.f32.mrb[0].mxu0
      %v8919 = vpop.f32.mrb[0].mxu0
      %v8920 = vpop.f32.mrb[0].mxu0
      %v8921 = vadd.f32 0.0, %v8920
      %v8922 = vpop.f32.mrb[0].mxu0
      %8923 = vmatprep.mubr.bf16.mxu0 0
      %8924 = vmatmul.mubr.bf16.gmra.mrb[0].mxu0 %v8637
      %v8925 = vpop.f32.mrb[0].mxu0
      %v8926 = vadd.f32 0.0, %v8925
      %v8927 = vpop.f32.mrb[0].mxu0
      %v8928 = vpop.f32.mrb[0].mxu0
      %v8929 = vpop.f32.mrb[0].mxu0
      %8930 = vmatprep.mubr.bf16.mxu0 0
      %8931 = vmatmul.mubr.bf16.gmra.mrb[0].mxu0 %v8645
      %v8932 = vpop.f32.mrb[0].mxu0
      %v8933 = vadd.f32 0.0, %v8932
      %v8934 = vpop.f32.mrb[0].mxu0
      %v8935 = vpop.f32.mrb[0].mxu0
      %v8936 = vadd.f32 0.0, %v8935
      %v8937 = vpop.f32.mrb[0].mxu0
      %8938 = vmatprep.mubr.bf16.mxu0 0
      %8939 = vmatmul.mubr.bf16.gmra.mrb[0].mxu0 %v8653
      %v8940 = vpop.f32.mrb[0].mxu0
      %v8941 = vpop.f32.mrb[0].mxu0
      %v8942 = vpop.f32.mrb[0].mxu0
      %v8943 = vadd.f32 0.0, %v8942
      %v8944 = vpop.f32.mrb[0].mxu0
      %8945 = vmatprep.mubr.bf16.mxu0 0
      %8946 = vmatmul.mubr.bf16.gmra.mrb[0].mxu0 %v8661
      %v8947 = vpop.f32.mrb[0].mxu0
      %v8948 = vadd.f32 0.0, %v8947
      %v8949 = vpop.f32.mrb[0].mxu0
      %v8950 = vpop.f32.mrb[0].mxu0
      %v8951 = vpop.f32.mrb[0].mxu0
      %8952 = vmatprep.mubr.bf16.mxu0 0
      %8953 = vmatmul.mubr.bf16.gmra.mrb[0].mxu0 %v8669
      %v8954 = vpop.f32.mrb[0].mxu0
      %v8955 = vadd.f32 0.0, %v8954
      %v8956 = vpop.f32.mrb[0].mxu0
      %v8957 = vpop.f32.mrb[0].mxu0
      %v8958 = vadd.f32 0.0, %v8957
      %v8959 = vpop.f32.mrb[0].mxu0
      %8960 = vmatprep.mubr.bf16.mxu0 0
      %8961 = vmatmul.mubr.bf16.gmra.mrb[0].mxu0 %v8677
      %v8962 = vpop.f32.mrb[0].mxu0
      %v8963 = vpop.f32.mrb[0].mxu0
      %v8964 = vpop.f32.mrb[0].mxu0
      %v8965 = vadd.f32 0.0, %v8964
      %v8966 = vpop.f32.mrb[0].mxu0
      %8967 = vmatprep.mubr.bf16.mxu0 0
      %8968 = vmatmul.mubr.bf16.gmra.mrb[0].mxu0 %v8685
      %v8969 = vpop.f32.mrb[0].mxu0
      %v8970 = vadd.f32 0.0, %v8969
      %v8971 = vpop.f32.mrb[0].mxu0
      %v8972 = vpop.f32.mrb[0].mxu0
      %v8973 = vpop.f32.mrb[0].mxu0
      %8974 = vmatprep.mubr.bf16.mxu0 0
      %8975 = vmatmul.mubr.bf16.gmra.mrb[0].mxu0 %v8693
      %v8976 = vpop.f32.mrb[0].mxu0
      %v8977 = vadd.f32 0.0, %v8976
      %v8978 = vpop.f32.mrb[0].mxu0
      %v8979 = vpop.f32.mrb[0].mxu0
      %v8980 = vadd.f32 0.0, %v8979
      %v8981 = vpop.f32.mrb[0].mxu0
      %8982 = vmatprep.mubr.bf16.mxu0 0
      %8983 = vmatmul.mubr.bf16.gmra.mrb[0].mxu0 %v8701
      %v8984 = vpop.f32.mrb[0].mxu0
      %v8985 = vpop.f32.mrb[0].mxu0
      %v8986 = vpop.f32.mrb[0].mxu0
      %v8987 = vadd.f32 0.0, %v8986
      %v8988 = vpop.f32.mrb[0].mxu0
      %8989 = vmatprep.mubr.bf16.mxu0 0
      %8990 = vmatmul.mubr.bf16.gmra.mrb[0].mxu0 %v8709
      %v8991 = vpop.f32.mrb[0].mxu0
      %v8992 = vadd.f32 0.0, %v8991
      %v8993 = vpop.f32.mrb[0].mxu0
      %v8994 = vpop.f32.mrb[0].mxu0
      %v8995 = vpop.f32.mrb[0].mxu0
      %8996 = vmatprep.mubr.bf16.mxu0 0
      %8997 = vmatmul.mubr.bf16.gmra.mrb[0].mxu0 %v8717
      %v8998 = vpop.f32.mrb[0].mxu0
      %v8999 = vadd.f32 0.0, %v8998
      %v9000 = vpop.f32.mrb[0].mxu0
      %v9001 = vpop.f32.mrb[0].mxu0
      %v9002 = vadd.f32 0.0, %v9001
      %v9003 = vpop.f32.mrb[0].mxu0
      %9004 = vmatprep.mubr.bf16.mxu0 0
      %9005 = vmatmul.mubr.bf16.gmra.mrb[0].mxu0 %v8725
      %v9006 = vpop.f32.mrb[0].mxu0
      %v9007 = vpop.f32.mrb[0].mxu0
      %v9008 = vpop.f32.mrb[0].mxu0
      %v9009 = vadd.f32 0.0, %v9008
      %v9010 = vpop.f32.mrb[0].mxu0
      %9011 = vmatprep.mubr.bf16.mxu0 0
      %9012 = vmatmul.mubr.bf16.gmra.mrb[0].mxu0 %v8733
      %v9013 = vpop.f32.mrb[0].mxu0
      %v9014 = vadd.f32 0.0, %v9013
      %v9015 = vpop.f32.mrb[0].mxu0
      %v9016 = vpop.f32.mrb[0].mxu0
      %v9017 = vpop.f32.mrb[0].mxu0
      %9018 = vmatprep.mubr.bf16.mxu0 0
      %9019 = vmatmul.mubr.bf16.gmra.mrb[0].mxu0 %v8741
      %v9020 = vpop.f32.mrb[0].mxu0
      %v9021 = vadd.f32 0.0, %v9020
      %v9022 = vpop.f32.mrb[0].mxu0
      %v9023 = vpop.f32.mrb[0].mxu0
      %v9024 = vadd.f32 0.0, %v9023
      %v9025 = vpop.f32.mrb[0].mxu0
      %9026 = vmatprep.mubr.bf16.mxu0 0
      %9027 = vmatmul.mubr.bf16.gmra.mrb[0].mxu0 %v8749
      %v9028 = vpop.f32.mrb[0].mxu0
      %v9029 = vpop.f32.mrb[0].mxu0
      %v9030 = vpop.f32.mrb[0].mxu0
      %v9031 = vadd.f32 0.0, %v9030
      %v9032 = vpop.f32.mrb[0].mxu0
      %9033 = vmatprep.mubr.bf16.mxu0 0
      %9034 = vmatmul.mubr.bf16.gmra.mrb[0].mxu0 %v8757
      %v9035 = vpop.f32.mrb[0].mxu0
      %v9036 = vadd.f32 0.0, %v9035
      %v9037 = vpop.f32.mrb[0].mxu0
      %v9038 = vpop.f32.mrb[0].mxu0
      %v9039 = vpop.f32.mrb[0].mxu0
      %9040 = vmatprep.mubr.bf16.mxu0 0
      %9041 = vmatmul.mubr.bf16.gmra.mrb[0].mxu0 %v8765
      %v9042 = vpop.f32.mrb[0].mxu0
      %v9043 = vadd.f32 0.0, %v9042
      %v9044 = vpop.f32.mrb[0].mxu0
      %v9045 = vpop.f32.mrb[0].mxu0
      %v9046 = vadd.f32 0.0, %v9045
      %v9047 = vpop.f32.mrb[0].mxu0
      %9048 = vmatprep.mubr.bf16.mxu0 0
      %9049 = vmatmul.mubr.bf16.gmra.mrb[0].mxu0 %v8773
      %v9050 = vpop.f32.mrb[0].mxu0
      %v9051 = vpop.f32.mrb[0].mxu0
      %v9052 = vpop.f32.mrb[0].mxu0
      %v9053 = vadd.f32 0.0, %v9052
      %v9054 = vpop.f32.mrb[0].mxu0
      %9055 = vmatprep.mubr.bf16.mxu0 0
      %9056 = vmatmul.mubr.bf16.gmra.mrb[0].mxu0 %v8781
      %v9057 = vpop.f32.mrb[0].mxu0
      %v9058 = vadd.f32 0.0, %v9057
      %v9059 = vpop.f32.mrb[0].mxu0
      %v9060 = vpop.f32.mrb[0].mxu0
      %v9061 = vpop.f32.mrb[0].mxu0
      %9062 = vdwg.mxu0
      %v9063 = vadd.f32 %v8512, %v8889
      %v9064 = vadd.f32 %v8513, %v8892
      %v9065 = vadd.f32 %v8514, %v8899
      %v9066 = vadd.f32 %v8515, %v8904
      %v9067 = vadd.f32 %v8516, %v8911
      %v9068 = vadd.f32 %v8517, %v8914
      %v9069 = vadd.f32 %v8518, %v8921
      %v9070 = vadd.f32 %v8519, %v8926
      %v9071 = vadd.f32 %v8520, %v8933
      %v9072 = vadd.f32 %v8521, %v8936
      %v9073 = vadd.f32 %v8522, %v8943
      %v9074 = vadd.f32 %v8523, %v8948
      %v9075 = vadd.f32 %v8524, %v8955
      %v9076 = vadd.f32 %v8525, %v8958
      %v9077 = vadd.f32 %v8526, %v8965
      %v9078 = vadd.f32 %v8527, %v8970
      %v9079 = vadd.f32 %v8528, %v8977
      %v9080 = vadd.f32 %v8529, %v8980
      %v9081 = vadd.f32 %v8530, %v8987
      %v9082 = vadd.f32 %v8531, %v8992
      %v9083 = vadd.f32 %v8532, %v8999
      %v9084 = vadd.f32 %v8533, %v9002
      %v9085 = vadd.f32 %v8534, %v9009
      %v9086 = vadd.f32 %v8535, %v9014
      %v9087 = vadd.f32 %v8536, %v9021
      %v9088 = vadd.f32 %v8537, %v9024
      %v9089 = vadd.f32 %v8538, %v9031
      %v9090 = vadd.f32 %v8539, %v9036
      %v9091 = vadd.f32 %v8540, %v9043
      %v9092 = vadd.f32 %v8541, %v9046
      %v9093 = vadd.f32 %v8542, %v9053
      %v9094 = vadd.f32 %v8543, %v9058
      %v9095 = vld [vmem:[#allocation2 + $0x18] sm:$0xf8]
      %v9096 = vld [vmem:[#allocation2 + $0x20] sm:$0xff]
      %v9097 = vld [vmem:[#allocation2 + $0x28] sm:$0xff]
      %v9098 = vld [vmem:[#allocation2 + $0x30] sm:$0xff]
      %v9099 = vld [vmem:[#allocation2 + $0x38] sm:$0xff]
      %v9100 = vld [vmem:[#allocation2 + $0x40] sm:$0xff]
      %v9101 = vld [vmem:[#allocation2 + $0x48] sm:$0xff]
      %v9102 = vld [vmem:[#allocation2 + $0x50] sm:$0xff]
      %v9103 = vld [vmem:[#allocation2 + $0x58] sm:$0xff]
      %v9104 = vld [vmem:[#allocation2 + $0x60] sm:$0xff]
      %v9105 = vld [vmem:[#allocation2 + $0x68] sm:$0xff]
      %v9106 = vld [vmem:[#allocation2 + $0x70] sm:$0xff]
      %v9107 = vld [vmem:[#allocation2 + $0x78] sm:$0xff]
      %v9108 = vld [vmem:[#allocation2 + $0x80] sm:$0xff]
      %v9109 = vld [vmem:[#allocation2 + $0x88] sm:$0xff]
      %v9110 = vld [vmem:[#allocation2 + $0x90] sm:$0xff]
      %v9111 = vld [vmem:[#allocation2 + $0x98] sm:$0xff]
      %v9112 = vld [vmem:[#allocation2 + $0xa0] sm:$0xff]
      %v9113 = vld [vmem:[#allocation2 + $0xa8] sm:$0xff]
      %v9114 = vld [vmem:[#allocation2 + $0xb0] sm:$0xff]
      %v9115 = vld [vmem:[#allocation2 + $0xb8] sm:$0xff]
      %v9116 = vld [vmem:[#allocation2 + $0xc0] sm:$0xff]
      %v9117 = vld [vmem:[#allocation2 + $0xc8] sm:$0xff]
      %v9118 = vld [vmem:[#allocation2 + $0xd0] sm:$0xff]
      %v9119 = vld [vmem:[#allocation2 + $0xd8] sm:$0xf]
      %s9120 = scalar_lea.vmem %s6, 384
      %v9121 = vld [vmem:[%s9120] sm:$0xf]
      %v9122 = vld [vmem:[%s9120 + $0x4] sm:$0xf]
      %v9123 = vld [vmem:[%s9120 + $0x8] sm:$0xf]
      %v9124 = vld [vmem:[%s9120 + $0xc] sm:$0xf]
      %v9125 = vld [vmem:[%s9120 + $0x10] sm:$0xf]
      %v9126 = vld [vmem:[%s9120 + $0x14] sm:$0xf]
      %v9127 = vld [vmem:[%s9120 + $0x18] sm:$0xf]
      %v9128 = vld [vmem:[%s9120 + $0x1c] sm:$0xf]
      %v9129 = vld [vmem:[%s9120 + $0x20] sm:$0xf]
      %v9130 = vld [vmem:[%s9120 + $0x24] sm:$0xf]
      %v9131 = vld [vmem:[%s9120 + $0x28] sm:$0xf]
      %v9132 = vld [vmem:[%s9120 + $0x2c] sm:$0xf]
      %v9133 = vld [vmem:[%s9120 + $0x30] sm:$0xf]
      %v9134 = vld [vmem:[%s9120 + $0x34] sm:$0xf]
      %v9135 = vld [vmem:[%s9120 + $0x38] sm:$0xf]
      %v9136 = vld [vmem:[%s9120 + $0x3c] sm:$0xf]
      %v9138 = vshrl.u32 %v9095, 16
      %v9140 = vrot.slane %v9138, 3
      %v9141 = vshll.u32 %v9095, 16
      %v9143 = vrot.slane %v9141, 4
      %v9144 = vor.u32 %v9140, %v9143
      %v9146 = vshrl.u32 %v9096, 16
      %v9148 = vrot.slane %v9146, 3
      %v9149 = vshll.u32 %v9096, 16
      %v9151 = vrot.slane %v9149, 4
      %v9152 = vor.u32 %v9148, %v9151
      %v9153 = vsel %vm6739, %v9144, %v9152
      %v9155 = vshrl.u32 %v9097, 16
      %v9157 = vrot.slane %v9155, 3
      %v9158 = vshll.u32 %v9097, 16
      %v9160 = vrot.slane %v9158, 4
      %v9161 = vor.u32 %v9157, %v9160
      %v9162 = vsel %vm6739, %v9152, %v9161
      %v9164 = vshrl.u32 %v9098, 16
      %v9166 = vrot.slane %v9164, 3
      %v9167 = vshll.u32 %v9098, 16
      %v9169 = vrot.slane %v9167, 4
      %v9170 = vor.u32 %v9166, %v9169
      %v9171 = vsel %vm6739, %v9161, %v9170
      %v9173 = vshrl.u32 %v9099, 16
      %v9175 = vrot.slane %v9173, 3
      %v9176 = vshll.u32 %v9099, 16
      %v9178 = vrot.slane %v9176, 4
      %v9179 = vor.u32 %v9175, %v9178
      %v9180 = vsel %vm6739, %v9170, %v9179
      %v9182 = vshrl.u32 %v9100, 16
      %v9184 = vrot.slane %v9182, 3
      %v9185 = vshll.u32 %v9100, 16
      %v9187 = vrot.slane %v9185, 4
      %v9188 = vor.u32 %v9184, %v9187
      %v9189 = vsel %vm6739, %v9179, %v9188
      %v9191 = vshrl.u32 %v9101, 16
      %v9193 = vrot.slane %v9191, 3
      %v9194 = vshll.u32 %v9101, 16
      %v9196 = vrot.slane %v9194, 4
      %v9197 = vor.u32 %v9193, %v9196
      %v9198 = vsel %vm6739, %v9188, %v9197
      %v9200 = vshrl.u32 %v9102, 16
      %v9202 = vrot.slane %v9200, 3
      %v9203 = vshll.u32 %v9102, 16
      %v9205 = vrot.slane %v9203, 4
      %v9206 = vor.u32 %v9202, %v9205
      %v9207 = vsel %vm6739, %v9197, %v9206
      %v9209 = vshrl.u32 %v9103, 16
      %v9211 = vrot.slane %v9209, 3
      %v9212 = vshll.u32 %v9103, 16
      %v9214 = vrot.slane %v9212, 4
      %v9215 = vor.u32 %v9211, %v9214
      %v9216 = vsel %vm6739, %v9206, %v9215
      %v9218 = vshrl.u32 %v9104, 16
      %v9220 = vrot.slane %v9218, 3
      %v9221 = vshll.u32 %v9104, 16
      %v9223 = vrot.slane %v9221, 4
      %v9224 = vor.u32 %v9220, %v9223
      %v9225 = vsel %vm6739, %v9215, %v9224
      %v9227 = vshrl.u32 %v9105, 16
      %v9229 = vrot.slane %v9227, 3
      %v9230 = vshll.u32 %v9105, 16
      %v9232 = vrot.slane %v9230, 4
      %v9233 = vor.u32 %v9229, %v9232
      %v9234 = vsel %vm6739, %v9224, %v9233
      %v9236 = vshrl.u32 %v9106, 16
      %v9238 = vrot.slane %v9236, 3
      %v9239 = vshll.u32 %v9106, 16
      %v9241 = vrot.slane %v9239, 4
      %v9242 = vor.u32 %v9238, %v9241
      %v9243 = vsel %vm6739, %v9233, %v9242
      %v9245 = vshrl.u32 %v9107, 16
      %v9247 = vrot.slane %v9245, 3
      %v9248 = vshll.u32 %v9107, 16
      %v9250 = vrot.slane %v9248, 4
      %v9251 = vor.u32 %v9247, %v9250
      %v9252 = vsel %vm6739, %v9242, %v9251
      %v9254 = vshrl.u32 %v9108, 16
      %v9256 = vrot.slane %v9254, 3
      %v9257 = vshll.u32 %v9108, 16
      %v9259 = vrot.slane %v9257, 4
      %v9260 = vor.u32 %v9256, %v9259
      %v9261 = vsel %vm6739, %v9251, %v9260
      %v9263 = vshrl.u32 %v9109, 16
      %v9265 = vrot.slane %v9263, 3
      %v9266 = vshll.u32 %v9109, 16
      %v9268 = vrot.slane %v9266, 4
      %v9269 = vor.u32 %v9265, %v9268
      %v9270 = vsel %vm6739, %v9260, %v9269
      %v9272 = vshrl.u32 %v9110, 16
      %v9274 = vrot.slane %v9272, 3
      %v9275 = vshll.u32 %v9110, 16
      %v9277 = vrot.slane %v9275, 4
      %v9278 = vor.u32 %v9274, %v9277
      %v9279 = vsel %vm6739, %v9269, %v9278
      %v9281 = vshrl.u32 %v9111, 16
      %v9283 = vrot.slane %v9281, 3
      %v9284 = vshll.u32 %v9111, 16
      %v9286 = vrot.slane %v9284, 4
      %v9287 = vor.u32 %v9283, %v9286
      %v9288 = vsel %vm6739, %v9278, %v9287
      %v9290 = vshrl.u32 %v9112, 16
      %v9292 = vrot.slane %v9290, 3
      %v9293 = vshll.u32 %v9112, 16
      %v9295 = vrot.slane %v9293, 4
      %v9296 = vor.u32 %v9292, %v9295
      %v9297 = vsel %vm6739, %v9287, %v9296
      %v9299 = vshrl.u32 %v9113, 16
      %v9301 = vrot.slane %v9299, 3
      %v9302 = vshll.u32 %v9113, 16
      %v9304 = vrot.slane %v9302, 4
      %v9305 = vor.u32 %v9301, %v9304
      %v9306 = vsel %vm6739, %v9296, %v9305
      %v9308 = vshrl.u32 %v9114, 16
      %v9310 = vrot.slane %v9308, 3
      %v9311 = vshll.u32 %v9114, 16
      %v9313 = vrot.slane %v9311, 4
      %v9314 = vor.u32 %v9310, %v9313
      %v9315 = vsel %vm6739, %v9305, %v9314
      %v9317 = vshrl.u32 %v9115, 16
      %v9319 = vrot.slane %v9317, 3
      %v9320 = vshll.u32 %v9115, 16
      %v9322 = vrot.slane %v9320, 4
      %v9323 = vor.u32 %v9319, %v9322
      %v9324 = vsel %vm6739, %v9314, %v9323
      %v9326 = vshrl.u32 %v9116, 16
      %v9328 = vrot.slane %v9326, 3
      %v9329 = vshll.u32 %v9116, 16
      %v9331 = vrot.slane %v9329, 4
      %v9332 = vor.u32 %v9328, %v9331
      %v9333 = vsel %vm6739, %v9323, %v9332
      %v9335 = vshrl.u32 %v9117, 16
      %v9337 = vrot.slane %v9335, 3
      %v9338 = vshll.u32 %v9117, 16
      %v9340 = vrot.slane %v9338, 4
      %v9341 = vor.u32 %v9337, %v9340
      %v9342 = vsel %vm6739, %v9332, %v9341
      %v9344 = vshrl.u32 %v9118, 16
      %v9346 = vrot.slane %v9344, 3
      %v9347 = vshll.u32 %v9118, 16
      %v9349 = vrot.slane %v9347, 4
      %v9350 = vor.u32 %v9346, %v9349
      %v9351 = vsel %vm6739, %v9341, %v9350
      %v9353 = vshrl.u32 %v9119, 16
      %v9355 = vrot.slane %v9353, 3
      %v9356 = vshll.u32 %v9119, 16
      %v9358 = vrot.slane %v9356, 4
      %v9359 = vor.u32 %v9355, %v9358
      %v9360 = vsel %vm6739, %v9350, %v9359
      %v9401 = vunpack.c.l.b16 %v9121
      %v9402 = vunpack.c.l.b16 %v9122
      %v9403 = vunpack.c.l.b16 %v9123
      %v9404 = vunpack.c.l.b16 %v9124
      %v9405 = vunpack.c.l.b16 %v9125
      %v9406 = vunpack.c.l.b16 %v9126
      %v9407 = vunpack.c.l.b16 %v9127
      %v9408 = vunpack.c.l.b16 %v9128
      %v9409 = vunpack.c.l.b16 %v9129
      %v9410 = vunpack.c.l.b16 %v9130
      %v9411 = vunpack.c.l.b16 %v9131
      %v9412 = vunpack.c.l.b16 %v9132
      %v9413 = vunpack.c.l.b16 %v9133
      %v9414 = vunpack.c.l.b16 %v9134
      %v9415 = vunpack.c.l.b16 %v9135
      %v9416 = vunpack.c.l.b16 %v9136
      %v9417 = vpack.c.b16 %v9402, %v9401
      %v9418 = vpack.c.b16 %v9404, %v9403
      %v9419 = vpack.c.b16 %v9406, %v9405
      %v9420 = vpack.c.b16 %v9408, %v9407
      %v9421 = vpack.c.b16 %v9410, %v9409
      %v9422 = vpack.c.b16 %v9412, %v9411
      %v9423 = vpack.c.b16 %v9414, %v9413
      %v9424 = vpack.c.b16 %v9416, %v9415
      %9433 = vmatprep.subr.bf16.mxu0 0
      %9434 = vmatpush1.bf16.msra.mxu0 %v9417
      %9435 = vmatprep.subr.bf16.mxu0 0
      %9436 = vmatpush1.bf16.msra.mxu0 %v9418
      %9437 = vmatprep.subr.bf16.mxu0 0
      %9438 = vmatpush1.bf16.msra.mxu0 %v9419
      %9439 = vmatprep.subr.bf16.mxu0 0
      %9440 = vmatpush1.bf16.msra.mxu0 %v9420
      %9441 = vmatprep.subr.bf16.mxu0 0
      %9442 = vmatpush1.bf16.msra.mxu0 %v9421
      %9443 = vmatprep.subr.bf16.mxu0 0
      %9444 = vmatpush1.bf16.msra.mxu0 %v9422
      %9445 = vmatprep.subr.bf16.mxu0 0
      %9446 = vmatpush1.bf16.msra.mxu0 %v9423
      %9447 = vmatprep.subr.bf16.mxu0 0
      %9448 = vmatpush1.bf16.msra.mxu0 %v9424
      %9449 = vmatprep.subr.bf16.mxu0 0
      %9450 = vmatpush1.bf16.msra.mxu0 0
      %9451 = vmatprep.subr.bf16.mxu0 0
      %9452 = vmatpush1.bf16.msra.mxu0 0
      %9453 = vmatprep.subr.bf16.mxu0 0
      %9454 = vmatpush1.bf16.msra.mxu0 0
      %9455 = vmatprep.subr.bf16.mxu0 0
      %9456 = vmatpush1.bf16.msra.mxu0 0
      %9457 = vmatprep.subr.bf16.mxu0 0
      %9458 = vmatpush1.bf16.msra.mxu0 0
      %9459 = vmatprep.subr.bf16.mxu0 0
      %9460 = vmatpush1.bf16.msra.mxu0 0
      %9461 = vmatprep.subr.bf16.mxu0 0
      %9462 = vmatpush1.bf16.msra.mxu0 0
      %9463 = vmatprep.subr.bf16.mxu0 0
      %9464 = vmatpush1.bf16.msra.mxu0 0
      %9465 = vmatprep.mubr.bf16.mxu0 0
      %9466 = vmatmul.mubr.bf16.gmra.mrb[0].mxu0 %v9153
      %v9467 = vpop.f32.mrb[0].mxu0
      %v9468 = vadd.f32 0.0, %v9467
      %v9469 = vpop.f32.mrb[0].mxu0
      %v9470 = vpop.f32.mrb[0].mxu0
      %v9471 = vadd.f32 0.0, %v9470
      %v9472 = vpop.f32.mrb[0].mxu0
      %9473 = vmatprep.mubr.bf16.mxu0 0
      %9474 = vmatmul.mubr.bf16.gmra.mrb[0].mxu0 %v9162
      %v9475 = vpop.f32.mrb[0].mxu0
      %v9476 = vpop.f32.mrb[0].mxu0
      %v9477 = vpop.f32.mrb[0].mxu0
      %v9478 = vadd.f32 0.0, %v9477
      %v9479 = vpop.f32.mrb[0].mxu0
      %9480 = vmatprep.mubr.bf16.mxu0 0
      %9481 = vmatmul.mubr.bf16.gmra.mrb[0].mxu0 %v9171
      %v9482 = vpop.f32.mrb[0].mxu0
      %v9483 = vadd.f32 0.0, %v9482
      %v9484 = vpop.f32.mrb[0].mxu0
      %v9485 = vpop.f32.mrb[0].mxu0
      %v9486 = vpop.f32.mrb[0].mxu0
      %9487 = vmatprep.mubr.bf16.mxu0 0
      %9488 = vmatmul.mubr.bf16.gmra.mrb[0].mxu0 %v9180
      %v9489 = vpop.f32.mrb[0].mxu0
      %v9490 = vadd.f32 0.0, %v9489
      %v9491 = vpop.f32.mrb[0].mxu0
      %v9492 = vpop.f32.mrb[0].mxu0
      %v9493 = vadd.f32 0.0, %v9492
      %v9494 = vpop.f32.mrb[0].mxu0
      %9495 = vmatprep.mubr.bf16.mxu0 0
      %9496 = vmatmul.mubr.bf16.gmra.mrb[0].mxu0 %v9189
      %v9497 = vpop.f32.mrb[0].mxu0
      %v9498 = vpop.f32.mrb[0].mxu0
      %v9499 = vpop.f32.mrb[0].mxu0
      %v9500 = vadd.f32 0.0, %v9499
      %v9501 = vpop.f32.mrb[0].mxu0
      %9502 = vmatprep.mubr.bf16.mxu0 0
      %9503 = vmatmul.mubr.bf16.gmra.mrb[0].mxu0 %v9198
      %v9504 = vpop.f32.mrb[0].mxu0
      %v9505 = vadd.f32 0.0, %v9504
      %v9506 = vpop.f32.mrb[0].mxu0
      %v9507 = vpop.f32.mrb[0].mxu0
      %v9508 = vpop.f32.mrb[0].mxu0
      %9509 = vmatprep.mubr.bf16.mxu0 0
      %9510 = vmatmul.mubr.bf16.gmra.mrb[0].mxu0 %v9207
      %v9511 = vpop.f32.mrb[0].mxu0
      %v9512 = vadd.f32 0.0, %v9511
      %v9513 = vpop.f32.mrb[0].mxu0
      %v9514 = vpop.f32.mrb[0].mxu0
      %v9515 = vadd.f32 0.0, %v9514
      %v9516 = vpop.f32.mrb[0].mxu0
      %9517 = vmatprep.mubr.bf16.mxu0 0
      %9518 = vmatmul.mubr.bf16.gmra.mrb[0].mxu0 %v9216
      %v9519 = vpop.f32.mrb[0].mxu0
      %v9520 = vpop.f32.mrb[0].mxu0
      %v9521 = vpop.f32.mrb[0].mxu0
      %v9522 = vadd.f32 0.0, %v9521
      %v9523 = vpop.f32.mrb[0].mxu0
      %9524 = vmatprep.mubr.bf16.mxu0 0
      %9525 = vmatmul.mubr.bf16.gmra.mrb[0].mxu0 %v9225
      %v9526 = vpop.f32.mrb[0].mxu0
      %v9527 = vadd.f32 0.0, %v9526
      %v9528 = vpop.f32.mrb[0].mxu0
      %v9529 = vpop.f32.mrb[0].mxu0
      %v9530 = vpop.f32.mrb[0].mxu0
      %9531 = vmatprep.mubr.bf16.mxu0 0
      %9532 = vmatmul.mubr.bf16.gmra.mrb[0].mxu0 %v9234
      %v9533 = vpop.f32.mrb[0].mxu0
      %v9534 = vadd.f32 0.0, %v9533
      %v9535 = vpop.f32.mrb[0].mxu0
      %v9536 = vpop.f32.mrb[0].mxu0
      %v9537 = vadd.f32 0.0, %v9536
      %v9538 = vpop.f32.mrb[0].mxu0
      %9539 = vmatprep.mubr.bf16.mxu0 0
      %9540 = vmatmul.mubr.bf16.gmra.mrb[0].mxu0 %v9243
      %v9541 = vpop.f32.mrb[0].mxu0
      %v9542 = vpop.f32.mrb[0].mxu0
      %v9543 = vpop.f32.mrb[0].mxu0
      %v9544 = vadd.f32 0.0, %v9543
      %v9545 = vpop.f32.mrb[0].mxu0
      %9546 = vmatprep.mubr.bf16.mxu0 0
      %9547 = vmatmul.mubr.bf16.gmra.mrb[0].mxu0 %v9252
      %v9548 = vpop.f32.mrb[0].mxu0
      %v9549 = vadd.f32 0.0, %v9548
      %v9550 = vpop.f32.mrb[0].mxu0
      %v9551 = vpop.f32.mrb[0].mxu0
      %v9552 = vpop.f32.mrb[0].mxu0
      %9553 = vmatprep.mubr.bf16.mxu0 0
      %9554 = vmatmul.mubr.bf16.gmra.mrb[0].mxu0 %v9261
      %v9555 = vpop.f32.mrb[0].mxu0
      %v9556 = vadd.f32 0.0, %v9555
      %v9557 = vpop.f32.mrb[0].mxu0
      %v9558 = vpop.f32.mrb[0].mxu0
      %v9559 = vadd.f32 0.0, %v9558
      %v9560 = vpop.f32.mrb[0].mxu0
      %9561 = vmatprep.mubr.bf16.mxu0 0
      %9562 = vmatmul.mubr.bf16.gmra.mrb[0].mxu0 %v9270
      %v9563 = vpop.f32.mrb[0].mxu0
      %v9564 = vpop.f32.mrb[0].mxu0
      %v9565 = vpop.f32.mrb[0].mxu0
      %v9566 = vadd.f32 0.0, %v9565
      %v9567 = vpop.f32.mrb[0].mxu0
      %9568 = vmatprep.mubr.bf16.mxu0 0
      %9569 = vmatmul.mubr.bf16.gmra.mrb[0].mxu0 %v9279
      %v9570 = vpop.f32.mrb[0].mxu0
      %v9571 = vadd.f32 0.0, %v9570
      %v9572 = vpop.f32.mrb[0].mxu0
      %v9573 = vpop.f32.mrb[0].mxu0
      %v9574 = vpop.f32.mrb[0].mxu0
      %9575 = vmatprep.mubr.bf16.mxu0 0
      %9576 = vmatmul.mubr.bf16.gmra.mrb[0].mxu0 %v9288
      %v9577 = vpop.f32.mrb[0].mxu0
      %v9578 = vadd.f32 0.0, %v9577
      %v9579 = vpop.f32.mrb[0].mxu0
      %v9580 = vpop.f32.mrb[0].mxu0
      %v9581 = vadd.f32 0.0, %v9580
      %v9582 = vpop.f32.mrb[0].mxu0
      %9583 = vmatprep.mubr.bf16.mxu0 0
      %9584 = vmatmul.mubr.bf16.gmra.mrb[0].mxu0 %v9297
      %v9585 = vpop.f32.mrb[0].mxu0
      %v9586 = vpop.f32.mrb[0].mxu0
      %v9587 = vpop.f32.mrb[0].mxu0
      %v9588 = vadd.f32 0.0, %v9587
      %v9589 = vpop.f32.mrb[0].mxu0
      %9590 = vmatprep.mubr.bf16.mxu0 0
      %9591 = vmatmul.mubr.bf16.gmra.mrb[0].mxu0 %v9306
      %v9592 = vpop.f32.mrb[0].mxu0
      %v9593 = vadd.f32 0.0, %v9592
      %v9594 = vpop.f32.mrb[0].mxu0
      %v9595 = vpop.f32.mrb[0].mxu0
      %v9596 = vpop.f32.mrb[0].mxu0
      %9597 = vmatprep.mubr.bf16.mxu0 0
      %9598 = vmatmul.mubr.bf16.gmra.mrb[0].mxu0 %v9315
      %v9599 = vpop.f32.mrb[0].mxu0
      %v9600 = vadd.f32 0.0, %v9599
      %v9601 = vpop.f32.mrb[0].mxu0
      %v9602 = vpop.f32.mrb[0].mxu0
      %v9603 = vadd.f32 0.0, %v9602
      %v9604 = vpop.f32.mrb[0].mxu0
      %9605 = vmatprep.mubr.bf16.mxu0 0
      %9606 = vmatmul.mubr.bf16.gmra.mrb[0].mxu0 %v9324
      %v9607 = vpop.f32.mrb[0].mxu0
      %v9608 = vpop.f32.mrb[0].mxu0
      %v9609 = vpop.f32.mrb[0].mxu0
      %v9610 = vadd.f32 0.0, %v9609
      %v9611 = vpop.f32.mrb[0].mxu0
      %9612 = vmatprep.mubr.bf16.mxu0 0
      %9613 = vmatmul.mubr.bf16.gmra.mrb[0].mxu0 %v9333
      %v9614 = vpop.f32.mrb[0].mxu0
      %v9615 = vadd.f32 0.0, %v9614
      %v9616 = vpop.f32.mrb[0].mxu0
      %v9617 = vpop.f32.mrb[0].mxu0
      %v9618 = vpop.f32.mrb[0].mxu0
      %9619 = vmatprep.mubr.bf16.mxu0 0
      %9620 = vmatmul.mubr.bf16.gmra.mrb[0].mxu0 %v9342
      %v9621 = vpop.f32.mrb[0].mxu0
      %v9622 = vadd.f32 0.0, %v9621
      %v9623 = vpop.f32.mrb[0].mxu0
      %v9624 = vpop.f32.mrb[0].mxu0
      %v9625 = vadd.f32 0.0, %v9624
      %v9626 = vpop.f32.mrb[0].mxu0
      %9627 = vmatprep.mubr.bf16.mxu0 0
      %9628 = vmatmul.mubr.bf16.gmra.mrb[0].mxu0 %v9351
      %v9629 = vpop.f32.mrb[0].mxu0
      %v9630 = vpop.f32.mrb[0].mxu0
      %v9631 = vpop.f32.mrb[0].mxu0
      %v9632 = vadd.f32 0.0, %v9631
      %v9633 = vpop.f32.mrb[0].mxu0
      %9634 = vmatprep.mubr.bf16.mxu0 0
      %9635 = vmatmul.mubr.bf16.gmra.mrb[0].mxu0 %v9360
      %v9636 = vpop.f32.mrb[0].mxu0
      %v9637 = vadd.f32 0.0, %v9636
      %v9638 = vpop.f32.mrb[0].mxu0
      %v9639 = vpop.f32.mrb[0].mxu0
      %v9640 = vpop.f32.mrb[0].mxu0
      %9641 = vdwg.mxu0
      %v9642 = vadd.f32 %v9063, %v9468
      %v9643 = vadd.f32 %v9064, %v9471
      %v9644 = vadd.f32 %v9065, %v9478
      %v9645 = vadd.f32 %v9066, %v9483
      %v9646 = vadd.f32 %v9067, %v9490
      %v9647 = vadd.f32 %v9068, %v9493
      %v9648 = vadd.f32 %v9069, %v9500
      %v9649 = vadd.f32 %v9070, %v9505
      %v9650 = vadd.f32 %v9071, %v9512
      %v9651 = vadd.f32 %v9072, %v9515
      %v9652 = vadd.f32 %v9073, %v9522
      %v9653 = vadd.f32 %v9074, %v9527
      %v9654 = vadd.f32 %v9075, %v9534
      %v9655 = vadd.f32 %v9076, %v9537
      %v9656 = vadd.f32 %v9077, %v9544
      %v9657 = vadd.f32 %v9078, %v9549
      %v9658 = vadd.f32 %v9079, %v9556
      %v9659 = vadd.f32 %v9080, %v9559
      %v9660 = vadd.f32 %v9081, %v9566
      %v9661 = vadd.f32 %v9082, %v9571
      %v9662 = vadd.f32 %v9083, %v9578
      %v9663 = vadd.f32 %v9084, %v9581
      %v9664 = vadd.f32 %v9085, %v9588
      %v9665 = vadd.f32 %v9086, %v9593
      %v9666 = vadd.f32 %v9087, %v9600
      %v9667 = vadd.f32 %v9088, %v9603
      %v9668 = vadd.f32 %v9089, %v9610
      %v9669 = vadd.f32 %v9090, %v9615
      %v9670 = vadd.f32 %v9091, %v9622
      %v9671 = vadd.f32 %v9092, %v9625
      %v9672 = vadd.f32 %v9093, %v9632
      %v9673 = vadd.f32 %v9094, %v9637
      %v9674 = vld [vmem:[#allocation2 + $0x18] sm:$0xf0]
      %s9675 = scalar_lea.vmem %s6, 448
      %v9676 = vld [vmem:[%s9675] sm:$0xf]
      %v9677 = vld [vmem:[%s9675 + $0x4] sm:$0xf]
      %v9678 = vld [vmem:[%s9675 + $0x8] sm:$0xf]
      %v9679 = vld [vmem:[%s9675 + $0xc] sm:$0xf]
      %v9680 = vld [vmem:[%s9675 + $0x10] sm:$0xf]
      %v9681 = vld [vmem:[%s9675 + $0x14] sm:$0xf]
      %v9682 = vld [vmem:[%s9675 + $0x18] sm:$0xf]
      %v9683 = vld [vmem:[%s9675 + $0x1c] sm:$0xf]
      %v9684 = vld [vmem:[%s9675 + $0x20] sm:$0xf]
      %v9685 = vld [vmem:[%s9675 + $0x24] sm:$0xf]
      %v9686 = vld [vmem:[%s9675 + $0x28] sm:$0xf]
      %v9687 = vld [vmem:[%s9675 + $0x2c] sm:$0xf]
      %v9688 = vld [vmem:[%s9675 + $0x30] sm:$0xf]
      %v9689 = vld [vmem:[%s9675 + $0x34] sm:$0xf]
      %v9690 = vld [vmem:[%s9675 + $0x38] sm:$0xf]
      %v9691 = vld [vmem:[%s9675 + $0x3c] sm:$0xf]
      %v9717 = vrot.slane %v9674, 4
      %v9718 = vrot.slane %v9096, 4
      %v9719 = vsel %vm6408, %v9717, %v9718
      %v9720 = vrot.slane %v9097, 4
      %v9721 = vsel %vm6408, %v9718, %v9720
      %v9722 = vrot.slane %v9098, 4
      %v9723 = vsel %vm6408, %v9720, %v9722
      %v9724 = vrot.slane %v9099, 4
      %v9725 = vsel %vm6408, %v9722, %v9724
      %v9726 = vrot.slane %v9100, 4
      %v9727 = vsel %vm6408, %v9724, %v9726
      %v9728 = vrot.slane %v9101, 4
      %v9729 = vsel %vm6408, %v9726, %v9728
      %v9730 = vrot.slane %v9102, 4
      %v9731 = vsel %vm6408, %v9728, %v9730
      %v9732 = vrot.slane %v9103, 4
      %v9733 = vsel %vm6408, %v9730, %v9732
      %v9734 = vrot.slane %v9104, 4
      %v9735 = vsel %vm6408, %v9732, %v9734
      %v9736 = vrot.slane %v9105, 4
      %v9737 = vsel %vm6408, %v9734, %v9736
      %v9738 = vrot.slane %v9106, 4
      %v9739 = vsel %vm6408, %v9736, %v9738
      %v9740 = vrot.slane %v9107, 4
      %v9741 = vsel %vm6408, %v9738, %v9740
      %v9742 = vrot.slane %v9108, 4
      %v9743 = vsel %vm6408, %v9740, %v9742
      %v9744 = vrot.slane %v9109, 4
      %v9745 = vsel %vm6408, %v9742, %v9744
      %v9746 = vrot.slane %v9110, 4
      %v9747 = vsel %vm6408, %v9744, %v9746
      %v9748 = vrot.slane %v9111, 4
      %v9749 = vsel %vm6408, %v9746, %v9748
      %v9750 = vrot.slane %v9112, 4
      %v9751 = vsel %vm6408, %v9748, %v9750
      %v9752 = vrot.slane %v9113, 4
      %v9753 = vsel %vm6408, %v9750, %v9752
      %v9754 = vrot.slane %v9114, 4
      %v9755 = vsel %vm6408, %v9752, %v9754
      %v9756 = vrot.slane %v9115, 4
      %v9757 = vsel %vm6408, %v9754, %v9756
      %v9758 = vrot.slane %v9116, 4
      %v9759 = vsel %vm6408, %v9756, %v9758
      %v9760 = vrot.slane %v9117, 4
      %v9761 = vsel %vm6408, %v9758, %v9760
      %v9762 = vrot.slane %v9118, 4
      %v9763 = vsel %vm6408, %v9760, %v9762
      %v9764 = vrot.slane %v9119, 4
      %v9765 = vsel %vm6408, %v9762, %v9764
      %v9806 = vunpack.c.l.b16 %v9676
      %v9807 = vunpack.c.l.b16 %v9677
      %v9808 = vunpack.c.l.b16 %v9678
      %v9809 = vunpack.c.l.b16 %v9679
      %v9810 = vunpack.c.l.b16 %v9680
      %v9811 = vunpack.c.l.b16 %v9681
      %v9812 = vunpack.c.l.b16 %v9682
      %v9813 = vunpack.c.l.b16 %v9683
      %v9814 = vunpack.c.l.b16 %v9684
      %v9815 = vunpack.c.l.b16 %v9685
      %v9816 = vunpack.c.l.b16 %v9686
      %v9817 = vunpack.c.l.b16 %v9687
      %v9818 = vunpack.c.l.b16 %v9688
      %v9819 = vunpack.c.l.b16 %v9689
      %v9820 = vunpack.c.l.b16 %v9690
      %v9821 = vunpack.c.l.b16 %v9691
      %v9822 = vpack.c.b16 %v9807, %v9806
      %v9823 = vpack.c.b16 %v9809, %v9808
      %v9824 = vpack.c.b16 %v9811, %v9810
      %v9825 = vpack.c.b16 %v9813, %v9812
      %v9826 = vpack.c.b16 %v9815, %v9814
      %v9827 = vpack.c.b16 %v9817, %v9816
      %v9828 = vpack.c.b16 %v9819, %v9818
      %v9829 = vpack.c.b16 %v9821, %v9820
      %9838 = vmatprep.subr.bf16.mxu0 0
      %9839 = vmatpush1.bf16.msra.mxu0 %v9822
      %9840 = vmatprep.subr.bf16.mxu0 0
      %9841 = vmatpush1.bf16.msra.mxu0 %v9823
      %9842 = vmatprep.subr.bf16.mxu0 0
      %9843 = vmatpush1.bf16.msra.mxu0 %v9824
      %9844 = vmatprep.subr.bf16.mxu0 0
      %9845 = vmatpush1.bf16.msra.mxu0 %v9825
      %9846 = vmatprep.subr.bf16.mxu0 0
      %9847 = vmatpush1.bf16.msra.mxu0 %v9826
      %9848 = vmatprep.subr.bf16.mxu0 0
      %9849 = vmatpush1.bf16.msra.mxu0 %v9827
      %9850 = vmatprep.subr.bf16.mxu0 0
      %9851 = vmatpush1.bf16.msra.mxu0 %v9828
      %9852 = vmatprep.subr.bf16.mxu0 0
      %9853 = vmatpush1.bf16.msra.mxu0 %v9829
      %9854 = vmatprep.subr.bf16.mxu0 0
      %9855 = vmatpush1.bf16.msra.mxu0 0
      %9856 = vmatprep.subr.bf16.mxu0 0
      %9857 = vmatpush1.bf16.msra.mxu0 0
      %9858 = vmatprep.subr.bf16.mxu0 0
      %9859 = vmatpush1.bf16.msra.mxu0 0
      %9860 = vmatprep.subr.bf16.mxu0 0
      %9861 = vmatpush1.bf16.msra.mxu0 0
      %9862 = vmatprep.subr.bf16.mxu0 0
      %9863 = vmatpush1.bf16.msra.mxu0 0
      %9864 = vmatprep.subr.bf16.mxu0 0
      %9865 = vmatpush1.bf16.msra.mxu0 0
      %9866 = vmatprep.subr.bf16.mxu0 0
      %9867 = vmatpush1.bf16.msra.mxu0 0
      %9868 = vmatprep.subr.bf16.mxu0 0
      %9869 = vmatpush1.bf16.msra.mxu0 0
      %9870 = vmatprep.mubr.bf16.mxu0 0
      %9871 = vmatmul.mubr.bf16.gmra.mrb[0].mxu0 %v9719
      %v9872 = vpop.f32.mrb[0].mxu0
      %v9873 = vadd.f32 0.0, %v9872
      %v9874 = vpop.f32.mrb[0].mxu0
      %v9875 = vpop.f32.mrb[0].mxu0
      %v9876 = vadd.f32 0.0, %v9875
      %v9877 = vpop.f32.mrb[0].mxu0
      %9878 = vmatprep.mubr.bf16.mxu0 0
      %9879 = vmatmul.mubr.bf16.gmra.mrb[0].mxu0 %v9721
      %v9880 = vpop.f32.mrb[0].mxu0
      %v9881 = vpop.f32.mrb[0].mxu0
      %v9882 = vpop.f32.mrb[0].mxu0
      %v9883 = vadd.f32 0.0, %v9882
      %v9884 = vpop.f32.mrb[0].mxu0
      %9885 = vmatprep.mubr.bf16.mxu0 0
      %9886 = vmatmul.mubr.bf16.gmra.mrb[0].mxu0 %v9723
      %v9887 = vpop.f32.mrb[0].mxu0
      %v9888 = vadd.f32 0.0, %v9887
      %v9889 = vpop.f32.mrb[0].mxu0
      %v9890 = vpop.f32.mrb[0].mxu0
      %v9891 = vpop.f32.mrb[0].mxu0
      %9892 = vmatprep.mubr.bf16.mxu0 0
      %9893 = vmatmul.mubr.bf16.gmra.mrb[0].mxu0 %v9725
      %v9894 = vpop.f32.mrb[0].mxu0
      %v9895 = vadd.f32 0.0, %v9894
      %v9896 = vpop.f32.mrb[0].mxu0
      %v9897 = vpop.f32.mrb[0].mxu0
      %v9898 = vadd.f32 0.0, %v9897
      %v9899 = vpop.f32.mrb[0].mxu0
      %9900 = vmatprep.mubr.bf16.mxu0 0
      %9901 = vmatmul.mubr.bf16.gmra.mrb[0].mxu0 %v9727
      %v9902 = vpop.f32.mrb[0].mxu0
      %v9903 = vpop.f32.mrb[0].mxu0
      %v9904 = vpop.f32.mrb[0].mxu0
      %v9905 = vadd.f32 0.0, %v9904
      %v9906 = vpop.f32.mrb[0].mxu0
      %9907 = vmatprep.mubr.bf16.mxu0 0
      %9908 = vmatmul.mubr.bf16.gmra.mrb[0].mxu0 %v9729
      %v9909 = vpop.f32.mrb[0].mxu0
      %v9910 = vadd.f32 0.0, %v9909
      %v9911 = vpop.f32.mrb[0].mxu0
      %v9912 = vpop.f32.mrb[0].mxu0
      %v9913 = vpop.f32.mrb[0].mxu0
      %9914 = vmatprep.mubr.bf16.mxu0 0
      %9915 = vmatmul.mubr.bf16.gmra.mrb[0].mxu0 %v9731
      %v9916 = vpop.f32.mrb[0].mxu0
      %v9917 = vadd.f32 0.0, %v9916
      %v9918 = vpop.f32.mrb[0].mxu0
      %v9919 = vpop.f32.mrb[0].mxu0
      %v9920 = vadd.f32 0.0, %v9919
      %v9921 = vpop.f32.mrb[0].mxu0
      %9922 = vmatprep.mubr.bf16.mxu0 0
      %9923 = vmatmul.mubr.bf16.gmra.mrb[0].mxu0 %v9733
      %v9924 = vpop.f32.mrb[0].mxu0
      %v9925 = vpop.f32.mrb[0].mxu0
      %v9926 = vpop.f32.mrb[0].mxu0
      %v9927 = vadd.f32 0.0, %v9926
      %v9928 = vpop.f32.mrb[0].mxu0
      %9929 = vmatprep.mubr.bf16.mxu0 0
      %9930 = vmatmul.mubr.bf16.gmra.mrb[0].mxu0 %v9735
      %v9931 = vpop.f32.mrb[0].mxu0
      %v9932 = vadd.f32 0.0, %v9931
      %v9933 = vpop.f32.mrb[0].mxu0
      %v9934 = vpop.f32.mrb[0].mxu0
      %v9935 = vpop.f32.mrb[0].mxu0
      %9936 = vmatprep.mubr.bf16.mxu0 0
      %9937 = vmatmul.mubr.bf16.gmra.mrb[0].mxu0 %v9737
      %v9938 = vpop.f32.mrb[0].mxu0
      %v9939 = vadd.f32 0.0, %v9938
      %v9940 = vpop.f32.mrb[0].mxu0
      %v9941 = vpop.f32.mrb[0].mxu0
      %v9942 = vadd.f32 0.0, %v9941
      %v9943 = vpop.f32.mrb[0].mxu0
      %9944 = vmatprep.mubr.bf16.mxu0 0
      %9945 = vmatmul.mubr.bf16.gmra.mrb[0].mxu0 %v9739
      %v9946 = vpop.f32.mrb[0].mxu0
      %v9947 = vpop.f32.mrb[0].mxu0
      %v9948 = vpop.f32.mrb[0].mxu0
      %v9949 = vadd.f32 0.0, %v9948
      %v9950 = vpop.f32.mrb[0].mxu0
      %9951 = vmatprep.mubr.bf16.mxu0 0
      %9952 = vmatmul.mubr.bf16.gmra.mrb[0].mxu0 %v9741
      %v9953 = vpop.f32.mrb[0].mxu0
      %v9954 = vadd.f32 0.0, %v9953
      %v9955 = vpop.f32.mrb[0].mxu0
      %v9956 = vpop.f32.mrb[0].mxu0
      %v9957 = vpop.f32.mrb[0].mxu0
      %9958 = vmatprep.mubr.bf16.mxu0 0
      %9959 = vmatmul.mubr.bf16.gmra.mrb[0].mxu0 %v9743
      %v9960 = vpop.f32.mrb[0].mxu0
      %v9961 = vadd.f32 0.0, %v9960
      %v9962 = vpop.f32.mrb[0].mxu0
      %v9963 = vpop.f32.mrb[0].mxu0
      %v9964 = vadd.f32 0.0, %v9963
      %v9965 = vpop.f32.mrb[0].mxu0
      %9966 = vmatprep.mubr.bf16.mxu0 0
      %9967 = vmatmul.mubr.bf16.gmra.mrb[0].mxu0 %v9745
      %v9968 = vpop.f32.mrb[0].mxu0
      %v9969 = vpop.f32.mrb[0].mxu0
      %v9970 = vpop.f32.mrb[0].mxu0
      %v9971 = vadd.f32 0.0, %v9970
      %v9972 = vpop.f32.mrb[0].mxu0
      %9973 = vmatprep.mubr.bf16.mxu0 0
      %9974 = vmatmul.mubr.bf16.gmra.mrb[0].mxu0 %v9747
      %v9975 = vpop.f32.mrb[0].mxu0
      %v9976 = vadd.f32 0.0, %v9975
      %v9977 = vpop.f32.mrb[0].mxu0
      %v9978 = vpop.f32.mrb[0].mxu0
      %v9979 = vpop.f32.mrb[0].mxu0
      %9980 = vmatprep.mubr.bf16.mxu0 0
      %9981 = vmatmul.mubr.bf16.gmra.mrb[0].mxu0 %v9749
      %v9982 = vpop.f32.mrb[0].mxu0
      %v9983 = vadd.f32 0.0, %v9982
      %v9984 = vpop.f32.mrb[0].mxu0
      %v9985 = vpop.f32.mrb[0].mxu0
      %v9986 = vadd.f32 0.0, %v9985
      %v9987 = vpop.f32.mrb[0].mxu0
      %9988 = vmatprep.mubr.bf16.mxu0 0
      %9989 = vmatmul.mubr.bf16.gmra.mrb[0].mxu0 %v9751
      %v9990 = vpop.f32.mrb[0].mxu0
      %v9991 = vpop.f32.mrb[0].mxu0
      %v9992 = vpop.f32.mrb[0].mxu0
      %v9993 = vadd.f32 0.0, %v9992
      %v9994 = vpop.f32.mrb[0].mxu0
      %9995 = vmatprep.mubr.bf16.mxu0 0
      %9996 = vmatmul.mubr.bf16.gmra.mrb[0].mxu0 %v9753
      %v9997 = vpop.f32.mrb[0].mxu0
      %v9998 = vadd.f32 0.0, %v9997
      %v9999 = vpop.f32.mrb[0].mxu0
      %v10000 = vpop.f32.mrb[0].mxu0
      %v10001 = vpop.f32.mrb[0].mxu0
      %10002 = vmatprep.mubr.bf16.mxu0 0
      %10003 = vmatmul.mubr.bf16.gmra.mrb[0].mxu0 %v9755
      %v10004 = vpop.f32.mrb[0].mxu0
      %v10005 = vadd.f32 0.0, %v10004
      %v10006 = vpop.f32.mrb[0].mxu0
      %v10007 = vpop.f32.mrb[0].mxu0
      %v10008 = vadd.f32 0.0, %v10007
      %v10009 = vpop.f32.mrb[0].mxu0
      %10010 = vmatprep.mubr.bf16.mxu0 0
      %10011 = vmatmul.mubr.bf16.gmra.mrb[0].mxu0 %v9757
      %v10012 = vpop.f32.mrb[0].mxu0
      %v10013 = vpop.f32.mrb[0].mxu0
      %v10014 = vpop.f32.mrb[0].mxu0
      %v10015 = vadd.f32 0.0, %v10014
      %v10016 = vpop.f32.mrb[0].mxu0
      %10017 = vmatprep.mubr.bf16.mxu0 0
      %10018 = vmatmul.mubr.bf16.gmra.mrb[0].mxu0 %v9759
      %v10019 = vpop.f32.mrb[0].mxu0
      %v10020 = vadd.f32 0.0, %v10019
      %v10021 = vpop.f32.mrb[0].mxu0
      %v10022 = vpop.f32.mrb[0].mxu0
      %v10023 = vpop.f32.mrb[0].mxu0
      %10024 = vmatprep.mubr.bf16.mxu0 0
      %10025 = vmatmul.mubr.bf16.gmra.mrb[0].mxu0 %v9761
      %v10026 = vpop.f32.mrb[0].mxu0
      %v10027 = vadd.f32 0.0, %v10026
      %v10028 = vpop.f32.mrb[0].mxu0
      %v10029 = vpop.f32.mrb[0].mxu0
      %v10030 = vadd.f32 0.0, %v10029
      %v10031 = vpop.f32.mrb[0].mxu0
      %10032 = vmatprep.mubr.bf16.mxu0 0
      %10033 = vmatmul.mubr.bf16.gmra.mrb[0].mxu0 %v9763
      %v10034 = vpop.f32.mrb[0].mxu0
      %v10035 = vpop.f32.mrb[0].mxu0
      %v10036 = vpop.f32.mrb[0].mxu0
      %v10037 = vadd.f32 0.0, %v10036
      %v10038 = vpop.f32.mrb[0].mxu0
      %10039 = vmatprep.mubr.bf16.mxu0 0
      %10040 = vmatmul.mubr.bf16.gmra.mrb[0].mxu0 %v9765
      %v10041 = vpop.f32.mrb[0].mxu0
      %v10042 = vadd.f32 0.0, %v10041
      %v10043 = vpop.f32.mrb[0].mxu0
      %v10044 = vpop.f32.mrb[0].mxu0
      %v10045 = vpop.f32.mrb[0].mxu0
      %10046 = vdwg.mxu0
      %v10047 = vadd.f32 %v9642, %v9873
      %v10048 = vadd.f32 %v9643, %v9876
      %v10049 = vadd.f32 %v9644, %v9883
      %v10050 = vadd.f32 %v9645, %v9888
      %v10051 = vadd.f32 %v9646, %v9895
      %v10052 = vadd.f32 %v9647, %v9898
      %v10053 = vadd.f32 %v9648, %v9905
      %v10054 = vadd.f32 %v9649, %v9910
      %v10055 = vadd.f32 %v9650, %v9917
      %v10056 = vadd.f32 %v9651, %v9920
      %v10057 = vadd.f32 %v9652, %v9927
      %v10058 = vadd.f32 %v9653, %v9932
      %v10059 = vadd.f32 %v9654, %v9939
      %v10060 = vadd.f32 %v9655, %v9942
      %v10061 = vadd.f32 %v9656, %v9949
      %v10062 = vadd.f32 %v9657, %v9954
      %v10063 = vadd.f32 %v9658, %v9961
      %v10064 = vadd.f32 %v9659, %v9964
      %v10065 = vadd.f32 %v9660, %v9971
      %v10066 = vadd.f32 %v9661, %v9976
      %v10067 = vadd.f32 %v9662, %v9983
      %v10068 = vadd.f32 %v9663, %v9986
      %v10069 = vadd.f32 %v9664, %v9993
      %v10070 = vadd.f32 %v9665, %v9998
      %v10071 = vadd.f32 %v9666, %v10005
      %v10072 = vadd.f32 %v9667, %v10008
      %v10073 = vadd.f32 %v9668, %v10015
      %v10074 = vadd.f32 %v9669, %v10020
      %v10075 = vadd.f32 %v9670, %v10027
      %v10076 = vadd.f32 %v9671, %v10030
      %v10077 = vadd.f32 %v9672, %v10037
      %v10078 = vadd.f32 %v9673, %v10042
      %v10079 = vld [vmem:[#allocation2 + $0xd8] sm:$0x1f]
      %s10080 = scalar_lea.vmem %s6, 512
      %v10081 = vld [vmem:[%s10080] sm:$0xf]
      %v10082 = vld [vmem:[%s10080 + $0x4] sm:$0xf]
      %v10083 = vld [vmem:[%s10080 + $0x8] sm:$0xf]
      %v10084 = vld [vmem:[%s10080 + $0xc] sm:$0xf]
      %v10085 = vld [vmem:[%s10080 + $0x10] sm:$0xf]
      %v10086 = vld [vmem:[%s10080 + $0x14] sm:$0xf]
      %v10087 = vld [vmem:[%s10080 + $0x18] sm:$0xf]
      %v10088 = vld [vmem:[%s10080 + $0x1c] sm:$0xf]
      %v10089 = vld [vmem:[%s10080 + $0x20] sm:$0xf]
      %v10090 = vld [vmem:[%s10080 + $0x24] sm:$0xf]
      %v10091 = vld [vmem:[%s10080 + $0x28] sm:$0xf]
      %v10092 = vld [vmem:[%s10080 + $0x2c] sm:$0xf]
      %v10093 = vld [vmem:[%s10080 + $0x30] sm:$0xf]
      %v10094 = vld [vmem:[%s10080 + $0x34] sm:$0xf]
      %v10095 = vld [vmem:[%s10080 + $0x38] sm:$0xf]
      %v10096 = vld [vmem:[%s10080 + $0x3c] sm:$0xf]
      %v10098 = vshrl.u32 %v9674, 16
      %v10100 = vrot.slane %v10098, 4
      %v10101 = vshll.u32 %v9674, 16
      %v10103 = vrot.slane %v10101, 5
      %v10104 = vor.u32 %v10100, %v10103
      %v10105 = vrot.slane %v9146, 4
      %v10106 = vrot.slane %v9149, 5
      %v10107 = vor.u32 %v10105, %v10106
      %v10108 = vsel %vm7263, %v10104, %v10107
      %v10109 = vrot.slane %v9155, 4
      %v10110 = vrot.slane %v9158, 5
      %v10111 = vor.u32 %v10109, %v10110
      %v10112 = vsel %vm7263, %v10107, %v10111
      %v10113 = vrot.slane %v9164, 4
      %v10114 = vrot.slane %v9167, 5
      %v10115 = vor.u32 %v10113, %v10114
      %v10116 = vsel %vm7263, %v10111, %v10115
      %v10117 = vrot.slane %v9173, 4
      %v10118 = vrot.slane %v9176, 5
      %v10119 = vor.u32 %v10117, %v10118
      %v10120 = vsel %vm7263, %v10115, %v10119
      %v10121 = vrot.slane %v9182, 4
      %v10122 = vrot.slane %v9185, 5
      %v10123 = vor.u32 %v10121, %v10122
      %v10124 = vsel %vm7263, %v10119, %v10123
      %v10125 = vrot.slane %v9191, 4
      %v10126 = vrot.slane %v9194, 5
      %v10127 = vor.u32 %v10125, %v10126
      %v10128 = vsel %vm7263, %v10123, %v10127
      %v10129 = vrot.slane %v9200, 4
      %v10130 = vrot.slane %v9203, 5
      %v10131 = vor.u32 %v10129, %v10130
      %v10132 = vsel %vm7263, %v10127, %v10131
      %v10133 = vrot.slane %v9209, 4
      %v10134 = vrot.slane %v9212, 5
      %v10135 = vor.u32 %v10133, %v10134
      %v10136 = vsel %vm7263, %v10131, %v10135
      %v10137 = vrot.slane %v9218, 4
      %v10138 = vrot.slane %v9221, 5
      %v10139 = vor.u32 %v10137, %v10138
      %v10140 = vsel %vm7263, %v10135, %v10139
      %v10141 = vrot.slane %v9227, 4
      %v10142 = vrot.slane %v9230, 5
      %v10143 = vor.u32 %v10141, %v10142
      %v10144 = vsel %vm7263, %v10139, %v10143
      %v10145 = vrot.slane %v9236, 4
      %v10146 = vrot.slane %v9239, 5
      %v10147 = vor.u32 %v10145, %v10146
      %v10148 = vsel %vm7263, %v10143, %v10147
      %v10149 = vrot.slane %v9245, 4
      %v10150 = vrot.slane %v9248, 5
      %v10151 = vor.u32 %v10149, %v10150
      %v10152 = vsel %vm7263, %v10147, %v10151
      %v10153 = vrot.slane %v9254, 4
      %v10154 = vrot.slane %v9257, 5
      %v10155 = vor.u32 %v10153, %v10154
      %v10156 = vsel %vm7263, %v10151, %v10155
      %v10157 = vrot.slane %v9263, 4
      %v10158 = vrot.slane %v9266, 5
      %v10159 = vor.u32 %v10157, %v10158
      %v10160 = vsel %vm7263, %v10155, %v10159
      %v10161 = vrot.slane %v9272, 4
      %v10162 = vrot.slane %v9275, 5
      %v10163 = vor.u32 %v10161, %v10162
      %v10164 = vsel %vm7263, %v10159, %v10163
      %v10165 = vrot.slane %v9281, 4
      %v10166 = vrot.slane %v9284, 5
      %v10167 = vor.u32 %v10165, %v10166
      %v10168 = vsel %vm7263, %v10163, %v10167
      %v10169 = vrot.slane %v9290, 4
      %v10170 = vrot.slane %v9293, 5
      %v10171 = vor.u32 %v10169, %v10170
      %v10172 = vsel %vm7263, %v10167, %v10171
      %v10173 = vrot.slane %v9299, 4
      %v10174 = vrot.slane %v9302, 5
      %v10175 = vor.u32 %v10173, %v10174
      %v10176 = vsel %vm7263, %v10171, %v10175
      %v10177 = vrot.slane %v9308, 4
      %v10178 = vrot.slane %v9311, 5
      %v10179 = vor.u32 %v10177, %v10178
      %v10180 = vsel %vm7263, %v10175, %v10179
      %v10181 = vrot.slane %v9317, 4
      %v10182 = vrot.slane %v9320, 5
      %v10183 = vor.u32 %v10181, %v10182
      %v10184 = vsel %vm7263, %v10179, %v10183
      %v10185 = vrot.slane %v9326, 4
      %v10186 = vrot.slane %v9329, 5
      %v10187 = vor.u32 %v10185, %v10186
      %v10188 = vsel %vm7263, %v10183, %v10187
      %v10189 = vrot.slane %v9335, 4
      %v10190 = vrot.slane %v9338, 5
      %v10191 = vor.u32 %v10189, %v10190
      %v10192 = vsel %vm7263, %v10187, %v10191
      %v10193 = vrot.slane %v9344, 4
      %v10194 = vrot.slane %v9347, 5
      %v10195 = vor.u32 %v10193, %v10194
      %v10196 = vsel %vm7263, %v10191, %v10195
      %v10198 = vshrl.u32 %v10079, 16
      %v10200 = vrot.slane %v10198, 4
      %v10201 = vshll.u32 %v10079, 16
      %v10203 = vrot.slane %v10201, 5
      %v10204 = vor.u32 %v10200, %v10203
      %v10205 = vsel %vm7263, %v10195, %v10204
      %v10246 = vunpack.c.l.b16 %v10081
      %v10247 = vunpack.c.l.b16 %v10082
      %v10248 = vunpack.c.l.b16 %v10083
      %v10249 = vunpack.c.l.b16 %v10084
      %v10250 = vunpack.c.l.b16 %v10085
      %v10251 = vunpack.c.l.b16 %v10086
      %v10252 = vunpack.c.l.b16 %v10087
      %v10253 = vunpack.c.l.b16 %v10088
      %v10254 = vunpack.c.l.b16 %v10089
      %v10255 = vunpack.c.l.b16 %v10090
      %v10256 = vunpack.c.l.b16 %v10091
      %v10257 = vunpack.c.l.b16 %v10092
      %v10258 = vunpack.c.l.b16 %v10093
      %v10259 = vunpack.c.l.b16 %v10094
      %v10260 = vunpack.c.l.b16 %v10095
      %v10261 = vunpack.c.l.b16 %v10096
      %v10262 = vpack.c.b16 %v10247, %v10246
      %v10263 = vpack.c.b16 %v10249, %v10248
      %v10264 = vpack.c.b16 %v10251, %v10250
      %v10265 = vpack.c.b16 %v10253, %v10252
      %v10266 = vpack.c.b16 %v10255, %v10254
      %v10267 = vpack.c.b16 %v10257, %v10256
      %v10268 = vpack.c.b16 %v10259, %v10258
      %v10269 = vpack.c.b16 %v10261, %v10260
      %10278 = vmatprep.subr.bf16.mxu0 0
      %10279 = vmatpush1.bf16.msra.mxu0 %v10262
      %10280 = vmatprep.subr.bf16.mxu0 0
      %10281 = vmatpush1.bf16.msra.mxu0 %v10263
      %10282 = vmatprep.subr.bf16.mxu0 0
      %10283 = vmatpush1.bf16.msra.mxu0 %v10264
      %10284 = vmatprep.subr.bf16.mxu0 0
      %10285 = vmatpush1.bf16.msra.mxu0 %v10265
      %10286 = vmatprep.subr.bf16.mxu0 0
      %10287 = vmatpush1.bf16.msra.mxu0 %v10266
      %10288 = vmatprep.subr.bf16.mxu0 0
      %10289 = vmatpush1.bf16.msra.mxu0 %v10267
      %10290 = vmatprep.subr.bf16.mxu0 0
      %10291 = vmatpush1.bf16.msra.mxu0 %v10268
      %10292 = vmatprep.subr.bf16.mxu0 0
      %10293 = vmatpush1.bf16.msra.mxu0 %v10269
      %10294 = vmatprep.subr.bf16.mxu0 0
      %10295 = vmatpush1.bf16.msra.mxu0 0
      %10296 = vmatprep.subr.bf16.mxu0 0
      %10297 = vmatpush1.bf16.msra.mxu0 0
      %10298 = vmatprep.subr.bf16.mxu0 0
      %10299 = vmatpush1.bf16.msra.mxu0 0
      %10300 = vmatprep.subr.bf16.mxu0 0
      %10301 = vmatpush1.bf16.msra.mxu0 0
      %10302 = vmatprep.subr.bf16.mxu0 0
      %10303 = vmatpush1.bf16.msra.mxu0 0
      %10304 = vmatprep.subr.bf16.mxu0 0
      %10305 = vmatpush1.bf16.msra.mxu0 0
      %10306 = vmatprep.subr.bf16.mxu0 0
      %10307 = vmatpush1.bf16.msra.mxu0 0
      %10308 = vmatprep.subr.bf16.mxu0 0
      %10309 = vmatpush1.bf16.msra.mxu0 0
      %10310 = vmatprep.mubr.bf16.mxu0 0
      %10311 = vmatmul.mubr.bf16.gmra.mrb[0].mxu0 %v10108
      %v10312 = vpop.f32.mrb[0].mxu0
      %v10313 = vadd.f32 0.0, %v10312
      %v10314 = vpop.f32.mrb[0].mxu0
      %v10315 = vpop.f32.mrb[0].mxu0
      %v10316 = vadd.f32 0.0, %v10315
      %v10317 = vpop.f32.mrb[0].mxu0
      %10318 = vmatprep.mubr.bf16.mxu0 0
      %10319 = vmatmul.mubr.bf16.gmra.mrb[0].mxu0 %v10112
      %v10320 = vpop.f32.mrb[0].mxu0
      %v10321 = vpop.f32.mrb[0].mxu0
      %v10322 = vpop.f32.mrb[0].mxu0
      %v10323 = vadd.f32 0.0, %v10322
      %v10324 = vpop.f32.mrb[0].mxu0
      %10325 = vmatprep.mubr.bf16.mxu0 0
      %10326 = vmatmul.mubr.bf16.gmra.mrb[0].mxu0 %v10116
      %v10327 = vpop.f32.mrb[0].mxu0
      %v10328 = vadd.f32 0.0, %v10327
      %v10329 = vpop.f32.mrb[0].mxu0
      %v10330 = vpop.f32.mrb[0].mxu0
      %v10331 = vpop.f32.mrb[0].mxu0
      %10332 = vmatprep.mubr.bf16.mxu0 0
      %10333 = vmatmul.mubr.bf16.gmra.mrb[0].mxu0 %v10120
      %v10334 = vpop.f32.mrb[0].mxu0
      %v10335 = vadd.f32 0.0, %v10334
      %v10336 = vpop.f32.mrb[0].mxu0
      %v10337 = vpop.f32.mrb[0].mxu0
      %v10338 = vadd.f32 0.0, %v10337
      %v10339 = vpop.f32.mrb[0].mxu0
      %10340 = vmatprep.mubr.bf16.mxu0 0
      %10341 = vmatmul.mubr.bf16.gmra.mrb[0].mxu0 %v10124
      %v10342 = vpop.f32.mrb[0].mxu0
      %v10343 = vpop.f32.mrb[0].mxu0
      %v10344 = vpop.f32.mrb[0].mxu0
      %v10345 = vadd.f32 0.0, %v10344
      %v10346 = vpop.f32.mrb[0].mxu0
      %10347 = vmatprep.mubr.bf16.mxu0 0
      %10348 = vmatmul.mubr.bf16.gmra.mrb[0].mxu0 %v10128
      %v10349 = vpop.f32.mrb[0].mxu0
      %v10350 = vadd.f32 0.0, %v10349
      %v10351 = vpop.f32.mrb[0].mxu0
      %v10352 = vpop.f32.mrb[0].mxu0
      %v10353 = vpop.f32.mrb[0].mxu0
      %10354 = vmatprep.mubr.bf16.mxu0 0
      %10355 = vmatmul.mubr.bf16.gmra.mrb[0].mxu0 %v10132
      %v10356 = vpop.f32.mrb[0].mxu0
      %v10357 = vadd.f32 0.0, %v10356
      %v10358 = vpop.f32.mrb[0].mxu0
      %v10359 = vpop.f32.mrb[0].mxu0
      %v10360 = vadd.f32 0.0, %v10359
      %v10361 = vpop.f32.mrb[0].mxu0
      %10362 = vmatprep.mubr.bf16.mxu0 0
      %10363 = vmatmul.mubr.bf16.gmra.mrb[0].mxu0 %v10136
      %v10364 = vpop.f32.mrb[0].mxu0
      %v10365 = vpop.f32.mrb[0].mxu0
      %v10366 = vpop.f32.mrb[0].mxu0
      %v10367 = vadd.f32 0.0, %v10366
      %v10368 = vpop.f32.mrb[0].mxu0
      %10369 = vmatprep.mubr.bf16.mxu0 0
      %10370 = vmatmul.mubr.bf16.gmra.mrb[0].mxu0 %v10140
      %v10371 = vpop.f32.mrb[0].mxu0
      %v10372 = vadd.f32 0.0, %v10371
      %v10373 = vpop.f32.mrb[0].mxu0
      %v10374 = vpop.f32.mrb[0].mxu0
      %v10375 = vpop.f32.mrb[0].mxu0
      %10376 = vmatprep.mubr.bf16.mxu0 0
      %10377 = vmatmul.mubr.bf16.gmra.mrb[0].mxu0 %v10144
      %v10378 = vpop.f32.mrb[0].mxu0
      %v10379 = vadd.f32 0.0, %v10378
      %v10380 = vpop.f32.mrb[0].mxu0
      %v10381 = vpop.f32.mrb[0].mxu0
      %v10382 = vadd.f32 0.0, %v10381
      %v10383 = vpop.f32.mrb[0].mxu0
      %10384 = vmatprep.mubr.bf16.mxu0 0
      %10385 = vmatmul.mubr.bf16.gmra.mrb[0].mxu0 %v10148
      %v10386 = vpop.f32.mrb[0].mxu0
      %v10387 = vpop.f32.mrb[0].mxu0
      %v10388 = vpop.f32.mrb[0].mxu0
      %v10389 = vadd.f32 0.0, %v10388
      %v10390 = vpop.f32.mrb[0].mxu0
      %10391 = vmatprep.mubr.bf16.mxu0 0
      %10392 = vmatmul.mubr.bf16.gmra.mrb[0].mxu0 %v10152
      %v10393 = vpop.f32.mrb[0].mxu0
      %v10394 = vadd.f32 0.0, %v10393
      %v10395 = vpop.f32.mrb[0].mxu0
      %v10396 = vpop.f32.mrb[0].mxu0
      %v10397 = vpop.f32.mrb[0].mxu0
      %10398 = vmatprep.mubr.bf16.mxu0 0
      %10399 = vmatmul.mubr.bf16.gmra.mrb[0].mxu0 %v10156
      %v10400 = vpop.f32.mrb[0].mxu0
      %v10401 = vadd.f32 0.0, %v10400
      %v10402 = vpop.f32.mrb[0].mxu0
      %v10403 = vpop.f32.mrb[0].mxu0
      %v10404 = vadd.f32 0.0, %v10403
      %v10405 = vpop.f32.mrb[0].mxu0
      %10406 = vmatprep.mubr.bf16.mxu0 0
      %10407 = vmatmul.mubr.bf16.gmra.mrb[0].mxu0 %v10160
      %v10408 = vpop.f32.mrb[0].mxu0
      %v10409 = vpop.f32.mrb[0].mxu0
      %v10410 = vpop.f32.mrb[0].mxu0
      %v10411 = vadd.f32 0.0, %v10410
      %v10412 = vpop.f32.mrb[0].mxu0
      %10413 = vmatprep.mubr.bf16.mxu0 0
      %10414 = vmatmul.mubr.bf16.gmra.mrb[0].mxu0 %v10164
      %v10415 = vpop.f32.mrb[0].mxu0
      %v10416 = vadd.f32 0.0, %v10415
      %v10417 = vpop.f32.mrb[0].mxu0
      %v10418 = vpop.f32.mrb[0].mxu0
      %v10419 = vpop.f32.mrb[0].mxu0
      %10420 = vmatprep.mubr.bf16.mxu0 0
      %10421 = vmatmul.mubr.bf16.gmra.mrb[0].mxu0 %v10168
      %v10422 = vpop.f32.mrb[0].mxu0
      %v10423 = vadd.f32 0.0, %v10422
      %v10424 = vpop.f32.mrb[0].mxu0
      %v10425 = vpop.f32.mrb[0].mxu0
      %v10426 = vadd.f32 0.0, %v10425
      %v10427 = vpop.f32.mrb[0].mxu0
      %10428 = vmatprep.mubr.bf16.mxu0 0
      %10429 = vmatmul.mubr.bf16.gmra.mrb[0].mxu0 %v10172
      %v10430 = vpop.f32.mrb[0].mxu0
      %v10431 = vpop.f32.mrb[0].mxu0
      %v10432 = vpop.f32.mrb[0].mxu0
      %v10433 = vadd.f32 0.0, %v10432
      %v10434 = vpop.f32.mrb[0].mxu0
      %10435 = vmatprep.mubr.bf16.mxu0 0
      %10436 = vmatmul.mubr.bf16.gmra.mrb[0].mxu0 %v10176
      %v10437 = vpop.f32.mrb[0].mxu0
      %v10438 = vadd.f32 0.0, %v10437
      %v10439 = vpop.f32.mrb[0].mxu0
      %v10440 = vpop.f32.mrb[0].mxu0
      %v10441 = vpop.f32.mrb[0].mxu0
      %10442 = vmatprep.mubr.bf16.mxu0 0
      %10443 = vmatmul.mubr.bf16.gmra.mrb[0].mxu0 %v10180
      %v10444 = vpop.f32.mrb[0].mxu0
      %v10445 = vadd.f32 0.0, %v10444
      %v10446 = vpop.f32.mrb[0].mxu0
      %v10447 = vpop.f32.mrb[0].mxu0
      %v10448 = vadd.f32 0.0, %v10447
      %v10449 = vpop.f32.mrb[0].mxu0
      %10450 = vmatprep.mubr.bf16.mxu0 0
      %10451 = vmatmul.mubr.bf16.gmra.mrb[0].mxu0 %v10184
      %v10452 = vpop.f32.mrb[0].mxu0
      %v10453 = vpop.f32.mrb[0].mxu0
      %v10454 = vpop.f32.mrb[0].mxu0
      %v10455 = vadd.f32 0.0, %v10454
      %v10456 = vpop.f32.mrb[0].mxu0
      %10457 = vmatprep.mubr.bf16.mxu0 0
      %10458 = vmatmul.mubr.bf16.gmra.mrb[0].mxu0 %v10188
      %v10459 = vpop.f32.mrb[0].mxu0
      %v10460 = vadd.f32 0.0, %v10459
      %v10461 = vpop.f32.mrb[0].mxu0
      %v10462 = vpop.f32.mrb[0].mxu0
      %v10463 = vpop.f32.mrb[0].mxu0
      %10464 = vmatprep.mubr.bf16.mxu0 0
      %10465 = vmatmul.mubr.bf16.gmra.mrb[0].mxu0 %v10192
      %v10466 = vpop.f32.mrb[0].mxu0
      %v10467 = vadd.f32 0.0, %v10466
      %v10468 = vpop.f32.mrb[0].mxu0
      %v10469 = vpop.f32.mrb[0].mxu0
      %v10470 = vadd.f32 0.0, %v10469
      %v10471 = vpop.f32.mrb[0].mxu0
      %10472 = vmatprep.mubr.bf16.mxu0 0
      %10473 = vmatmul.mubr.bf16.gmra.mrb[0].mxu0 %v10196
      %v10474 = vpop.f32.mrb[0].mxu0
      %v10475 = vpop.f32.mrb[0].mxu0
      %v10476 = vpop.f32.mrb[0].mxu0
      %v10477 = vadd.f32 0.0, %v10476
      %v10478 = vpop.f32.mrb[0].mxu0
      %10479 = vmatprep.mubr.bf16.mxu0 0
      %10480 = vmatmul.mubr.bf16.gmra.mrb[0].mxu0 %v10205
      %v10481 = vpop.f32.mrb[0].mxu0
      %v10482 = vadd.f32 0.0, %v10481
      %v10483 = vpop.f32.mrb[0].mxu0
      %v10484 = vpop.f32.mrb[0].mxu0
      %v10485 = vpop.f32.mrb[0].mxu0
      %10486 = vdwg.mxu0
      %v10487 = vadd.f32 %v10047, %v10313
      %v10488 = vadd.f32 %v10048, %v10316
      %v10489 = vadd.f32 %v10049, %v10323
      %v10490 = vadd.f32 %v10050, %v10328
      %v10491 = vadd.f32 %v10051, %v10335
      %v10492 = vadd.f32 %v10052, %v10338
      %v10493 = vadd.f32 %v10053, %v10345
      %v10494 = vadd.f32 %v10054, %v10350
      %v10495 = vadd.f32 %v10055, %v10357
      %v10496 = vadd.f32 %v10056, %v10360
      %v10497 = vadd.f32 %v10057, %v10367
      %v10498 = vadd.f32 %v10058, %v10372
      %v10499 = vadd.f32 %v10059, %v10379
      %v10500 = vadd.f32 %v10060, %v10382
      %v10501 = vadd.f32 %v10061, %v10389
      %v10502 = vadd.f32 %v10062, %v10394
      %v10503 = vadd.f32 %v10063, %v10401
      %v10504 = vadd.f32 %v10064, %v10404
      %v10505 = vadd.f32 %v10065, %v10411
      %v10506 = vadd.f32 %v10066, %v10416
      %v10507 = vadd.f32 %v10067, %v10423
      %v10508 = vadd.f32 %v10068, %v10426
      %v10509 = vadd.f32 %v10069, %v10433
      %v10510 = vadd.f32 %v10070, %v10438
      %v10511 = vadd.f32 %v10071, %v10445
      %v10512 = vadd.f32 %v10072, %v10448
      %v10513 = vadd.f32 %v10073, %v10455
      %v10514 = vadd.f32 %v10074, %v10460
      %v10515 = vadd.f32 %v10075, %v10467
      %v10516 = vadd.f32 %v10076, %v10470
      %v10517 = vadd.f32 %v10077, %v10477
      %v10518 = vadd.f32 %v10078, %v10482
      %v10519 = vld [vmem:[%s7] sm:$0x1]
      %v10521 = vlaneseq
      %v10522 = vshrl.u32 %v10521, 7
      %v10523 = vsub.s32 0, %v10522
      %v10524 = vrot.slane %v10519, %v10523
      %v10526 = vadd.f32 %v10487, %v10524
      %v10527 = vadd.f32 %v10488, %v10524
      %v10528 = vadd.f32 %v10489, %v10524
      %v10529 = vadd.f32 %v10490, %v10524
      %v10530 = vadd.f32 %v10491, %v10524
      %v10531 = vadd.f32 %v10492, %v10524
      %v10532 = vadd.f32 %v10493, %v10524
      %v10533 = vadd.f32 %v10494, %v10524
      %v10534 = vadd.f32 %v10495, %v10524
      %v10535 = vadd.f32 %v10496, %v10524
      %v10536 = vadd.f32 %v10497, %v10524
      %v10537 = vadd.f32 %v10498, %v10524
      %v10538 = vadd.f32 %v10499, %v10524
      %v10539 = vadd.f32 %v10500, %v10524
      %v10540 = vadd.f32 %v10501, %v10524
      %v10541 = vadd.f32 %v10502, %v10524
      %v10542 = vadd.f32 %v10503, %v10524
      %v10543 = vadd.f32 %v10504, %v10524
      %v10544 = vadd.f32 %v10505, %v10524
      %v10545 = vadd.f32 %v10506, %v10524
      %v10546 = vadd.f32 %v10507, %v10524
      %v10547 = vadd.f32 %v10508, %v10524
      %v10548 = vadd.f32 %v10509, %v10524
      %v10549 = vadd.f32 %v10510, %v10524
      %v10550 = vadd.f32 %v10511, %v10524
      %v10551 = vadd.f32 %v10512, %v10524
      %v10552 = vadd.f32 %v10513, %v10524
      %v10553 = vadd.f32 %v10514, %v10524
      %v10554 = vadd.f32 %v10515, %v10524
      %v10555 = vadd.f32 %v10516, %v10524
      %v10556 = vadd.f32 %v10517, %v10524
      %v10557 = vadd.f32 %v10518, %v10524
      %v10558 = vld [vmem:[%s8] sm:$0x1]
      %v10559 = vld [vmem:[%s9] sm:$0x1]
      %10560 = vadd.xlane.f32.xlu0 %v10526
      %v10561 = vpop.xlane.xlu0 %10560
      %10562 = vadd.xlane.f32.xlu0 %v10527
      %v10563 = vpop.xlane.xlu0 %10562
      %10564 = vadd.xlane.f32.xlu0 %v10528
      %v10565 = vpop.xlane.xlu0 %10564
      %10566 = vadd.xlane.f32.xlu0 %v10529
      %v10567 = vpop.xlane.xlu0 %10566
      %10568 = vadd.xlane.f32.xlu0 %v10530
      %v10569 = vpop.xlane.xlu0 %10568
      %10570 = vadd.xlane.f32.xlu0 %v10531
      %v10571 = vpop.xlane.xlu0 %10570
      %10572 = vadd.xlane.f32.xlu0 %v10532
      %v10573 = vpop.xlane.xlu0 %10572
      %10574 = vadd.xlane.f32.xlu0 %v10533
      %v10575 = vpop.xlane.xlu0 %10574
      %10576 = vadd.xlane.f32.xlu0 %v10534
      %v10577 = vpop.xlane.xlu0 %10576
      %10578 = vadd.xlane.f32.xlu0 %v10535
      %v10579 = vpop.xlane.xlu0 %10578
      %10580 = vadd.xlane.f32.xlu0 %v10536
      %v10581 = vpop.xlane.xlu0 %10580
      %10582 = vadd.xlane.f32.xlu0 %v10537
      %v10583 = vpop.xlane.xlu0 %10582
      %10584 = vadd.xlane.f32.xlu0 %v10538
      %v10585 = vpop.xlane.xlu0 %10584
      %10586 = vadd.xlane.f32.xlu0 %v10539
      %v10587 = vpop.xlane.xlu0 %10586
      %10588 = vadd.xlane.f32.xlu0 %v10540
      %v10589 = vpop.xlane.xlu0 %10588
      %10590 = vadd.xlane.f32.xlu0 %v10541
      %v10591 = vpop.xlane.xlu0 %10590
      %10592 = vadd.xlane.f32.xlu0 %v10542
      %v10593 = vpop.xlane.xlu0 %10592
      %10594 = vadd.xlane.f32.xlu0 %v10543
      %v10595 = vpop.xlane.xlu0 %10594
      %10596 = vadd.xlane.f32.xlu0 %v10544
      %v10597 = vpop.xlane.xlu0 %10596
      %10598 = vadd.xlane.f32.xlu0 %v10545
      %v10599 = vpop.xlane.xlu0 %10598
      %10600 = vadd.xlane.f32.xlu0 %v10546
      %v10601 = vpop.xlane.xlu0 %10600
      %10602 = vadd.xlane.f32.xlu0 %v10547
      %v10603 = vpop.xlane.xlu0 %10602
      %10604 = vadd.xlane.f32.xlu0 %v10548
      %v10605 = vpop.xlane.xlu0 %10604
      %10606 = vadd.xlane.f32.xlu0 %v10549
      %v10607 = vpop.xlane.xlu0 %10606
      %10608 = vadd.xlane.f32.xlu0 %v10550
      %v10609 = vpop.xlane.xlu0 %10608
      %10610 = vadd.xlane.f32.xlu0 %v10551
      %v10611 = vpop.xlane.xlu0 %10610
      %10612 = vadd.xlane.f32.xlu0 %v10552
      %v10613 = vpop.xlane.xlu0 %10612
      %10614 = vadd.xlane.f32.xlu0 %v10553
      %v10615 = vpop.xlane.xlu0 %10614
      %10616 = vadd.xlane.f32.xlu0 %v10554
      %v10617 = vpop.xlane.xlu0 %10616
      %10618 = vadd.xlane.f32.xlu0 %v10555
      %v10619 = vpop.xlane.xlu0 %10618
      %10620 = vadd.xlane.f32.xlu0 %v10556
      %v10621 = vpop.xlane.xlu0 %10620
      %10622 = vadd.xlane.f32.xlu0 %v10557
      %v10623 = vpop.xlane.xlu0 %10622
      %v10624 = vmul.f32 %v10561, 0.125
      %v10625 = vmul.f32 %v10563, 0.125
      %v10626 = vmul.f32 %v10565, 0.125
      %v10627 = vmul.f32 %v10567, 0.125
      %v10628 = vmul.f32 %v10569, 0.125
      %v10629 = vmul.f32 %v10571, 0.125
      %v10630 = vmul.f32 %v10573, 0.125
      %v10631 = vmul.f32 %v10575, 0.125
      %v10632 = vmul.f32 %v10577, 0.125
      %v10633 = vmul.f32 %v10579, 0.125
      %v10634 = vmul.f32 %v10581, 0.125
      %v10635 = vmul.f32 %v10583, 0.125
      %v10636 = vmul.f32 %v10585, 0.125
      %v10637 = vmul.f32 %v10587, 0.125
      %v10638 = vmul.f32 %v10589, 0.125
      %v10639 = vmul.f32 %v10591, 0.125
      %v10640 = vmul.f32 %v10593, 0.125
      %v10641 = vmul.f32 %v10595, 0.125
      %v10642 = vmul.f32 %v10597, 0.125
      %v10643 = vmul.f32 %v10599, 0.125
      %v10644 = vmul.f32 %v10601, 0.125
      %v10645 = vmul.f32 %v10603, 0.125
      %v10646 = vmul.f32 %v10605, 0.125
      %v10647 = vmul.f32 %v10607, 0.125
      %v10648 = vmul.f32 %v10609, 0.125
      %v10649 = vmul.f32 %v10611, 0.125
      %v10650 = vmul.f32 %v10613, 0.125
      %v10651 = vmul.f32 %v10615, 0.125
      %v10652 = vmul.f32 %v10617, 0.125
      %v10653 = vmul.f32 %v10619, 0.125
      %v10654 = vmul.f32 %v10621, 0.125
      %v10655 = vmul.f32 %v10623, 0.125
      %v10656 = vmul.f32 %v10526, %v10526
      %v10657 = vmul.f32 %v10527, %v10527
      %v10658 = vmul.f32 %v10528, %v10528
      %v10659 = vmul.f32 %v10529, %v10529
      %v10660 = vmul.f32 %v10530, %v10530
      %v10661 = vmul.f32 %v10531, %v10531
      %v10662 = vmul.f32 %v10532, %v10532
      %v10663 = vmul.f32 %v10533, %v10533
      %v10664 = vmul.f32 %v10534, %v10534
      %v10665 = vmul.f32 %v10535, %v10535
      %v10666 = vmul.f32 %v10536, %v10536
      %v10667 = vmul.f32 %v10537, %v10537
      %v10668 = vmul.f32 %v10538, %v10538
      %v10669 = vmul.f32 %v10539, %v10539
      %v10670 = vmul.f32 %v10540, %v10540
      %v10671 = vmul.f32 %v10541, %v10541
      %v10672 = vmul.f32 %v10542, %v10542
      %v10673 = vmul.f32 %v10543, %v10543
      %v10674 = vmul.f32 %v10544, %v10544
      %v10675 = vmul.f32 %v10545, %v10545
      %v10676 = vmul.f32 %v10546, %v10546
      %v10677 = vmul.f32 %v10547, %v10547
      %v10678 = vmul.f32 %v10548, %v10548
      %v10679 = vmul.f32 %v10549, %v10549
      %v10680 = vmul.f32 %v10550, %v10550
      %v10681 = vmul.f32 %v10551, %v10551
      %v10682 = vmul.f32 %v10552, %v10552
      %v10683 = vmul.f32 %v10553, %v10553
      %v10684 = vmul.f32 %v10554, %v10554
      %v10685 = vmul.f32 %v10555, %v10555
      %v10686 = vmul.f32 %v10556, %v10556
      %v10687 = vmul.f32 %v10557, %v10557
      %10688 = vadd.xlane.f32.xlu0 %v10656
      %v10689 = vpop.xlane.xlu0 %10688
      %10690 = vadd.xlane.f32.xlu0 %v10657
      %v10691 = vpop.xlane.xlu0 %10690
      %10692 = vadd.xlane.f32.xlu0 %v10658
      %v10693 = vpop.xlane.xlu0 %10692
      %10694 = vadd.xlane.f32.xlu0 %v10659
      %v10695 = vpop.xlane.xlu0 %10694
      %10696 = vadd.xlane.f32.xlu0 %v10660
      %v10697 = vpop.xlane.xlu0 %10696
      %10698 = vadd.xlane.f32.xlu0 %v10661
      %v10699 = vpop.xlane.xlu0 %10698
      %10700 = vadd.xlane.f32.xlu0 %v10662
      %v10701 = vpop.xlane.xlu0 %10700
      %10702 = vadd.xlane.f32.xlu0 %v10663
      %v10703 = vpop.xlane.xlu0 %10702
      %10704 = vadd.xlane.f32.xlu0 %v10664
      %v10705 = vpop.xlane.xlu0 %10704
      %10706 = vadd.xlane.f32.xlu0 %v10665
      %v10707 = vpop.xlane.xlu0 %10706
      %10708 = vadd.xlane.f32.xlu0 %v10666
      %v10709 = vpop.xlane.xlu0 %10708
      %10710 = vadd.xlane.f32.xlu0 %v10667
      %v10711 = vpop.xlane.xlu0 %10710
      %10712 = vadd.xlane.f32.xlu0 %v10668
      %v10713 = vpop.xlane.xlu0 %10712
      %10714 = vadd.xlane.f32.xlu0 %v10669
      %v10715 = vpop.xlane.xlu0 %10714
      %10716 = vadd.xlane.f32.xlu0 %v10670
      %v10717 = vpop.xlane.xlu0 %10716
      %10718 = vadd.xlane.f32.xlu0 %v10671
      %v10719 = vpop.xlane.xlu0 %10718
      %10720 = vadd.xlane.f32.xlu0 %v10672
      %v10721 = vpop.xlane.xlu0 %10720
      %10722 = vadd.xlane.f32.xlu0 %v10673
      %v10723 = vpop.xlane.xlu0 %10722
      %10724 = vadd.xlane.f32.xlu0 %v10674
      %v10725 = vpop.xlane.xlu0 %10724
      %10726 = vadd.xlane.f32.xlu0 %v10675
      %v10727 = vpop.xlane.xlu0 %10726
      %10728 = vadd.xlane.f32.xlu0 %v10676
      %v10729 = vpop.xlane.xlu0 %10728
      %10730 = vadd.xlane.f32.xlu0 %v10677
      %v10731 = vpop.xlane.xlu0 %10730
      %10732 = vadd.xlane.f32.xlu0 %v10678
      %v10733 = vpop.xlane.xlu0 %10732
      %10734 = vadd.xlane.f32.xlu0 %v10679
      %v10735 = vpop.xlane.xlu0 %10734
      %10736 = vadd.xlane.f32.xlu0 %v10680
      %v10737 = vpop.xlane.xlu0 %10736
      %10738 = vadd.xlane.f32.xlu0 %v10681
      %v10739 = vpop.xlane.xlu0 %10738
      %10740 = vadd.xlane.f32.xlu0 %v10682
      %v10741 = vpop.xlane.xlu0 %10740
      %10742 = vadd.xlane.f32.xlu0 %v10683
      %v10743 = vpop.xlane.xlu0 %10742
      %10744 = vadd.xlane.f32.xlu0 %v10684
      %v10745 = vpop.xlane.xlu0 %10744
      %10746 = vadd.xlane.f32.xlu0 %v10685
      %v10747 = vpop.xlane.xlu0 %10746
      %10748 = vadd.xlane.f32.xlu0 %v10686
      %v10749 = vpop.xlane.xlu0 %10748
      %10750 = vadd.xlane.f32.xlu0 %v10687
      %v10751 = vpop.xlane.xlu0 %10750
      %v10752 = vmul.f32 %v10689, 0.125
      %v10753 = vmul.f32 %v10691, 0.125
      %v10754 = vmul.f32 %v10693, 0.125
      %v10755 = vmul.f32 %v10695, 0.125
      %v10756 = vmul.f32 %v10697, 0.125
      %v10757 = vmul.f32 %v10699, 0.125
      %v10758 = vmul.f32 %v10701, 0.125
      %v10759 = vmul.f32 %v10703, 0.125
      %v10760 = vmul.f32 %v10705, 0.125
      %v10761 = vmul.f32 %v10707, 0.125
      %v10762 = vmul.f32 %v10709, 0.125
      %v10763 = vmul.f32 %v10711, 0.125
      %v10764 = vmul.f32 %v10713, 0.125
      %v10765 = vmul.f32 %v10715, 0.125
      %v10766 = vmul.f32 %v10717, 0.125
      %v10767 = vmul.f32 %v10719, 0.125
      %v10768 = vmul.f32 %v10721, 0.125
      %v10769 = vmul.f32 %v10723, 0.125
      %v10770 = vmul.f32 %v10725, 0.125
      %v10771 = vmul.f32 %v10727, 0.125
      %v10772 = vmul.f32 %v10729, 0.125
      %v10773 = vmul.f32 %v10731, 0.125
      %v10774 = vmul.f32 %v10733, 0.125
      %v10775 = vmul.f32 %v10735, 0.125
      %v10776 = vmul.f32 %v10737, 0.125
      %v10777 = vmul.f32 %v10739, 0.125
      %v10778 = vmul.f32 %v10741, 0.125
      %v10779 = vmul.f32 %v10743, 0.125
      %v10780 = vmul.f32 %v10745, 0.125
      %v10781 = vmul.f32 %v10747, 0.125
      %v10782 = vmul.f32 %v10749, 0.125
      %v10783 = vmul.f32 %v10751, 0.125
      %v10784 = vmul.f32 %v10624, %v10624
      %v10785 = vmul.f32 %v10625, %v10625
      %v10786 = vmul.f32 %v10626, %v10626
      %v10787 = vmul.f32 %v10627, %v10627
      %v10788 = vmul.f32 %v10628, %v10628
      %v10789 = vmul.f32 %v10629, %v10629
      %v10790 = vmul.f32 %v10630, %v10630
      %v10791 = vmul.f32 %v10631, %v10631
      %v10792 = vmul.f32 %v10632, %v10632
      %v10793 = vmul.f32 %v10633, %v10633
      %v10794 = vmul.f32 %v10634, %v10634
      %v10795 = vmul.f32 %v10635, %v10635
      %v10796 = vmul.f32 %v10636, %v10636
      %v10797 = vmul.f32 %v10637, %v10637
      %v10798 = vmul.f32 %v10638, %v10638
      %v10799 = vmul.f32 %v10639, %v10639
      %v10800 = vmul.f32 %v10640, %v10640
      %v10801 = vmul.f32 %v10641, %v10641
      %v10802 = vmul.f32 %v10642, %v10642
      %v10803 = vmul.f32 %v10643, %v10643
      %v10804 = vmul.f32 %v10644, %v10644
      %v10805 = vmul.f32 %v10645, %v10645
      %v10806 = vmul.f32 %v10646, %v10646
      %v10807 = vmul.f32 %v10647, %v10647
      %v10808 = vmul.f32 %v10648, %v10648
      %v10809 = vmul.f32 %v10649, %v10649
      %v10810 = vmul.f32 %v10650, %v10650
      %v10811 = vmul.f32 %v10651, %v10651
      %v10812 = vmul.f32 %v10652, %v10652
      %v10813 = vmul.f32 %v10653, %v10653
      %v10814 = vmul.f32 %v10654, %v10654
      %v10815 = vmul.f32 %v10655, %v10655
      %v10816 = vsub.f32 %v10752, %v10784
      %v10817 = vsub.f32 %v10753, %v10785
      %v10818 = vsub.f32 %v10754, %v10786
      %v10819 = vsub.f32 %v10755, %v10787
      %v10820 = vsub.f32 %v10756, %v10788
      %v10821 = vsub.f32 %v10757, %v10789
      %v10822 = vsub.f32 %v10758, %v10790
      %v10823 = vsub.f32 %v10759, %v10791
      %v10824 = vsub.f32 %v10760, %v10792
      %v10825 = vsub.f32 %v10761, %v10793
      %v10826 = vsub.f32 %v10762, %v10794
      %v10827 = vsub.f32 %v10763, %v10795
      %v10828 = vsub.f32 %v10764, %v10796
      %v10829 = vsub.f32 %v10765, %v10797
      %v10830 = vsub.f32 %v10766, %v10798
      %v10831 = vsub.f32 %v10767, %v10799
      %v10832 = vsub.f32 %v10768, %v10800
      %v10833 = vsub.f32 %v10769, %v10801
      %v10834 = vsub.f32 %v10770, %v10802
      %v10835 = vsub.f32 %v10771, %v10803
      %v10836 = vsub.f32 %v10772, %v10804
      %v10837 = vsub.f32 %v10773, %v10805
      %v10838 = vsub.f32 %v10774, %v10806
      %v10839 = vsub.f32 %v10775, %v10807
      %v10840 = vsub.f32 %v10776, %v10808
      %v10841 = vsub.f32 %v10777, %v10809
      %v10842 = vsub.f32 %v10778, %v10810
      %v10843 = vsub.f32 %v10779, %v10811
      %v10844 = vsub.f32 %v10780, %v10812
      %v10845 = vsub.f32 %v10781, %v10813
      %v10846 = vsub.f32 %v10782, %v10814
      %v10847 = vsub.f32 %v10783, %v10815
      %v10848 = vsub.f32 %v10526, %v10624
      %v10849 = vsub.f32 %v10527, %v10625
      %v10850 = vsub.f32 %v10528, %v10626
      %v10851 = vsub.f32 %v10529, %v10627
      %v10852 = vsub.f32 %v10530, %v10628
      %v10853 = vsub.f32 %v10531, %v10629
      %v10854 = vsub.f32 %v10532, %v10630
      %v10855 = vsub.f32 %v10533, %v10631
      %v10856 = vsub.f32 %v10534, %v10632
      %v10857 = vsub.f32 %v10535, %v10633
      %v10858 = vsub.f32 %v10536, %v10634
      %v10859 = vsub.f32 %v10537, %v10635
      %v10860 = vsub.f32 %v10538, %v10636
      %v10861 = vsub.f32 %v10539, %v10637
      %v10862 = vsub.f32 %v10540, %v10638
      %v10863 = vsub.f32 %v10541, %v10639
      %v10864 = vsub.f32 %v10542, %v10640
      %v10865 = vsub.f32 %v10543, %v10641
      %v10866 = vsub.f32 %v10544, %v10642
      %v10867 = vsub.f32 %v10545, %v10643
      %v10868 = vsub.f32 %v10546, %v10644
      %v10869 = vsub.f32 %v10547, %v10645
      %v10870 = vsub.f32 %v10548, %v10646
      %v10871 = vsub.f32 %v10549, %v10647
      %v10872 = vsub.f32 %v10550, %v10648
      %v10873 = vsub.f32 %v10551, %v10649
      %v10874 = vsub.f32 %v10552, %v10650
      %v10875 = vsub.f32 %v10553, %v10651
      %v10876 = vsub.f32 %v10554, %v10652
      %v10877 = vsub.f32 %v10555, %v10653
      %v10878 = vsub.f32 %v10556, %v10654
      %v10879 = vsub.f32 %v10557, %v10655
      %v10880 = vadd.f32 %v10816, 1e-05
      %v10881 = vadd.f32 %v10817, 1e-05
      %v10882 = vadd.f32 %v10818, 1e-05
      %v10883 = vadd.f32 %v10819, 1e-05
      %v10884 = vadd.f32 %v10820, 1e-05
      %v10885 = vadd.f32 %v10821, 1e-05
      %v10886 = vadd.f32 %v10822, 1e-05
      %v10887 = vadd.f32 %v10823, 1e-05
      %v10888 = vadd.f32 %v10824, 1e-05
      %v10889 = vadd.f32 %v10825, 1e-05
      %v10890 = vadd.f32 %v10826, 1e-05
      %v10891 = vadd.f32 %v10827, 1e-05
      %v10892 = vadd.f32 %v10828, 1e-05
      %v10893 = vadd.f32 %v10829, 1e-05
      %v10894 = vadd.f32 %v10830, 1e-05
      %v10895 = vadd.f32 %v10831, 1e-05
      %v10896 = vadd.f32 %v10832, 1e-05
      %v10897 = vadd.f32 %v10833, 1e-05
      %v10898 = vadd.f32 %v10834, 1e-05
      %v10899 = vadd.f32 %v10835, 1e-05
      %v10900 = vadd.f32 %v10836, 1e-05
      %v10901 = vadd.f32 %v10837, 1e-05
      %v10902 = vadd.f32 %v10838, 1e-05
      %v10903 = vadd.f32 %v10839, 1e-05
      %v10904 = vadd.f32 %v10840, 1e-05
      %v10905 = vadd.f32 %v10841, 1e-05
      %v10906 = vadd.f32 %v10842, 1e-05
      %v10907 = vadd.f32 %v10843, 1e-05
      %v10908 = vadd.f32 %v10844, 1e-05
      %v10909 = vadd.f32 %v10845, 1e-05
      %v10910 = vadd.f32 %v10846, 1e-05
      %v10911 = vadd.f32 %v10847, 1e-05
      %v10912 = vrsqrt.pop %v10880
      %v10913 = vrsqrt.pop %v10881
      %v10914 = vrsqrt.pop %v10882
      %v10915 = vrsqrt.pop %v10883
      %v10916 = vrsqrt.pop %v10884
      %v10917 = vrsqrt.pop %v10885
      %v10918 = vrsqrt.pop %v10886
      %v10919 = vrsqrt.pop %v10887
      %v10920 = vrsqrt.pop %v10888
      %v10921 = vrsqrt.pop %v10889
      %v10922 = vrsqrt.pop %v10890
      %v10923 = vrsqrt.pop %v10891
      %v10924 = vrsqrt.pop %v10892
      %v10925 = vrsqrt.pop %v10893
      %v10926 = vrsqrt.pop %v10894
      %v10927 = vrsqrt.pop %v10895
      %v10928 = vrsqrt.pop %v10896
      %v10929 = vrsqrt.pop %v10897
      %v10930 = vrsqrt.pop %v10898
      %v10931 = vrsqrt.pop %v10899
      %v10932 = vrsqrt.pop %v10900
      %v10933 = vrsqrt.pop %v10901
      %v10934 = vrsqrt.pop %v10902
      %v10935 = vrsqrt.pop %v10903
      %v10936 = vrsqrt.pop %v10904
      %v10937 = vrsqrt.pop %v10905
      %v10938 = vrsqrt.pop %v10906
      %v10939 = vrsqrt.pop %v10907
      %v10940 = vrsqrt.pop %v10908
      %v10941 = vrsqrt.pop %v10909
      %v10942 = vrsqrt.pop %v10910
      %v10943 = vrsqrt.pop %v10911
      %v10944 = vmul.f32 %v10848, %v10912
      %v10945 = vmul.f32 %v10849, %v10913
      %v10946 = vmul.f32 %v10850, %v10914
      %v10947 = vmul.f32 %v10851, %v10915
      %v10948 = vmul.f32 %v10852, %v10916
      %v10949 = vmul.f32 %v10853, %v10917
      %v10950 = vmul.f32 %v10854, %v10918
      %v10951 = vmul.f32 %v10855, %v10919
      %v10952 = vmul.f32 %v10856, %v10920
      %v10953 = vmul.f32 %v10857, %v10921
      %v10954 = vmul.f32 %v10858, %v10922
      %v10955 = vmul.f32 %v10859, %v10923
      %v10956 = vmul.f32 %v10860, %v10924
      %v10957 = vmul.f32 %v10861, %v10925
      %v10958 = vmul.f32 %v10862, %v10926
      %v10959 = vmul.f32 %v10863, %v10927
      %v10960 = vmul.f32 %v10864, %v10928
      %v10961 = vmul.f32 %v10865, %v10929
      %v10962 = vmul.f32 %v10866, %v10930
      %v10963 = vmul.f32 %v10867, %v10931
      %v10964 = vmul.f32 %v10868, %v10932
      %v10965 = vmul.f32 %v10869, %v10933
      %v10966 = vmul.f32 %v10870, %v10934
      %v10967 = vmul.f32 %v10871, %v10935
      %v10968 = vmul.f32 %v10872, %v10936
      %v10969 = vmul.f32 %v10873, %v10937
      %v10970 = vmul.f32 %v10874, %v10938
      %v10971 = vmul.f32 %v10875, %v10939
      %v10972 = vmul.f32 %v10876, %v10940
      %v10973 = vmul.f32 %v10877, %v10941
      %v10974 = vmul.f32 %v10878, %v10942
      %v10975 = vmul.f32 %v10879, %v10943
      %v10977 = vlaneseq
      %v10978 = vshrl.u32 %v10977, 7
      %v10979 = vsub.s32 0, %v10978
      %v10980 = vrot.slane %v10558, %v10979
      %v10982 = vmul.f32 %v10944, %v10980
      %v10983 = vmul.f32 %v10945, %v10980
      %v10984 = vmul.f32 %v10946, %v10980
      %v10985 = vmul.f32 %v10947, %v10980
      %v10986 = vmul.f32 %v10948, %v10980
      %v10987 = vmul.f32 %v10949, %v10980
      %v10988 = vmul.f32 %v10950, %v10980
      %v10989 = vmul.f32 %v10951, %v10980
      %v10990 = vmul.f32 %v10952, %v10980
      %v10991 = vmul.f32 %v10953, %v10980
      %v10992 = vmul.f32 %v10954, %v10980
      %v10993 = vmul.f32 %v10955, %v10980
      %v10994 = vmul.f32 %v10956, %v10980
      %v10995 = vmul.f32 %v10957, %v10980
      %v10996 = vmul.f32 %v10958, %v10980
      %v10997 = vmul.f32 %v10959, %v10980
      %v10998 = vmul.f32 %v10960, %v10980
      %v10999 = vmul.f32 %v10961, %v10980
      %v11000 = vmul.f32 %v10962, %v10980
      %v11001 = vmul.f32 %v10963, %v10980
      %v11002 = vmul.f32 %v10964, %v10980
      %v11003 = vmul.f32 %v10965, %v10980
      %v11004 = vmul.f32 %v10966, %v10980
      %v11005 = vmul.f32 %v10967, %v10980
      %v11006 = vmul.f32 %v10968, %v10980
      %v11007 = vmul.f32 %v10969, %v10980
      %v11008 = vmul.f32 %v10970, %v10980
      %v11009 = vmul.f32 %v10971, %v10980
      %v11010 = vmul.f32 %v10972, %v10980
      %v11011 = vmul.f32 %v10973, %v10980
      %v11012 = vmul.f32 %v10974, %v10980
      %v11013 = vmul.f32 %v10975, %v10980
      %v11015 = vlaneseq
      %v11016 = vshrl.u32 %v11015, 7
      %v11017 = vsub.s32 0, %v11016
      %v11018 = vrot.slane %v10559, %v11017
      %v11020 = vadd.f32 %v10982, %v11018
      %v11021 = vadd.f32 %v10983, %v11018
      %v11022 = vadd.f32 %v10984, %v11018
      %v11023 = vadd.f32 %v10985, %v11018
      %v11024 = vadd.f32 %v10986, %v11018
      %v11025 = vadd.f32 %v10987, %v11018
      %v11026 = vadd.f32 %v10988, %v11018
      %v11027 = vadd.f32 %v10989, %v11018
      %v11028 = vadd.f32 %v10990, %v11018
      %v11029 = vadd.f32 %v10991, %v11018
      %v11030 = vadd.f32 %v10992, %v11018
      %v11031 = vadd.f32 %v10993, %v11018
      %v11032 = vadd.f32 %v10994, %v11018
      %v11033 = vadd.f32 %v10995, %v11018
      %v11034 = vadd.f32 %v10996, %v11018
      %v11035 = vadd.f32 %v10997, %v11018
      %v11036 = vadd.f32 %v10998, %v11018
      %v11037 = vadd.f32 %v10999, %v11018
      %v11038 = vadd.f32 %v11000, %v11018
      %v11039 = vadd.f32 %v11001, %v11018
      %v11040 = vadd.f32 %v11002, %v11018
      %v11041 = vadd.f32 %v11003, %v11018
      %v11042 = vadd.f32 %v11004, %v11018
      %v11043 = vadd.f32 %v11005, %v11018
      %v11044 = vadd.f32 %v11006, %v11018
      %v11045 = vadd.f32 %v11007, %v11018
      %v11046 = vadd.f32 %v11008, %v11018
      %v11047 = vadd.f32 %v11009, %v11018
      %v11048 = vadd.f32 %v11010, %v11018
      %v11049 = vadd.f32 %v11011, %v11018
      %v11050 = vadd.f32 %v11012, %v11018
      %v11051 = vadd.f32 %v11013, %v11018
      %v11052 = vld [vmem:[%s408 + $0xc] sm:$0xf]
      %v11053 = vld [vmem:[%s408 + $0x10] sm:$0xf]
      %v11054 = vld [vmem:[%s408 + $0x14] sm:$0xf]
      %v11055 = vld [vmem:[%s408 + $0x18] sm:$0xf]
      %v11056 = vld [vmem:[%s408 + $0x1c] sm:$0xf]
      %v11057 = vld [vmem:[%s408 + $0x20] sm:$0xf]
      %v11058 = vld [vmem:[%s408 + $0x24] sm:$0xf]
      %v11059 = vld [vmem:[%s408 + $0x28] sm:$0xf]
      %v11060 = vld [vmem:[%s408 + $0x2c] sm:$0xf]
      %v11061 = vld [vmem:[%s408 + $0x30] sm:$0xf]
      %v11062 = vld [vmem:[%s408 + $0x34] sm:$0xf]
      %v11063 = vld [vmem:[%s408 + $0x38] sm:$0xf]
      %v11064 = vld [vmem:[%s408 + $0x3c] sm:$0xf]
      %v11065 = vld [vmem:[%s408 + $0x40] sm:$0xf]
      %v11066 = vld [vmem:[%s408 + $0x44] sm:$0xf]
      %v11067 = vld [vmem:[%s408 + $0x48] sm:$0xf]
      %v11068 = vld [vmem:[%s408 + $0x4c] sm:$0xf]
      %v11069 = vld [vmem:[%s408 + $0x50] sm:$0xf]
      %v11070 = vld [vmem:[%s408 + $0x54] sm:$0xf]
      %v11071 = vld [vmem:[%s408 + $0x58] sm:$0xf]
      %v11072 = vld [vmem:[%s408 + $0x5c] sm:$0xf]
      %v11073 = vld [vmem:[%s408 + $0x60] sm:$0xf]
      %v11074 = vld [vmem:[%s408 + $0x64] sm:$0xf]
      %v11075 = vld [vmem:[%s408 + $0x68] sm:$0xf]
      %v11076 = vld [vmem:[%s408 + $0x6c] sm:$0xf]
      %v11077 = vld [vmem:[%s408 + $0x70] sm:$0xf]
      %v11078 = vld [vmem:[%s408 + $0x74] sm:$0xf]
      %v11079 = vld [vmem:[%s408 + $0x78] sm:$0xf]
      %v11080 = vld [vmem:[%s408 + $0x7c] sm:$0xf]
      %v11081 = vld [vmem:[%s408 + $0x80] sm:$0xf]
      %v11082 = vld [vmem:[%s408 + $0x84] sm:$0xf]
      %v11083 = vld [vmem:[%s408 + $0x88] sm:$0xf]
      %v11084 = vld [vmem:[%s408 + $0x8c] sm:$0xf]
      %v11085 = vld [vmem:[%s408 + $0x90] sm:$0xf]
      %v11086 = vld [vmem:[%s408 + $0x94] sm:$0xf]
      %v11087 = vld [vmem:[%s408 + $0x98] sm:$0xf]
      %v11088 = vld [vmem:[%s408 + $0x9c] sm:$0xf]
      %v11089 = vld [vmem:[%s408 + $0xa0] sm:$0xf]
      %v11090 = vld [vmem:[%s408 + $0xa4] sm:$0xf]
      %v11091 = vld [vmem:[%s408 + $0xa8] sm:$0xf]
      %v11092 = vld [vmem:[%s408 + $0xac] sm:$0xf]
      %v11093 = vld [vmem:[%s408 + $0xb0] sm:$0xf]
      %v11094 = vld [vmem:[%s408 + $0xb4] sm:$0xf]
      %v11095 = vld [vmem:[%s408 + $0xb8] sm:$0xf]
      %v11096 = vld [vmem:[%s408 + $0xbc] sm:$0xf]
      %v11097 = vld [vmem:[%s408 + $0xc0] sm:$0xf]
      %v11098 = vld [vmem:[%s408 + $0xc4] sm:$0xf]
      %v11099 = vld [vmem:[%s408 + $0xc8] sm:$0xf]
      %v11100 = vld [vmem:[%s408 + $0xcc] sm:$0x1]
      %v11101 = vld [vmem:[%s10] sm:$0xf]
      %v11102 = vld [vmem:[%s10 + $0x4] sm:$0xf]
      %v11103 = vld [vmem:[%s10 + $0x8] sm:$0xf]
      %v11104 = vld [vmem:[%s10 + $0xc] sm:$0xf]
      %v11105 = vld [vmem:[%s10 + $0x10] sm:$0xf]
      %v11106 = vld [vmem:[%s10 + $0x14] sm:$0xf]
      %v11107 = vld [vmem:[%s10 + $0x18] sm:$0xf]
      %v11108 = vld [vmem:[%s10 + $0x1c] sm:$0xf]
      %v11109 = vld [vmem:[%s10 + $0x20] sm:$0xf]
      %v11110 = vld [vmem:[%s10 + $0x24] sm:$0xf]
      %v11111 = vld [vmem:[%s10 + $0x28] sm:$0xf]
      %v11112 = vld [vmem:[%s10 + $0x2c] sm:$0xf]
      %v11113 = vld [vmem:[%s10 + $0x30] sm:$0xf]
      %v11114 = vld [vmem:[%s10 + $0x34] sm:$0xf]
      %v11115 = vld [vmem:[%s10 + $0x38] sm:$0xf]
      %v11116 = vld [vmem:[%s10 + $0x3c] sm:$0xf]
      %v11117 = vld [vmem:[%s11] sm:$0x1]
      %v11119 = vlaneseq
      %v11120 = vshrl.u32 %v11119, 7
      %v11121 = vsub.s32 0, %v11120
      %v11122 = vrot.slane %v11117, %v11121
      %v11173 = vunpack.c.l.b16 %v11052
      %v11174 = vunpack.c.l.b16 %v11053
      %v11175 = vunpack.c.l.b16 %v11054
      %v11176 = vunpack.c.l.b16 %v11055
      %v11177 = vunpack.c.l.b16 %v11056
      %v11178 = vunpack.c.l.b16 %v11057
      %v11179 = vunpack.c.l.b16 %v11058
      %v11180 = vunpack.c.l.b16 %v11059
      %v11181 = vunpack.c.l.b16 %v11060
      %v11182 = vunpack.c.l.b16 %v11061
      %v11183 = vunpack.c.l.b16 %v11062
      %v11184 = vunpack.c.l.b16 %v11063
      %v11185 = vunpack.c.l.b16 %v11064
      %v11186 = vunpack.c.l.b16 %v11065
      %v11187 = vunpack.c.l.b16 %v11066
      %v11188 = vunpack.c.l.b16 %v11067
      %v11189 = vunpack.c.l.b16 %v11068
      %v11190 = vunpack.c.l.b16 %v11069
      %v11191 = vunpack.c.l.b16 %v11070
      %v11192 = vunpack.c.l.b16 %v11071
      %v11193 = vunpack.c.l.b16 %v11072
      %v11194 = vunpack.c.l.b16 %v11073
      %v11195 = vunpack.c.l.b16 %v11074
      %v11196 = vunpack.c.l.b16 %v11075
      %v11197 = vunpack.c.l.b16 %v11076
      %v11198 = vunpack.c.l.b16 %v11077
      %v11199 = vunpack.c.l.b16 %v11078
      %v11200 = vunpack.c.l.b16 %v11079
      %v11201 = vunpack.c.l.b16 %v11080
      %v11202 = vunpack.c.l.b16 %v11081
      %v11203 = vunpack.c.l.b16 %v11082
      %v11204 = vunpack.c.l.b16 %v11083
      %v11205 = vunpack.c.l.b16 %v11084
      %v11206 = vunpack.c.l.b16 %v11085
      %v11207 = vunpack.c.l.b16 %v11086
      %v11208 = vunpack.c.l.b16 %v11087
      %v11209 = vunpack.c.l.b16 %v11088
      %v11210 = vunpack.c.l.b16 %v11089
      %v11211 = vunpack.c.l.b16 %v11090
      %v11212 = vunpack.c.l.b16 %v11091
      %v11213 = vunpack.c.l.b16 %v11092
      %v11214 = vunpack.c.l.b16 %v11093
      %v11215 = vunpack.c.l.b16 %v11094
      %v11216 = vunpack.c.l.b16 %v11095
      %v11217 = vunpack.c.l.b16 %v11096
      %v11218 = vunpack.c.l.b16 %v11097
      %v11219 = vunpack.c.l.b16 %v11098
      %v11220 = vunpack.c.l.b16 %v11099
      %v11221 = vunpack.c.l.b16 %v11100
      %v11222 = vpack.c.b16 %v11174, %v11173
      %v11223 = vpack.c.b16 %v11176, %v11175
      %v11224 = vpack.c.b16 %v11178, %v11177
      %v11225 = vpack.c.b16 %v11180, %v11179
      %v11226 = vpack.c.b16 %v11182, %v11181
      %v11227 = vpack.c.b16 %v11184, %v11183
      %v11228 = vpack.c.b16 %v11186, %v11185
      %v11229 = vpack.c.b16 %v11188, %v11187
      %v11230 = vpack.c.b16 %v11190, %v11189
      %v11231 = vpack.c.b16 %v11192, %v11191
      %v11232 = vpack.c.b16 %v11194, %v11193
      %v11233 = vpack.c.b16 %v11196, %v11195
      %v11234 = vpack.c.b16 %v11198, %v11197
      %v11235 = vpack.c.b16 %v11200, %v11199
      %v11236 = vpack.c.b16 %v11202, %v11201
      %v11237 = vpack.c.b16 %v11204, %v11203
      %v11238 = vpack.c.b16 %v11206, %v11205
      %v11239 = vpack.c.b16 %v11208, %v11207
      %v11240 = vpack.c.b16 %v11210, %v11209
      %v11241 = vpack.c.b16 %v11212, %v11211
      %v11242 = vpack.c.b16 %v11214, %v11213
      %v11243 = vpack.c.b16 %v11216, %v11215
      %v11244 = vpack.c.b16 %v11218, %v11217
      %v11245 = vpack.c.b16 %v11220, %v11219
      %v11246 = vpack.c.b16 %v11221, %v11221
      %v11248 = vshrl.u32 %v11222, 16
      %v11250 = vshll.u32 %v11222, 16
      %v11252 = vrot.slane %v11250, 1
      %v11253 = vor.u32 %v11248, %v11252
      %v11255 = vshll.u32 %v11223, 16
      %v11257 = vrot.slane %v11255, 1
      %v11258 = vsel %vm620, %v11253, %v11257
      %v11259 = vshrl.u32 %v11223, 16
      %v11261 = vor.u32 %v11259, %v11257
      %v11263 = vshll.u32 %v11224, 16
      %v11265 = vrot.slane %v11263, 1
      %v11266 = vsel %vm620, %v11261, %v11265
      %v11267 = vshrl.u32 %v11224, 16
      %v11269 = vor.u32 %v11267, %v11265
      %v11271 = vshll.u32 %v11225, 16
      %v11273 = vrot.slane %v11271, 1
      %v11274 = vsel %vm620, %v11269, %v11273
      %v11275 = vshrl.u32 %v11225, 16
      %v11277 = vor.u32 %v11275, %v11273
      %v11279 = vshll.u32 %v11226, 16
      %v11281 = vrot.slane %v11279, 1
      %v11282 = vsel %vm620, %v11277, %v11281
      %v11283 = vshrl.u32 %v11226, 16
      %v11285 = vor.u32 %v11283, %v11281
      %v11287 = vshll.u32 %v11227, 16
      %v11289 = vrot.slane %v11287, 1
      %v11290 = vsel %vm620, %v11285, %v11289
      %v11291 = vshrl.u32 %v11227, 16
      %v11293 = vor.u32 %v11291, %v11289
      %v11295 = vshll.u32 %v11228, 16
      %v11297 = vrot.slane %v11295, 1
      %v11298 = vsel %vm620, %v11293, %v11297
      %v11299 = vshrl.u32 %v11228, 16
      %v11301 = vor.u32 %v11299, %v11297
      %v11303 = vshll.u32 %v11229, 16
      %v11305 = vrot.slane %v11303, 1
      %v11306 = vsel %vm620, %v11301, %v11305
      %v11307 = vshrl.u32 %v11229, 16
      %v11309 = vor.u32 %v11307, %v11305
      %v11311 = vshll.u32 %v11230, 16
      %v11313 = vrot.slane %v11311, 1
      %v11314 = vsel %vm620, %v11309, %v11313
      %v11315 = vshrl.u32 %v11230, 16
      %v11317 = vor.u32 %v11315, %v11313
      %v11319 = vshll.u32 %v11231, 16
      %v11321 = vrot.slane %v11319, 1
      %v11322 = vsel %vm620, %v11317, %v11321
      %v11323 = vshrl.u32 %v11231, 16
      %v11325 = vor.u32 %v11323, %v11321
      %v11327 = vshll.u32 %v11232, 16
      %v11329 = vrot.slane %v11327, 1
      %v11330 = vsel %vm620, %v11325, %v11329
      %v11331 = vshrl.u32 %v11232, 16
      %v11333 = vor.u32 %v11331, %v11329
      %v11335 = vshll.u32 %v11233, 16
      %v11337 = vrot.slane %v11335, 1
      %v11338 = vsel %vm620, %v11333, %v11337
      %v11339 = vshrl.u32 %v11233, 16
      %v11341 = vor.u32 %v11339, %v11337
      %v11343 = vshll.u32 %v11234, 16
      %v11345 = vrot.slane %v11343, 1
      %v11346 = vsel %vm620, %v11341, %v11345
      %v11347 = vshrl.u32 %v11234, 16
      %v11349 = vor.u32 %v11347, %v11345
      %v11351 = vshll.u32 %v11235, 16
      %v11353 = vrot.slane %v11351, 1
      %v11354 = vsel %vm620, %v11349, %v11353
      %v11355 = vshrl.u32 %v11235, 16
      %v11357 = vor.u32 %v11355, %v11353
      %v11359 = vshll.u32 %v11236, 16
      %v11361 = vrot.slane %v11359, 1
      %v11362 = vsel %vm620, %v11357, %v11361
      %v11363 = vshrl.u32 %v11236, 16
      %v11365 = vor.u32 %v11363, %v11361
      %v11367 = vshll.u32 %v11237, 16
      %v11369 = vrot.slane %v11367, 1
      %v11370 = vsel %vm620, %v11365, %v11369
      %v11371 = vshrl.u32 %v11237, 16
      %v11373 = vor.u32 %v11371, %v11369
      %v11375 = vshll.u32 %v11238, 16
      %v11377 = vrot.slane %v11375, 1
      %v11378 = vsel %vm620, %v11373, %v11377
      %v11379 = vshrl.u32 %v11238, 16
      %v11381 = vor.u32 %v11379, %v11377
      %v11383 = vshll.u32 %v11239, 16
      %v11385 = vrot.slane %v11383, 1
      %v11386 = vsel %vm620, %v11381, %v11385
      %v11387 = vshrl.u32 %v11239, 16
      %v11389 = vor.u32 %v11387, %v11385
      %v11391 = vshll.u32 %v11240, 16
      %v11393 = vrot.slane %v11391, 1
      %v11394 = vsel %vm620, %v11389, %v11393
      %v11395 = vshrl.u32 %v11240, 16
      %v11397 = vor.u32 %v11395, %v11393
      %v11399 = vshll.u32 %v11241, 16
      %v11401 = vrot.slane %v11399, 1
      %v11402 = vsel %vm620, %v11397, %v11401
      %v11403 = vshrl.u32 %v11241, 16
      %v11405 = vor.u32 %v11403, %v11401
      %v11407 = vshll.u32 %v11242, 16
      %v11409 = vrot.slane %v11407, 1
      %v11410 = vsel %vm620, %v11405, %v11409
      %v11411 = vshrl.u32 %v11242, 16
      %v11413 = vor.u32 %v11411, %v11409
      %v11415 = vshll.u32 %v11243, 16
      %v11417 = vrot.slane %v11415, 1
      %v11418 = vsel %vm620, %v11413, %v11417
      %v11419 = vshrl.u32 %v11243, 16
      %v11421 = vor.u32 %v11419, %v11417
      %v11423 = vshll.u32 %v11244, 16
      %v11425 = vrot.slane %v11423, 1
      %v11426 = vsel %vm620, %v11421, %v11425
      %v11427 = vshrl.u32 %v11244, 16
      %v11429 = vor.u32 %v11427, %v11425
      %v11431 = vshll.u32 %v11245, 16
      %v11433 = vrot.slane %v11431, 1
      %v11434 = vsel %vm620, %v11429, %v11433
      %v11435 = vshrl.u32 %v11245, 16
      %v11437 = vor.u32 %v11435, %v11433
      %v11439 = vshll.u32 %v11246, 16
      %v11441 = vrot.slane %v11439, 1
      %v11442 = vsel %vm620, %v11437, %v11441
      %v11483 = vunpack.c.l.b16 %v11101
      %v11484 = vunpack.c.l.b16 %v11102
      %v11485 = vunpack.c.l.b16 %v11103
      %v11486 = vunpack.c.l.b16 %v11104
      %v11487 = vunpack.c.l.b16 %v11105
      %v11488 = vunpack.c.l.b16 %v11106
      %v11489 = vunpack.c.l.b16 %v11107
      %v11490 = vunpack.c.l.b16 %v11108
      %v11491 = vunpack.c.l.b16 %v11109
      %v11492 = vunpack.c.l.b16 %v11110
      %v11493 = vunpack.c.l.b16 %v11111
      %v11494 = vunpack.c.l.b16 %v11112
      %v11495 = vunpack.c.l.b16 %v11113
      %v11496 = vunpack.c.l.b16 %v11114
      %v11497 = vunpack.c.l.b16 %v11115
      %v11498 = vunpack.c.l.b16 %v11116
      %v11499 = vpack.c.b16 %v11484, %v11483
      %v11500 = vpack.c.b16 %v11486, %v11485
      %v11501 = vpack.c.b16 %v11488, %v11487
      %v11502 = vpack.c.b16 %v11490, %v11489
      %v11503 = vpack.c.b16 %v11492, %v11491
      %v11504 = vpack.c.b16 %v11494, %v11493
      %v11505 = vpack.c.b16 %v11496, %v11495
      %v11506 = vpack.c.b16 %v11498, %v11497
      %11515 = vmatprep.subr.bf16.mxu0 0
      %11516 = vmatpush1.bf16.msra.mxu0 %v11499
      %11517 = vmatprep.subr.bf16.mxu0 0
      %11518 = vmatpush1.bf16.msra.mxu0 %v11500
      %11519 = vmatprep.subr.bf16.mxu0 0
      %11520 = vmatpush1.bf16.msra.mxu0 %v11501
      %11521 = vmatprep.subr.bf16.mxu0 0
      %11522 = vmatpush1.bf16.msra.mxu0 %v11502
      %11523 = vmatprep.subr.bf16.mxu0 0
      %11524 = vmatpush1.bf16.msra.mxu0 %v11503
      %11525 = vmatprep.subr.bf16.mxu0 0
      %11526 = vmatpush1.bf16.msra.mxu0 %v11504
      %11527 = vmatprep.subr.bf16.mxu0 0
      %11528 = vmatpush1.bf16.msra.mxu0 %v11505
      %11529 = vmatprep.subr.bf16.mxu0 0
      %11530 = vmatpush1.bf16.msra.mxu0 %v11506
      %11531 = vmatprep.subr.bf16.mxu0 0
      %11532 = vmatpush1.bf16.msra.mxu0 0
      %11533 = vmatprep.subr.bf16.mxu0 0
      %11534 = vmatpush1.bf16.msra.mxu0 0
      %11535 = vmatprep.subr.bf16.mxu0 0
      %11536 = vmatpush1.bf16.msra.mxu0 0
      %11537 = vmatprep.subr.bf16.mxu0 0
      %11538 = vmatpush1.bf16.msra.mxu0 0
      %11539 = vmatprep.subr.bf16.mxu0 0
      %11540 = vmatpush1.bf16.msra.mxu0 0
      %11541 = vmatprep.subr.bf16.mxu0 0
      %11542 = vmatpush1.bf16.msra.mxu0 0
      %11543 = vmatprep.subr.bf16.mxu0 0
      %11544 = vmatpush1.bf16.msra.mxu0 0
      %11545 = vmatprep.subr.bf16.mxu0 0
      %11546 = vmatpush1.bf16.msra.mxu0 0
      %11547 = vmatprep.mubr.bf16.mxu0 0
      %11548 = vmatmul.mubr.bf16.gmra.mrb[0].mxu0 %v11258
      %v11549 = vpop.f32.mrb[0].mxu0
      %v11550 = vadd.f32 %v11122, %v11549
      %v11551 = vpop.f32.mrb[0].mxu0
      %v11552 = vpop.f32.mrb[0].mxu0
      %v11553 = vadd.f32 %v11122, %v11552
      %v11554 = vpop.f32.mrb[0].mxu0
      %11555 = vmatprep.mubr.bf16.mxu0 0
      %11556 = vmatmul.mubr.bf16.gmra.mrb[0].mxu0 %v11266
      %v11557 = vpop.f32.mrb[0].mxu0
      %v11558 = vpop.f32.mrb[0].mxu0
      %v11559 = vpop.f32.mrb[0].mxu0
      %v11560 = vadd.f32 %v11122, %v11559
      %v11561 = vpop.f32.mrb[0].mxu0
      %11562 = vmatprep.mubr.bf16.mxu0 0
      %11563 = vmatmul.mubr.bf16.gmra.mrb[0].mxu0 %v11274
      %v11564 = vpop.f32.mrb[0].mxu0
      %v11565 = vadd.f32 %v11122, %v11564
      %v11566 = vpop.f32.mrb[0].mxu0
      %v11567 = vpop.f32.mrb[0].mxu0
      %v11568 = vpop.f32.mrb[0].mxu0
      %11569 = vmatprep.mubr.bf16.mxu0 0
      %11570 = vmatmul.mubr.bf16.gmra.mrb[0].mxu0 %v11282
      %v11571 = vpop.f32.mrb[0].mxu0
      %v11572 = vadd.f32 %v11122, %v11571
      %v11573 = vpop.f32.mrb[0].mxu0
      %v11574 = vpop.f32.mrb[0].mxu0
      %v11575 = vadd.f32 %v11122, %v11574
      %v11576 = vpop.f32.mrb[0].mxu0
      %11577 = vmatprep.mubr.bf16.mxu0 0
      %11578 = vmatmul.mubr.bf16.gmra.mrb[0].mxu0 %v11290
      %v11579 = vpop.f32.mrb[0].mxu0
      %v11580 = vpop.f32.mrb[0].mxu0
      %v11581 = vpop.f32.mrb[0].mxu0
      %v11582 = vadd.f32 %v11122, %v11581
      %v11583 = vpop.f32.mrb[0].mxu0
      %11584 = vmatprep.mubr.bf16.mxu0 0
      %11585 = vmatmul.mubr.bf16.gmra.mrb[0].mxu0 %v11298
      %v11586 = vpop.f32.mrb[0].mxu0
      %v11587 = vadd.f32 %v11122, %v11586
      %v11588 = vpop.f32.mrb[0].mxu0
      %v11589 = vpop.f32.mrb[0].mxu0
      %v11590 = vpop.f32.mrb[0].mxu0
      %11591 = vmatprep.mubr.bf16.mxu0 0
      %11592 = vmatmul.mubr.bf16.gmra.mrb[0].mxu0 %v11306
      %v11593 = vpop.f32.mrb[0].mxu0
      %v11594 = vadd.f32 %v11122, %v11593
      %v11595 = vpop.f32.mrb[0].mxu0
      %v11596 = vpop.f32.mrb[0].mxu0
      %v11597 = vadd.f32 %v11122, %v11596
      %v11598 = vpop.f32.mrb[0].mxu0
      %11599 = vmatprep.mubr.bf16.mxu0 0
      %11600 = vmatmul.mubr.bf16.gmra.mrb[0].mxu0 %v11314
      %v11601 = vpop.f32.mrb[0].mxu0
      %v11602 = vpop.f32.mrb[0].mxu0
      %v11603 = vpop.f32.mrb[0].mxu0
      %v11604 = vadd.f32 %v11122, %v11603
      %v11605 = vpop.f32.mrb[0].mxu0
      %11606 = vmatprep.mubr.bf16.mxu0 0
      %11607 = vmatmul.mubr.bf16.gmra.mrb[0].mxu0 %v11322
      %v11608 = vpop.f32.mrb[0].mxu0
      %v11609 = vadd.f32 %v11122, %v11608
      %v11610 = vpop.f32.mrb[0].mxu0
      %v11611 = vpop.f32.mrb[0].mxu0
      %v11612 = vpop.f32.mrb[0].mxu0
      %11613 = vmatprep.mubr.bf16.mxu0 0
      %11614 = vmatmul.mubr.bf16.gmra.mrb[0].mxu0 %v11330
      %v11615 = vpop.f32.mrb[0].mxu0
      %v11616 = vadd.f32 %v11122, %v11615
      %v11617 = vpop.f32.mrb[0].mxu0
      %v11618 = vpop.f32.mrb[0].mxu0
      %v11619 = vadd.f32 %v11122, %v11618
      %v11620 = vpop.f32.mrb[0].mxu0
      %11621 = vmatprep.mubr.bf16.mxu0 0
      %11622 = vmatmul.mubr.bf16.gmra.mrb[0].mxu0 %v11338
      %v11623 = vpop.f32.mrb[0].mxu0
      %v11624 = vpop.f32.mrb[0].mxu0
      %v11625 = vpop.f32.mrb[0].mxu0
      %v11626 = vadd.f32 %v11122, %v11625
      %v11627 = vpop.f32.mrb[0].mxu0
      %11628 = vmatprep.mubr.bf16.mxu0 0
      %11629 = vmatmul.mubr.bf16.gmra.mrb[0].mxu0 %v11346
      %v11630 = vpop.f32.mrb[0].mxu0
      %v11631 = vadd.f32 %v11122, %v11630
      %v11632 = vpop.f32.mrb[0].mxu0
      %v11633 = vpop.f32.mrb[0].mxu0
      %v11634 = vpop.f32.mrb[0].mxu0
      %11635 = vmatprep.mubr.bf16.mxu0 0
      %11636 = vmatmul.mubr.bf16.gmra.mrb[0].mxu0 %v11354
      %v11637 = vpop.f32.mrb[0].mxu0
      %v11638 = vadd.f32 %v11122, %v11637
      %v11639 = vpop.f32.mrb[0].mxu0
      %v11640 = vpop.f32.mrb[0].mxu0
      %v11641 = vadd.f32 %v11122, %v11640
      %v11642 = vpop.f32.mrb[0].mxu0
      %11643 = vmatprep.mubr.bf16.mxu0 0
      %11644 = vmatmul.mubr.bf16.gmra.mrb[0].mxu0 %v11362
      %v11645 = vpop.f32.mrb[0].mxu0
      %v11646 = vpop.f32.mrb[0].mxu0
      %v11647 = vpop.f32.mrb[0].mxu0
      %v11648 = vadd.f32 %v11122, %v11647
      %v11649 = vpop.f32.mrb[0].mxu0
      %11650 = vmatprep.mubr.bf16.mxu0 0
      %11651 = vmatmul.mubr.bf16.gmra.mrb[0].mxu0 %v11370
      %v11652 = vpop.f32.mrb[0].mxu0
      %v11653 = vadd.f32 %v11122, %v11652
      %v11654 = vpop.f32.mrb[0].mxu0
      %v11655 = vpop.f32.mrb[0].mxu0
      %v11656 = vpop.f32.mrb[0].mxu0
      %11657 = vmatprep.mubr.bf16.mxu0 0
      %11658 = vmatmul.mubr.bf16.gmra.mrb[0].mxu0 %v11378
      %v11659 = vpop.f32.mrb[0].mxu0
      %v11660 = vadd.f32 %v11122, %v11659
      %v11661 = vpop.f32.mrb[0].mxu0
      %v11662 = vpop.f32.mrb[0].mxu0
      %v11663 = vadd.f32 %v11122, %v11662
      %v11664 = vpop.f32.mrb[0].mxu0
      %11665 = vmatprep.mubr.bf16.mxu0 0
      %11666 = vmatmul.mubr.bf16.gmra.mrb[0].mxu0 %v11386
      %v11667 = vpop.f32.mrb[0].mxu0
      %v11668 = vpop.f32.mrb[0].mxu0
      %v11669 = vpop.f32.mrb[0].mxu0
      %v11670 = vadd.f32 %v11122, %v11669
      %v11671 = vpop.f32.mrb[0].mxu0
      %11672 = vmatprep.mubr.bf16.mxu0 0
      %11673 = vmatmul.mubr.bf16.gmra.mrb[0].mxu0 %v11394
      %v11674 = vpop.f32.mrb[0].mxu0
      %v11675 = vadd.f32 %v11122, %v11674
      %v11676 = vpop.f32.mrb[0].mxu0
      %v11677 = vpop.f32.mrb[0].mxu0
      %v11678 = vpop.f32.mrb[0].mxu0
      %11679 = vmatprep.mubr.bf16.mxu0 0
      %11680 = vmatmul.mubr.bf16.gmra.mrb[0].mxu0 %v11402
      %v11681 = vpop.f32.mrb[0].mxu0
      %v11682 = vadd.f32 %v11122, %v11681
      %v11683 = vpop.f32.mrb[0].mxu0
      %v11684 = vpop.f32.mrb[0].mxu0
      %v11685 = vadd.f32 %v11122, %v11684
      %v11686 = vpop.f32.mrb[0].mxu0
      %11687 = vmatprep.mubr.bf16.mxu0 0
      %11688 = vmatmul.mubr.bf16.gmra.mrb[0].mxu0 %v11410
      %v11689 = vpop.f32.mrb[0].mxu0
      %v11690 = vpop.f32.mrb[0].mxu0
      %v11691 = vpop.f32.mrb[0].mxu0
      %v11692 = vadd.f32 %v11122, %v11691
      %v11693 = vpop.f32.mrb[0].mxu0
      %11694 = vmatprep.mubr.bf16.mxu0 0
      %11695 = vmatmul.mubr.bf16.gmra.mrb[0].mxu0 %v11418
      %v11696 = vpop.f32.mrb[0].mxu0
      %v11697 = vadd.f32 %v11122, %v11696
      %v11698 = vpop.f32.mrb[0].mxu0
      %v11699 = vpop.f32.mrb[0].mxu0
      %v11700 = vpop.f32.mrb[0].mxu0
      %11701 = vmatprep.mubr.bf16.mxu0 0
      %11702 = vmatmul.mubr.bf16.gmra.mrb[0].mxu0 %v11426
      %v11703 = vpop.f32.mrb[0].mxu0
      %v11704 = vadd.f32 %v11122, %v11703
      %v11705 = vpop.f32.mrb[0].mxu0
      %v11706 = vpop.f32.mrb[0].mxu0
      %v11707 = vadd.f32 %v11122, %v11706
      %v11708 = vpop.f32.mrb[0].mxu0
      %11709 = vmatprep.mubr.bf16.mxu0 0
      %11710 = vmatmul.mubr.bf16.gmra.mrb[0].mxu0 %v11434
      %v11711 = vpop.f32.mrb[0].mxu0
      %v11712 = vpop.f32.mrb[0].mxu0
      %v11713 = vpop.f32.mrb[0].mxu0
      %v11714 = vadd.f32 %v11122, %v11713
      %v11715 = vpop.f32.mrb[0].mxu0
      %11716 = vmatprep.mubr.bf16.mxu0 0
      %11717 = vmatmul.mubr.bf16.gmra.mrb[0].mxu0 %v11442
      %v11718 = vpop.f32.mrb[0].mxu0
      %v11719 = vadd.f32 %v11122, %v11718
      %v11720 = vpop.f32.mrb[0].mxu0
      %v11721 = vpop.f32.mrb[0].mxu0
      %v11722 = vpop.f32.mrb[0].mxu0
      %11723 = vdwg.mxu0
      %v11724 = vadd.f32 %v11020, %v11550
      %v11725 = vadd.f32 %v11021, %v11553
      %v11726 = vadd.f32 %v11022, %v11560
      %v11727 = vadd.f32 %v11023, %v11565
      %v11728 = vadd.f32 %v11024, %v11572
      %v11729 = vadd.f32 %v11025, %v11575
      %v11730 = vadd.f32 %v11026, %v11582
      %v11731 = vadd.f32 %v11027, %v11587
      %v11732 = vadd.f32 %v11028, %v11594
      %v11733 = vadd.f32 %v11029, %v11597
      %v11734 = vadd.f32 %v11030, %v11604
      %v11735 = vadd.f32 %v11031, %v11609
      %v11736 = vadd.f32 %v11032, %v11616
      %v11737 = vadd.f32 %v11033, %v11619
      %v11738 = vadd.f32 %v11034, %v11626
      %v11739 = vadd.f32 %v11035, %v11631
      %v11740 = vadd.f32 %v11036, %v11638
      %v11741 = vadd.f32 %v11037, %v11641
      %v11742 = vadd.f32 %v11038, %v11648
      %v11743 = vadd.f32 %v11039, %v11653
      %v11744 = vadd.f32 %v11040, %v11660
      %v11745 = vadd.f32 %v11041, %v11663
      %v11746 = vadd.f32 %v11042, %v11670
      %v11747 = vadd.f32 %v11043, %v11675
      %v11748 = vadd.f32 %v11044, %v11682
      %v11749 = vadd.f32 %v11045, %v11685
      %v11750 = vadd.f32 %v11046, %v11692
      %v11751 = vadd.f32 %v11047, %v11697
      %v11752 = vadd.f32 %v11048, %v11704
      %v11753 = vadd.f32 %v11049, %v11707
      %v11754 = vadd.f32 %v11050, %v11714
      %v11755 = vadd.f32 %v11051, %v11719
      %v11756 = vmul.f32 %v11724, 0.5
      %v11757 = vmul.f32 %v11725, 0.5
      %v11758 = vmul.f32 %v11726, 0.5
      %v11759 = vmul.f32 %v11727, 0.5
      %v11760 = vmul.f32 %v11728, 0.5
      %v11761 = vmul.f32 %v11729, 0.5
      %v11762 = vmul.f32 %v11730, 0.5
      %v11763 = vmul.f32 %v11731, 0.5
      %v11764 = vmul.f32 %v11732, 0.5
      %v11765 = vmul.f32 %v11733, 0.5
      %v11766 = vmul.f32 %v11734, 0.5
      %v11767 = vmul.f32 %v11735, 0.5
      %v11768 = vmul.f32 %v11736, 0.5
      %v11769 = vmul.f32 %v11737, 0.5
      %v11770 = vmul.f32 %v11738, 0.5
      %v11771 = vmul.f32 %v11739, 0.5
      %v11772 = vmul.f32 %v11740, 0.5
      %v11773 = vmul.f32 %v11741, 0.5
      %v11774 = vmul.f32 %v11742, 0.5
      %v11775 = vmul.f32 %v11743, 0.5
      %v11776 = vmul.f32 %v11744, 0.5
      %v11777 = vmul.f32 %v11745, 0.5
      %v11778 = vmul.f32 %v11746, 0.5
      %v11779 = vmul.f32 %v11747, 0.5
      %v11780 = vmul.f32 %v11748, 0.5
      %v11781 = vmul.f32 %v11749, 0.5
      %v11782 = vmul.f32 %v11750, 0.5
      %v11783 = vmul.f32 %v11751, 0.5
      %v11784 = vmul.f32 %v11752, 0.5
      %v11785 = vmul.f32 %v11753, 0.5
      %v11786 = vmul.f32 %v11754, 0.5
      %v11787 = vmul.f32 %v11755, 0.5
      %v11788 = vmul.f32 %v11724, 0.70710677
      %v11789 = vmul.f32 %v11725, 0.70710677
      %v11790 = vmul.f32 %v11726, 0.70710677
      %v11791 = vmul.f32 %v11727, 0.70710677
      %v11792 = vmul.f32 %v11728, 0.70710677
      %v11793 = vmul.f32 %v11729, 0.70710677
      %v11794 = vmul.f32 %v11730, 0.70710677
      %v11795 = vmul.f32 %v11731, 0.70710677
      %v11796 = vmul.f32 %v11732, 0.70710677
      %v11797 = vmul.f32 %v11733, 0.70710677
      %v11798 = vmul.f32 %v11734, 0.70710677
      %v11799 = vmul.f32 %v11735, 0.70710677
      %v11800 = vmul.f32 %v11736, 0.70710677
      %v11801 = vmul.f32 %v11737, 0.70710677
      %v11802 = vmul.f32 %v11738, 0.70710677
      %v11803 = vmul.f32 %v11739, 0.70710677
      %v11804 = vmul.f32 %v11740, 0.70710677
      %v11805 = vmul.f32 %v11741, 0.70710677
      %v11806 = vmul.f32 %v11742, 0.70710677
      %v11807 = vmul.f32 %v11743, 0.70710677
      %v11808 = vmul.f32 %v11744, 0.70710677
      %v11809 = vmul.f32 %v11745, 0.70710677
      %v11810 = vmul.f32 %v11746, 0.70710677
      %v11811 = vmul.f32 %v11747, 0.70710677
      %v11812 = vmul.f32 %v11748, 0.70710677
      %v11813 = vmul.f32 %v11749, 0.70710677
      %v11814 = vmul.f32 %v11750, 0.70710677
      %v11815 = vmul.f32 %v11751, 0.70710677
      %v11816 = vmul.f32 %v11752, 0.70710677
      %v11817 = vmul.f32 %v11753, 0.70710677
      %v11818 = vmul.f32 %v11754, 0.70710677
      %v11819 = vmul.f32 %v11755, 0.70710677
      %v11820 = verf.f32.pop %v11788
      %v11821 = verf.f32.pop %v11789
      %v11822 = verf.f32.pop %v11790
      %v11823 = verf.f32.pop %v11791
      %v11824 = verf.f32.pop %v11792
      %v11825 = verf.f32.pop %v11793
      %v11826 = verf.f32.pop %v11794
      %v11827 = verf.f32.pop %v11795
      %v11828 = verf.f32.pop %v11796
      %v11829 = verf.f32.pop %v11797
      %v11830 = verf.f32.pop %v11798
      %v11831 = verf.f32.pop %v11799
      %v11832 = verf.f32.pop %v11800
      %v11833 = verf.f32.pop %v11801
      %v11834 = verf.f32.pop %v11802
      %v11835 = verf.f32.pop %v11803
      %v11836 = verf.f32.pop %v11804
      %v11837 = verf.f32.pop %v11805
      %v11838 = verf.f32.pop %v11806
      %v11839 = verf.f32.pop %v11807
      %v11840 = verf.f32.pop %v11808
      %v11841 = verf.f32.pop %v11809
      %v11842 = verf.f32.pop %v11810
      %v11843 = verf.f32.pop %v11811
      %v11844 = verf.f32.pop %v11812
      %v11845 = verf.f32.pop %v11813
      %v11846 = verf.f32.pop %v11814
      %v11847 = verf.f32.pop %v11815
      %v11848 = verf.f32.pop %v11816
      %v11849 = verf.f32.pop %v11817
      %v11850 = verf.f32.pop %v11818
      %v11851 = verf.f32.pop %v11819
      %v11852 = vadd.f32 %v11820, 1.0
      %v11853 = vadd.f32 %v11821, 1.0
      %v11854 = vadd.f32 %v11822, 1.0
      %v11855 = vadd.f32 %v11823, 1.0
      %v11856 = vadd.f32 %v11824, 1.0
      %v11857 = vadd.f32 %v11825, 1.0
      %v11858 = vadd.f32 %v11826, 1.0
      %v11859 = vadd.f32 %v11827, 1.0
      %v11860 = vadd.f32 %v11828, 1.0
      %v11861 = vadd.f32 %v11829, 1.0
      %v11862 = vadd.f32 %v11830, 1.0
      %v11863 = vadd.f32 %v11831, 1.0
      %v11864 = vadd.f32 %v11832, 1.0
      %v11865 = vadd.f32 %v11833, 1.0
      %v11866 = vadd.f32 %v11834, 1.0
      %v11867 = vadd.f32 %v11835, 1.0
      %v11868 = vadd.f32 %v11836, 1.0
      %v11869 = vadd.f32 %v11837, 1.0
      %v11870 = vadd.f32 %v11838, 1.0
      %v11871 = vadd.f32 %v11839, 1.0
      %v11872 = vadd.f32 %v11840, 1.0
      %v11873 = vadd.f32 %v11841, 1.0
      %v11874 = vadd.f32 %v11842, 1.0
      %v11875 = vadd.f32 %v11843, 1.0
      %v11876 = vadd.f32 %v11844, 1.0
      %v11877 = vadd.f32 %v11845, 1.0
      %v11878 = vadd.f32 %v11846, 1.0
      %v11879 = vadd.f32 %v11847, 1.0
      %v11880 = vadd.f32 %v11848, 1.0
      %v11881 = vadd.f32 %v11849, 1.0
      %v11882 = vadd.f32 %v11850, 1.0
      %v11883 = vadd.f32 %v11851, 1.0
      %v11884 = vmul.f32 %v11756, %v11852
      %v11885 = vmul.f32 %v11757, %v11853
      %v11886 = vmul.f32 %v11758, %v11854
      %v11887 = vmul.f32 %v11759, %v11855
      %v11888 = vmul.f32 %v11760, %v11856
      %v11889 = vmul.f32 %v11761, %v11857
      %v11890 = vmul.f32 %v11762, %v11858
      %v11891 = vmul.f32 %v11763, %v11859
      %v11892 = vmul.f32 %v11764, %v11860
      %v11893 = vmul.f32 %v11765, %v11861
      %v11894 = vmul.f32 %v11766, %v11862
      %v11895 = vmul.f32 %v11767, %v11863
      %v11896 = vmul.f32 %v11768, %v11864
      %v11897 = vmul.f32 %v11769, %v11865
      %v11898 = vmul.f32 %v11770, %v11866
      %v11899 = vmul.f32 %v11771, %v11867
      %v11900 = vmul.f32 %v11772, %v11868
      %v11901 = vmul.f32 %v11773, %v11869
      %v11902 = vmul.f32 %v11774, %v11870
      %v11903 = vmul.f32 %v11775, %v11871
      %v11904 = vmul.f32 %v11776, %v11872
      %v11905 = vmul.f32 %v11777, %v11873
      %v11906 = vmul.f32 %v11778, %v11874
      %v11907 = vmul.f32 %v11779, %v11875
      %v11908 = vmul.f32 %v11780, %v11876
      %v11909 = vmul.f32 %v11781, %v11877
      %v11910 = vmul.f32 %v11782, %v11878
      %v11911 = vmul.f32 %v11783, %v11879
      %v11912 = vmul.f32 %v11784, %v11880
      %v11913 = vmul.f32 %v11785, %v11881
      %v11914 = vmul.f32 %v11786, %v11882
      %v11915 = vmul.f32 %v11787, %v11883
      %11916 = vst [vmem:[%s413] sm:$0xff] %v11884
      %11917 = vst [vmem:[%s413 + $0x8] sm:$0xff] %v11885
      %11918 = vst [vmem:[%s413 + $0x10] sm:$0xff] %v11886
      %11919 = vst [vmem:[%s413 + $0x18] sm:$0xff] %v11887
      %11920 = vst [vmem:[%s413 + $0x20] sm:$0xff] %v11888
      %11921 = vst [vmem:[%s413 + $0x28] sm:$0xff] %v11889
      %11922 = vst [vmem:[%s413 + $0x30] sm:$0xff] %v11890
      %11923 = vst [vmem:[%s413 + $0x38] sm:$0xff] %v11891
      %11924 = vst [vmem:[%s413 + $0x40] sm:$0xff] %v11892
      %11925 = vst [vmem:[%s413 + $0x48] sm:$0xff] %v11893
      %11926 = vst [vmem:[%s413 + $0x50] sm:$0xff] %v11894
      %11927 = vst [vmem:[%s413 + $0x58] sm:$0xff] %v11895
      %11928 = vst [vmem:[%s413 + $0x60] sm:$0xff] %v11896
      %11929 = vst [vmem:[%s413 + $0x68] sm:$0xff] %v11897
      %11930 = vst [vmem:[%s413 + $0x70] sm:$0xff] %v11898
      %11931 = vst [vmem:[%s413 + $0x78] sm:$0xff] %v11899
      %11932 = vst [vmem:[%s413 + $0x80] sm:$0xff] %v11900
      %11933 = vst [vmem:[%s413 + $0x88] sm:$0xff] %v11901
      %11934 = vst [vmem:[%s413 + $0x90] sm:$0xff] %v11902
      %11935 = vst [vmem:[%s413 + $0x98] sm:$0xff] %v11903
      %11936 = vst [vmem:[%s413 + $0xa0] sm:$0xff] %v11904
      %11937 = vst [vmem:[%s413 + $0xa8] sm:$0xff] %v11905
      %11938 = vst [vmem:[%s413 + $0xb0] sm:$0xff] %v11906
      %11939 = vst [vmem:[%s413 + $0xb8] sm:$0xff] %v11907
      %11940 = vst [vmem:[%s413 + $0xc0] sm:$0xff] %v11908
      %11941 = vst [vmem:[%s413 + $0xc8] sm:$0xff] %v11909
      %11942 = vst [vmem:[%s413 + $0xd0] sm:$0xff] %v11910
      %11943 = vst [vmem:[%s413 + $0xd8] sm:$0xff] %v11911
      %11944 = vst [vmem:[%s413 + $0xe0] sm:$0xff] %v11912
      %11945 = vst [vmem:[%s413 + $0xe8] sm:$0xff] %v11913
      %11946 = vst [vmem:[%s413 + $0xf0] sm:$0xff] %v11914
      %11947 = vst [vmem:[%s413 + $0xf8] sm:$0xff] %v11915
      %p11948 = scmp.lt.s32.totalorder %s23, 1
      %s11949 = scalar_select %p11948, %s23, 1
      %s11950 = smul.addr %s11949, 32
      %s11951 = smul.addr %s11950, 8
      %s11952 = scalar_lea.vmem %s12, %s11951
      // Predicated region
      $region69: #{_lambda_.1} parent=67 // pred_check
        %p11953 = pneg %p298
      $region70: #{_lambda_.1} parent=67 // pred_check_branch
        %11955 = sbr.rel (%p11953) target = $region72
      $region71: #{_lambda_.1} parent=67 // pred_region
        _
      $region72: #{_lambda_.1} parent=67 // pred_fallthru
        _
    $region68: #{_lambda_.1} parent=5 // pred_fallthru
      _
    %p11956 = scmp.le.s32.totalorder 2, %s18
    // Predicated region
    $region73: #{_lambda_.1} parent=5 // pred_check
      %p11957 = pneg %p11956
    $region74: #{_lambda_.1} parent=5 // pred_check_branch
      %11959 = sbr.rel (%p11957) target = $region76
    $region75: #{_lambda_.1} parent=5 // pred_region
      %s11960 = ssub.s32 %s18, 2
      // Predicated region
      $region77: #{_lambda_.1} parent=75 // pred_check
        %p11961 = pneg %p304
      $region78: #{_lambda_.1} parent=75 // pred_check_branch
        %11963 = sbr.rel (%p11961) target = $region80
      $region79: #{_lambda_.1} parent=75 // pred_region
        %p11964 = scmp.lt.s32.totalorder %s24, 1
        %s11965 = scalar_select %p11964, %s24, 1
        %s11966 = smul.addr %s11965, 32
        %s11967 = smul.addr %s11966, 8
        %s11968 = scalar_lea.vmem %s12, %s11967
      $region80: #{_lambda_.1} parent=75 // pred_fallthru
        _
    $region76: #{_lambda_.1} parent=5 // pred_fallthru
      _
  $region6: #{_lambda_.1} parent=0 // loop_footer
    %s22 = sadd.s32 1, %s18
  $region7: #{_lambda_.1} parent=0 // loop_footer_branch
    %17 = sbr.rel target = $region3
  $region8: #{_lambda_.1} parent=0 // loop_exit
    _

</llo_original>
